<compile_context>
chip_gen: v6e
topology: v6e:2x2x1
jax: 0.10.0
libtpu: 0.0.40
codegen_flags: <defaults>
</compile_context>

<pallas_src>
import functools

import jax
import jax.numpy as jnp
from jax import lax
from jax.experimental import pallas as pl
from jax.experimental.pallas import tpu as pltpu

# Keep reference (XLA) matmuls and in-kernel dots at the same (full f32) precision so the
# correctness check is meaningful.
jax.config.update("jax_default_matmul_precision", "highest")


# ----------------------------------------------------------------------------
# tiling helper
# ----------------------------------------------------------------------------
def _choose_tile(dim_size: int, target: int, align: int) -> int:
    """Largest tile <= target that divides dim_size and is align-aligned.

    Falls back to the full dimension, which is always a legal block shape.
    """
    if dim_size <= target:
        return dim_size
    t = (target // align) * align
    while t >= align:
        if dim_size % t == 0:
            return t
        t -= align
    return dim_size


# ----------------------------------------------------------------------------
# kernel 1: complex LayerNorm (row-tiled)
# ----------------------------------------------------------------------------
def _cln_kernel(xr_ref, xi_ref, wr_ref, wi_ref, br_ref, bi_ref, or_ref, oi_ref, *, eps):
    xr = xr_ref[...]
    xi = xi_ref[...]
    mr = jnp.mean(xr, axis=-1, keepdims=True)
    mi = jnp.mean(xi, axis=-1, keepdims=True)
    cr = xr - mr
    ci = xi - mi
    vr = jnp.mean(cr * cr, axis=-1, keepdims=True)
    vi = jnp.mean(ci * ci, axis=-1, keepdims=True)
    # principal sqrt of (vr + eps) + i*vi   (note vi >= 0)
    a = vr + eps
    b = vi
    r = jnp.sqrt(a * a + b * b)
    sre = jnp.sqrt(jnp.maximum((r + a) * 0.5, 0.0))
    sim = jnp.sqrt(jnp.maximum((r - a) * 0.5, 0.0))
    inv = 1.0 / r                      # |sqrt(z)|^2 = |z| = r, and r >= a >= eps > 0
    # (c) / s = c * conj(s) / |s|^2
    nr = (cr * sre + ci * sim) * inv
    ni = (ci * sre - cr * sim) * inv
    wr = wr_ref[...]
    wi = wi_ref[...]
    or_ref[...] = wr * nr - wi * ni + br_ref[...]
    oi_ref[...] = wr * ni + wi * nr + bi_ref[...]


def complex_layernorm(xr, xi, wr, wi, br, bi, *, eps):
    r_, d = xr.shape
    tr = _choose_tile(r_, 256, 8)
    row_spec = pl.BlockSpec((tr, d), lambda i: (i, 0))
    par_spec = pl.BlockSpec((1, d), lambda i: (0, 0))
    return pl.pallas_call(
        functools.partial(_cln_kernel, eps=eps),
        grid=(r_ // tr,),
        in_specs=[row_spec, row_spec, par_spec, par_spec, par_spec, par_spec],
        out_specs=(row_spec, row_spec),
        out_shape=(jax.ShapeDtypeStruct((r_, d), jnp.float32),
                   jax.ShapeDtypeStruct((r_, d), jnp.float32)),
        compiler_params=pltpu.CompilerParams(dimension_semantics=("parallel",)),
    )(xr, xi, wr, wi, br, bi)


# ----------------------------------------------------------------------------
# kernel 2: complex matmul (3-mult Gauss trick) with fused finalize variants
# ----------------------------------------------------------------------------
def _cmm_step(ar_ref, ai_ref, br_ref, bi_ref, accr, acci):
    k = pl.program_id(2)

    @pl.when(k == 0)
    def _():
        accr[...] = jnp.zeros_like(accr)
        acci[...] = jnp.zeros_like(acci)

    a_r = ar_ref[...]
    a_i = ai_ref[...]
    b_r = br_ref[...]
    b_i = bi_ref[...]
    # (a_r + i a_i) @ (b_r + i b_i) with 3 real MXU matmuls instead of 4.
    t1 = jnp.dot(a_r, b_r, preferred_element_type=jnp.float32)
    t2 = jnp.dot(a_i, b_i, preferred_element_type=jnp.float32)
    t3 = jnp.dot(a_r + a_i, b_r + b_i, preferred_element_type=jnp.float32)
    accr[...] += t1 - t2
    acci[...] += t3 - t1 - t2


def _cmm_kernel(ar_ref, ai_ref, br_ref, bi_ref, or_ref, oi_ref, accr, acci):
    _cmm_step(ar_ref, ai_ref, br_ref, bi_ref, accr, acci)

    @pl.when(pl.program_id(2) == pl.num_programs(2) - 1)
    def _():
        or_ref[...] = accr[...]
        oi_ref[...] = acci[...]


def _cmm_bias_res_kernel(ar_ref, ai_ref, br_ref, bi_ref,
                         biasr_ref, biasi_ref, resr_ref, resi_ref,
                         or_ref, oi_ref, accr, acci):
    _cmm_step(ar_ref, ai_ref, br_ref, bi_ref, accr, acci)

    @pl.when(pl.program_id(2) == pl.num_programs(2) - 1)
    def _():
        or_ref[...] = accr[...] + biasr_ref[...] + resr_ref[...]
        oi_ref[...] = acci[...] + biasi_ref[...] + resi_ref[...]


def _cmm_ista_kernel(ar_ref, ai_ref, br_ref, bi_ref, resr_ref, resi_ref,
                     or_ref, oi_ref, accr, acci, *, step, lambd, relu_type):
    _cmm_step(ar_ref, ai_ref, br_ref, bi_ref, accr, acci)

    @pl.when(pl.program_id(2) == pl.num_programs(2) - 1)
    def _():
        # z = y + step*(y@W^T) - step*lambd   (real scalar subtracts from the real part only)
        zr = resr_ref[...] + step * accr[...] - step * lambd
        zi = resi_ref[...] + step * acci[...]
        if relu_type == "crelu":
            or_ref[...] = jnp.maximum(zr, 0.0)
            oi_ref[...] = jnp.maximum(zi, 0.0)
        elif relu_type == "zrelu":
            keep = jnp.logical_and(zr >= 0.0, zi >= 0.0)
            or_ref[...] = jnp.where(keep, zr, 0.0)
            oi_ref[...] = jnp.where(keep, zi, 0.0)
        else:
            raise ValueError(f"unknown relu_type {relu_type}")


def complex_matmul(ar, ai, br, bi, *, bias=None, residual=None, ista=None):
    """(ar + i*ai) @ (br + i*bi), all float32 planes.

    Optional fused finalize:
      * bias + residual      -> to_out projection (+ grad_x residual)
      * ista={step,lambd,relu_type} + residual -> feedforward ISTA step + CReLU/ZReLU
    """
    m, k = ar.shape
    k2, n = br.shape
    assert k == k2
    tm = _choose_tile(m, 256, 8)
    tn = _choose_tile(n, 256, 128)
    tk = _choose_tile(k, 512, 128)
    grid = (m // tm, n // tn, k // tk)
    a_spec = pl.BlockSpec((tm, tk), lambda i, j, kk: (i, kk))
    b_spec = pl.BlockSpec((tk, tn), lambda i, j, kk: (kk, j))
    o_spec = pl.BlockSpec((tm, tn), lambda i, j, kk: (i, j))

    in_specs = [a_spec, a_spec, b_spec, b_spec]
    args = [ar, ai, br, bi]

    if ista is not None:
        assert residual is not None and bias is None
        resr, resi = residual
        in_specs += [o_spec, o_spec]
        args += [resr, resi]
        kernel = functools.partial(_cmm_ista_kernel, **ista)
    elif bias is not None:
        assert residual is not None
        biasr, biasi = bias
        resr, resi = residual
        bias_spec = pl.BlockSpec((1, tn), lambda i, j, kk: (0, j))
        in_specs += [bias_spec, bias_spec, o_spec, o_spec]
        args += [biasr.reshape(1, n), biasi.reshape(1, n), resr, resi]
        kernel = _cmm_bias_res_kernel
    else:
        assert residual is None
        kernel = _cmm_kernel

    return pl.pallas_call(
        kernel,
        grid=grid,
        in_specs=in_specs,
        out_specs=(o_spec, o_spec),
        out_shape=(jax.ShapeDtypeStruct((m, n), jnp.float32),
                   jax.ShapeDtypeStruct((m, n), jnp.float32)),
        scratch_shapes=[pltpu.VMEM((tm, tn), jnp.float32),
                        pltpu.VMEM((tm, tn), jnp.float32)],
        compiler_params=pltpu.CompilerParams(
            dimension_semantics=("parallel", "parallel", "arbitrary")),
    )(*args)


# ----------------------------------------------------------------------------
# kernel 3: fused per-(batch*head) attention with complex softmax
# ----------------------------------------------------------------------------
def _attn_kernel(wr_ref, wi_ref, or_ref, oi_ref, *, scale):
    wr = wr_ref[...]   # (N, Dh) — leading grid dim squeezed out
    wi = wi_ref[...]
    dn = (((1,), (1,)), ((), ()))   # contract last dims: (N,Dh)x(N,Dh) -> (N,N)
    # dots = (w @ conj(w)^T) * scale, via 3 real MXU matmuls
    s1 = lax.dot_general(wr, wr, dn, preferred_element_type=jnp.float32)
    s2 = lax.dot_general(wi, wi, dn, preferred_element_type=jnp.float32)
    s3 = lax.dot_general(wr + wi, wr - wi, dn, preferred_element_type=jnp.float32)
    dr = (s1 + s2) * scale
    di = (s3 - s1 + s2) * scale
    # ComplexSoftmax: softmax(|dots|) with the original phase restored
    mag = jnp.sqrt(dr * dr + di * di)
    mmax = jnp.max(mag, axis=-1, keepdims=True)
    e = jnp.exp(mag - mmax)
    p = e / jnp.sum(e, axis=-1, keepdims=True)
    safe = mag > 0.0
    den = jnp.where(safe, mag, 1.0)
    cph = jnp.where(safe, dr / den, 1.0)   # cos(angle); angle(0) = 0
    sph = jnp.where(safe, di / den, 0.0)   # sin(angle)
    attn_r = p * cph
    attn_i = p * sph
    # out = attn @ w, again 3 real MXU matmuls
    u1 = jnp.dot(attn_r, wr, preferred_element_type=jnp.float32)
    u2 = jnp.dot(attn_i, wi, preferred_element_type=jnp.float32)
    u3 = jnp.dot(attn_r + attn_i, wr + wi, preferred_element_type=jnp.float32)
    or_ref[...] = u1 - u2
    oi_ref[...] = u3 - u1 - u2


def complex_attention(wr, wi, *, scale):
    # TODO(synk): for long sequences this whole-N kernel should become a flash-style online
    #             softmax over key tiles; for the tested shapes the full (N,N) tile fits easily.
    bh, n, dh = wr.shape
    spec = pl.BlockSpec((None, n, dh), lambda b: (b, 0, 0))
    return pl.pallas_call(
        functools.partial(_attn_kernel, scale=scale),
        grid=(bh,),
        in_specs=[spec, spec],
        out_specs=(spec, spec),
        out_shape=(jax.ShapeDtypeStruct((bh, n, dh), jnp.float32),
                   jax.ShapeDtypeStruct((bh, n, dh), jnp.float32)),
        compiler_params=pltpu.CompilerParams(dimension_semantics=("parallel",)),
    )(wr, wi)


# ----------------------------------------------------------------------------
# Pallas transformer forward (real/imag f32 planes end-to-end)
# ----------------------------------------------------------------------------
def make_transformer(layers_f32, cfg):
    B, N, D = cfg["B"], cfg["N"], cfg["D"]
    H, Dh = cfg["H"], cfg["Dh"]
    step, lambd, eps = cfg["step"], cfg["lambd"], cfg["eps"]
    relu_type = cfg["relu_type"]
    scale = float(Dh) ** -0.5
    inner = H * Dh
    ista = dict(step=step, lambd=lambd, relu_type=relu_type)

    @jax.jit
    def forward(x):                      # x: complex64 (B, N, D)
        xr = jnp.real(x).astype(jnp.float32).reshape(B * N, D)
        xi = jnp.imag(x).astype(jnp.float32).reshape(B * N, D)
        for lp in layers_f32:
            # PreNorm(Attention)
            yr, yi = complex_layernorm(xr, xi, lp["ln1_wr"], lp["ln1_wi"],
                                       lp["ln1_br"], lp["ln1_bi"], eps=eps)
            qr, qi = complex_matmul(yr, yi, lp["wqkv_t_r"], lp["wqkv_t_i"])
            wr_h = qr.reshape(B, N, H, Dh).transpose(0, 2, 1, 3).reshape(B * H, N, Dh)
            wi_h = qi.reshape(B, N, H, Dh).transpose(0, 2, 1, 3).reshape(B * H, N, Dh)
            or_h, oi_h = complex_attention(wr_h, wi_h, scale=scale)
            ar = or_h.reshape(B, H, N, Dh).transpose(0, 2, 1, 3).reshape(B * N, inner)
            ai = oi_h.reshape(B, H, N, Dh).transpose(0, 2, 1, 3).reshape(B * N, inner)
            # to_out projection + bias + residual (grad_x = attn(x) + x), fused in one kernel
            gr, gi = complex_matmul(ar, ai, lp["wout_t_r"], lp["wout_t_i"],
                                    bias=(lp["bout_r"], lp["bout_i"]),
                                    residual=(xr, xi))
            # PreNorm(FeedForward type1): matmul + ISTA step + activation fused in one kernel
            y2r, y2i = complex_layernorm(gr, gi, lp["ln2_wr"], lp["ln2_wi"],
                                         lp["ln2_br"], lp["ln2_bi"], eps=eps)
            xr, xi = complex_matmul(y2r, y2i, lp["wff_t_r"], lp["wff_t_i"],
                                    residual=(y2r, y2i), ista=ista)
        return lax.complex(xr, xi).reshape(B, N, D)

    return forward


# ----------------------------------------------------------------------------
# pure-JAX complex reference (mirrors the torch module, eval mode)
# ----------------------------------------------------------------------------
def _layernorm_ref(x, w, b, eps):
    mr = jnp.mean(x.real, axis=-1, keepdims=True)
    mi = jnp.mean(x.imag, axis=-1, keepdims=True)
    vr = jnp.var(x.real, axis=-1, keepdims=True)
    vi = jnp.var(x.imag, axis=-1, keepdims=True)
    mean = lax.complex(mr, mi)
    var = lax.complex(vr, vi)
    xn = (x - mean) / jnp.sqrt(var + eps)
    return w * xn + b


def _attention_ref(y, wqkv, wout, bout, H, Dh, scale):
    B, N, D = y.shape
    qkv = y @ wqkv.T
    w = qkv.reshape(B, N, H, Dh).transpose(0, 2, 1, 3)
    dots = jnp.einsum('bhnd,bhmd->bhnm', w, jnp.conj(w)) * scale
    mag = jnp.abs(dots)
    p = jax.nn.softmax(mag, axis=-1)
    ph = jnp.angle(dots)
    attn = lax.complex(p * jnp.cos(ph), p * jnp.sin(ph))
    out = jnp.einsum('bhnm,bhmd->bhnd', attn, w)
    out = out.transpose(0, 2, 1, 3).reshape(B, N, H * Dh)
    return out @ wout.T + bout


def _feedforward_ref(y, wff, step, lambd, relu_type):
    x1 = y @ wff.T
    z = y + step * x1 - step * lambd
    if relu_type == "crelu":
        return lax.complex(jnp.maximum(z.real, 0.0), jnp.maximum(z.imag, 0.0))
    keep = jnp.logical_and(z.real >= 0.0, z.imag >= 0.0).astype(z.real.dtype)
    return z * keep


def transformer_ref(x, layers_c, cfg):
    H, Dh = cfg["H"], cfg["Dh"]
    eps, step, lambd = cfg["eps"], cfg["step"], cfg["lambd"]
    relu_type = cfg["relu_type"]
    scale = float(Dh) ** -0.5
    for lp in layers_c:
        y1 = _layernorm_ref(x, lp["ln1_w"], lp["ln1_b"], eps)
        att = _attention_ref(y1, lp["wqkv"], lp["wout"], lp["bout"], H, Dh, scale)
        grad_x = att + x
        y2 = _layernorm_ref(grad_x, lp["ln2_w"], lp["ln2_b"], eps)
        x = _feedforward_ref(y2, lp["wff"], step, lambd, relu_type)
    return x


# ----------------------------------------------------------------------------
# parameter construction
# ----------------------------------------------------------------------------
def _cnormal(key, shape, scl):
    k1, k2 = jax.random.split(key)
    return lax.complex(scl * jax.random.normal(k1, shape, jnp.float32),
                       scl * jax.random.normal(k2, shape, jnp.float32))


def init_params(key, depth, dim, heads, dim_head):
    inner = heads * dim_head
    layers = []
    for _ in range(depth):
        key, *ks = jax.random.split(key, 9)
        layers.append(dict(
            ln1_w=1.0 + _cnormal(ks[0], (dim,), 0.1),
            ln1_b=_cnormal(ks[1], (dim,), 0.05),
            wqkv=_cnormal(ks[2], (inner, dim), dim ** -0.5),
            wout=_cnormal(ks[3], (dim, inner), inner ** -0.5),
            bout=_cnormal(ks[4], (dim,), 0.02),
            ln2_w=1.0 + _cnormal(ks[5], (dim,), 0.1),
            ln2_b=_cnormal(ks[6], (dim,), 0.05),
            wff=_cnormal(ks[7], (dim, dim), dim ** -0.5),
        ))
    return layers


def to_f32_layer(lp):
    def ri(a):
        return jnp.real(a).astype(jnp.float32), jnp.imag(a).astype(jnp.float32)

    out = {}
    out["ln1_wr"], out["ln1_wi"] = ri(lp["ln1_w"].reshape(1, -1))
    out["ln1_br"], out["ln1_bi"] = ri(lp["ln1_b"].reshape(1, -1))
    out["ln2_wr"], out["ln2_wi"] = ri(lp["ln2_w"].reshape(1, -1))
    out["ln2_br"], out["ln2_bi"] = ri(lp["ln2_b"].reshape(1, -1))
    out["wqkv_t_r"], out["wqkv_t_i"] = ri(lp["wqkv"].T)   # (dim, inner)  matmul-ready
    out["wout_t_r"], out["wout_t_i"] = ri(lp["wout"].T)   # (inner, dim)
    out["bout_r"], out["bout_i"] = ri(lp["bout"].reshape(1, -1))
    out["wff_t_r"], out["wff_t_i"] = ri(lp["wff"].T)      # (dim, dim)
    return out


# ----------------------------------------------------------------------------
if __name__ == "__main__":
    B, N, D = 2, 8, 32          # batch, sequence, model dim
    H, Dh = 4, 8                # heads, dim_head  -> inner_dim = 32
    depth = 2
    cfg = dict(B=B, N=N, D=D, H=H, Dh=Dh,
               step=0.1, lambd=0.1, eps=1e-5, relu_type="crelu")

    key = jax.random.PRNGKey(0)
    key, kx1, kx2, kp = jax.random.split(key, 4)
    x = lax.complex(jax.random.normal(kx1, (B, N, D), jnp.float32),
                    jax.random.normal(kx2, (B, N, D), jnp.float32))   # complex64

    layers_c = init_params(kp, depth, D, H, Dh)
    layers_f32 = [to_f32_layer(lp) for lp in layers_c]

    fwd = make_transformer(layers_f32, cfg)
    out = fwd(x)
    out = jax.block_until_ready(out)

    ref = transformer_ref(x, layers_c, cfg)
    assert out.shape == x.shape and out.dtype == x.dtype
    max_err = float(jnp.max(jnp.abs(out - ref)))
    assert jnp.all(jnp.isfinite(jnp.abs(out))), "non-finite output"
    assert max_err < 2e-3, f"mismatch vs reference: max abs err {max_err}"
    print("KERNEL_OK")
</pallas_src>

<mosaic_0001>
module attributes {stable_mosaic.version = 11 : i64} {
  func.func @_cln_kernel(%arg0: i32, %arg1: memref<16x32xf32, #tpu.memory_space<vmem>>, %arg2: memref<16x32xf32, #tpu.memory_space<vmem>>, %arg3: memref<1x32xf32, #tpu.memory_space<vmem>>, %arg4: memref<1x32xf32, #tpu.memory_space<vmem>>, %arg5: memref<1x32xf32, #tpu.memory_space<vmem>>, %arg6: memref<1x32xf32, #tpu.memory_space<vmem>>, %arg7: memref<16x32xf32, #tpu.memory_space<vmem>>, %arg8: memref<16x32xf32, #tpu.memory_space<vmem>>) attributes {dimension_semantics = [#tpu.dimension_semantics<parallel>], iteration_bounds = array<i64: 1>, scalar_prefetch = 0 : i64, scratch_operands = 0 : i64, tpu.core_type = #tpu.core_type<tc>, window_params = [{transform_indices = @transform_0, window_bounds = array<i64: 16, 32>}, {transform_indices = @transform_1, window_bounds = array<i64: 16, 32>}, {pipeline_mode = #tpu.pipeline_mode<synchronous>, transform_indices = @transform_2, window_bounds = array<i64: 1, 32>}, {pipeline_mode = #tpu.pipeline_mode<synchronous>, transform_indices = @transform_3, window_bounds = array<i64: 1, 32>}, {pipeline_mode = #tpu.pipeline_mode<synchronous>, transform_indices = @transform_4, window_bounds = array<i64: 1, 32>}, {pipeline_mode = #tpu.pipeline_mode<synchronous>, transform_indices = @transform_5, window_bounds = array<i64: 1, 32>}, {transform_indices = @transform_6, window_bounds = array<i64: 16, 32>}, {transform_indices = @transform_7, window_bounds = array<i64: 16, 32>}]} {
    %c0 = arith.constant 0 : index
    %c0_0 = arith.constant 0 : index
    %0 = vector.load %arg1[%c0, %c0_0] : memref<16x32xf32, #tpu.memory_space<vmem>>, vector<16x32xf32>
    %c0_1 = arith.constant 0 : index
    %c0_2 = arith.constant 0 : index
    %1 = vector.load %arg2[%c0_1, %c0_2] : memref<16x32xf32, #tpu.memory_space<vmem>>, vector<16x32xf32>
    %cst = arith.constant dense<0.000000e+00> : vector<16xf32>
    %2 = vector.multi_reduction <add>, %0, %cst [1] : vector<16x32xf32> to vector<16xf32>
    %3 = vector.shape_cast %2 : vector<16xf32> to vector<16x1xf32>
    %cst_3 = arith.constant 3.200000e+01 : f32
    %4 = vector.broadcast %cst_3 : f32 to vector<16x1xf32>
    %5 = arith.divf %3, %4 : vector<16x1xf32>
    %cst_4 = arith.constant dense<0.000000e+00> : vector<16xf32>
    %6 = vector.multi_reduction <add>, %1, %cst_4 [1] : vector<16x32xf32> to vector<16xf32>
    %7 = vector.shape_cast %6 : vector<16xf32> to vector<16x1xf32>
    %cst_5 = arith.constant 3.200000e+01 : f32
    %8 = vector.broadcast %cst_5 : f32 to vector<16x1xf32>
    %9 = arith.divf %7, %8 : vector<16x1xf32>
    %10 = vector.broadcast %5 : vector<16x1xf32> to vector<16x32xf32>
    %11 = arith.subf %0, %10 : vector<16x32xf32>
    %12 = vector.broadcast %9 : vector<16x1xf32> to vector<16x32xf32>
    %13 = arith.subf %1, %12 : vector<16x32xf32>
    %14 = arith.mulf %11, %11 : vector<16x32xf32>
    %cst_6 = arith.constant dense<0.000000e+00> : vector<16xf32>
    %15 = vector.multi_reduction <add>, %14, %cst_6 [1] : vector<16x32xf32> to vector<16xf32>
    %16 = vector.shape_cast %15 : vector<16xf32> to vector<16x1xf32>
    %cst_7 = arith.constant 3.200000e+01 : f32
    %17 = vector.broadcast %cst_7 : f32 to vector<16x1xf32>
    %18 = arith.divf %16, %17 : vector<16x1xf32>
    %19 = arith.mulf %13, %13 : vector<16x32xf32>
    %cst_8 = arith.constant dense<0.000000e+00> : vector<16xf32>
    %20 = vector.multi_reduction <add>, %19, %cst_8 [1] : vector<16x32xf32> to vector<16xf32>
    %21 = vector.shape_cast %20 : vector<16xf32> to vector<16x1xf32>
    %cst_9 = arith.constant 3.200000e+01 : f32
    %22 = vector.broadcast %cst_9 : f32 to vector<16x1xf32>
    %23 = arith.divf %21, %22 : vector<16x1xf32>
    %cst_10 = arith.constant 9.99999974E-6 : f32
    %24 = vector.broadcast %cst_10 : f32 to vector<16x1xf32>
    %25 = arith.addf %18, %24 : vector<16x1xf32>
    %26 = arith.mulf %25, %25 : vector<16x1xf32>
    %27 = arith.mulf %23, %23 : vector<16x1xf32>
    %28 = arith.addf %26, %27 : vector<16x1xf32>
    %29 = math.sqrt %28 : vector<16x1xf32>
    %30 = arith.addf %29, %25 : vector<16x1xf32>
    %cst_11 = arith.constant 5.000000e-01 : f32
    %31 = vector.broadcast %cst_11 : f32 to vector<16x1xf32>
    %32 = arith.mulf %30, %31 : vector<16x1xf32>
    %cst_12 = arith.constant 0.000000e+00 : f32
    %33 = vector.broadcast %cst_12 : f32 to vector<16x1xf32>
    %34 = arith.maximumf %32, %33 : vector<16x1xf32>
    %35 = math.sqrt %34 : vector<16x1xf32>
    %36 = arith.subf %29, %25 : vector<16x1xf32>
    %cst_13 = arith.constant 5.000000e-01 : f32
    %37 = vector.broadcast %cst_13 : f32 to vector<16x1xf32>
    %38 = arith.mulf %36, %37 : vector<16x1xf32>
    %cst_14 = arith.constant 0.000000e+00 : f32
    %39 = vector.broadcast %cst_14 : f32 to vector<16x1xf32>
    %40 = arith.maximumf %38, %39 : vector<16x1xf32>
    %41 = math.sqrt %40 : vector<16x1xf32>
    %cst_15 = arith.constant 1.000000e+00 : f32
    %42 = vector.broadcast %cst_15 : f32 to vector<16x1xf32>
    %43 = arith.divf %42, %29 : vector<16x1xf32>
    %44 = vector.broadcast %35 : vector<16x1xf32> to vector<16x32xf32>
    %45 = arith.mulf %11, %44 : vector<16x32xf32>
    %46 = vector.broadcast %41 : vector<16x1xf32> to vector<16x32xf32>
    %47 = arith.mulf %13, %46 : vector<16x32xf32>
    %48 = arith.addf %45, %47 : vector<16x32xf32>
    %49 = vector.broadcast %43 : vector<16x1xf32> to vector<16x32xf32>
    %50 = arith.mulf %48, %49 : vector<16x32xf32>
    %51 = vector.broadcast %35 : vector<16x1xf32> to vector<16x32xf32>
    %52 = arith.mulf %13, %51 : vector<16x32xf32>
    %53 = vector.broadcast %41 : vector<16x1xf32> to vector<16x32xf32>
    %54 = arith.mulf %11, %53 : vector<16x32xf32>
    %55 = arith.subf %52, %54 : vector<16x32xf32>
    %56 = vector.broadcast %43 : vector<16x1xf32> to vector<16x32xf32>
    %57 = arith.mulf %55, %56 : vector<16x32xf32>
    %c0_16 = arith.constant 0 : index
    %c0_17 = arith.constant 0 : index
    %58 = vector.load %arg3[%c0_16, %c0_17] : memref<1x32xf32, #tpu.memory_space<vmem>>, vector<1x32xf32>
    %c0_18 = arith.constant 0 : index
    %c0_19 = arith.constant 0 : index
    %59 = vector.load %arg4[%c0_18, %c0_19] : memref<1x32xf32, #tpu.memory_space<vmem>>, vector<1x32xf32>
    %60 = vector.broadcast %58 : vector<1x32xf32> to vector<16x32xf32>
    %61 = arith.mulf %60, %50 : vector<16x32xf32>
    %62 = vector.broadcast %59 : vector<1x32xf32> to vector<16x32xf32>
    %63 = arith.mulf %62, %57 : vector<16x32xf32>
    %64 = arith.subf %61, %63 : vector<16x32xf32>
    %c0_20 = arith.constant 0 : index
    %c0_21 = arith.constant 0 : index
    %65 = vector.load %arg5[%c0_20, %c0_21] : memref<1x32xf32, #tpu.memory_space<vmem>>, vector<1x32xf32>
    %66 = vector.broadcast %65 : vector<1x32xf32> to vector<16x32xf32>
    %67 = arith.addf %64, %66 : vector<16x32xf32>
    %c0_22 = arith.constant 0 : index
    %c0_23 = arith.constant 0 : index
    %68 = vector.load %arg7[%c0_22, %c0_23] : memref<16x32xf32, #tpu.memory_space<vmem>>, vector<16x32xf32>
    tpu.vector_store %arg7[%c0_22, %c0_23], %67 {strides = array<i32>} : memref<16x32xf32, #tpu.memory_space<vmem>>, vector<16x32xf32>,
    %69 = vector.broadcast %58 : vector<1x32xf32> to vector<16x32xf32>
    %70 = arith.mulf %69, %57 : vector<16x32xf32>
    %71 = vector.broadcast %59 : vector<1x32xf32> to vector<16x32xf32>
    %72 = arith.mulf %71, %50 : vector<16x32xf32>
    %73 = arith.addf %70, %72 : vector<16x32xf32>
    %c0_24 = arith.constant 0 : index
    %c0_25 = arith.constant 0 : index
    %74 = vector.load %arg6[%c0_24, %c0_25] : memref<1x32xf32, #tpu.memory_space<vmem>>, vector<1x32xf32>
    %75 = vector.broadcast %74 : vector<1x32xf32> to vector<16x32xf32>
    %76 = arith.addf %73, %75 : vector<16x32xf32>
    %c0_26 = arith.constant 0 : index
    %c0_27 = arith.constant 0 : index
    %77 = vector.load %arg8[%c0_26, %c0_27] : memref<16x32xf32, #tpu.memory_space<vmem>>, vector<16x32xf32>
    tpu.vector_store %arg8[%c0_26, %c0_27], %76 {strides = array<i32>} : memref<16x32xf32, #tpu.memory_space<vmem>>, vector<16x32xf32>,
    return
  }
  func.func @transform_0(%arg0: i32) -> (i32, i32) {
    %c0_i32 = arith.constant 0 : i32
    %c0_i32_0 = arith.constant 0 : i32
    return %arg0, %c0_i32 : i32, i32
  }
  func.func @transform_1(%arg0: i32) -> (i32, i32) {
    %c0_i32 = arith.constant 0 : i32
    %c0_i32_0 = arith.constant 0 : i32
    return %arg0, %c0_i32 : i32, i32
  }
  func.func @transform_2(%arg0: i32) -> (i32, i32) {
    %c0_i32 = arith.constant 0 : i32
    %c0_i32_0 = arith.constant 0 : i32
    %c0_i32_1 = arith.constant 0 : i32
    return %c0_i32, %c0_i32_0 : i32, i32
  }
  func.func @transform_3(%arg0: i32) -> (i32, i32) {
    %c0_i32 = arith.constant 0 : i32
    %c0_i32_0 = arith.constant 0 : i32
    %c0_i32_1 = arith.constant 0 : i32
    return %c0_i32, %c0_i32_0 : i32, i32
  }
  func.func @transform_4(%arg0: i32) -> (i32, i32) {
    %c0_i32 = arith.constant 0 : i32
    %c0_i32_0 = arith.constant 0 : i32
    %c0_i32_1 = arith.constant 0 : i32
    return %c0_i32, %c0_i32_0 : i32, i32
  }
  func.func @transform_5(%arg0: i32) -> (i32, i32) {
    %c0_i32 = arith.constant 0 : i32
    %c0_i32_0 = arith.constant 0 : i32
    %c0_i32_1 = arith.constant 0 : i32
    return %c0_i32, %c0_i32_0 : i32, i32
  }
  func.func @transform_6(%arg0: i32) -> (i32, i32) {
    %c0_i32 = arith.constant 0 : i32
    %c0_i32_0 = arith.constant 0 : i32
    return %arg0, %c0_i32 : i32, i32
  }
  func.func @transform_7(%arg0: i32) -> (i32, i32) {
    %c0_i32 = arith.constant 0 : i32
    %c0_i32_0 = arith.constant 0 : i32
    return %arg0, %c0_i32 : i32, i32
  }
}

module attributes {stable_mosaic.version = 11 : i64} {
  func.func @_cmm_kernel(%arg0: i32, %arg1: i32, %arg2: i32, %arg3: memref<16x32xf32, #tpu.memory_space<vmem>>, %arg4: memref<16x32xf32, #tpu.memory_space<vmem>>, %arg5: memref<32x32xf32, #tpu.memory_space<vmem>>, %arg6: memref<32x32xf32, #tpu.memory_space<vmem>>, %arg7: memref<16x32xf32, #tpu.memory_space<vmem>>, %arg8: memref<16x32xf32, #tpu.memory_space<vmem>>, %arg9: memref<16x32xf32, #tpu.memory_space<vmem>>, %arg10: memref<16x32xf32, #tpu.memory_space<vmem>>) attributes {dimension_semantics = [#tpu.dimension_semantics<parallel>, #tpu.dimension_semantics<parallel>, #tpu.dimension_semantics<arbitrary>], iteration_bounds = array<i64: 1, 1, 1>, scalar_prefetch = 0 : i64, scratch_operands = 2 : i64, tpu.core_type = #tpu.core_type<tc>, window_params = [{transform_indices = @transform_0, window_bounds = array<i64: 16, 32>}, {transform_indices = @transform_1, window_bounds = array<i64: 16, 32>}, {transform_indices = @transform_2, window_bounds = array<i64: 32, 32>}, {transform_indices = @transform_3, window_bounds = array<i64: 32, 32>}, {transform_indices = @transform_4, window_bounds = array<i64: 16, 32>}, {transform_indices = @transform_5, window_bounds = array<i64: 16, 32>}]} {
    %c0_i32 = arith.constant 0 : i32
    %0 = arith.cmpi eq, %arg2, %c0_i32 : i32
    %1 = arith.extui %0 : i1 to i32
    %c0_i32_0 = arith.constant 0 : i32
    %2 = arith.cmpi ne, %1, %c0_i32_0 : i32
    scf.if %2 {
      %cst_20 = arith.constant 0.000000e+00 : f32
      %24 = vector.broadcast %cst_20 : f32 to vector<16x32xf32>
      %c0_21 = arith.constant 0 : index
      %c0_22 = arith.constant 0 : index
      %25 = vector.load %arg9[%c0_21, %c0_22] : memref<16x32xf32, #tpu.memory_space<vmem>>, vector<16x32xf32>
      tpu.vector_store %arg9[%c0_21, %c0_22], %24 {strides = array<i32>} : memref<16x32xf32, #tpu.memory_space<vmem>>, vector<16x32xf32>,
      %cst_23 = arith.constant 0.000000e+00 : f32
      %26 = vector.broadcast %cst_23 : f32 to vector<16x32xf32>
      %c0_24 = arith.constant 0 : index
      %c0_25 = arith.constant 0 : index
      %27 = vector.load %arg10[%c0_24, %c0_25] : memref<16x32xf32, #tpu.memory_space<vmem>>, vector<16x32xf32>
      tpu.vector_store %arg10[%c0_24, %c0_25], %26 {strides = array<i32>} : memref<16x32xf32, #tpu.memory_space<vmem>>, vector<16x32xf32>,
    } else {
    }
    %c0 = arith.constant 0 : index
    %c0_1 = arith.constant 0 : index
    %3 = vector.load %arg3[%c0, %c0_1] : memref<16x32xf32, #tpu.memory_space<vmem>>, vector<16x32xf32>
    %c0_2 = arith.constant 0 : index
    %c0_3 = arith.constant 0 : index
    %4 = vector.load %arg4[%c0_2, %c0_3] : memref<16x32xf32, #tpu.memory_space<vmem>>, vector<16x32xf32>
    %c0_4 = arith.constant 0 : index
    %c0_5 = arith.constant 0 : index
    %5 = vector.load %arg5[%c0_4, %c0_5] : memref<32x32xf32, #tpu.memory_space<vmem>>, vector<32x32xf32>
    %c0_6 = arith.constant 0 : index
    %c0_7 = arith.constant 0 : index
    %6 = vector.load %arg6[%c0_6, %c0_7] : memref<32x32xf32, #tpu.memory_space<vmem>>, vector<32x32xf32>
    %cst = arith.constant dense<0.000000e+00> : vector<16x32xf32>
    %7 = tpu.matmul %3, %5, %cst {dimension_numbers = #tpu.dot_dimension_numbers<[1], [0], [0], [1], [0, 0, 1, 1], [], []>, precision = #tpu.contract_precision<fp32>} : vector<16x32xf32>, vector<32x32xf32>, vector<16x32xf32> -> vector<16x32xf32>
    %cst_8 = arith.constant dense<0.000000e+00> : vector<16x32xf32>
    %8 = tpu.matmul %4, %6, %cst_8 {dimension_numbers = #tpu.dot_dimension_numbers<[1], [0], [0], [1], [0, 0, 1, 1], [], []>, precision = #tpu.contract_precision<fp32>} : vector<16x32xf32>, vector<32x32xf32>, vector<16x32xf32> -> vector<16x32xf32>
    %9 = arith.addf %3, %4 : vector<16x32xf32>
    %10 = arith.addf %5, %6 : vector<32x32xf32>
    %cst_9 = arith.constant dense<0.000000e+00> : vector<16x32xf32>
    %11 = tpu.matmul %9, %10, %cst_9 {dimension_numbers = #tpu.dot_dimension_numbers<[1], [0], [0], [1], [0, 0, 1, 1], [], []>, precision = #tpu.contract_precision<fp32>} : vector<16x32xf32>, vector<32x32xf32>, vector<16x32xf32> -> vector<16x32xf32>
    %c0_10 = arith.constant 0 : index
    %c0_11 = arith.constant 0 : index
    %12 = vector.load %arg9[%c0_10, %c0_11] : memref<16x32xf32, #tpu.memory_space<vmem>>, vector<16x32xf32>
    %13 = arith.subf %7, %8 : vector<16x32xf32>
    %14 = arith.addf %12, %13 : vector<16x32xf32>
    %c0_12 = arith.constant 0 : index
    %c0_13 = arith.constant 0 : index
    %15 = vector.load %arg9[%c0_12, %c0_13] : memref<16x32xf32, #tpu.memory_space<vmem>>, vector<16x32xf32>
    tpu.vector_store %arg9[%c0_12, %c0_13], %14 {strides = array<i32>} : memref<16x32xf32, #tpu.memory_space<vmem>>, vector<16x32xf32>,
    %c0_14 = arith.constant 0 : index
    %c0_15 = arith.constant 0 : index
    %16 = vector.load %arg10[%c0_14, %c0_15] : memref<16x32xf32, #tpu.memory_space<vmem>>, vector<16x32xf32>
    %17 = arith.subf %11, %7 : vector<16x32xf32>
    %18 = arith.subf %17, %8 : vector<16x32xf32>
    %19 = arith.addf %16, %18 : vector<16x32xf32>
    %c0_16 = arith.constant 0 : index
    %c0_17 = arith.constant 0 : index
    %20 = vector.load %arg10[%c0_16, %c0_17] : memref<16x32xf32, #tpu.memory_space<vmem>>, vector<16x32xf32>
    tpu.vector_store %arg10[%c0_16, %c0_17], %19 {strides = array<i32>} : memref<16x32xf32, #tpu.memory_space<vmem>>, vector<16x32xf32>,
    %c0_i32_18 = arith.constant 0 : i32
    %21 = arith.cmpi eq, %arg2, %c0_i32_18 : i32
    %22 = arith.extui %21 : i1 to i32
    %c0_i32_19 = arith.constant 0 : i32
    %23 = arith.cmpi ne, %22, %c0_i32_19 : i32
    scf.if %23 {
      %c0_20 = arith.constant 0 : index
      %c0_21 = arith.constant 0 : index
      %24 = vector.load %arg9[%c0_20, %c0_21] : memref<16x32xf32, #tpu.memory_space<vmem>>, vector<16x32xf32>
      %c0_22 = arith.constant 0 : index
      %c0_23 = arith.constant 0 : index
      %25 = vector.load %arg7[%c0_22, %c0_23] : memref<16x32xf32, #tpu.memory_space<vmem>>, vector<16x32xf32>
      tpu.vector_store %arg7[%c0_22, %c0_23], %24 {strides = array<i32>} : memref<16x32xf32, #tpu.memory_space<vmem>>, vector<16x32xf32>,
      %c0_24 = arith.constant 0 : index
      %c0_25 = arith.constant 0 : index
      %26 = vector.load %arg10[%c0_24, %c0_25] : memref<16x32xf32, #tpu.memory_space<vmem>>, vector<16x32xf32>
      %c0_26 = arith.constant 0 : index
      %c0_27 = arith.constant 0 : index
      %27 = vector.load %arg8[%c0_26, %c0_27] : memref<16x32xf32, #tpu.memory_space<vmem>>, vector<16x32xf32>
      tpu.vector_store %arg8[%c0_26, %c0_27], %26 {strides = array<i32>} : memref<16x32xf32, #tpu.memory_space<vmem>>, vector<16x32xf32>,
    } else {
    }
    return
  }
  func.func @transform_0(%arg0: i32, %arg1: i32, %arg2: i32) -> (i32, i32) {
    %c0_i32 = arith.constant 0 : i32
    return %arg0, %arg2 : i32, i32
  }
  func.func @transform_1(%arg0: i32, %arg1: i32, %arg2: i32) -> (i32, i32) {
    %c0_i32 = arith.constant 0 : i32
    return %arg0, %arg2 : i32, i32
  }
  func.func @transform_2(%arg0: i32, %arg1: i32, %arg2: i32) -> (i32, i32) {
    %c0_i32 = arith.constant 0 : i32
    return %arg2, %arg1 : i32, i32
  }
  func.func @transform_3(%arg0: i32, %arg1: i32, %arg2: i32) -> (i32, i32) {
    %c0_i32 = arith.constant 0 : i32
    return %arg2, %arg1 : i32, i32
  }
  func.func @transform_4(%arg0: i32, %arg1: i32, %arg2: i32) -> (i32, i32) {
    %c0_i32 = arith.constant 0 : i32
    return %arg0, %arg1 : i32, i32
  }
  func.func @transform_5(%arg0: i32, %arg1: i32, %arg2: i32) -> (i32, i32) {
    %c0_i32 = arith.constant 0 : i32
    return %arg0, %arg1 : i32, i32
  }
}

module attributes {stable_mosaic.version = 11 : i64} {
  func.func @_attn_kernel(%arg0: i32, %arg1: memref<1x8x8xf32, #tpu.memory_space<vmem>>, %arg2: memref<1x8x8xf32, #tpu.memory_space<vmem>>, %arg3: memref<1x8x8xf32, #tpu.memory_space<vmem>>, %arg4: memref<1x8x8xf32, #tpu.memory_space<vmem>>) attributes {dimension_semantics = [#tpu.dimension_semantics<parallel>], iteration_bounds = array<i64: 8>, scalar_prefetch = 0 : i64, scratch_operands = 0 : i64, tpu.core_type = #tpu.core_type<tc>, window_params = [{transform_indices = @transform_0, window_bounds = array<i64: 1, 8, 8>}, {transform_indices = @transform_1, window_bounds = array<i64: 1, 8, 8>}, {transform_indices = @transform_2, window_bounds = array<i64: 1, 8, 8>}, {transform_indices = @transform_3, window_bounds = array<i64: 1, 8, 8>}]} {
    %c0 = arith.constant 0 : index
    %c0_0 = arith.constant 0 : index
    %c0_1 = arith.constant 0 : index
    %0 = vector.load %arg1[%c0, %c0_0, %c0_1] : memref<1x8x8xf32, #tpu.memory_space<vmem>>, vector<1x8x8xf32>
    %1 = vector.shape_cast %0 : vector<1x8x8xf32> to vector<8x8xf32>
    %c0_2 = arith.constant 0 : index
    %c0_3 = arith.constant 0 : index
    %c0_4 = arith.constant 0 : index
    %2 = vector.load %arg2[%c0_2, %c0_3, %c0_4] : memref<1x8x8xf32, #tpu.memory_space<vmem>>, vector<1x8x8xf32>
    %3 = vector.shape_cast %2 : vector<1x8x8xf32> to vector<8x8xf32>
    %cst = arith.constant dense<0.000000e+00> : vector<8x8xf32>
    %4 = tpu.matmul %1, %1, %cst {dimension_numbers = #tpu.dot_dimension_numbers<[1], [1], [0], [0], [0, 0, 1, 0], [], []>, precision = #tpu.contract_precision<fp32>} : vector<8x8xf32>, vector<8x8xf32>, vector<8x8xf32> -> vector<8x8xf32>
    %cst_5 = arith.constant dense<0.000000e+00> : vector<8x8xf32>
    %5 = tpu.matmul %3, %3, %cst_5 {dimension_numbers = #tpu.dot_dimension_numbers<[1], [1], [0], [0], [0, 0, 1, 0], [], []>, precision = #tpu.contract_precision<fp32>} : vector<8x8xf32>, vector<8x8xf32>, vector<8x8xf32> -> vector<8x8xf32>
    %6 = arith.addf %1, %3 : vector<8x8xf32>
    %7 = arith.subf %1, %3 : vector<8x8xf32>
    %cst_6 = arith.constant dense<0.000000e+00> : vector<8x8xf32>
    %8 = tpu.matmul %6, %7, %cst_6 {dimension_numbers = #tpu.dot_dimension_numbers<[1], [1], [0], [0], [0, 0, 1, 0], [], []>, precision = #tpu.contract_precision<fp32>} : vector<8x8xf32>, vector<8x8xf32>, vector<8x8xf32> -> vector<8x8xf32>
    %9 = arith.addf %4, %5 : vector<8x8xf32>
    %cst_7 = arith.constant 0.353553385 : f32
    %10 = vector.broadcast %cst_7 : f32 to vector<8x8xf32>
    %11 = arith.mulf %9, %10 : vector<8x8xf32>
    %12 = arith.subf %8, %4 : vector<8x8xf32>
    %13 = arith.addf %12, %5 : vector<8x8xf32>
    %cst_8 = arith.constant 0.353553385 : f32
    %14 = vector.broadcast %cst_8 : f32 to vector<8x8xf32>
    %15 = arith.mulf %13, %14 : vector<8x8xf32>
    %16 = arith.mulf %11, %11 : vector<8x8xf32>
    %17 = arith.mulf %15, %15 : vector<8x8xf32>
    %18 = arith.addf %16, %17 : vector<8x8xf32>
    %19 = math.sqrt %18 : vector<8x8xf32>
    %cst_9 = arith.constant dense<0xFF800000> : vector<8xf32>
    %20 = vector.multi_reduction <maximumf>, %19, %cst_9 [1] : vector<8x8xf32> to vector<8xf32>
    %21 = vector.shape_cast %20 : vector<8xf32> to vector<8x1xf32>
    %22 = vector.broadcast %21 : vector<8x1xf32> to vector<8x8xf32>
    %23 = arith.subf %19, %22 : vector<8x8xf32>
    %24 = math.exp %23 : vector<8x8xf32>
    %cst_10 = arith.constant dense<0.000000e+00> : vector<8xf32>
    %25 = vector.multi_reduction <add>, %24, %cst_10 [1] : vector<8x8xf32> to vector<8xf32>
    %26 = vector.shape_cast %25 : vector<8xf32> to vector<8x1xf32>
    %27 = vector.broadcast %26 : vector<8x1xf32> to vector<8x8xf32>
    %28 = arith.divf %24, %27 : vector<8x8xf32>
    %cst_11 = arith.constant 0.000000e+00 : f32
    %29 = vector.broadcast %cst_11 : f32 to vector<8x8xf32>
    %30 = arith.cmpf ogt, %19, %29 : vector<8x8xf32>
    %cst_12 = arith.constant 1.000000e+00 : f32
    %31 = vector.broadcast %cst_12 : f32 to vector<8x8xf32>
    %32 = arith.select %30, %19, %31 : vector<8x8xi1>, vector<8x8xf32>
    %33 = arith.divf %11, %32 : vector<8x8xf32>
    %cst_13 = arith.constant 1.000000e+00 : f32
    %34 = vector.broadcast %cst_13 : f32 to vector<8x8xf32>
    %35 = arith.select %30, %33, %34 : vector<8x8xi1>, vector<8x8xf32>
    %36 = arith.divf %15, %32 : vector<8x8xf32>
    %cst_14 = arith.constant 0.000000e+00 : f32
    %37 = vector.broadcast %cst_14 : f32 to vector<8x8xf32>
    %38 = arith.select %30, %36, %37 : vector<8x8xi1>, vector<8x8xf32>
    %39 = arith.mulf %28, %35 : vector<8x8xf32>
    %40 = arith.mulf %28, %38 : vector<8x8xf32>
    %cst_15 = arith.constant dense<0.000000e+00> : vector<8x8xf32>
    %41 = tpu.matmul %39, %1, %cst_15 {dimension_numbers = #tpu.dot_dimension_numbers<[1], [0], [0], [1], [0, 0, 1, 1], [], []>, precision = #tpu.contract_precision<fp32>} : vector<8x8xf32>, vector<8x8xf32>, vector<8x8xf32> -> vector<8x8xf32>
    %cst_16 = arith.constant dense<0.000000e+00> : vector<8x8xf32>
    %42 = tpu.matmul %40, %3, %cst_16 {dimension_numbers = #tpu.dot_dimension_numbers<[1], [0], [0], [1], [0, 0, 1, 1], [], []>, precision = #tpu.contract_precision<fp32>} : vector<8x8xf32>, vector<8x8xf32>, vector<8x8xf32> -> vector<8x8xf32>
    %43 = arith.addf %39, %40 : vector<8x8xf32>
    %44 = arith.addf %1, %3 : vector<8x8xf32>
    %cst_17 = arith.constant dense<0.000000e+00> : vector<8x8xf32>
    %45 = tpu.matmul %43, %44, %cst_17 {dimension_numbers = #tpu.dot_dimension_numbers<[1], [0], [0], [1], [0, 0, 1, 1], [], []>, precision = #tpu.contract_precision<fp32>} : vector<8x8xf32>, vector<8x8xf32>, vector<8x8xf32> -> vector<8x8xf32>
    %46 = arith.subf %41, %42 : vector<8x8xf32>
    %c0_18 = arith.constant 0 : index
    %c0_19 = arith.constant 0 : index
    %c0_20 = arith.constant 0 : index
    %47 = vector.load %arg3[%c0_18, %c0_19, %c0_20] : memref<1x8x8xf32, #tpu.memory_space<vmem>>, vector<1x8x8xf32>
    %48 = vector.shape_cast %47 : vector<1x8x8xf32> to vector<8x8xf32>
    %49 = vector.shape_cast %46 : vector<8x8xf32> to vector<1x8x8xf32>
    tpu.vector_store %arg3[%c0_18, %c0_19, %c0_20], %49 {strides = array<i32>} : memref<1x8x8xf32, #tpu.memory_space<vmem>>, vector<1x8x8xf32>,
    %50 = arith.subf %45, %41 : vector<8x8xf32>
    %51 = arith.subf %50, %42 : vector<8x8xf32>
    %c0_21 = arith.constant 0 : index
    %c0_22 = arith.constant 0 : index
    %c0_23 = arith.constant 0 : index
    %52 = vector.load %arg4[%c0_21, %c0_22, %c0_23] : memref<1x8x8xf32, #tpu.memory_space<vmem>>, vector<1x8x8xf32>
    %53 = vector.shape_cast %52 : vector<1x8x8xf32> to vector<8x8xf32>
    %54 = vector.shape_cast %51 : vector<8x8xf32> to vector<1x8x8xf32>
    tpu.vector_store %arg4[%c0_21, %c0_22, %c0_23], %54 {strides = array<i32>} : memref<1x8x8xf32, #tpu.memory_space<vmem>>, vector<1x8x8xf32>,
    return
  }
  func.func @transform_0(%arg0: i32) -> (i32, i32, i32) {
    %c0_i32 = arith.constant 0 : i32
    %c0_i32_0 = arith.constant 0 : i32
    %c0_i32_1 = arith.constant 0 : i32
    return %arg0, %c0_i32, %c0_i32_0 : i32, i32, i32
  }
  func.func @transform_1(%arg0: i32) -> (i32, i32, i32) {
    %c0_i32 = arith.constant 0 : i32
    %c0_i32_0 = arith.constant 0 : i32
    %c0_i32_1 = arith.constant 0 : i32
    return %arg0, %c0_i32, %c0_i32_0 : i32, i32, i32
  }
  func.func @transform_2(%arg0: i32) -> (i32, i32, i32) {
    %c0_i32 = arith.constant 0 : i32
    %c0_i32_0 = arith.constant 0 : i32
    %c0_i32_1 = arith.constant 0 : i32
    return %arg0, %c0_i32, %c0_i32_0 : i32, i32, i32
  }
  func.func @transform_3(%arg0: i32) -> (i32, i32, i32) {
    %c0_i32 = arith.constant 0 : i32
    %c0_i32_0 = arith.constant 0 : i32
    %c0_i32_1 = arith.constant 0 : i32
    return %arg0, %c0_i32, %c0_i32_0 : i32, i32, i32
  }
}

module attributes {stable_mosaic.version = 11 : i64} {
  func.func @_cmm_bias_res_kernel(%arg0: i32, %arg1: i32, %arg2: i32, %arg3: memref<16x32xf32, #tpu.memory_space<vmem>>, %arg4: memref<16x32xf32, #tpu.memory_space<vmem>>, %arg5: memref<32x32xf32, #tpu.memory_space<vmem>>, %arg6: memref<32x32xf32, #tpu.memory_space<vmem>>, %arg7: memref<1x32xf32, #tpu.memory_space<vmem>>, %arg8: memref<1x32xf32, #tpu.memory_space<vmem>>, %arg9: memref<16x32xf32, #tpu.memory_space<vmem>>, %arg10: memref<16x32xf32, #tpu.memory_space<vmem>>, %arg11: memref<16x32xf32, #tpu.memory_space<vmem>>, %arg12: memref<16x32xf32, #tpu.memory_space<vmem>>, %arg13: memref<16x32xf32, #tpu.memory_space<vmem>>, %arg14: memref<16x32xf32, #tpu.memory_space<vmem>>) attributes {dimension_semantics = [#tpu.dimension_semantics<parallel>, #tpu.dimension_semantics<parallel>, #tpu.dimension_semantics<arbitrary>], iteration_bounds = array<i64: 1, 1, 1>, scalar_prefetch = 0 : i64, scratch_operands = 2 : i64, tpu.core_type = #tpu.core_type<tc>, window_params = [{transform_indices = @transform_0, window_bounds = array<i64: 16, 32>}, {transform_indices = @transform_1, window_bounds = array<i64: 16, 32>}, {transform_indices = @transform_2, window_bounds = array<i64: 32, 32>}, {transform_indices = @transform_3, window_bounds = array<i64: 32, 32>}, {transform_indices = @transform_4, window_bounds = array<i64: 1, 32>}, {transform_indices = @transform_5, window_bounds = array<i64: 1, 32>}, {transform_indices = @transform_6, window_bounds = array<i64: 16, 32>}, {transform_indices = @transform_7, window_bounds = array<i64: 16, 32>}, {transform_indices = @transform_8, window_bounds = array<i64: 16, 32>}, {transform_indices = @transform_9, window_bounds = array<i64: 16, 32>}]} {
    %c0_i32 = arith.constant 0 : i32
    %0 = arith.cmpi eq, %arg2, %c0_i32 : i32
    %1 = arith.extui %0 : i1 to i32
    %c0_i32_0 = arith.constant 0 : i32
    %2 = arith.cmpi ne, %1, %c0_i32_0 : i32
    scf.if %2 {
      %cst_20 = arith.constant 0.000000e+00 : f32
      %24 = vector.broadcast %cst_20 : f32 to vector<16x32xf32>
      %c0_21 = arith.constant 0 : index
      %c0_22 = arith.constant 0 : index
      %25 = vector.load %arg13[%c0_21, %c0_22] : memref<16x32xf32, #tpu.memory_space<vmem>>, vector<16x32xf32>
      tpu.vector_store %arg13[%c0_21, %c0_22], %24 {strides = array<i32>} : memref<16x32xf32, #tpu.memory_space<vmem>>, vector<16x32xf32>,
      %cst_23 = arith.constant 0.000000e+00 : f32
      %26 = vector.broadcast %cst_23 : f32 to vector<16x32xf32>
      %c0_24 = arith.constant 0 : index
      %c0_25 = arith.constant 0 : index
      %27 = vector.load %arg14[%c0_24, %c0_25] : memref<16x32xf32, #tpu.memory_space<vmem>>, vector<16x32xf32>
      tpu.vector_store %arg14[%c0_24, %c0_25], %26 {strides = array<i32>} : memref<16x32xf32, #tpu.memory_space<vmem>>, vector<16x32xf32>,
    } else {
    }
    %c0 = arith.constant 0 : index
    %c0_1 = arith.constant 0 : index
    %3 = vector.load %arg3[%c0, %c0_1] : memref<16x32xf32, #tpu.memory_space<vmem>>, vector<16x32xf32>
    %c0_2 = arith.constant 0 : index
    %c0_3 = arith.constant 0 : index
    %4 = vector.load %arg4[%c0_2, %c0_3] : memref<16x32xf32, #tpu.memory_space<vmem>>, vector<16x32xf32>
    %c0_4 = arith.constant 0 : index
    %c0_5 = arith.constant 0 : index
    %5 = vector.load %arg5[%c0_4, %c0_5] : memref<32x32xf32, #tpu.memory_space<vmem>>, vector<32x32xf32>
    %c0_6 = arith.constant 0 : index
    %c0_7 = arith.constant 0 : index
    %6 = vector.load %arg6[%c0_6, %c0_7] : memref<32x32xf32, #tpu.memory_space<vmem>>, vector<32x32xf32>
    %cst = arith.constant dense<0.000000e+00> : vector<16x32xf32>
    %7 = tpu.matmul %3, %5, %cst {dimension_numbers = #tpu.dot_dimension_numbers<[1], [0], [0], [1], [0, 0, 1, 1], [], []>, precision = #tpu.contract_precision<fp32>} : vector<16x32xf32>, vector<32x32xf32>, vector<16x32xf32> -> vector<16x32xf32>
    %cst_8 = arith.constant dense<0.000000e+00> : vector<16x32xf32>
    %8 = tpu.matmul %4, %6, %cst_8 {dimension_numbers = #tpu.dot_dimension_numbers<[1], [0], [0], [1], [0, 0, 1, 1], [], []>, precision = #tpu.contract_precision<fp32>} : vector<16x32xf32>, vector<32x32xf32>, vector<16x32xf32> -> vector<16x32xf32>
    %9 = arith.addf %3, %4 : vector<16x32xf32>
    %10 = arith.addf %5, %6 : vector<32x32xf32>
    %cst_9 = arith.constant dense<0.000000e+00> : vector<16x32xf32>
    %11 = tpu.matmul %9, %10, %cst_9 {dimension_numbers = #tpu.dot_dimension_numbers<[1], [0], [0], [1], [0, 0, 1, 1], [], []>, precision = #tpu.contract_precision<fp32>} : vector<16x32xf32>, vector<32x32xf32>, vector<16x32xf32> -> vector<16x32xf32>
    %c0_10 = arith.constant 0 : index
    %c0_11 = arith.constant 0 : index
    %12 = vector.load %arg13[%c0_10, %c0_11] : memref<16x32xf32, #tpu.memory_space<vmem>>, vector<16x32xf32>
    %13 = arith.subf %7, %8 : vector<16x32xf32>
    %14 = arith.addf %12, %13 : vector<16x32xf32>
    %c0_12 = arith.constant 0 : index
    %c0_13 = arith.constant 0 : index
    %15 = vector.load %arg13[%c0_12, %c0_13] : memref<16x32xf32, #tpu.memory_space<vmem>>, vector<16x32xf32>
    tpu.vector_store %arg13[%c0_12, %c0_13], %14 {strides = array<i32>} : memref<16x32xf32, #tpu.memory_space<vmem>>, vector<16x32xf32>,
    %c0_14 = arith.constant 0 : index
    %c0_15 = arith.constant 0 : index
    %16 = vector.load %arg14[%c0_14, %c0_15] : memref<16x32xf32, #tpu.memory_space<vmem>>, vector<16x32xf32>
    %17 = arith.subf %11, %7 : vector<16x32xf32>
    %18 = arith.subf %17, %8 : vector<16x32xf32>
    %19 = arith.addf %16, %18 : vector<16x32xf32>
    %c0_16 = arith.constant 0 : index
    %c0_17 = arith.constant 0 : index
    %20 = vector.load %arg14[%c0_16, %c0_17] : memref<16x32xf32, #tpu.memory_space<vmem>>, vector<16x32xf32>
    tpu.vector_store %arg14[%c0_16, %c0_17], %19 {strides = array<i32>} : memref<16x32xf32, #tpu.memory_space<vmem>>, vector<16x32xf32>,
    %c0_i32_18 = arith.constant 0 : i32
    %21 = arith.cmpi eq, %arg2, %c0_i32_18 : i32
    %22 = arith.extui %21 : i1 to i32
    %c0_i32_19 = arith.constant 0 : i32
    %23 = arith.cmpi ne, %22, %c0_i32_19 : i32
    scf.if %23 {
      %c0_20 = arith.constant 0 : index
      %c0_21 = arith.constant 0 : index
      %24 = vector.load %arg13[%c0_20, %c0_21] : memref<16x32xf32, #tpu.memory_space<vmem>>, vector<16x32xf32>
      %c0_22 = arith.constant 0 : index
      %c0_23 = arith.constant 0 : index
      %25 = vector.load %arg7[%c0_22, %c0_23] : memref<1x32xf32, #tpu.memory_space<vmem>>, vector<1x32xf32>
      %26 = vector.broadcast %25 : vector<1x32xf32> to vector<16x32xf32>
      %27 = arith.addf %24, %26 : vector<16x32xf32>
      %c0_24 = arith.constant 0 : index
      %c0_25 = arith.constant 0 : index
      %28 = vector.load %arg9[%c0_24, %c0_25] : memref<16x32xf32, #tpu.memory_space<vmem>>, vector<16x32xf32>
      %29 = arith.addf %27, %28 : vector<16x32xf32>
      %c0_26 = arith.constant 0 : index
      %c0_27 = arith.constant 0 : index
      %30 = vector.load %arg11[%c0_26, %c0_27] : memref<16x32xf32, #tpu.memory_space<vmem>>, vector<16x32xf32>
      tpu.vector_store %arg11[%c0_26, %c0_27], %29 {strides = array<i32>} : memref<16x32xf32, #tpu.memory_space<vmem>>, vector<16x32xf32>,
      %c0_28 = arith.constant 0 : index
      %c0_29 = arith.constant 0 : index
      %31 = vector.load %arg14[%c0_28, %c0_29] : memref<16x32xf32, #tpu.memory_space<vmem>>, vector<16x32xf32>
      %c0_30 = arith.constant 0 : index
      %c0_31 = arith.constant 0 : index
      %32 = vector.load %arg8[%c0_30, %c0_31] : memref<1x32xf32, #tpu.memory_space<vmem>>, vector<1x32xf32>
      %33 = vector.broadcast %32 : vector<1x32xf32> to vector<16x32xf32>
      %34 = arith.addf %31, %33 : vector<16x32xf32>
      %c0_32 = arith.constant 0 : index
      %c0_33 = arith.constant 0 : index
      %35 = vector.load %arg10[%c0_32, %c0_33] : memref<16x32xf32, #tpu.memory_space<vmem>>, vector<16x32xf32>
      %36 = arith.addf %34, %35 : vector<16x32xf32>
      %c0_34 = arith.constant 0 : index
      %c0_35 = arith.constant 0 : index
      %37 = vector.load %arg12[%c0_34, %c0_35] : memref<16x32xf32, #tpu.memory_space<vmem>>, vector<16x32xf32>
      tpu.vector_store %arg12[%c0_34, %c0_35], %36 {strides = array<i32>} : memref<16x32xf32, #tpu.memory_space<vmem>>, vector<16x32xf32>,
    } else {
    }
    return
  }
  func.func @transform_0(%arg0: i32, %arg1: i32, %arg2: i32) -> (i32, i32) {
    %c0_i32 = arith.constant 0 : i32
    return %arg0, %arg2 : i32, i32
  }
  func.func @transform_1(%arg0: i32, %arg1: i32, %arg2: i32) -> (i32, i32) {
    %c0_i32 = arith.constant 0 : i32
    return %arg0, %arg2 : i32, i32
  }
  func.func @transform_2(%arg0: i32, %arg1: i32, %arg2: i32) -> (i32, i32) {
    %c0_i32 = arith.constant 0 : i32
    return %arg2, %arg1 : i32, i32
  }
  func.func @transform_3(%arg0: i32, %arg1: i32, %arg2: i32) -> (i32, i32) {
    %c0_i32 = arith.constant 0 : i32
    return %arg2, %arg1 : i32, i32
  }
  func.func @transform_4(%arg0: i32, %arg1: i32, %arg2: i32) -> (i32, i32) {
    %c0_i32 = arith.constant 0 : i32
    %c0_i32_0 = arith.constant 0 : i32
    return %c0_i32, %arg1 : i32, i32
  }
  func.func @transform_5(%arg0: i32, %arg1: i32, %arg2: i32) -> (i32, i32) {
    %c0_i32 = arith.constant 0 : i32
    %c0_i32_0 = arith.constant 0 : i32
    return %c0_i32, %arg1 : i32, i32
  }
  func.func @transform_6(%arg0: i32, %arg1: i32, %arg2: i32) -> (i32, i32) {
    %c0_i32 = arith.constant 0 : i32
    return %arg0, %arg1 : i32, i32
  }
  func.func @transform_7(%arg0: i32, %arg1: i32, %arg2: i32) -> (i32, i32) {
    %c0_i32 = arith.constant 0 : i32
    return %arg0, %arg1 : i32, i32
  }
  func.func @transform_8(%arg0: i32, %arg1: i32, %arg2: i32) -> (i32, i32) {
    %c0_i32 = arith.constant 0 : i32
    return %arg0, %arg1 : i32, i32
  }
  func.func @transform_9(%arg0: i32, %arg1: i32, %arg2: i32) -> (i32, i32) {
    %c0_i32 = arith.constant 0 : i32
    return %arg0, %arg1 : i32, i32
  }
}

module attributes {stable_mosaic.version = 11 : i64} {
  func.func @_cmm_ista_kernel(%arg0: i32, %arg1: i32, %arg2: i32, %arg3: memref<16x32xf32, #tpu.memory_space<vmem>>, %arg4: memref<16x32xf32, #tpu.memory_space<vmem>>, %arg5: memref<32x32xf32, #tpu.memory_space<vmem>>, %arg6: memref<32x32xf32, #tpu.memory_space<vmem>>, %arg7: memref<16x32xf32, #tpu.memory_space<vmem>>, %arg8: memref<16x32xf32, #tpu.memory_space<vmem>>, %arg9: memref<16x32xf32, #tpu.memory_space<vmem>>, %arg10: memref<16x32xf32, #tpu.memory_space<vmem>>, %arg11: memref<16x32xf32, #tpu.memory_space<vmem>>, %arg12: memref<16x32xf32, #tpu.memory_space<vmem>>) attributes {dimension_semantics = [#tpu.dimension_semantics<parallel>, #tpu.dimension_semantics<parallel>, #tpu.dimension_semantics<arbitrary>], iteration_bounds = array<i64: 1, 1, 1>, scalar_prefetch = 0 : i64, scratch_operands = 2 : i64, tpu.core_type = #tpu.core_type<tc>, window_params = [{transform_indices = @transform_0, window_bounds = array<i64: 16, 32>}, {transform_indices = @transform_1, window_bounds = array<i64: 16, 32>}, {transform_indices = @transform_2, window_bounds = array<i64: 32, 32>}, {transform_indices = @transform_3, window_bounds = array<i64: 32, 32>}, {transform_indices = @transform_4, window_bounds = array<i64: 16, 32>}, {transform_indices = @transform_5, window_bounds = array<i64: 16, 32>}, {transform_indices = @transform_6, window_bounds = array<i64: 16, 32>}, {transform_indices = @transform_7, window_bounds = array<i64: 16, 32>}]} {
    %c0_i32 = arith.constant 0 : i32
    %0 = arith.cmpi eq, %arg2, %c0_i32 : i32
    %1 = arith.extui %0 : i1 to i32
    %c0_i32_0 = arith.constant 0 : i32
    %2 = arith.cmpi ne, %1, %c0_i32_0 : i32
    scf.if %2 {
      %cst_20 = arith.constant 0.000000e+00 : f32
      %24 = vector.broadcast %cst_20 : f32 to vector<16x32xf32>
      %c0_21 = arith.constant 0 : index
      %c0_22 = arith.constant 0 : index
      %25 = vector.load %arg11[%c0_21, %c0_22] : memref<16x32xf32, #tpu.memory_space<vmem>>, vector<16x32xf32>
      tpu.vector_store %arg11[%c0_21, %c0_22], %24 {strides = array<i32>} : memref<16x32xf32, #tpu.memory_space<vmem>>, vector<16x32xf32>,
      %cst_23 = arith.constant 0.000000e+00 : f32
      %26 = vector.broadcast %cst_23 : f32 to vector<16x32xf32>
      %c0_24 = arith.constant 0 : index
      %c0_25 = arith.constant 0 : index
      %27 = vector.load %arg12[%c0_24, %c0_25] : memref<16x32xf32, #tpu.memory_space<vmem>>, vector<16x32xf32>
      tpu.vector_store %arg12[%c0_24, %c0_25], %26 {strides = array<i32>} : memref<16x32xf32, #tpu.memory_space<vmem>>, vector<16x32xf32>,
    } else {
    }
    %c0 = arith.constant 0 : index
    %c0_1 = arith.constant 0 : index
    %3 = vector.load %arg3[%c0, %c0_1] : memref<16x32xf32, #tpu.memory_space<vmem>>, vector<16x32xf32>
    %c0_2 = arith.constant 0 : index
    %c0_3 = arith.constant 0 : index
    %4 = vector.load %arg4[%c0_2, %c0_3] : memref<16x32xf32, #tpu.memory_space<vmem>>, vector<16x32xf32>
    %c0_4 = arith.constant 0 : index
    %c0_5 = arith.constant 0 : index
    %5 = vector.load %arg5[%c0_4, %c0_5] : memref<32x32xf32, #tpu.memory_space<vmem>>, vector<32x32xf32>
    %c0_6 = arith.constant 0 : index
    %c0_7 = arith.constant 0 : index
    %6 = vector.load %arg6[%c0_6, %c0_7] : memref<32x32xf32, #tpu.memory_space<vmem>>, vector<32x32xf32>
    %cst = arith.constant dense<0.000000e+00> : vector<16x32xf32>
    %7 = tpu.matmul %3, %5, %cst {dimension_numbers = #tpu.dot_dimension_numbers<[1], [0], [0], [1], [0, 0, 1, 1], [], []>, precision = #tpu.contract_precision<fp32>} : vector<16x32xf32>, vector<32x32xf32>, vector<16x32xf32> -> vector<16x32xf32>
    %cst_8 = arith.constant dense<0.000000e+00> : vector<16x32xf32>
    %8 = tpu.matmul %4, %6, %cst_8 {dimension_numbers = #tpu.dot_dimension_numbers<[1], [0], [0], [1], [0, 0, 1, 1], [], []>, precision = #tpu.contract_precision<fp32>} : vector<16x32xf32>, vector<32x32xf32>, vector<16x32xf32> -> vector<16x32xf32>
    %9 = arith.addf %3, %4 : vector<16x32xf32>
    %10 = arith.addf %5, %6 : vector<32x32xf32>
    %cst_9 = arith.constant dense<0.000000e+00> : vector<16x32xf32>
    %11 = tpu.matmul %9, %10, %cst_9 {dimension_numbers = #tpu.dot_dimension_numbers<[1], [0], [0], [1], [0, 0, 1, 1], [], []>, precision = #tpu.contract_precision<fp32>} : vector<16x32xf32>, vector<32x32xf32>, vector<16x32xf32> -> vector<16x32xf32>
    %c0_10 = arith.constant 0 : index
    %c0_11 = arith.constant 0 : index
    %12 = vector.load %arg11[%c0_10, %c0_11] : memref<16x32xf32, #tpu.memory_space<vmem>>, vector<16x32xf32>
    %13 = arith.subf %7, %8 : vector<16x32xf32>
    %14 = arith.addf %12, %13 : vector<16x32xf32>
    %c0_12 = arith.constant 0 : index
    %c0_13 = arith.constant 0 : index
    %15 = vector.load %arg11[%c0_12, %c0_13] : memref<16x32xf32, #tpu.memory_space<vmem>>, vector<16x32xf32>
    tpu.vector_store %arg11[%c0_12, %c0_13], %14 {strides = array<i32>} : memref<16x32xf32, #tpu.memory_space<vmem>>, vector<16x32xf32>,
    %c0_14 = arith.constant 0 : index
    %c0_15 = arith.constant 0 : index
    %16 = vector.load %arg12[%c0_14, %c0_15] : memref<16x32xf32, #tpu.memory_space<vmem>>, vector<16x32xf32>
    %17 = arith.subf %11, %7 : vector<16x32xf32>
    %18 = arith.subf %17, %8 : vector<16x32xf32>
    %19 = arith.addf %16, %18 : vector<16x32xf32>
    %c0_16 = arith.constant 0 : index
    %c0_17 = arith.constant 0 : index
    %20 = vector.load %arg12[%c0_16, %c0_17] : memref<16x32xf32, #tpu.memory_space<vmem>>, vector<16x32xf32>
    tpu.vector_store %arg12[%c0_16, %c0_17], %19 {strides = array<i32>} : memref<16x32xf32, #tpu.memory_space<vmem>>, vector<16x32xf32>,
    %c0_i32_18 = arith.constant 0 : i32
    %21 = arith.cmpi eq, %arg2, %c0_i32_18 : i32
    %22 = arith.extui %21 : i1 to i32
    %c0_i32_19 = arith.constant 0 : i32
    %23 = arith.cmpi ne, %22, %c0_i32_19 : i32
    scf.if %23 {
      %c0_20 = arith.constant 0 : index
      %c0_21 = arith.constant 0 : index
      %24 = vector.load %arg7[%c0_20, %c0_21] : memref<16x32xf32, #tpu.memory_space<vmem>>, vector<16x32xf32>
      %c0_22 = arith.constant 0 : index
      %c0_23 = arith.constant 0 : index
      %25 = vector.load %arg11[%c0_22, %c0_23] : memref<16x32xf32, #tpu.memory_space<vmem>>, vector<16x32xf32>
      %cst_24 = arith.constant 1.000000e-01 : f32
      %26 = vector.broadcast %cst_24 : f32 to vector<16x32xf32>
      %27 = arith.mulf %26, %25 : vector<16x32xf32>
      %28 = arith.addf %24, %27 : vector<16x32xf32>
      %cst_25 = arith.constant 0.00999999977 : f32
      %29 = vector.broadcast %cst_25 : f32 to vector<16x32xf32>
      %30 = arith.subf %28, %29 : vector<16x32xf32>
      %c0_26 = arith.constant 0 : index
      %c0_27 = arith.constant 0 : index
      %31 = vector.load %arg8[%c0_26, %c0_27] : memref<16x32xf32, #tpu.memory_space<vmem>>, vector<16x32xf32>
      %c0_28 = arith.constant 0 : index
      %c0_29 = arith.constant 0 : index
      %32 = vector.load %arg12[%c0_28, %c0_29] : memref<16x32xf32, #tpu.memory_space<vmem>>, vector<16x32xf32>
      %cst_30 = arith.constant 1.000000e-01 : f32
      %33 = vector.broadcast %cst_30 : f32 to vector<16x32xf32>
      %34 = arith.mulf %33, %32 : vector<16x32xf32>
      %35 = arith.addf %31, %34 : vector<16x32xf32>
      %cst_31 = arith.constant 0.000000e+00 : f32
      %36 = vector.broadcast %cst_31 : f32 to vector<16x32xf32>
      %37 = arith.maximumf %30, %36 : vector<16x32xf32>
      %c0_32 = arith.constant 0 : index
      %c0_33 = arith.constant 0 : index
      %38 = vector.load %arg9[%c0_32, %c0_33] : memref<16x32xf32, #tpu.memory_space<vmem>>, vector<16x32xf32>
      tpu.vector_store %arg9[%c0_32, %c0_33], %37 {strides = array<i32>} : memref<16x32xf32, #tpu.memory_space<vmem>>, vector<16x32xf32>,
      %cst_34 = arith.constant 0.000000e+00 : f32
      %39 = vector.broadcast %cst_34 : f32 to vector<16x32xf32>
      %40 = arith.maximumf %35, %39 : vector<16x32xf32>
      %c0_35 = arith.constant 0 : index
      %c0_36 = arith.constant 0 : index
      %41 = vector.load %arg10[%c0_35, %c0_36] : memref<16x32xf32, #tpu.memory_space<vmem>>, vector<16x32xf32>
      tpu.vector_store %arg10[%c0_35, %c0_36], %40 {strides = array<i32>} : memref<16x32xf32, #tpu.memory_space<vmem>>, vector<16x32xf32>,
    } else {
    }
    return
  }
  func.func @transform_0(%arg0: i32, %arg1: i32, %arg2: i32) -> (i32, i32) {
    %c0_i32 = arith.constant 0 : i32
    return %arg0, %arg2 : i32, i32
  }
  func.func @transform_1(%arg0: i32, %arg1: i32, %arg2: i32) -> (i32, i32) {
    %c0_i32 = arith.constant 0 : i32
    return %arg0, %arg2 : i32, i32
  }
  func.func @transform_2(%arg0: i32, %arg1: i32, %arg2: i32) -> (i32, i32) {
    %c0_i32 = arith.constant 0 : i32
    return %arg2, %arg1 : i32, i32
  }
  func.func @transform_3(%arg0: i32, %arg1: i32, %arg2: i32) -> (i32, i32) {
    %c0_i32 = arith.constant 0 : i32
    return %arg2, %arg1 : i32, i32
  }
  func.func @transform_4(%arg0: i32, %arg1: i32, %arg2: i32) -> (i32, i32) {
    %c0_i32 = arith.constant 0 : i32
    return %arg0, %arg1 : i32, i32
  }
  func.func @transform_5(%arg0: i32, %arg1: i32, %arg2: i32) -> (i32, i32) {
    %c0_i32 = arith.constant 0 : i32
    return %arg0, %arg1 : i32, i32
  }
  func.func @transform_6(%arg0: i32, %arg1: i32, %arg2: i32) -> (i32, i32) {
    %c0_i32 = arith.constant 0 : i32
    return %arg0, %arg1 : i32, i32
  }
  func.func @transform_7(%arg0: i32, %arg1: i32, %arg2: i32) -> (i32, i32) {
    %c0_i32 = arith.constant 0 : i32
    return %arg0, %arg1 : i32, i32
  }
}

</mosaic_0001>

<llo_original>
// kernel: custom-call
$region0: #{custom-call}
  %s0 = inlined_call_operand.hbm [shape: c64[2,8,32], index: 0, kind: input, shape index: {}]
  %s1 = inlined_call_operand.vmem [shape: f32[2,8,32], index: 1, kind: output, shape index: {}]
  $region1: #{custom-call} parent=0
    #allocation0 [shape = 's32[1]{0}', space=sflag, size = 0x4, scoped, tag = 'scoped memory for custom-call']
    %2 = vsyncpa [#allocation0], 0
    %s3 = sshll.u32 %s1, 4
    %s4 = int_to_ptr.vmem [resolvable:$true] %s3
    %6 = dma.hbm_to_vmem [thread:$0]  %s0, 256, %s4, [#allocation0]
    %7 = dma.done [#allocation0], 256
    %8 = vsyncpa [#allocation0], 1

// kernel: custom-call.1
$region0: #{custom-call.1}
  %s0 = inlined_call_operand.hbm [shape: c64[2,8,32], index: 0, kind: input, shape index: {}]
  %s1 = inlined_call_operand.vmem [shape: f32[2,8,32], index: 1, kind: output, shape index: {}]
  %s2 = scalar_lea.hbm %s0, 256
  $region1: #{custom-call.1} parent=0
    #allocation0 [shape = 's32[1]{0}', space=sflag, size = 0x4, scoped, tag = 'scoped memory for custom-call.1']
    %3 = vsyncpa [#allocation0], 0
    %s4 = sshll.u32 %s1, 4
    %s5 = int_to_ptr.vmem [resolvable:$true] %s4
    %7 = dma.hbm_to_vmem [thread:$0]  %s2, 256, %s5, [#allocation0]
    %8 = dma.done [#allocation0], 256
    %9 = vsyncpa [#allocation0], 1

// kernel: forward.12
$region0: #{forward.12}
  #allocation0 [shape = 'u32[]', space=smem, size = 0x4, offset = 0x4, fixed_abs, tag = 'smem constant byte address 0x4 - core index']
  #allocation1 [shape = 'u32[144,128]{1,0:T(1,128)}', space=vmem, size = 0x12000, scoped, tag = 'internal scratch']
  %s0 = inlined_call_operand.vmem [shape: f32[16,32], index: 0, kind: input, shape index: {}]
  %s1 = inlined_call_operand.vmem [shape: f32[16,32], index: 1, kind: input, shape index: {}]
  %s2 = inlined_call_operand.vmem [shape: f32[1,32], index: 2, kind: input, shape index: {}]
  %s3 = inlined_call_operand.vmem [shape: f32[1,32], index: 3, kind: input, shape index: {}]
  %s4 = inlined_call_operand.vmem [shape: f32[1,32], index: 4, kind: input, shape index: {}]
  %s5 = inlined_call_operand.vmem [shape: f32[1,32], index: 5, kind: input, shape index: {}]
  %s6 = inlined_call_operand.vmem [shape: f32[16,32], index: 6, kind: output, shape index: {0}]
  %s7 = inlined_call_operand.vmem [shape: f32[16,32], index: 7, kind: output, shape index: {1}]
  %8 = xla_tuple %s6, %s7
  %s9 = sld [smem:[#allocation0]]
  $region42: #{forward.12} parent=0
    _
  %s11 = ssub.s32 1, %s9
  %s12 = scalar_select 0, %s11, %s9
  // Predicated region
  $region2: #{forward.12} parent=0 // pred_check
    _
  $region3: #{forward.12} parent=0 // pred_check_branch
    %14 = sbr.rel (0) target = $region5
  $region4: #{forward.12} parent=0 // pred_region
    _
  $region5: #{forward.12} parent=0 // pred_fallthru
    _
  // Predicated region
  $region6: #{forward.12} parent=0 // pred_check
    _
  $region7: #{forward.12} parent=0 // pred_check_branch
    %16 = sbr.rel (0) target = $region9
  $region8: #{forward.12} parent=0 // pred_region
    _
  $region9: #{forward.12} parent=0 // pred_fallthru
    _
  // Predicated region
  $region10: #{forward.12} parent=0 // pred_check
    _
  $region11: #{forward.12} parent=0 // pred_check_branch
    %18 = sbr.rel (0) target = $region13
  $region12: #{forward.12} parent=0 // pred_region
    _
  $region13: #{forward.12} parent=0 // pred_fallthru
    _
  // Predicated region
  $region14: #{forward.12} parent=0 // pred_check
    _
  $region15: #{forward.12} parent=0 // pred_check_branch
    %20 = sbr.rel (0) target = $region17
  $region16: #{forward.12} parent=0 // pred_region
    _
  $region17: #{forward.12} parent=0 // pred_fallthru
    _
  // Predicated region
  $region18: #{forward.12} parent=0 // pred_check
    _
  $region19: #{forward.12} parent=0 // pred_check_branch
    %22 = sbr.rel (0) target = $region21
  $region20: #{forward.12} parent=0 // pred_region
    _
  $region21: #{forward.12} parent=0 // pred_fallthru
    _
  // Predicated region
  $region22: #{forward.12} parent=0 // pred_check
    _
  $region23: #{forward.12} parent=0 // pred_check_branch
    %24 = sbr.rel (0) target = $region25
  $region24: #{forward.12} parent=0 // pred_region
    _
  $region25: #{forward.12} parent=0 // pred_fallthru
    _
  %v25 = vld [vmem:[%s0] sm:$0xff]
  %v26 = vld [vmem:[%s0 + $0x8] sm:$0xff]
  %v27 = vld [vmem:[%s1] sm:$0xff]
  %v28 = vld [vmem:[%s1 + $0x8] sm:$0xff]
  %vm29 = vcmask 261120
  %v30 = vsel %vm29, %v25, 0.0
  %31 = vadd.xlane.f32.xlu0 %v30
  %v32 = vpop.xlane.xlu0 %31
  %v33 = vsel %vm29, %v26, 0.0
  %34 = vadd.xlane.f32.xlu0 %v33
  %v35 = vpop.xlane.xlu0 %34
  %v36 = vrcp.pop 32.0
  %v37 = vmul.f32 %v32, %v36
  %v38 = vmul.f32 %v35, %v36
  %v39 = vsel %vm29, %v27, 0.0
  %40 = vadd.xlane.f32.xlu0 %v39
  %v41 = vpop.xlane.xlu0 %40
  %v42 = vsel %vm29, %v28, 0.0
  %43 = vadd.xlane.f32.xlu0 %v42
  %v44 = vpop.xlane.xlu0 %43
  %v45 = vmul.f32 %v41, %v36
  %v46 = vmul.f32 %v44, %v36
  %v47 = vsub.f32 %v25, %v37
  %v48 = vsub.f32 %v26, %v38
  %v49 = vsub.f32 %v27, %v45
  %v50 = vsub.f32 %v28, %v46
  %v51 = vmul.f32 %v47, %v47
  %v52 = vmul.f32 %v48, %v48
  %v53 = vsel %vm29, %v51, 0.0
  %54 = vadd.xlane.f32.xlu0 %v53
  %v55 = vpop.xlane.xlu0 %54
  %v56 = vsel %vm29, %v52, 0.0
  %57 = vadd.xlane.f32.xlu0 %v56
  %v58 = vpop.xlane.xlu0 %57
  %v59 = vmul.f32 %v55, %v36
  %v60 = vmul.f32 %v58, %v36
  %v61 = vmul.f32 %v49, %v49
  %v62 = vmul.f32 %v50, %v50
  %v63 = vsel %vm29, %v61, 0.0
  %64 = vadd.xlane.f32.xlu0 %v63
  %v65 = vpop.xlane.xlu0 %64
  %v66 = vsel %vm29, %v62, 0.0
  %67 = vadd.xlane.f32.xlu0 %v66
  %v68 = vpop.xlane.xlu0 %67
  %v69 = vmul.f32 %v65, %v36
  %v70 = vmul.f32 %v68, %v36
  %v71 = vadd.f32 %v59, 1e-05
  %v72 = vadd.f32 %v60, 1e-05
  %v73 = vmul.f32 %v71, %v71
  %v74 = vmul.f32 %v72, %v72
  %v75 = vmul.f32 %v69, %v69
  %v76 = vmul.f32 %v70, %v70
  %v77 = vadd.f32 %v73, %v75
  %v78 = vadd.f32 %v74, %v76
  %v79 = vrsqrt.pop %v77
  %v80 = vmul.f32 %v77, %v79
  %vm81 = vcmp.eq.f32.partialorder %v77, inf
  %v82 = vsel %vm81, %v77, %v80
  %vm83 = vcmp.eq.f32.partialorder %v77, 0.0
  %v84 = vand.u32 %v77, 2147483648
  %v85 = vsel %vm83, %v84, %v82
  %v86 = vrsqrt.pop %v78
  %v87 = vmul.f32 %v78, %v86
  %vm88 = vcmp.eq.f32.partialorder %v78, inf
  %v89 = vsel %vm88, %v78, %v87
  %vm90 = vcmp.eq.f32.partialorder %v78, 0.0
  %v91 = vand.u32 %v78, 2147483648
  %v92 = vsel %vm90, %v91, %v89
  %v93 = vadd.f32 %v85, %v71
  %v94 = vadd.f32 %v92, %v72
  %v95 = vmul.f32 %v93, 0.5
  %v96 = vmul.f32 %v94, 0.5
  %v97 = vmax.f32 %v95, 0.0
  %v98 = vmax.f32 %v96, 0.0
  %v99 = vrsqrt.pop %v97
  %v100 = vmul.f32 %v97, %v99
  %vm101 = vcmp.eq.f32.partialorder %v97, inf
  %v102 = vsel %vm101, %v97, %v100
  %vm103 = vcmp.eq.f32.partialorder %v97, 0.0
  %v104 = vand.u32 %v97, 2147483648
  %v105 = vsel %vm103, %v104, %v102
  %v106 = vrsqrt.pop %v98
  %v107 = vmul.f32 %v98, %v106
  %vm108 = vcmp.eq.f32.partialorder %v98, inf
  %v109 = vsel %vm108, %v98, %v107
  %vm110 = vcmp.eq.f32.partialorder %v98, 0.0
  %v111 = vand.u32 %v98, 2147483648
  %v112 = vsel %vm110, %v111, %v109
  %v113 = vsub.f32 %v85, %v71
  %v114 = vsub.f32 %v92, %v72
  %v115 = vmul.f32 %v113, 0.5
  %v116 = vmul.f32 %v114, 0.5
  %v117 = vmax.f32 %v115, 0.0
  %v118 = vmax.f32 %v116, 0.0
  %v119 = vrsqrt.pop %v117
  %v120 = vmul.f32 %v117, %v119
  %vm121 = vcmp.eq.f32.partialorder %v117, inf
  %v122 = vsel %vm121, %v117, %v120
  %vm123 = vcmp.eq.f32.partialorder %v117, 0.0
  %v124 = vand.u32 %v117, 2147483648
  %v125 = vsel %vm123, %v124, %v122
  %v126 = vrsqrt.pop %v118
  %v127 = vmul.f32 %v118, %v126
  %vm128 = vcmp.eq.f32.partialorder %v118, inf
  %v129 = vsel %vm128, %v118, %v127
  %vm130 = vcmp.eq.f32.partialorder %v118, 0.0
  %v131 = vand.u32 %v118, 2147483648
  %v132 = vsel %vm130, %v131, %v129
  %v133 = vrcp.pop %v85
  %v134 = vmul.f32 1.0, %v133
  %v135 = vrcp.pop %v92
  %v136 = vmul.f32 1.0, %v135
  %v137 = vmul.f32 %v47, %v105
  %v138 = vmul.f32 %v48, %v112
  %v139 = vmul.f32 %v49, %v125
  %v140 = vmul.f32 %v50, %v132
  %v141 = vadd.f32 %v137, %v139
  %v142 = vadd.f32 %v138, %v140
  %v143 = vmul.f32 %v141, %v134
  %v144 = vmul.f32 %v142, %v136
  %v145 = vmul.f32 %v49, %v105
  %v146 = vmul.f32 %v50, %v112
  %v147 = vmul.f32 %v47, %v125
  %v148 = vmul.f32 %v48, %v132
  %v149 = vsub.f32 %v145, %v147
  %v150 = vsub.f32 %v146, %v148
  %v151 = vmul.f32 %v149, %v134
  %v152 = vmul.f32 %v150, %v136
  %v153 = vld [vmem:[%s2] sm:$0x1]
  %v154 = vld [vmem:[%s3] sm:$0x1]
  %v156 = vlaneseq
  %v157 = vshrl.u32 %v156, 7
  %v158 = vsub.s32 0, %v157
  %v159 = vrot.slane %v153, %v158
  %v161 = vmul.f32 %v159, %v143
  %v162 = vmul.f32 %v159, %v144
  %v164 = vlaneseq
  %v165 = vshrl.u32 %v164, 7
  %v166 = vsub.s32 0, %v165
  %v167 = vrot.slane %v154, %v166
  %v169 = vmul.f32 %v167, %v151
  %v170 = vmul.f32 %v167, %v152
  %v171 = vsub.f32 %v161, %v169
  %v172 = vsub.f32 %v162, %v170
  %v173 = vld [vmem:[%s4] sm:$0x1]
  %v175 = vlaneseq
  %v176 = vshrl.u32 %v175, 7
  %v177 = vsub.s32 0, %v176
  %v178 = vrot.slane %v173, %v177
  %v180 = vadd.f32 %v171, %v178
  %v181 = vadd.f32 %v172, %v178
  %182 = vst.msk [vmem:[%s6] sm:$0xff] %vm29, %v180
  %183 = vst.msk [vmem:[%s6 + $0x8] sm:$0xff] %vm29, %v181
  %v184 = vmul.f32 %v159, %v151
  %v185 = vmul.f32 %v159, %v152
  %v186 = vmul.f32 %v167, %v143
  %v187 = vmul.f32 %v167, %v144
  %v188 = vadd.f32 %v184, %v186
  %v189 = vadd.f32 %v185, %v187
  %v190 = vld [vmem:[%s5] sm:$0x1]
  %v192 = vlaneseq
  %v193 = vshrl.u32 %v192, 7
  %v194 = vsub.s32 0, %v193
  %v195 = vrot.slane %v190, %v194
  %v197 = vadd.f32 %v188, %v195
  %v198 = vadd.f32 %v189, %v195
  %199 = vst.msk [vmem:[%s7] sm:$0xff] %vm29, %v197
  %200 = vst.msk [vmem:[%s7 + $0x8] sm:$0xff] %vm29, %v198
  // Predicated region
  $region26: #{forward.12} parent=0 // pred_check
    _
  $region27: #{forward.12} parent=0 // pred_check_branch
    %202 = sbr.rel (0) target = $region29
  $region28: #{forward.12} parent=0 // pred_region
    _
  $region29: #{forward.12} parent=0 // pred_fallthru
    _
  // Predicated region
  $region30: #{forward.12} parent=0 // pred_check
    _
  $region31: #{forward.12} parent=0 // pred_check_branch
    %204 = sbr.rel (0) target = $region33
  $region32: #{forward.12} parent=0 // pred_region
    _
  $region33: #{forward.12} parent=0 // pred_fallthru
    _
  // Predicated region
  $region34: #{forward.12} parent=0 // pred_check
    _
  $region35: #{forward.12} parent=0 // pred_check_branch
    %206 = sbr.rel (0) target = $region37
  $region36: #{forward.12} parent=0 // pred_region
    _
  $region37: #{forward.12} parent=0 // pred_fallthru
    _
  // Predicated region
  $region38: #{forward.12} parent=0 // pred_check
    _
  $region39: #{forward.12} parent=0 // pred_check_branch
    %208 = sbr.rel (0) target = $region41
  $region40: #{forward.12} parent=0 // pred_region
    _
  $region41: #{forward.12} parent=0 // pred_fallthru
    _

// kernel: forward.13
$region0: #{forward.13}
  #allocation0 [shape = 'u32[]', space=smem, size = 0x4, offset = 0x4, fixed_abs, tag = 'smem constant byte address 0x4 - core index']
  #allocation1 [shape = 'u32[144,128]{1,0:T(1,128)}', space=vmem, size = 0x12000, scoped, tag = 'internal scratch']
  #allocation2 [shape = 'f32[16,32]{1,0:T(8,128)}', space=vmem, size = 0x2000, scoped, tag = 'scratch operand']
  #allocation3 [shape = 'f32[16,32]{1,0:T(8,128)}', space=vmem, size = 0x2000, scoped, tag = 'scratch operand']
  %s0 = inlined_call_operand.vmem [shape: f32[16,32], index: 0, kind: input, shape index: {}]
  %s1 = inlined_call_operand.vmem [shape: f32[16,32], index: 1, kind: input, shape index: {}]
  %s2 = inlined_call_operand.vmem [shape: f32[32,32], index: 2, kind: input, shape index: {}]
  %s3 = inlined_call_operand.vmem [shape: f32[32,32], index: 3, kind: input, shape index: {}]
  %s4 = inlined_call_operand.vmem [shape: f32[16,32], index: 4, kind: output, shape index: {0}]
  %s5 = inlined_call_operand.vmem [shape: f32[16,32], index: 5, kind: output, shape index: {1}]
  %6 = xla_tuple %s4, %s5
  %s7 = sld [smem:[#allocation0]]
  $region42: #{forward.13} parent=0
    _
  %s9 = ssub.s32 1, %s7
  %s10 = scalar_select 0, %s9, %s7
  // Predicated region
  $region2: #{forward.13} parent=0 // pred_check
    _
  $region3: #{forward.13} parent=0 // pred_check_branch
    %12 = sbr.rel (0) target = $region5
  $region4: #{forward.13} parent=0 // pred_region
    _
  $region5: #{forward.13} parent=0 // pred_fallthru
    _
  // Predicated region
  $region6: #{forward.13} parent=0 // pred_check
    _
  $region7: #{forward.13} parent=0 // pred_check_branch
    %14 = sbr.rel (0) target = $region9
  $region8: #{forward.13} parent=0 // pred_region
    _
  $region9: #{forward.13} parent=0 // pred_fallthru
    _
  // Predicated region
  $region10: #{forward.13} parent=0 // pred_check
    _
  $region11: #{forward.13} parent=0 // pred_check_branch
    %16 = sbr.rel (0) target = $region13
  $region12: #{forward.13} parent=0 // pred_region
    _
  $region13: #{forward.13} parent=0 // pred_fallthru
    _
  // Predicated region
  $region14: #{forward.13} parent=0 // pred_check
    _
  $region15: #{forward.13} parent=0 // pred_check_branch
    %18 = sbr.rel (0) target = $region17
  $region16: #{forward.13} parent=0 // pred_region
    _
  $region17: #{forward.13} parent=0 // pred_fallthru
    _
  %p19 = scmp.eq.s32.totalorder 0, 0
  // Predicated region
  $region18: #{forward.13} parent=0 // pred_check
    %p20 = pneg %p19
  $region19: #{forward.13} parent=0 // pred_check_branch
    %22 = sbr.rel (%p20) target = $region21
  $region20: #{forward.13} parent=0 // pred_region
    %vm23 = vcmask 261120
    %24 = vst.msk [vmem:[#allocation2] sm:$0xff] %vm23, 0.0
    %25 = vst.msk [vmem:[#allocation2 + $0x8] sm:$0xff] %vm23, 0.0
    %26 = vst.msk [vmem:[#allocation3] sm:$0xff] %vm23, 0.0
    %27 = vst.msk [vmem:[#allocation3 + $0x8] sm:$0xff] %vm23, 0.0
  $region21: #{forward.13} parent=0 // pred_fallthru
    _
  %v28 = vld [vmem:[%s0] sm:$0xff]
  %v29 = vld [vmem:[%s0 + $0x8] sm:$0xff]
  %v30 = vld [vmem:[%s1] sm:$0xff]
  %v31 = vld [vmem:[%s1 + $0x8] sm:$0xff]
  %v32 = vld [vmem:[%s2] sm:$0xff]
  %v33 = vld [vmem:[%s2 + $0x8] sm:$0xff]
  %v34 = vld [vmem:[%s2 + $0x10] sm:$0xff]
  %v35 = vld [vmem:[%s2 + $0x18] sm:$0xff]
  %v36 = vld [vmem:[%s3] sm:$0xff]
  %v37 = vld [vmem:[%s3 + $0x8] sm:$0xff]
  %v38 = vld [vmem:[%s3 + $0x10] sm:$0xff]
  %v39 = vld [vmem:[%s3 + $0x18] sm:$0xff]
  %vm40 = vcmask 261120
  %v42 = vsel %vm40, %v28, 0
  %v45 = vsel %vm40, %v29, 0
  %47 = vmatprep.subr.mxu0 0.0
  %48 = vmatpush1.msra.mxu0 0.0
  %49 = vmatprep.subr.mxu0 0.0
  %50 = vmatpush1.msra.mxu0 0.0
  %51 = vmatprep.subr.mxu0 0.0
  %52 = vmatpush1.msra.mxu0 0.0
  %53 = vmatprep.subr.mxu0 0.0
  %54 = vmatpush1.msra.mxu0 0.0
  %55 = vmatprep.subr.mxu0 0.0
  %56 = vmatpush1.msra.mxu0 0.0
  %57 = vmatprep.subr.mxu0 0.0
  %58 = vmatpush1.msra.mxu0 0.0
  %59 = vmatprep.subr.mxu0 0.0
  %60 = vmatpush1.msra.mxu0 0.0
  %61 = vmatprep.subr.mxu0 0.0
  %62 = vmatpush1.msra.mxu0 0.0
  %63 = vmatprep.subr.mxu0 0.0
  %64 = vmatpush1.msra.mxu0 0.0
  %65 = vmatprep.subr.mxu0 0.0
  %66 = vmatpush1.msra.mxu0 0.0
  %67 = vmatprep.subr.mxu0 0.0
  %68 = vmatpush1.msra.mxu0 0.0
  %69 = vmatprep.subr.mxu0 0.0
  %70 = vmatpush1.msra.mxu0 0.0
  %71 = vmatprep.subr.mxu0 0.0
  %v72 = vand.u32 %v35, 4294901760
  %73 = vmatpush1.msra.mxu0 %v72
  %74 = vmatprep.subr.mxu0 0.0
  %v75 = vand.u32 %v34, 4294901760
  %76 = vmatpush1.msra.mxu0 %v75
  %77 = vmatprep.subr.mxu0 0.0
  %v78 = vand.u32 %v33, 4294901760
  %79 = vmatpush1.msra.mxu0 %v78
  %80 = vmatprep.subr.mxu0 0.0
  %v81 = vand.u32 %v32, 4294901760
  %82 = vmatpush1.msra.mxu0 %v81
  %83 = vmatprep.subr.mxu0 0.0
  %84 = vmatpush2.msra.mxu0 0.0
  %85 = vmatprep.subr.mxu0 0.0
  %86 = vmatpush2.msra.mxu0 0.0
  %87 = vmatprep.subr.mxu0 0.0
  %88 = vmatpush2.msra.mxu0 0.0
  %89 = vmatprep.subr.mxu0 0.0
  %90 = vmatpush2.msra.mxu0 0.0
  %91 = vmatprep.subr.mxu0 0.0
  %92 = vmatpush2.msra.mxu0 0.0
  %93 = vmatprep.subr.mxu0 0.0
  %94 = vmatpush2.msra.mxu0 0.0
  %95 = vmatprep.subr.mxu0 0.0
  %96 = vmatpush2.msra.mxu0 0.0
  %97 = vmatprep.subr.mxu0 0.0
  %98 = vmatpush2.msra.mxu0 0.0
  %99 = vmatprep.subr.mxu0 0.0
  %100 = vmatpush2.msra.mxu0 0.0
  %101 = vmatprep.subr.mxu0 0.0
  %102 = vmatpush2.msra.mxu0 0.0
  %103 = vmatprep.subr.mxu0 0.0
  %104 = vmatpush2.msra.mxu0 0.0
  %105 = vmatprep.subr.mxu0 0.0
  %106 = vmatpush2.msra.mxu0 0.0
  %107 = vmatprep.subr.mxu0 0.0
  %108 = vmatpush2.msra.mxu0 0.0
  %109 = vmatprep.subr.mxu0 0.0
  %110 = vmatpush2.msra.mxu0 0.0
  %111 = vmatprep.subr.mxu0 0.0
  %112 = vmatpush2.msra.mxu0 0.0
  %113 = vmatprep.subr.mxu0 0.0
  %114 = vmatpush2.msra.mxu0 0.0
  %115 = vmatprep.mubr.f32.mxu0 0.0
  %v116 = vand.u32 %v42, 4294901760
  %v117 = vsub.f32 %v42, %v116
  %v118 = vand.u32 %v117, 4294901760
  %v119 = vsub.f32 %v117, %v118
  %v120 = vand.u32 %v119, 4294901760
  %121 = vmatmul.mubr.f32.gmra.mxu0 %v120
  %v122 = vpop.f32.mrf.mxu0
  %v123 = vadd.f32 0.0, %v122
  %v124 = vpop.f32.mrf.mxu0
  %125 = vmatprep.mubr.f32.mxu0 0.0
  %v126 = vand.u32 %v45, 4294901760
  %v127 = vsub.f32 %v45, %v126
  %v128 = vand.u32 %v127, 4294901760
  %v129 = vsub.f32 %v127, %v128
  %v130 = vand.u32 %v129, 4294901760
  %131 = vmatmul.mubr.f32.gmra.mxu0 %v130
  %v132 = vpop.f32.mrf.mxu0
  %v133 = vadd.f32 0.0, %v132
  %v134 = vpop.f32.mrf.mxu0
  %135 = vdwg.mxu0
  %136 = vmatprep.subr.mxu0 0.0
  %137 = vmatpush1.msra.mxu0 0.0
  %138 = vmatprep.subr.mxu0 0.0
  %139 = vmatpush1.msra.mxu0 0.0
  %140 = vmatprep.subr.mxu0 0.0
  %141 = vmatpush1.msra.mxu0 0.0
  %142 = vmatprep.subr.mxu0 0.0
  %143 = vmatpush1.msra.mxu0 0.0
  %144 = vmatprep.subr.mxu0 0.0
  %145 = vmatpush1.msra.mxu0 0.0
  %146 = vmatprep.subr.mxu0 0.0
  %147 = vmatpush1.msra.mxu0 0.0
  %148 = vmatprep.subr.mxu0 0.0
  %149 = vmatpush1.msra.mxu0 0.0
  %150 = vmatprep.subr.mxu0 0.0
  %151 = vmatpush1.msra.mxu0 0.0
  %152 = vmatprep.subr.mxu0 0.0
  %153 = vmatpush1.msra.mxu0 0.0
  %154 = vmatprep.subr.mxu0 0.0
  %155 = vmatpush1.msra.mxu0 0.0
  %156 = vmatprep.subr.mxu0 0.0
  %157 = vmatpush1.msra.mxu0 0.0
  %158 = vmatprep.subr.mxu0 0.0
  %159 = vmatpush1.msra.mxu0 0.0
  %160 = vmatprep.subr.mxu0 0.0
  %v161 = vand.u32 %v35, 4294901760
  %v162 = vsub.f32 %v35, %v161
  %v163 = vand.u32 %v162, 4294901760
  %v164 = vsub.f32 %v162, %v163
  %v165 = vand.u32 %v164, 4294901760
  %166 = vmatpush1.msra.mxu0 %v165
  %167 = vmatprep.subr.mxu0 0.0
  %v168 = vand.u32 %v34, 4294901760
  %v169 = vsub.f32 %v34, %v168
  %v170 = vand.u32 %v169, 4294901760
  %v171 = vsub.f32 %v169, %v170
  %v172 = vand.u32 %v171, 4294901760
  %173 = vmatpush1.msra.mxu0 %v172
  %174 = vmatprep.subr.mxu0 0.0
  %v175 = vand.u32 %v33, 4294901760
  %v176 = vsub.f32 %v33, %v175
  %v177 = vand.u32 %v176, 4294901760
  %v178 = vsub.f32 %v176, %v177
  %v179 = vand.u32 %v178, 4294901760
  %180 = vmatpush1.msra.mxu0 %v179
  %181 = vmatprep.subr.mxu0 0.0
  %v182 = vand.u32 %v32, 4294901760
  %v183 = vsub.f32 %v32, %v182
  %v184 = vand.u32 %v183, 4294901760
  %v185 = vsub.f32 %v183, %v184
  %v186 = vand.u32 %v185, 4294901760
  %187 = vmatpush1.msra.mxu0 %v186
  %188 = vmatprep.subr.mxu0 0.0
  %189 = vmatpush2.msra.mxu0 0.0
  %190 = vmatprep.subr.mxu0 0.0
  %191 = vmatpush2.msra.mxu0 0.0
  %192 = vmatprep.subr.mxu0 0.0
  %193 = vmatpush2.msra.mxu0 0.0
  %194 = vmatprep.subr.mxu0 0.0
  %195 = vmatpush2.msra.mxu0 0.0
  %196 = vmatprep.subr.mxu0 0.0
  %197 = vmatpush2.msra.mxu0 0.0
  %198 = vmatprep.subr.mxu0 0.0
  %199 = vmatpush2.msra.mxu0 0.0
  %200 = vmatprep.subr.mxu0 0.0
  %201 = vmatpush2.msra.mxu0 0.0
  %202 = vmatprep.subr.mxu0 0.0
  %203 = vmatpush2.msra.mxu0 0.0
  %204 = vmatprep.subr.mxu0 0.0
  %205 = vmatpush2.msra.mxu0 0.0
  %206 = vmatprep.subr.mxu0 0.0
  %207 = vmatpush2.msra.mxu0 0.0
  %208 = vmatprep.subr.mxu0 0.0
  %209 = vmatpush2.msra.mxu0 0.0
  %210 = vmatprep.subr.mxu0 0.0
  %211 = vmatpush2.msra.mxu0 0.0
  %212 = vmatprep.subr.mxu0 0.0
  %213 = vmatpush2.msra.mxu0 0.0
  %214 = vmatprep.subr.mxu0 0.0
  %215 = vmatpush2.msra.mxu0 0.0
  %216 = vmatprep.subr.mxu0 0.0
  %217 = vmatpush2.msra.mxu0 0.0
  %218 = vmatprep.subr.mxu0 0.0
  %219 = vmatpush2.msra.mxu0 0.0
  %220 = vmatprep.mubr.f32.mxu0 0.0
  %v221 = vand.u32 %v42, 4294901760
  %222 = vmatmul.mubr.f32.gmra.mxu0 %v221
  %v223 = vpop.f32.mrf.mxu0
  %v224 = vadd.f32 %v123, %v223
  %v225 = vpop.f32.mrf.mxu0
  %226 = vmatprep.mubr.f32.mxu0 0.0
  %v227 = vand.u32 %v45, 4294901760
  %228 = vmatmul.mubr.f32.gmra.mxu0 %v227
  %v229 = vpop.f32.mrf.mxu0
  %v230 = vadd.f32 %v133, %v229
  %v231 = vpop.f32.mrf.mxu0
  %232 = vdwg.mxu0
  %233 = vmatprep.subr.mxu0 0.0
  %234 = vmatpush1.msra.mxu0 0.0
  %235 = vmatprep.subr.mxu0 0.0
  %236 = vmatpush1.msra.mxu0 0.0
  %237 = vmatprep.subr.mxu0 0.0
  %238 = vmatpush1.msra.mxu0 0.0
  %239 = vmatprep.subr.mxu0 0.0
  %240 = vmatpush1.msra.mxu0 0.0
  %241 = vmatprep.subr.mxu0 0.0
  %242 = vmatpush1.msra.mxu0 0.0
  %243 = vmatprep.subr.mxu0 0.0
  %244 = vmatpush1.msra.mxu0 0.0
  %245 = vmatprep.subr.mxu0 0.0
  %246 = vmatpush1.msra.mxu0 0.0
  %247 = vmatprep.subr.mxu0 0.0
  %248 = vmatpush1.msra.mxu0 0.0
  %249 = vmatprep.subr.mxu0 0.0
  %250 = vmatpush1.msra.mxu0 0.0
  %251 = vmatprep.subr.mxu0 0.0
  %252 = vmatpush1.msra.mxu0 0.0
  %253 = vmatprep.subr.mxu0 0.0
  %254 = vmatpush1.msra.mxu0 0.0
  %255 = vmatprep.subr.mxu0 0.0
  %256 = vmatpush1.msra.mxu0 0.0
  %257 = vmatprep.subr.mxu0 0.0
  %v258 = vand.u32 %v35, 4294901760
  %v259 = vsub.f32 %v35, %v258
  %260 = vmatpush1.msra.mxu0 %v259
  %261 = vmatprep.subr.mxu0 0.0
  %v262 = vand.u32 %v34, 4294901760
  %v263 = vsub.f32 %v34, %v262
  %264 = vmatpush1.msra.mxu0 %v263
  %265 = vmatprep.subr.mxu0 0.0
  %v266 = vand.u32 %v33, 4294901760
  %v267 = vsub.f32 %v33, %v266
  %268 = vmatpush1.msra.mxu0 %v267
  %269 = vmatprep.subr.mxu0 0.0
  %v270 = vand.u32 %v32, 4294901760
  %v271 = vsub.f32 %v32, %v270
  %272 = vmatpush1.msra.mxu0 %v271
  %273 = vmatprep.subr.mxu0 0.0
  %274 = vmatpush2.msra.mxu0 0.0
  %275 = vmatprep.subr.mxu0 0.0
  %276 = vmatpush2.msra.mxu0 0.0
  %277 = vmatprep.subr.mxu0 0.0
  %278 = vmatpush2.msra.mxu0 0.0
  %279 = vmatprep.subr.mxu0 0.0
  %280 = vmatpush2.msra.mxu0 0.0
  %281 = vmatprep.subr.mxu0 0.0
  %282 = vmatpush2.msra.mxu0 0.0
  %283 = vmatprep.subr.mxu0 0.0
  %284 = vmatpush2.msra.mxu0 0.0
  %285 = vmatprep.subr.mxu0 0.0
  %286 = vmatpush2.msra.mxu0 0.0
  %287 = vmatprep.subr.mxu0 0.0
  %288 = vmatpush2.msra.mxu0 0.0
  %289 = vmatprep.subr.mxu0 0.0
  %290 = vmatpush2.msra.mxu0 0.0
  %291 = vmatprep.subr.mxu0 0.0
  %292 = vmatpush2.msra.mxu0 0.0
  %293 = vmatprep.subr.mxu0 0.0
  %294 = vmatpush2.msra.mxu0 0.0
  %295 = vmatprep.subr.mxu0 0.0
  %296 = vmatpush2.msra.mxu0 0.0
  %297 = vmatprep.subr.mxu0 0.0
  %298 = vmatpush2.msra.mxu0 0.0
  %299 = vmatprep.subr.mxu0 0.0
  %300 = vmatpush2.msra.mxu0 0.0
  %301 = vmatprep.subr.mxu0 0.0
  %302 = vmatpush2.msra.mxu0 0.0
  %303 = vmatprep.subr.mxu0 0.0
  %304 = vmatpush2.msra.mxu0 0.0
  %305 = vmatprep.mubr.f32.mxu0 0.0
  %v306 = vand.u32 %v42, 4294901760
  %v307 = vsub.f32 %v42, %v306
  %308 = vmatmul.mubr.f32.gmra.mxu0 %v307
  %v309 = vpop.f32.mrf.mxu0
  %v310 = vadd.f32 %v224, %v309
  %v311 = vpop.f32.mrf.mxu0
  %312 = vmatprep.mubr.f32.mxu0 0.0
  %v313 = vand.u32 %v45, 4294901760
  %v314 = vsub.f32 %v45, %v313
  %315 = vmatmul.mubr.f32.gmra.mxu0 %v314
  %v316 = vpop.f32.mrf.mxu0
  %v317 = vadd.f32 %v230, %v316
  %v318 = vpop.f32.mrf.mxu0
  %319 = vdwg.mxu0
  %320 = vmatprep.subr.mxu0 0.0
  %321 = vmatpush1.msra.mxu0 0.0
  %322 = vmatprep.subr.mxu0 0.0
  %323 = vmatpush1.msra.mxu0 0.0
  %324 = vmatprep.subr.mxu0 0.0
  %325 = vmatpush1.msra.mxu0 0.0
  %326 = vmatprep.subr.mxu0 0.0
  %327 = vmatpush1.msra.mxu0 0.0
  %328 = vmatprep.subr.mxu0 0.0
  %329 = vmatpush1.msra.mxu0 0.0
  %330 = vmatprep.subr.mxu0 0.0
  %331 = vmatpush1.msra.mxu0 0.0
  %332 = vmatprep.subr.mxu0 0.0
  %333 = vmatpush1.msra.mxu0 0.0
  %334 = vmatprep.subr.mxu0 0.0
  %335 = vmatpush1.msra.mxu0 0.0
  %336 = vmatprep.subr.mxu0 0.0
  %337 = vmatpush1.msra.mxu0 0.0
  %338 = vmatprep.subr.mxu0 0.0
  %339 = vmatpush1.msra.mxu0 0.0
  %340 = vmatprep.subr.mxu0 0.0
  %341 = vmatpush1.msra.mxu0 0.0
  %342 = vmatprep.subr.mxu0 0.0
  %343 = vmatpush1.msra.mxu0 0.0
  %344 = vmatprep.subr.mxu0 0.0
  %v345 = vand.u32 %v35, 4294901760
  %346 = vmatpush1.msra.mxu0 %v345
  %347 = vmatprep.subr.mxu0 0.0
  %v348 = vand.u32 %v34, 4294901760
  %349 = vmatpush1.msra.mxu0 %v348
  %350 = vmatprep.subr.mxu0 0.0
  %v351 = vand.u32 %v33, 4294901760
  %352 = vmatpush1.msra.mxu0 %v351
  %353 = vmatprep.subr.mxu0 0.0
  %v354 = vand.u32 %v32, 4294901760
  %355 = vmatpush1.msra.mxu0 %v354
  %356 = vmatprep.subr.mxu0 0.0
  %357 = vmatpush2.msra.mxu0 0.0
  %358 = vmatprep.subr.mxu0 0.0
  %359 = vmatpush2.msra.mxu0 0.0
  %360 = vmatprep.subr.mxu0 0.0
  %361 = vmatpush2.msra.mxu0 0.0
  %362 = vmatprep.subr.mxu0 0.0
  %363 = vmatpush2.msra.mxu0 0.0
  %364 = vmatprep.subr.mxu0 0.0
  %365 = vmatpush2.msra.mxu0 0.0
  %366 = vmatprep.subr.mxu0 0.0
  %367 = vmatpush2.msra.mxu0 0.0
  %368 = vmatprep.subr.mxu0 0.0
  %369 = vmatpush2.msra.mxu0 0.0
  %370 = vmatprep.subr.mxu0 0.0
  %371 = vmatpush2.msra.mxu0 0.0
  %372 = vmatprep.subr.mxu0 0.0
  %373 = vmatpush2.msra.mxu0 0.0
  %374 = vmatprep.subr.mxu0 0.0
  %375 = vmatpush2.msra.mxu0 0.0
  %376 = vmatprep.subr.mxu0 0.0
  %377 = vmatpush2.msra.mxu0 0.0
  %378 = vmatprep.subr.mxu0 0.0
  %379 = vmatpush2.msra.mxu0 0.0
  %380 = vmatprep.subr.mxu0 0.0
  %381 = vmatpush2.msra.mxu0 0.0
  %382 = vmatprep.subr.mxu0 0.0
  %383 = vmatpush2.msra.mxu0 0.0
  %384 = vmatprep.subr.mxu0 0.0
  %385 = vmatpush2.msra.mxu0 0.0
  %386 = vmatprep.subr.mxu0 0.0
  %387 = vmatpush2.msra.mxu0 0.0
  %388 = vmatprep.mubr.f32.mxu0 0.0
  %v389 = vand.u32 %v42, 4294901760
  %v390 = vsub.f32 %v42, %v389
  %v391 = vand.u32 %v390, 4294901760
  %392 = vmatmul.mubr.f32.gmra.mxu0 %v391
  %v393 = vpop.f32.mrf.mxu0
  %v394 = vadd.f32 %v310, %v393
  %v395 = vpop.f32.mrf.mxu0
  %396 = vmatprep.mubr.f32.mxu0 0.0
  %v397 = vand.u32 %v45, 4294901760
  %v398 = vsub.f32 %v45, %v397
  %v399 = vand.u32 %v398, 4294901760
  %400 = vmatmul.mubr.f32.gmra.mxu0 %v399
  %v401 = vpop.f32.mrf.mxu0
  %v402 = vadd.f32 %v317, %v401
  %v403 = vpop.f32.mrf.mxu0
  %404 = vdwg.mxu0
  %405 = vmatprep.subr.mxu0 0.0
  %406 = vmatpush1.msra.mxu0 0.0
  %407 = vmatprep.subr.mxu0 0.0
  %408 = vmatpush1.msra.mxu0 0.0
  %409 = vmatprep.subr.mxu0 0.0
  %410 = vmatpush1.msra.mxu0 0.0
  %411 = vmatprep.subr.mxu0 0.0
  %412 = vmatpush1.msra.mxu0 0.0
  %413 = vmatprep.subr.mxu0 0.0
  %414 = vmatpush1.msra.mxu0 0.0
  %415 = vmatprep.subr.mxu0 0.0
  %416 = vmatpush1.msra.mxu0 0.0
  %417 = vmatprep.subr.mxu0 0.0
  %418 = vmatpush1.msra.mxu0 0.0
  %419 = vmatprep.subr.mxu0 0.0
  %420 = vmatpush1.msra.mxu0 0.0
  %421 = vmatprep.subr.mxu0 0.0
  %422 = vmatpush1.msra.mxu0 0.0
  %423 = vmatprep.subr.mxu0 0.0
  %424 = vmatpush1.msra.mxu0 0.0
  %425 = vmatprep.subr.mxu0 0.0
  %426 = vmatpush1.msra.mxu0 0.0
  %427 = vmatprep.subr.mxu0 0.0
  %428 = vmatpush1.msra.mxu0 0.0
  %429 = vmatprep.subr.mxu0 0.0
  %v430 = vand.u32 %v35, 4294901760
  %v431 = vsub.f32 %v35, %v430
  %v432 = vand.u32 %v431, 4294901760
  %433 = vmatpush1.msra.mxu0 %v432
  %434 = vmatprep.subr.mxu0 0.0
  %v435 = vand.u32 %v34, 4294901760
  %v436 = vsub.f32 %v34, %v435
  %v437 = vand.u32 %v436, 4294901760
  %438 = vmatpush1.msra.mxu0 %v437
  %439 = vmatprep.subr.mxu0 0.0
  %v440 = vand.u32 %v33, 4294901760
  %v441 = vsub.f32 %v33, %v440
  %v442 = vand.u32 %v441, 4294901760
  %443 = vmatpush1.msra.mxu0 %v442
  %444 = vmatprep.subr.mxu0 0.0
  %v445 = vand.u32 %v32, 4294901760
  %v446 = vsub.f32 %v32, %v445
  %v447 = vand.u32 %v446, 4294901760
  %448 = vmatpush1.msra.mxu0 %v447
  %449 = vmatprep.subr.mxu0 0.0
  %450 = vmatpush2.msra.mxu0 0.0
  %451 = vmatprep.subr.mxu0 0.0
  %452 = vmatpush2.msra.mxu0 0.0
  %453 = vmatprep.subr.mxu0 0.0
  %454 = vmatpush2.msra.mxu0 0.0
  %455 = vmatprep.subr.mxu0 0.0
  %456 = vmatpush2.msra.mxu0 0.0
  %457 = vmatprep.subr.mxu0 0.0
  %458 = vmatpush2.msra.mxu0 0.0
  %459 = vmatprep.subr.mxu0 0.0
  %460 = vmatpush2.msra.mxu0 0.0
  %461 = vmatprep.subr.mxu0 0.0
  %462 = vmatpush2.msra.mxu0 0.0
  %463 = vmatprep.subr.mxu0 0.0
  %464 = vmatpush2.msra.mxu0 0.0
  %465 = vmatprep.subr.mxu0 0.0
  %466 = vmatpush2.msra.mxu0 0.0
  %467 = vmatprep.subr.mxu0 0.0
  %468 = vmatpush2.msra.mxu0 0.0
  %469 = vmatprep.subr.mxu0 0.0
  %470 = vmatpush2.msra.mxu0 0.0
  %471 = vmatprep.subr.mxu0 0.0
  %472 = vmatpush2.msra.mxu0 0.0
  %473 = vmatprep.subr.mxu0 0.0
  %474 = vmatpush2.msra.mxu0 0.0
  %475 = vmatprep.subr.mxu0 0.0
  %476 = vmatpush2.msra.mxu0 0.0
  %477 = vmatprep.subr.mxu0 0.0
  %478 = vmatpush2.msra.mxu0 0.0
  %479 = vmatprep.subr.mxu0 0.0
  %480 = vmatpush2.msra.mxu0 0.0
  %481 = vmatprep.mubr.f32.mxu0 0.0
  %v482 = vand.u32 %v42, 4294901760
  %483 = vmatmul.mubr.f32.gmra.mxu0 %v482
  %v484 = vpop.f32.mrf.mxu0
  %v485 = vadd.f32 %v394, %v484
  %v486 = vpop.f32.mrf.mxu0
  %487 = vmatprep.mubr.f32.mxu0 0.0
  %v488 = vand.u32 %v45, 4294901760
  %489 = vmatmul.mubr.f32.gmra.mxu0 %v488
  %v490 = vpop.f32.mrf.mxu0
  %v491 = vadd.f32 %v402, %v490
  %v492 = vpop.f32.mrf.mxu0
  %493 = vdwg.mxu0
  %494 = vmatprep.subr.mxu0 0.0
  %495 = vmatpush1.msra.mxu0 0.0
  %496 = vmatprep.subr.mxu0 0.0
  %497 = vmatpush1.msra.mxu0 0.0
  %498 = vmatprep.subr.mxu0 0.0
  %499 = vmatpush1.msra.mxu0 0.0
  %500 = vmatprep.subr.mxu0 0.0
  %501 = vmatpush1.msra.mxu0 0.0
  %502 = vmatprep.subr.mxu0 0.0
  %503 = vmatpush1.msra.mxu0 0.0
  %504 = vmatprep.subr.mxu0 0.0
  %505 = vmatpush1.msra.mxu0 0.0
  %506 = vmatprep.subr.mxu0 0.0
  %507 = vmatpush1.msra.mxu0 0.0
  %508 = vmatprep.subr.mxu0 0.0
  %509 = vmatpush1.msra.mxu0 0.0
  %510 = vmatprep.subr.mxu0 0.0
  %511 = vmatpush1.msra.mxu0 0.0
  %512 = vmatprep.subr.mxu0 0.0
  %513 = vmatpush1.msra.mxu0 0.0
  %514 = vmatprep.subr.mxu0 0.0
  %515 = vmatpush1.msra.mxu0 0.0
  %516 = vmatprep.subr.mxu0 0.0
  %517 = vmatpush1.msra.mxu0 0.0
  %518 = vmatprep.subr.mxu0 0.0
  %v519 = vand.u32 %v35, 4294901760
  %520 = vmatpush1.msra.mxu0 %v519
  %521 = vmatprep.subr.mxu0 0.0
  %v522 = vand.u32 %v34, 4294901760
  %523 = vmatpush1.msra.mxu0 %v522
  %524 = vmatprep.subr.mxu0 0.0
  %v525 = vand.u32 %v33, 4294901760
  %526 = vmatpush1.msra.mxu0 %v525
  %527 = vmatprep.subr.mxu0 0.0
  %v528 = vand.u32 %v32, 4294901760
  %529 = vmatpush1.msra.mxu0 %v528
  %530 = vmatprep.subr.mxu0 0.0
  %531 = vmatpush2.msra.mxu0 0.0
  %532 = vmatprep.subr.mxu0 0.0
  %533 = vmatpush2.msra.mxu0 0.0
  %534 = vmatprep.subr.mxu0 0.0
  %535 = vmatpush2.msra.mxu0 0.0
  %536 = vmatprep.subr.mxu0 0.0
  %537 = vmatpush2.msra.mxu0 0.0
  %538 = vmatprep.subr.mxu0 0.0
  %539 = vmatpush2.msra.mxu0 0.0
  %540 = vmatprep.subr.mxu0 0.0
  %541 = vmatpush2.msra.mxu0 0.0
  %542 = vmatprep.subr.mxu0 0.0
  %543 = vmatpush2.msra.mxu0 0.0
  %544 = vmatprep.subr.mxu0 0.0
  %545 = vmatpush2.msra.mxu0 0.0
  %546 = vmatprep.subr.mxu0 0.0
  %547 = vmatpush2.msra.mxu0 0.0
  %548 = vmatprep.subr.mxu0 0.0
  %549 = vmatpush2.msra.mxu0 0.0
  %550 = vmatprep.subr.mxu0 0.0
  %551 = vmatpush2.msra.mxu0 0.0
  %552 = vmatprep.subr.mxu0 0.0
  %553 = vmatpush2.msra.mxu0 0.0
  %554 = vmatprep.subr.mxu0 0.0
  %555 = vmatpush2.msra.mxu0 0.0
  %556 = vmatprep.subr.mxu0 0.0
  %557 = vmatpush2.msra.mxu0 0.0
  %558 = vmatprep.subr.mxu0 0.0
  %559 = vmatpush2.msra.mxu0 0.0
  %560 = vmatprep.subr.mxu0 0.0
  %561 = vmatpush2.msra.mxu0 0.0
  %562 = vmatprep.mubr.f32.mxu0 0.0
  %v563 = vand.u32 %v42, 4294901760
  %564 = vmatmul.mubr.f32.gmra.mxu0 %v563
  %v565 = vpop.f32.mrf.mxu0
  %v566 = vadd.f32 %v485, %v565
  %v567 = vpop.f32.mrf.mxu0
  %568 = vmatprep.mubr.f32.mxu0 0.0
  %v569 = vand.u32 %v45, 4294901760
  %570 = vmatmul.mubr.f32.gmra.mxu0 %v569
  %v571 = vpop.f32.mrf.mxu0
  %v572 = vadd.f32 %v491, %v571
  %v573 = vpop.f32.mrf.mxu0
  %574 = vdwg.mxu0
  %v576 = vsel %vm40, %v30, 0
  %v579 = vsel %vm40, %v31, 0
  %581 = vmatprep.subr.mxu0 0.0
  %582 = vmatpush1.msra.mxu0 0.0
  %583 = vmatprep.subr.mxu0 0.0
  %584 = vmatpush1.msra.mxu0 0.0
  %585 = vmatprep.subr.mxu0 0.0
  %586 = vmatpush1.msra.mxu0 0.0
  %587 = vmatprep.subr.mxu0 0.0
  %588 = vmatpush1.msra.mxu0 0.0
  %589 = vmatprep.subr.mxu0 0.0
  %590 = vmatpush1.msra.mxu0 0.0
  %591 = vmatprep.subr.mxu0 0.0
  %592 = vmatpush1.msra.mxu0 0.0
  %593 = vmatprep.subr.mxu0 0.0
  %594 = vmatpush1.msra.mxu0 0.0
  %595 = vmatprep.subr.mxu0 0.0
  %596 = vmatpush1.msra.mxu0 0.0
  %597 = vmatprep.subr.mxu0 0.0
  %598 = vmatpush1.msra.mxu0 0.0
  %599 = vmatprep.subr.mxu0 0.0
  %600 = vmatpush1.msra.mxu0 0.0
  %601 = vmatprep.subr.mxu0 0.0
  %602 = vmatpush1.msra.mxu0 0.0
  %603 = vmatprep.subr.mxu0 0.0
  %604 = vmatpush1.msra.mxu0 0.0
  %605 = vmatprep.subr.mxu0 0.0
  %v606 = vand.u32 %v39, 4294901760
  %607 = vmatpush1.msra.mxu0 %v606
  %608 = vmatprep.subr.mxu0 0.0
  %v609 = vand.u32 %v38, 4294901760
  %610 = vmatpush1.msra.mxu0 %v609
  %611 = vmatprep.subr.mxu0 0.0
  %v612 = vand.u32 %v37, 4294901760
  %613 = vmatpush1.msra.mxu0 %v612
  %614 = vmatprep.subr.mxu0 0.0
  %v615 = vand.u32 %v36, 4294901760
  %616 = vmatpush1.msra.mxu0 %v615
  %617 = vmatprep.subr.mxu0 0.0
  %618 = vmatpush2.msra.mxu0 0.0
  %619 = vmatprep.subr.mxu0 0.0
  %620 = vmatpush2.msra.mxu0 0.0
  %621 = vmatprep.subr.mxu0 0.0
  %622 = vmatpush2.msra.mxu0 0.0
  %623 = vmatprep.subr.mxu0 0.0
  %624 = vmatpush2.msra.mxu0 0.0
  %625 = vmatprep.subr.mxu0 0.0
  %626 = vmatpush2.msra.mxu0 0.0
  %627 = vmatprep.subr.mxu0 0.0
  %628 = vmatpush2.msra.mxu0 0.0
  %629 = vmatprep.subr.mxu0 0.0
  %630 = vmatpush2.msra.mxu0 0.0
  %631 = vmatprep.subr.mxu0 0.0
  %632 = vmatpush2.msra.mxu0 0.0
  %633 = vmatprep.subr.mxu0 0.0
  %634 = vmatpush2.msra.mxu0 0.0
  %635 = vmatprep.subr.mxu0 0.0
  %636 = vmatpush2.msra.mxu0 0.0
  %637 = vmatprep.subr.mxu0 0.0
  %638 = vmatpush2.msra.mxu0 0.0
  %639 = vmatprep.subr.mxu0 0.0
  %640 = vmatpush2.msra.mxu0 0.0
  %641 = vmatprep.subr.mxu0 0.0
  %642 = vmatpush2.msra.mxu0 0.0
  %643 = vmatprep.subr.mxu0 0.0
  %644 = vmatpush2.msra.mxu0 0.0
  %645 = vmatprep.subr.mxu0 0.0
  %646 = vmatpush2.msra.mxu0 0.0
  %647 = vmatprep.subr.mxu0 0.0
  %648 = vmatpush2.msra.mxu0 0.0
  %649 = vmatprep.mubr.f32.mxu0 0.0
  %v650 = vand.u32 %v576, 4294901760
  %v651 = vsub.f32 %v576, %v650
  %v652 = vand.u32 %v651, 4294901760
  %v653 = vsub.f32 %v651, %v652
  %v654 = vand.u32 %v653, 4294901760
  %655 = vmatmul.mubr.f32.gmra.mxu0 %v654
  %v656 = vpop.f32.mrf.mxu0
  %v657 = vadd.f32 0.0, %v656
  %v658 = vpop.f32.mrf.mxu0
  %659 = vmatprep.mubr.f32.mxu0 0.0
  %v660 = vand.u32 %v579, 4294901760
  %v661 = vsub.f32 %v579, %v660
  %v662 = vand.u32 %v661, 4294901760
  %v663 = vsub.f32 %v661, %v662
  %v664 = vand.u32 %v663, 4294901760
  %665 = vmatmul.mubr.f32.gmra.mxu0 %v664
  %v666 = vpop.f32.mrf.mxu0
  %v667 = vadd.f32 0.0, %v666
  %v668 = vpop.f32.mrf.mxu0
  %669 = vdwg.mxu0
  %670 = vmatprep.subr.mxu0 0.0
  %671 = vmatpush1.msra.mxu0 0.0
  %672 = vmatprep.subr.mxu0 0.0
  %673 = vmatpush1.msra.mxu0 0.0
  %674 = vmatprep.subr.mxu0 0.0
  %675 = vmatpush1.msra.mxu0 0.0
  %676 = vmatprep.subr.mxu0 0.0
  %677 = vmatpush1.msra.mxu0 0.0
  %678 = vmatprep.subr.mxu0 0.0
  %679 = vmatpush1.msra.mxu0 0.0
  %680 = vmatprep.subr.mxu0 0.0
  %681 = vmatpush1.msra.mxu0 0.0
  %682 = vmatprep.subr.mxu0 0.0
  %683 = vmatpush1.msra.mxu0 0.0
  %684 = vmatprep.subr.mxu0 0.0
  %685 = vmatpush1.msra.mxu0 0.0
  %686 = vmatprep.subr.mxu0 0.0
  %687 = vmatpush1.msra.mxu0 0.0
  %688 = vmatprep.subr.mxu0 0.0
  %689 = vmatpush1.msra.mxu0 0.0
  %690 = vmatprep.subr.mxu0 0.0
  %691 = vmatpush1.msra.mxu0 0.0
  %692 = vmatprep.subr.mxu0 0.0
  %693 = vmatpush1.msra.mxu0 0.0
  %694 = vmatprep.subr.mxu0 0.0
  %v695 = vand.u32 %v39, 4294901760
  %v696 = vsub.f32 %v39, %v695
  %v697 = vand.u32 %v696, 4294901760
  %v698 = vsub.f32 %v696, %v697
  %v699 = vand.u32 %v698, 4294901760
  %700 = vmatpush1.msra.mxu0 %v699
  %701 = vmatprep.subr.mxu0 0.0
  %v702 = vand.u32 %v38, 4294901760
  %v703 = vsub.f32 %v38, %v702
  %v704 = vand.u32 %v703, 4294901760
  %v705 = vsub.f32 %v703, %v704
  %v706 = vand.u32 %v705, 4294901760
  %707 = vmatpush1.msra.mxu0 %v706
  %708 = vmatprep.subr.mxu0 0.0
  %v709 = vand.u32 %v37, 4294901760
  %v710 = vsub.f32 %v37, %v709
  %v711 = vand.u32 %v710, 4294901760
  %v712 = vsub.f32 %v710, %v711
  %v713 = vand.u32 %v712, 4294901760
  %714 = vmatpush1.msra.mxu0 %v713
  %715 = vmatprep.subr.mxu0 0.0
  %v716 = vand.u32 %v36, 4294901760
  %v717 = vsub.f32 %v36, %v716
  %v718 = vand.u32 %v717, 4294901760
  %v719 = vsub.f32 %v717, %v718
  %v720 = vand.u32 %v719, 4294901760
  %721 = vmatpush1.msra.mxu0 %v720
  %722 = vmatprep.subr.mxu0 0.0
  %723 = vmatpush2.msra.mxu0 0.0
  %724 = vmatprep.subr.mxu0 0.0
  %725 = vmatpush2.msra.mxu0 0.0
  %726 = vmatprep.subr.mxu0 0.0
  %727 = vmatpush2.msra.mxu0 0.0
  %728 = vmatprep.subr.mxu0 0.0
  %729 = vmatpush2.msra.mxu0 0.0
  %730 = vmatprep.subr.mxu0 0.0
  %731 = vmatpush2.msra.mxu0 0.0
  %732 = vmatprep.subr.mxu0 0.0
  %733 = vmatpush2.msra.mxu0 0.0
  %734 = vmatprep.subr.mxu0 0.0
  %735 = vmatpush2.msra.mxu0 0.0
  %736 = vmatprep.subr.mxu0 0.0
  %737 = vmatpush2.msra.mxu0 0.0
  %738 = vmatprep.subr.mxu0 0.0
  %739 = vmatpush2.msra.mxu0 0.0
  %740 = vmatprep.subr.mxu0 0.0
  %741 = vmatpush2.msra.mxu0 0.0
  %742 = vmatprep.subr.mxu0 0.0
  %743 = vmatpush2.msra.mxu0 0.0
  %744 = vmatprep.subr.mxu0 0.0
  %745 = vmatpush2.msra.mxu0 0.0
  %746 = vmatprep.subr.mxu0 0.0
  %747 = vmatpush2.msra.mxu0 0.0
  %748 = vmatprep.subr.mxu0 0.0
  %749 = vmatpush2.msra.mxu0 0.0
  %750 = vmatprep.subr.mxu0 0.0
  %751 = vmatpush2.msra.mxu0 0.0
  %752 = vmatprep.subr.mxu0 0.0
  %753 = vmatpush2.msra.mxu0 0.0
  %754 = vmatprep.mubr.f32.mxu0 0.0
  %v755 = vand.u32 %v576, 4294901760
  %756 = vmatmul.mubr.f32.gmra.mxu0 %v755
  %v757 = vpop.f32.mrf.mxu0
  %v758 = vadd.f32 %v657, %v757
  %v759 = vpop.f32.mrf.mxu0
  %760 = vmatprep.mubr.f32.mxu0 0.0
  %v761 = vand.u32 %v579, 4294901760
  %762 = vmatmul.mubr.f32.gmra.mxu0 %v761
  %v763 = vpop.f32.mrf.mxu0
  %v764 = vadd.f32 %v667, %v763
  %v765 = vpop.f32.mrf.mxu0
  %766 = vdwg.mxu0
  %767 = vmatprep.subr.mxu0 0.0
  %768 = vmatpush1.msra.mxu0 0.0
  %769 = vmatprep.subr.mxu0 0.0
  %770 = vmatpush1.msra.mxu0 0.0
  %771 = vmatprep.subr.mxu0 0.0
  %772 = vmatpush1.msra.mxu0 0.0
  %773 = vmatprep.subr.mxu0 0.0
  %774 = vmatpush1.msra.mxu0 0.0
  %775 = vmatprep.subr.mxu0 0.0
  %776 = vmatpush1.msra.mxu0 0.0
  %777 = vmatprep.subr.mxu0 0.0
  %778 = vmatpush1.msra.mxu0 0.0
  %779 = vmatprep.subr.mxu0 0.0
  %780 = vmatpush1.msra.mxu0 0.0
  %781 = vmatprep.subr.mxu0 0.0
  %782 = vmatpush1.msra.mxu0 0.0
  %783 = vmatprep.subr.mxu0 0.0
  %784 = vmatpush1.msra.mxu0 0.0
  %785 = vmatprep.subr.mxu0 0.0
  %786 = vmatpush1.msra.mxu0 0.0
  %787 = vmatprep.subr.mxu0 0.0
  %788 = vmatpush1.msra.mxu0 0.0
  %789 = vmatprep.subr.mxu0 0.0
  %790 = vmatpush1.msra.mxu0 0.0
  %791 = vmatprep.subr.mxu0 0.0
  %v792 = vand.u32 %v39, 4294901760
  %v793 = vsub.f32 %v39, %v792
  %794 = vmatpush1.msra.mxu0 %v793
  %795 = vmatprep.subr.mxu0 0.0
  %v796 = vand.u32 %v38, 4294901760
  %v797 = vsub.f32 %v38, %v796
  %798 = vmatpush1.msra.mxu0 %v797
  %799 = vmatprep.subr.mxu0 0.0
  %v800 = vand.u32 %v37, 4294901760
  %v801 = vsub.f32 %v37, %v800
  %802 = vmatpush1.msra.mxu0 %v801
  %803 = vmatprep.subr.mxu0 0.0
  %v804 = vand.u32 %v36, 4294901760
  %v805 = vsub.f32 %v36, %v804
  %806 = vmatpush1.msra.mxu0 %v805
  %807 = vmatprep.subr.mxu0 0.0
  %808 = vmatpush2.msra.mxu0 0.0
  %809 = vmatprep.subr.mxu0 0.0
  %810 = vmatpush2.msra.mxu0 0.0
  %811 = vmatprep.subr.mxu0 0.0
  %812 = vmatpush2.msra.mxu0 0.0
  %813 = vmatprep.subr.mxu0 0.0
  %814 = vmatpush2.msra.mxu0 0.0
  %815 = vmatprep.subr.mxu0 0.0
  %816 = vmatpush2.msra.mxu0 0.0
  %817 = vmatprep.subr.mxu0 0.0
  %818 = vmatpush2.msra.mxu0 0.0
  %819 = vmatprep.subr.mxu0 0.0
  %820 = vmatpush2.msra.mxu0 0.0
  %821 = vmatprep.subr.mxu0 0.0
  %822 = vmatpush2.msra.mxu0 0.0
  %823 = vmatprep.subr.mxu0 0.0
  %824 = vmatpush2.msra.mxu0 0.0
  %825 = vmatprep.subr.mxu0 0.0
  %826 = vmatpush2.msra.mxu0 0.0
  %827 = vmatprep.subr.mxu0 0.0
  %828 = vmatpush2.msra.mxu0 0.0
  %829 = vmatprep.subr.mxu0 0.0
  %830 = vmatpush2.msra.mxu0 0.0
  %831 = vmatprep.subr.mxu0 0.0
  %832 = vmatpush2.msra.mxu0 0.0
  %833 = vmatprep.subr.mxu0 0.0
  %834 = vmatpush2.msra.mxu0 0.0
  %835 = vmatprep.subr.mxu0 0.0
  %836 = vmatpush2.msra.mxu0 0.0
  %837 = vmatprep.subr.mxu0 0.0
  %838 = vmatpush2.msra.mxu0 0.0
  %839 = vmatprep.mubr.f32.mxu0 0.0
  %v840 = vand.u32 %v576, 4294901760
  %v841 = vsub.f32 %v576, %v840
  %842 = vmatmul.mubr.f32.gmra.mxu0 %v841
  %v843 = vpop.f32.mrf.mxu0
  %v844 = vadd.f32 %v758, %v843
  %v845 = vpop.f32.mrf.mxu0
  %846 = vmatprep.mubr.f32.mxu0 0.0
  %v847 = vand.u32 %v579, 4294901760
  %v848 = vsub.f32 %v579, %v847
  %849 = vmatmul.mubr.f32.gmra.mxu0 %v848
  %v850 = vpop.f32.mrf.mxu0
  %v851 = vadd.f32 %v764, %v850
  %v852 = vpop.f32.mrf.mxu0
  %853 = vdwg.mxu0
  %854 = vmatprep.subr.mxu0 0.0
  %855 = vmatpush1.msra.mxu0 0.0
  %856 = vmatprep.subr.mxu0 0.0
  %857 = vmatpush1.msra.mxu0 0.0
  %858 = vmatprep.subr.mxu0 0.0
  %859 = vmatpush1.msra.mxu0 0.0
  %860 = vmatprep.subr.mxu0 0.0
  %861 = vmatpush1.msra.mxu0 0.0
  %862 = vmatprep.subr.mxu0 0.0
  %863 = vmatpush1.msra.mxu0 0.0
  %864 = vmatprep.subr.mxu0 0.0
  %865 = vmatpush1.msra.mxu0 0.0
  %866 = vmatprep.subr.mxu0 0.0
  %867 = vmatpush1.msra.mxu0 0.0
  %868 = vmatprep.subr.mxu0 0.0
  %869 = vmatpush1.msra.mxu0 0.0
  %870 = vmatprep.subr.mxu0 0.0
  %871 = vmatpush1.msra.mxu0 0.0
  %872 = vmatprep.subr.mxu0 0.0
  %873 = vmatpush1.msra.mxu0 0.0
  %874 = vmatprep.subr.mxu0 0.0
  %875 = vmatpush1.msra.mxu0 0.0
  %876 = vmatprep.subr.mxu0 0.0
  %877 = vmatpush1.msra.mxu0 0.0
  %878 = vmatprep.subr.mxu0 0.0
  %v879 = vand.u32 %v39, 4294901760
  %880 = vmatpush1.msra.mxu0 %v879
  %881 = vmatprep.subr.mxu0 0.0
  %v882 = vand.u32 %v38, 4294901760
  %883 = vmatpush1.msra.mxu0 %v882
  %884 = vmatprep.subr.mxu0 0.0
  %v885 = vand.u32 %v37, 4294901760
  %886 = vmatpush1.msra.mxu0 %v885
  %887 = vmatprep.subr.mxu0 0.0
  %v888 = vand.u32 %v36, 4294901760
  %889 = vmatpush1.msra.mxu0 %v888
  %890 = vmatprep.subr.mxu0 0.0
  %891 = vmatpush2.msra.mxu0 0.0
  %892 = vmatprep.subr.mxu0 0.0
  %893 = vmatpush2.msra.mxu0 0.0
  %894 = vmatprep.subr.mxu0 0.0
  %895 = vmatpush2.msra.mxu0 0.0
  %896 = vmatprep.subr.mxu0 0.0
  %897 = vmatpush2.msra.mxu0 0.0
  %898 = vmatprep.subr.mxu0 0.0
  %899 = vmatpush2.msra.mxu0 0.0
  %900 = vmatprep.subr.mxu0 0.0
  %901 = vmatpush2.msra.mxu0 0.0
  %902 = vmatprep.subr.mxu0 0.0
  %903 = vmatpush2.msra.mxu0 0.0
  %904 = vmatprep.subr.mxu0 0.0
  %905 = vmatpush2.msra.mxu0 0.0
  %906 = vmatprep.subr.mxu0 0.0
  %907 = vmatpush2.msra.mxu0 0.0
  %908 = vmatprep.subr.mxu0 0.0
  %909 = vmatpush2.msra.mxu0 0.0
  %910 = vmatprep.subr.mxu0 0.0
  %911 = vmatpush2.msra.mxu0 0.0
  %912 = vmatprep.subr.mxu0 0.0
  %913 = vmatpush2.msra.mxu0 0.0
  %914 = vmatprep.subr.mxu0 0.0
  %915 = vmatpush2.msra.mxu0 0.0
  %916 = vmatprep.subr.mxu0 0.0
  %917 = vmatpush2.msra.mxu0 0.0
  %918 = vmatprep.subr.mxu0 0.0
  %919 = vmatpush2.msra.mxu0 0.0
  %920 = vmatprep.subr.mxu0 0.0
  %921 = vmatpush2.msra.mxu0 0.0
  %922 = vmatprep.mubr.f32.mxu0 0.0
  %v923 = vand.u32 %v576, 4294901760
  %v924 = vsub.f32 %v576, %v923
  %v925 = vand.u32 %v924, 4294901760
  %926 = vmatmul.mubr.f32.gmra.mxu0 %v925
  %v927 = vpop.f32.mrf.mxu0
  %v928 = vadd.f32 %v844, %v927
  %v929 = vpop.f32.mrf.mxu0
  %930 = vmatprep.mubr.f32.mxu0 0.0
  %v931 = vand.u32 %v579, 4294901760
  %v932 = vsub.f32 %v579, %v931
  %v933 = vand.u32 %v932, 4294901760
  %934 = vmatmul.mubr.f32.gmra.mxu0 %v933
  %v935 = vpop.f32.mrf.mxu0
  %v936 = vadd.f32 %v851, %v935
  %v937 = vpop.f32.mrf.mxu0
  %938 = vdwg.mxu0
  %939 = vmatprep.subr.mxu0 0.0
  %940 = vmatpush1.msra.mxu0 0.0
  %941 = vmatprep.subr.mxu0 0.0
  %942 = vmatpush1.msra.mxu0 0.0
  %943 = vmatprep.subr.mxu0 0.0
  %944 = vmatpush1.msra.mxu0 0.0
  %945 = vmatprep.subr.mxu0 0.0
  %946 = vmatpush1.msra.mxu0 0.0
  %947 = vmatprep.subr.mxu0 0.0
  %948 = vmatpush1.msra.mxu0 0.0
  %949 = vmatprep.subr.mxu0 0.0
  %950 = vmatpush1.msra.mxu0 0.0
  %951 = vmatprep.subr.mxu0 0.0
  %952 = vmatpush1.msra.mxu0 0.0
  %953 = vmatprep.subr.mxu0 0.0
  %954 = vmatpush1.msra.mxu0 0.0
  %955 = vmatprep.subr.mxu0 0.0
  %956 = vmatpush1.msra.mxu0 0.0
  %957 = vmatprep.subr.mxu0 0.0
  %958 = vmatpush1.msra.mxu0 0.0
  %959 = vmatprep.subr.mxu0 0.0
  %960 = vmatpush1.msra.mxu0 0.0
  %961 = vmatprep.subr.mxu0 0.0
  %962 = vmatpush1.msra.mxu0 0.0
  %963 = vmatprep.subr.mxu0 0.0
  %v964 = vand.u32 %v39, 4294901760
  %v965 = vsub.f32 %v39, %v964
  %v966 = vand.u32 %v965, 4294901760
  %967 = vmatpush1.msra.mxu0 %v966
  %968 = vmatprep.subr.mxu0 0.0
  %v969 = vand.u32 %v38, 4294901760
  %v970 = vsub.f32 %v38, %v969
  %v971 = vand.u32 %v970, 4294901760
  %972 = vmatpush1.msra.mxu0 %v971
  %973 = vmatprep.subr.mxu0 0.0
  %v974 = vand.u32 %v37, 4294901760
  %v975 = vsub.f32 %v37, %v974
  %v976 = vand.u32 %v975, 4294901760
  %977 = vmatpush1.msra.mxu0 %v976
  %978 = vmatprep.subr.mxu0 0.0
  %v979 = vand.u32 %v36, 4294901760
  %v980 = vsub.f32 %v36, %v979
  %v981 = vand.u32 %v980, 4294901760
  %982 = vmatpush1.msra.mxu0 %v981
  %983 = vmatprep.subr.mxu0 0.0
  %984 = vmatpush2.msra.mxu0 0.0
  %985 = vmatprep.subr.mxu0 0.0
  %986 = vmatpush2.msra.mxu0 0.0
  %987 = vmatprep.subr.mxu0 0.0
  %988 = vmatpush2.msra.mxu0 0.0
  %989 = vmatprep.subr.mxu0 0.0
  %990 = vmatpush2.msra.mxu0 0.0
  %991 = vmatprep.subr.mxu0 0.0
  %992 = vmatpush2.msra.mxu0 0.0
  %993 = vmatprep.subr.mxu0 0.0
  %994 = vmatpush2.msra.mxu0 0.0
  %995 = vmatprep.subr.mxu0 0.0
  %996 = vmatpush2.msra.mxu0 0.0
  %997 = vmatprep.subr.mxu0 0.0
  %998 = vmatpush2.msra.mxu0 0.0
  %999 = vmatprep.subr.mxu0 0.0
  %1000 = vmatpush2.msra.mxu0 0.0
  %1001 = vmatprep.subr.mxu0 0.0
  %1002 = vmatpush2.msra.mxu0 0.0
  %1003 = vmatprep.subr.mxu0 0.0
  %1004 = vmatpush2.msra.mxu0 0.0
  %1005 = vmatprep.subr.mxu0 0.0
  %1006 = vmatpush2.msra.mxu0 0.0
  %1007 = vmatprep.subr.mxu0 0.0
  %1008 = vmatpush2.msra.mxu0 0.0
  %1009 = vmatprep.subr.mxu0 0.0
  %1010 = vmatpush2.msra.mxu0 0.0
  %1011 = vmatprep.subr.mxu0 0.0
  %1012 = vmatpush2.msra.mxu0 0.0
  %1013 = vmatprep.subr.mxu0 0.0
  %1014 = vmatpush2.msra.mxu0 0.0
  %1015 = vmatprep.mubr.f32.mxu0 0.0
  %v1016 = vand.u32 %v576, 4294901760
  %1017 = vmatmul.mubr.f32.gmra.mxu0 %v1016
  %v1018 = vpop.f32.mrf.mxu0
  %v1019 = vadd.f32 %v928, %v1018
  %v1020 = vpop.f32.mrf.mxu0
  %1021 = vmatprep.mubr.f32.mxu0 0.0
  %v1022 = vand.u32 %v579, 4294901760
  %1023 = vmatmul.mubr.f32.gmra.mxu0 %v1022
  %v1024 = vpop.f32.mrf.mxu0
  %v1025 = vadd.f32 %v936, %v1024
  %v1026 = vpop.f32.mrf.mxu0
  %1027 = vdwg.mxu0
  %1028 = vmatprep.subr.mxu0 0.0
  %1029 = vmatpush1.msra.mxu0 0.0
  %1030 = vmatprep.subr.mxu0 0.0
  %1031 = vmatpush1.msra.mxu0 0.0
  %1032 = vmatprep.subr.mxu0 0.0
  %1033 = vmatpush1.msra.mxu0 0.0
  %1034 = vmatprep.subr.mxu0 0.0
  %1035 = vmatpush1.msra.mxu0 0.0
  %1036 = vmatprep.subr.mxu0 0.0
  %1037 = vmatpush1.msra.mxu0 0.0
  %1038 = vmatprep.subr.mxu0 0.0
  %1039 = vmatpush1.msra.mxu0 0.0
  %1040 = vmatprep.subr.mxu0 0.0
  %1041 = vmatpush1.msra.mxu0 0.0
  %1042 = vmatprep.subr.mxu0 0.0
  %1043 = vmatpush1.msra.mxu0 0.0
  %1044 = vmatprep.subr.mxu0 0.0
  %1045 = vmatpush1.msra.mxu0 0.0
  %1046 = vmatprep.subr.mxu0 0.0
  %1047 = vmatpush1.msra.mxu0 0.0
  %1048 = vmatprep.subr.mxu0 0.0
  %1049 = vmatpush1.msra.mxu0 0.0
  %1050 = vmatprep.subr.mxu0 0.0
  %1051 = vmatpush1.msra.mxu0 0.0
  %1052 = vmatprep.subr.mxu0 0.0
  %v1053 = vand.u32 %v39, 4294901760
  %1054 = vmatpush1.msra.mxu0 %v1053
  %1055 = vmatprep.subr.mxu0 0.0
  %v1056 = vand.u32 %v38, 4294901760
  %1057 = vmatpush1.msra.mxu0 %v1056
  %1058 = vmatprep.subr.mxu0 0.0
  %v1059 = vand.u32 %v37, 4294901760
  %1060 = vmatpush1.msra.mxu0 %v1059
  %1061 = vmatprep.subr.mxu0 0.0
  %v1062 = vand.u32 %v36, 4294901760
  %1063 = vmatpush1.msra.mxu0 %v1062
  %1064 = vmatprep.subr.mxu0 0.0
  %1065 = vmatpush2.msra.mxu0 0.0
  %1066 = vmatprep.subr.mxu0 0.0
  %1067 = vmatpush2.msra.mxu0 0.0
  %1068 = vmatprep.subr.mxu0 0.0
  %1069 = vmatpush2.msra.mxu0 0.0
  %1070 = vmatprep.subr.mxu0 0.0
  %1071 = vmatpush2.msra.mxu0 0.0
  %1072 = vmatprep.subr.mxu0 0.0
  %1073 = vmatpush2.msra.mxu0 0.0
  %1074 = vmatprep.subr.mxu0 0.0
  %1075 = vmatpush2.msra.mxu0 0.0
  %1076 = vmatprep.subr.mxu0 0.0
  %1077 = vmatpush2.msra.mxu0 0.0
  %1078 = vmatprep.subr.mxu0 0.0
  %1079 = vmatpush2.msra.mxu0 0.0
  %1080 = vmatprep.subr.mxu0 0.0
  %1081 = vmatpush2.msra.mxu0 0.0
  %1082 = vmatprep.subr.mxu0 0.0
  %1083 = vmatpush2.msra.mxu0 0.0
  %1084 = vmatprep.subr.mxu0 0.0
  %1085 = vmatpush2.msra.mxu0 0.0
  %1086 = vmatprep.subr.mxu0 0.0
  %1087 = vmatpush2.msra.mxu0 0.0
  %1088 = vmatprep.subr.mxu0 0.0
  %1089 = vmatpush2.msra.mxu0 0.0
  %1090 = vmatprep.subr.mxu0 0.0
  %1091 = vmatpush2.msra.mxu0 0.0
  %1092 = vmatprep.subr.mxu0 0.0
  %1093 = vmatpush2.msra.mxu0 0.0
  %1094 = vmatprep.subr.mxu0 0.0
  %1095 = vmatpush2.msra.mxu0 0.0
  %1096 = vmatprep.mubr.f32.mxu0 0.0
  %v1097 = vand.u32 %v576, 4294901760
  %1098 = vmatmul.mubr.f32.gmra.mxu0 %v1097
  %v1099 = vpop.f32.mrf.mxu0
  %v1100 = vadd.f32 %v1019, %v1099
  %v1101 = vpop.f32.mrf.mxu0
  %1102 = vmatprep.mubr.f32.mxu0 0.0
  %v1103 = vand.u32 %v579, 4294901760
  %1104 = vmatmul.mubr.f32.gmra.mxu0 %v1103
  %v1105 = vpop.f32.mrf.mxu0
  %v1106 = vadd.f32 %v1025, %v1105
  %v1107 = vpop.f32.mrf.mxu0
  %1108 = vdwg.mxu0
  %v1109 = vadd.f32 %v28, %v30
  %v1110 = vadd.f32 %v29, %v31
  %v1111 = vadd.f32 %v32, %v36
  %v1112 = vadd.f32 %v33, %v37
  %v1113 = vadd.f32 %v34, %v38
  %v1114 = vadd.f32 %v35, %v39
  %v1116 = vsel %vm40, %v1109, 0
  %v1119 = vsel %vm40, %v1110, 0
  %1121 = vmatprep.subr.mxu0 0.0
  %1122 = vmatpush1.msra.mxu0 0.0
  %1123 = vmatprep.subr.mxu0 0.0
  %1124 = vmatpush1.msra.mxu0 0.0
  %1125 = vmatprep.subr.mxu0 0.0
  %1126 = vmatpush1.msra.mxu0 0.0
  %1127 = vmatprep.subr.mxu0 0.0
  %1128 = vmatpush1.msra.mxu0 0.0
  %1129 = vmatprep.subr.mxu0 0.0
  %1130 = vmatpush1.msra.mxu0 0.0
  %1131 = vmatprep.subr.mxu0 0.0
  %1132 = vmatpush1.msra.mxu0 0.0
  %1133 = vmatprep.subr.mxu0 0.0
  %1134 = vmatpush1.msra.mxu0 0.0
  %1135 = vmatprep.subr.mxu0 0.0
  %1136 = vmatpush1.msra.mxu0 0.0
  %1137 = vmatprep.subr.mxu0 0.0
  %1138 = vmatpush1.msra.mxu0 0.0
  %1139 = vmatprep.subr.mxu0 0.0
  %1140 = vmatpush1.msra.mxu0 0.0
  %1141 = vmatprep.subr.mxu0 0.0
  %1142 = vmatpush1.msra.mxu0 0.0
  %1143 = vmatprep.subr.mxu0 0.0
  %1144 = vmatpush1.msra.mxu0 0.0
  %1145 = vmatprep.subr.mxu0 0.0
  %v1146 = vand.u32 %v1114, 4294901760
  %1147 = vmatpush1.msra.mxu0 %v1146
  %1148 = vmatprep.subr.mxu0 0.0
  %v1149 = vand.u32 %v1113, 4294901760
  %1150 = vmatpush1.msra.mxu0 %v1149
  %1151 = vmatprep.subr.mxu0 0.0
  %v1152 = vand.u32 %v1112, 4294901760
  %1153 = vmatpush1.msra.mxu0 %v1152
  %1154 = vmatprep.subr.mxu0 0.0
  %v1155 = vand.u32 %v1111, 4294901760
  %1156 = vmatpush1.msra.mxu0 %v1155
  %1157 = vmatprep.subr.mxu0 0.0
  %1158 = vmatpush2.msra.mxu0 0.0
  %1159 = vmatprep.subr.mxu0 0.0
  %1160 = vmatpush2.msra.mxu0 0.0
  %1161 = vmatprep.subr.mxu0 0.0
  %1162 = vmatpush2.msra.mxu0 0.0
  %1163 = vmatprep.subr.mxu0 0.0
  %1164 = vmatpush2.msra.mxu0 0.0
  %1165 = vmatprep.subr.mxu0 0.0
  %1166 = vmatpush2.msra.mxu0 0.0
  %1167 = vmatprep.subr.mxu0 0.0
  %1168 = vmatpush2.msra.mxu0 0.0
  %1169 = vmatprep.subr.mxu0 0.0
  %1170 = vmatpush2.msra.mxu0 0.0
  %1171 = vmatprep.subr.mxu0 0.0
  %1172 = vmatpush2.msra.mxu0 0.0
  %1173 = vmatprep.subr.mxu0 0.0
  %1174 = vmatpush2.msra.mxu0 0.0
  %1175 = vmatprep.subr.mxu0 0.0
  %1176 = vmatpush2.msra.mxu0 0.0
  %1177 = vmatprep.subr.mxu0 0.0
  %1178 = vmatpush2.msra.mxu0 0.0
  %1179 = vmatprep.subr.mxu0 0.0
  %1180 = vmatpush2.msra.mxu0 0.0
  %1181 = vmatprep.subr.mxu0 0.0
  %1182 = vmatpush2.msra.mxu0 0.0
  %1183 = vmatprep.subr.mxu0 0.0
  %1184 = vmatpush2.msra.mxu0 0.0
  %1185 = vmatprep.subr.mxu0 0.0
  %1186 = vmatpush2.msra.mxu0 0.0
  %1187 = vmatprep.subr.mxu0 0.0
  %1188 = vmatpush2.msra.mxu0 0.0
  %1189 = vmatprep.mubr.f32.mxu0 0.0
  %v1190 = vand.u32 %v1116, 4294901760
  %v1191 = vsub.f32 %v1116, %v1190
  %v1192 = vand.u32 %v1191, 4294901760
  %v1193 = vsub.f32 %v1191, %v1192
  %v1194 = vand.u32 %v1193, 4294901760
  %1195 = vmatmul.mubr.f32.gmra.mxu0 %v1194
  %v1196 = vpop.f32.mrf.mxu0
  %v1197 = vadd.f32 0.0, %v1196
  %v1198 = vpop.f32.mrf.mxu0
  %1199 = vmatprep.mubr.f32.mxu0 0.0
  %v1200 = vand.u32 %v1119, 4294901760
  %v1201 = vsub.f32 %v1119, %v1200
  %v1202 = vand.u32 %v1201, 4294901760
  %v1203 = vsub.f32 %v1201, %v1202
  %v1204 = vand.u32 %v1203, 4294901760
  %1205 = vmatmul.mubr.f32.gmra.mxu0 %v1204
  %v1206 = vpop.f32.mrf.mxu0
  %v1207 = vadd.f32 0.0, %v1206
  %v1208 = vpop.f32.mrf.mxu0
  %1209 = vdwg.mxu0
  %1210 = vmatprep.subr.mxu0 0.0
  %1211 = vmatpush1.msra.mxu0 0.0
  %1212 = vmatprep.subr.mxu0 0.0
  %1213 = vmatpush1.msra.mxu0 0.0
  %1214 = vmatprep.subr.mxu0 0.0
  %1215 = vmatpush1.msra.mxu0 0.0
  %1216 = vmatprep.subr.mxu0 0.0
  %1217 = vmatpush1.msra.mxu0 0.0
  %1218 = vmatprep.subr.mxu0 0.0
  %1219 = vmatpush1.msra.mxu0 0.0
  %1220 = vmatprep.subr.mxu0 0.0
  %1221 = vmatpush1.msra.mxu0 0.0
  %1222 = vmatprep.subr.mxu0 0.0
  %1223 = vmatpush1.msra.mxu0 0.0
  %1224 = vmatprep.subr.mxu0 0.0
  %1225 = vmatpush1.msra.mxu0 0.0
  %1226 = vmatprep.subr.mxu0 0.0
  %1227 = vmatpush1.msra.mxu0 0.0
  %1228 = vmatprep.subr.mxu0 0.0
  %1229 = vmatpush1.msra.mxu0 0.0
  %1230 = vmatprep.subr.mxu0 0.0
  %1231 = vmatpush1.msra.mxu0 0.0
  %1232 = vmatprep.subr.mxu0 0.0
  %1233 = vmatpush1.msra.mxu0 0.0
  %1234 = vmatprep.subr.mxu0 0.0
  %v1235 = vand.u32 %v1114, 4294901760
  %v1236 = vsub.f32 %v1114, %v1235
  %v1237 = vand.u32 %v1236, 4294901760
  %v1238 = vsub.f32 %v1236, %v1237
  %v1239 = vand.u32 %v1238, 4294901760
  %1240 = vmatpush1.msra.mxu0 %v1239
  %1241 = vmatprep.subr.mxu0 0.0
  %v1242 = vand.u32 %v1113, 4294901760
  %v1243 = vsub.f32 %v1113, %v1242
  %v1244 = vand.u32 %v1243, 4294901760
  %v1245 = vsub.f32 %v1243, %v1244
  %v1246 = vand.u32 %v1245, 4294901760
  %1247 = vmatpush1.msra.mxu0 %v1246
  %1248 = vmatprep.subr.mxu0 0.0
  %v1249 = vand.u32 %v1112, 4294901760
  %v1250 = vsub.f32 %v1112, %v1249
  %v1251 = vand.u32 %v1250, 4294901760
  %v1252 = vsub.f32 %v1250, %v1251
  %v1253 = vand.u32 %v1252, 4294901760
  %1254 = vmatpush1.msra.mxu0 %v1253
  %1255 = vmatprep.subr.mxu0 0.0
  %v1256 = vand.u32 %v1111, 4294901760
  %v1257 = vsub.f32 %v1111, %v1256
  %v1258 = vand.u32 %v1257, 4294901760
  %v1259 = vsub.f32 %v1257, %v1258
  %v1260 = vand.u32 %v1259, 4294901760
  %1261 = vmatpush1.msra.mxu0 %v1260
  %1262 = vmatprep.subr.mxu0 0.0
  %1263 = vmatpush2.msra.mxu0 0.0
  %1264 = vmatprep.subr.mxu0 0.0
  %1265 = vmatpush2.msra.mxu0 0.0
  %1266 = vmatprep.subr.mxu0 0.0
  %1267 = vmatpush2.msra.mxu0 0.0
  %1268 = vmatprep.subr.mxu0 0.0
  %1269 = vmatpush2.msra.mxu0 0.0
  %1270 = vmatprep.subr.mxu0 0.0
  %1271 = vmatpush2.msra.mxu0 0.0
  %1272 = vmatprep.subr.mxu0 0.0
  %1273 = vmatpush2.msra.mxu0 0.0
  %1274 = vmatprep.subr.mxu0 0.0
  %1275 = vmatpush2.msra.mxu0 0.0
  %1276 = vmatprep.subr.mxu0 0.0
  %1277 = vmatpush2.msra.mxu0 0.0
  %1278 = vmatprep.subr.mxu0 0.0
  %1279 = vmatpush2.msra.mxu0 0.0
  %1280 = vmatprep.subr.mxu0 0.0
  %1281 = vmatpush2.msra.mxu0 0.0
  %1282 = vmatprep.subr.mxu0 0.0
  %1283 = vmatpush2.msra.mxu0 0.0
  %1284 = vmatprep.subr.mxu0 0.0
  %1285 = vmatpush2.msra.mxu0 0.0
  %1286 = vmatprep.subr.mxu0 0.0
  %1287 = vmatpush2.msra.mxu0 0.0
  %1288 = vmatprep.subr.mxu0 0.0
  %1289 = vmatpush2.msra.mxu0 0.0
  %1290 = vmatprep.subr.mxu0 0.0
  %1291 = vmatpush2.msra.mxu0 0.0
  %1292 = vmatprep.subr.mxu0 0.0
  %1293 = vmatpush2.msra.mxu0 0.0
  %1294 = vmatprep.mubr.f32.mxu0 0.0
  %v1295 = vand.u32 %v1116, 4294901760
  %1296 = vmatmul.mubr.f32.gmra.mxu0 %v1295
  %v1297 = vpop.f32.mrf.mxu0
  %v1298 = vadd.f32 %v1197, %v1297
  %v1299 = vpop.f32.mrf.mxu0
  %1300 = vmatprep.mubr.f32.mxu0 0.0
  %v1301 = vand.u32 %v1119, 4294901760
  %1302 = vmatmul.mubr.f32.gmra.mxu0 %v1301
  %v1303 = vpop.f32.mrf.mxu0
  %v1304 = vadd.f32 %v1207, %v1303
  %v1305 = vpop.f32.mrf.mxu0
  %1306 = vdwg.mxu0
  %1307 = vmatprep.subr.mxu0 0.0
  %1308 = vmatpush1.msra.mxu0 0.0
  %1309 = vmatprep.subr.mxu0 0.0
  %1310 = vmatpush1.msra.mxu0 0.0
  %1311 = vmatprep.subr.mxu0 0.0
  %1312 = vmatpush1.msra.mxu0 0.0
  %1313 = vmatprep.subr.mxu0 0.0
  %1314 = vmatpush1.msra.mxu0 0.0
  %1315 = vmatprep.subr.mxu0 0.0
  %1316 = vmatpush1.msra.mxu0 0.0
  %1317 = vmatprep.subr.mxu0 0.0
  %1318 = vmatpush1.msra.mxu0 0.0
  %1319 = vmatprep.subr.mxu0 0.0
  %1320 = vmatpush1.msra.mxu0 0.0
  %1321 = vmatprep.subr.mxu0 0.0
  %1322 = vmatpush1.msra.mxu0 0.0
  %1323 = vmatprep.subr.mxu0 0.0
  %1324 = vmatpush1.msra.mxu0 0.0
  %1325 = vmatprep.subr.mxu0 0.0
  %1326 = vmatpush1.msra.mxu0 0.0
  %1327 = vmatprep.subr.mxu0 0.0
  %1328 = vmatpush1.msra.mxu0 0.0
  %1329 = vmatprep.subr.mxu0 0.0
  %1330 = vmatpush1.msra.mxu0 0.0
  %1331 = vmatprep.subr.mxu0 0.0
  %v1332 = vand.u32 %v1114, 4294901760
  %v1333 = vsub.f32 %v1114, %v1332
  %1334 = vmatpush1.msra.mxu0 %v1333
  %1335 = vmatprep.subr.mxu0 0.0
  %v1336 = vand.u32 %v1113, 4294901760
  %v1337 = vsub.f32 %v1113, %v1336
  %1338 = vmatpush1.msra.mxu0 %v1337
  %1339 = vmatprep.subr.mxu0 0.0
  %v1340 = vand.u32 %v1112, 4294901760
  %v1341 = vsub.f32 %v1112, %v1340
  %1342 = vmatpush1.msra.mxu0 %v1341
  %1343 = vmatprep.subr.mxu0 0.0
  %v1344 = vand.u32 %v1111, 4294901760
  %v1345 = vsub.f32 %v1111, %v1344
  %1346 = vmatpush1.msra.mxu0 %v1345
  %1347 = vmatprep.subr.mxu0 0.0
  %1348 = vmatpush2.msra.mxu0 0.0
  %1349 = vmatprep.subr.mxu0 0.0
  %1350 = vmatpush2.msra.mxu0 0.0
  %1351 = vmatprep.subr.mxu0 0.0
  %1352 = vmatpush2.msra.mxu0 0.0
  %1353 = vmatprep.subr.mxu0 0.0
  %1354 = vmatpush2.msra.mxu0 0.0
  %1355 = vmatprep.subr.mxu0 0.0
  %1356 = vmatpush2.msra.mxu0 0.0
  %1357 = vmatprep.subr.mxu0 0.0
  %1358 = vmatpush2.msra.mxu0 0.0
  %1359 = vmatprep.subr.mxu0 0.0
  %1360 = vmatpush2.msra.mxu0 0.0
  %1361 = vmatprep.subr.mxu0 0.0
  %1362 = vmatpush2.msra.mxu0 0.0
  %1363 = vmatprep.subr.mxu0 0.0
  %1364 = vmatpush2.msra.mxu0 0.0
  %1365 = vmatprep.subr.mxu0 0.0
  %1366 = vmatpush2.msra.mxu0 0.0
  %1367 = vmatprep.subr.mxu0 0.0
  %1368 = vmatpush2.msra.mxu0 0.0
  %1369 = vmatprep.subr.mxu0 0.0
  %1370 = vmatpush2.msra.mxu0 0.0
  %1371 = vmatprep.subr.mxu0 0.0
  %1372 = vmatpush2.msra.mxu0 0.0
  %1373 = vmatprep.subr.mxu0 0.0
  %1374 = vmatpush2.msra.mxu0 0.0
  %1375 = vmatprep.subr.mxu0 0.0
  %1376 = vmatpush2.msra.mxu0 0.0
  %1377 = vmatprep.subr.mxu0 0.0
  %1378 = vmatpush2.msra.mxu0 0.0
  %1379 = vmatprep.mubr.f32.mxu0 0.0
  %v1380 = vand.u32 %v1116, 4294901760
  %v1381 = vsub.f32 %v1116, %v1380
  %1382 = vmatmul.mubr.f32.gmra.mxu0 %v1381
  %v1383 = vpop.f32.mrf.mxu0
  %v1384 = vadd.f32 %v1298, %v1383
  %v1385 = vpop.f32.mrf.mxu0
  %1386 = vmatprep.mubr.f32.mxu0 0.0
  %v1387 = vand.u32 %v1119, 4294901760
  %v1388 = vsub.f32 %v1119, %v1387
  %1389 = vmatmul.mubr.f32.gmra.mxu0 %v1388
  %v1390 = vpop.f32.mrf.mxu0
  %v1391 = vadd.f32 %v1304, %v1390
  %v1392 = vpop.f32.mrf.mxu0
  %1393 = vdwg.mxu0
  %1394 = vmatprep.subr.mxu0 0.0
  %1395 = vmatpush1.msra.mxu0 0.0
  %1396 = vmatprep.subr.mxu0 0.0
  %1397 = vmatpush1.msra.mxu0 0.0
  %1398 = vmatprep.subr.mxu0 0.0
  %1399 = vmatpush1.msra.mxu0 0.0
  %1400 = vmatprep.subr.mxu0 0.0
  %1401 = vmatpush1.msra.mxu0 0.0
  %1402 = vmatprep.subr.mxu0 0.0
  %1403 = vmatpush1.msra.mxu0 0.0
  %1404 = vmatprep.subr.mxu0 0.0
  %1405 = vmatpush1.msra.mxu0 0.0
  %1406 = vmatprep.subr.mxu0 0.0
  %1407 = vmatpush1.msra.mxu0 0.0
  %1408 = vmatprep.subr.mxu0 0.0
  %1409 = vmatpush1.msra.mxu0 0.0
  %1410 = vmatprep.subr.mxu0 0.0
  %1411 = vmatpush1.msra.mxu0 0.0
  %1412 = vmatprep.subr.mxu0 0.0
  %1413 = vmatpush1.msra.mxu0 0.0
  %1414 = vmatprep.subr.mxu0 0.0
  %1415 = vmatpush1.msra.mxu0 0.0
  %1416 = vmatprep.subr.mxu0 0.0
  %1417 = vmatpush1.msra.mxu0 0.0
  %1418 = vmatprep.subr.mxu0 0.0
  %v1419 = vand.u32 %v1114, 4294901760
  %1420 = vmatpush1.msra.mxu0 %v1419
  %1421 = vmatprep.subr.mxu0 0.0
  %v1422 = vand.u32 %v1113, 4294901760
  %1423 = vmatpush1.msra.mxu0 %v1422
  %1424 = vmatprep.subr.mxu0 0.0
  %v1425 = vand.u32 %v1112, 4294901760
  %1426 = vmatpush1.msra.mxu0 %v1425
  %1427 = vmatprep.subr.mxu0 0.0
  %v1428 = vand.u32 %v1111, 4294901760
  %1429 = vmatpush1.msra.mxu0 %v1428
  %1430 = vmatprep.subr.mxu0 0.0
  %1431 = vmatpush2.msra.mxu0 0.0
  %1432 = vmatprep.subr.mxu0 0.0
  %1433 = vmatpush2.msra.mxu0 0.0
  %1434 = vmatprep.subr.mxu0 0.0
  %1435 = vmatpush2.msra.mxu0 0.0
  %1436 = vmatprep.subr.mxu0 0.0
  %1437 = vmatpush2.msra.mxu0 0.0
  %1438 = vmatprep.subr.mxu0 0.0
  %1439 = vmatpush2.msra.mxu0 0.0
  %1440 = vmatprep.subr.mxu0 0.0
  %1441 = vmatpush2.msra.mxu0 0.0
  %1442 = vmatprep.subr.mxu0 0.0
  %1443 = vmatpush2.msra.mxu0 0.0
  %1444 = vmatprep.subr.mxu0 0.0
  %1445 = vmatpush2.msra.mxu0 0.0
  %1446 = vmatprep.subr.mxu0 0.0
  %1447 = vmatpush2.msra.mxu0 0.0
  %1448 = vmatprep.subr.mxu0 0.0
  %1449 = vmatpush2.msra.mxu0 0.0
  %1450 = vmatprep.subr.mxu0 0.0
  %1451 = vmatpush2.msra.mxu0 0.0
  %1452 = vmatprep.subr.mxu0 0.0
  %1453 = vmatpush2.msra.mxu0 0.0
  %1454 = vmatprep.subr.mxu0 0.0
  %1455 = vmatpush2.msra.mxu0 0.0
  %1456 = vmatprep.subr.mxu0 0.0
  %1457 = vmatpush2.msra.mxu0 0.0
  %1458 = vmatprep.subr.mxu0 0.0
  %1459 = vmatpush2.msra.mxu0 0.0
  %1460 = vmatprep.subr.mxu0 0.0
  %1461 = vmatpush2.msra.mxu0 0.0
  %1462 = vmatprep.mubr.f32.mxu0 0.0
  %v1463 = vand.u32 %v1116, 4294901760
  %v1464 = vsub.f32 %v1116, %v1463
  %v1465 = vand.u32 %v1464, 4294901760
  %1466 = vmatmul.mubr.f32.gmra.mxu0 %v1465
  %v1467 = vpop.f32.mrf.mxu0
  %v1468 = vadd.f32 %v1384, %v1467
  %v1469 = vpop.f32.mrf.mxu0
  %1470 = vmatprep.mubr.f32.mxu0 0.0
  %v1471 = vand.u32 %v1119, 4294901760
  %v1472 = vsub.f32 %v1119, %v1471
  %v1473 = vand.u32 %v1472, 4294901760
  %1474 = vmatmul.mubr.f32.gmra.mxu0 %v1473
  %v1475 = vpop.f32.mrf.mxu0
  %v1476 = vadd.f32 %v1391, %v1475
  %v1477 = vpop.f32.mrf.mxu0
  %1478 = vdwg.mxu0
  %1479 = vmatprep.subr.mxu0 0.0
  %1480 = vmatpush1.msra.mxu0 0.0
  %1481 = vmatprep.subr.mxu0 0.0
  %1482 = vmatpush1.msra.mxu0 0.0
  %1483 = vmatprep.subr.mxu0 0.0
  %1484 = vmatpush1.msra.mxu0 0.0
  %1485 = vmatprep.subr.mxu0 0.0
  %1486 = vmatpush1.msra.mxu0 0.0
  %1487 = vmatprep.subr.mxu0 0.0
  %1488 = vmatpush1.msra.mxu0 0.0
  %1489 = vmatprep.subr.mxu0 0.0
  %1490 = vmatpush1.msra.mxu0 0.0
  %1491 = vmatprep.subr.mxu0 0.0
  %1492 = vmatpush1.msra.mxu0 0.0
  %1493 = vmatprep.subr.mxu0 0.0
  %1494 = vmatpush1.msra.mxu0 0.0
  %1495 = vmatprep.subr.mxu0 0.0
  %1496 = vmatpush1.msra.mxu0 0.0
  %1497 = vmatprep.subr.mxu0 0.0
  %1498 = vmatpush1.msra.mxu0 0.0
  %1499 = vmatprep.subr.mxu0 0.0
  %1500 = vmatpush1.msra.mxu0 0.0
  %1501 = vmatprep.subr.mxu0 0.0
  %1502 = vmatpush1.msra.mxu0 0.0
  %1503 = vmatprep.subr.mxu0 0.0
  %v1504 = vand.u32 %v1114, 4294901760
  %v1505 = vsub.f32 %v1114, %v1504
  %v1506 = vand.u32 %v1505, 4294901760
  %1507 = vmatpush1.msra.mxu0 %v1506
  %1508 = vmatprep.subr.mxu0 0.0
  %v1509 = vand.u32 %v1113, 4294901760
  %v1510 = vsub.f32 %v1113, %v1509
  %v1511 = vand.u32 %v1510, 4294901760
  %1512 = vmatpush1.msra.mxu0 %v1511
  %1513 = vmatprep.subr.mxu0 0.0
  %v1514 = vand.u32 %v1112, 4294901760
  %v1515 = vsub.f32 %v1112, %v1514
  %v1516 = vand.u32 %v1515, 4294901760
  %1517 = vmatpush1.msra.mxu0 %v1516
  %1518 = vmatprep.subr.mxu0 0.0
  %v1519 = vand.u32 %v1111, 4294901760
  %v1520 = vsub.f32 %v1111, %v1519
  %v1521 = vand.u32 %v1520, 4294901760
  %1522 = vmatpush1.msra.mxu0 %v1521
  %1523 = vmatprep.subr.mxu0 0.0
  %1524 = vmatpush2.msra.mxu0 0.0
  %1525 = vmatprep.subr.mxu0 0.0
  %1526 = vmatpush2.msra.mxu0 0.0
  %1527 = vmatprep.subr.mxu0 0.0
  %1528 = vmatpush2.msra.mxu0 0.0
  %1529 = vmatprep.subr.mxu0 0.0
  %1530 = vmatpush2.msra.mxu0 0.0
  %1531 = vmatprep.subr.mxu0 0.0
  %1532 = vmatpush2.msra.mxu0 0.0
  %1533 = vmatprep.subr.mxu0 0.0
  %1534 = vmatpush2.msra.mxu0 0.0
  %1535 = vmatprep.subr.mxu0 0.0
  %1536 = vmatpush2.msra.mxu0 0.0
  %1537 = vmatprep.subr.mxu0 0.0
  %1538 = vmatpush2.msra.mxu0 0.0
  %1539 = vmatprep.subr.mxu0 0.0
  %1540 = vmatpush2.msra.mxu0 0.0
  %1541 = vmatprep.subr.mxu0 0.0
  %1542 = vmatpush2.msra.mxu0 0.0
  %1543 = vmatprep.subr.mxu0 0.0
  %1544 = vmatpush2.msra.mxu0 0.0
  %1545 = vmatprep.subr.mxu0 0.0
  %1546 = vmatpush2.msra.mxu0 0.0
  %1547 = vmatprep.subr.mxu0 0.0
  %1548 = vmatpush2.msra.mxu0 0.0
  %1549 = vmatprep.subr.mxu0 0.0
  %1550 = vmatpush2.msra.mxu0 0.0
  %1551 = vmatprep.subr.mxu0 0.0
  %1552 = vmatpush2.msra.mxu0 0.0
  %1553 = vmatprep.subr.mxu0 0.0
  %1554 = vmatpush2.msra.mxu0 0.0
  %1555 = vmatprep.mubr.f32.mxu0 0.0
  %v1556 = vand.u32 %v1116, 4294901760
  %1557 = vmatmul.mubr.f32.gmra.mxu0 %v1556
  %v1558 = vpop.f32.mrf.mxu0
  %v1559 = vadd.f32 %v1468, %v1558
  %v1560 = vpop.f32.mrf.mxu0
  %1561 = vmatprep.mubr.f32.mxu0 0.0
  %v1562 = vand.u32 %v1119, 4294901760
  %1563 = vmatmul.mubr.f32.gmra.mxu0 %v1562
  %v1564 = vpop.f32.mrf.mxu0
  %v1565 = vadd.f32 %v1476, %v1564
  %v1566 = vpop.f32.mrf.mxu0
  %1567 = vdwg.mxu0
  %1568 = vmatprep.subr.mxu0 0.0
  %1569 = vmatpush1.msra.mxu0 0.0
  %1570 = vmatprep.subr.mxu0 0.0
  %1571 = vmatpush1.msra.mxu0 0.0
  %1572 = vmatprep.subr.mxu0 0.0
  %1573 = vmatpush1.msra.mxu0 0.0
  %1574 = vmatprep.subr.mxu0 0.0
  %1575 = vmatpush1.msra.mxu0 0.0
  %1576 = vmatprep.subr.mxu0 0.0
  %1577 = vmatpush1.msra.mxu0 0.0
  %1578 = vmatprep.subr.mxu0 0.0
  %1579 = vmatpush1.msra.mxu0 0.0
  %1580 = vmatprep.subr.mxu0 0.0
  %1581 = vmatpush1.msra.mxu0 0.0
  %1582 = vmatprep.subr.mxu0 0.0
  %1583 = vmatpush1.msra.mxu0 0.0
  %1584 = vmatprep.subr.mxu0 0.0
  %1585 = vmatpush1.msra.mxu0 0.0
  %1586 = vmatprep.subr.mxu0 0.0
  %1587 = vmatpush1.msra.mxu0 0.0
  %1588 = vmatprep.subr.mxu0 0.0
  %1589 = vmatpush1.msra.mxu0 0.0
  %1590 = vmatprep.subr.mxu0 0.0
  %1591 = vmatpush1.msra.mxu0 0.0
  %1592 = vmatprep.subr.mxu0 0.0
  %v1593 = vand.u32 %v1114, 4294901760
  %1594 = vmatpush1.msra.mxu0 %v1593
  %1595 = vmatprep.subr.mxu0 0.0
  %v1596 = vand.u32 %v1113, 4294901760
  %1597 = vmatpush1.msra.mxu0 %v1596
  %1598 = vmatprep.subr.mxu0 0.0
  %v1599 = vand.u32 %v1112, 4294901760
  %1600 = vmatpush1.msra.mxu0 %v1599
  %1601 = vmatprep.subr.mxu0 0.0
  %v1602 = vand.u32 %v1111, 4294901760
  %1603 = vmatpush1.msra.mxu0 %v1602
  %1604 = vmatprep.subr.mxu0 0.0
  %1605 = vmatpush2.msra.mxu0 0.0
  %1606 = vmatprep.subr.mxu0 0.0
  %1607 = vmatpush2.msra.mxu0 0.0
  %1608 = vmatprep.subr.mxu0 0.0
  %1609 = vmatpush2.msra.mxu0 0.0
  %1610 = vmatprep.subr.mxu0 0.0
  %1611 = vmatpush2.msra.mxu0 0.0
  %1612 = vmatprep.subr.mxu0 0.0
  %1613 = vmatpush2.msra.mxu0 0.0
  %1614 = vmatprep.subr.mxu0 0.0
  %1615 = vmatpush2.msra.mxu0 0.0
  %1616 = vmatprep.subr.mxu0 0.0
  %1617 = vmatpush2.msra.mxu0 0.0
  %1618 = vmatprep.subr.mxu0 0.0
  %1619 = vmatpush2.msra.mxu0 0.0
  %1620 = vmatprep.subr.mxu0 0.0
  %1621 = vmatpush2.msra.mxu0 0.0
  %1622 = vmatprep.subr.mxu0 0.0
  %1623 = vmatpush2.msra.mxu0 0.0
  %1624 = vmatprep.subr.mxu0 0.0
  %1625 = vmatpush2.msra.mxu0 0.0
  %1626 = vmatprep.subr.mxu0 0.0
  %1627 = vmatpush2.msra.mxu0 0.0
  %1628 = vmatprep.subr.mxu0 0.0
  %1629 = vmatpush2.msra.mxu0 0.0
  %1630 = vmatprep.subr.mxu0 0.0
  %1631 = vmatpush2.msra.mxu0 0.0
  %1632 = vmatprep.subr.mxu0 0.0
  %1633 = vmatpush2.msra.mxu0 0.0
  %1634 = vmatprep.subr.mxu0 0.0
  %1635 = vmatpush2.msra.mxu0 0.0
  %1636 = vmatprep.mubr.f32.mxu0 0.0
  %v1637 = vand.u32 %v1116, 4294901760
  %1638 = vmatmul.mubr.f32.gmra.mxu0 %v1637
  %v1639 = vpop.f32.mrf.mxu0
  %v1640 = vadd.f32 %v1559, %v1639
  %v1641 = vpop.f32.mrf.mxu0
  %1642 = vmatprep.mubr.f32.mxu0 0.0
  %v1643 = vand.u32 %v1119, 4294901760
  %1644 = vmatmul.mubr.f32.gmra.mxu0 %v1643
  %v1645 = vpop.f32.mrf.mxu0
  %v1646 = vadd.f32 %v1565, %v1645
  %v1647 = vpop.f32.mrf.mxu0
  %1648 = vdwg.mxu0
  %v1649 = vld [vmem:[#allocation2] sm:$0xff]
  %v1650 = vld [vmem:[#allocation2 + $0x8] sm:$0xff]
  %v1651 = vsub.f32 %v566, %v1100
  %v1652 = vsub.f32 %v572, %v1106
  %v1653 = vadd.f32 %v1649, %v1651
  %v1654 = vadd.f32 %v1650, %v1652
  %1655 = vst.msk [vmem:[#allocation2] sm:$0xff] %vm40, %v1653
  %1656 = vst.msk [vmem:[#allocation2 + $0x8] sm:$0xff] %vm40, %v1654
  %v1657 = vld [vmem:[#allocation3] sm:$0xff]
  %v1658 = vld [vmem:[#allocation3 + $0x8] sm:$0xff]
  %v1659 = vsub.f32 %v1640, %v566
  %v1660 = vsub.f32 %v1646, %v572
  %v1661 = vsub.f32 %v1659, %v1100
  %v1662 = vsub.f32 %v1660, %v1106
  %v1663 = vadd.f32 %v1657, %v1661
  %v1664 = vadd.f32 %v1658, %v1662
  %1665 = vst.msk [vmem:[#allocation3] sm:$0xff] %vm40, %v1663
  %1666 = vst.msk [vmem:[#allocation3 + $0x8] sm:$0xff] %vm40, %v1664
  // Predicated region
  $region22: #{forward.13} parent=0 // pred_check
    %p1667 = pneg %p19
  $region23: #{forward.13} parent=0 // pred_check_branch
    %1669 = sbr.rel (%p1667) target = $region25
  $region24: #{forward.13} parent=0 // pred_region
    %v1670 = vld [vmem:[#allocation2] sm:$0xff]
    %v1671 = vld [vmem:[#allocation2 + $0x8] sm:$0xff]
    %1672 = vst.msk [vmem:[%s4] sm:$0xff] %vm40, %v1670
    %1673 = vst.msk [vmem:[%s4 + $0x8] sm:$0xff] %vm40, %v1671
    %v1674 = vld [vmem:[#allocation3] sm:$0xff]
    %v1675 = vld [vmem:[#allocation3 + $0x8] sm:$0xff]
    %1676 = vst.msk [vmem:[%s5] sm:$0xff] %vm40, %v1674
    %1677 = vst.msk [vmem:[%s5 + $0x8] sm:$0xff] %vm40, %v1675
  $region25: #{forward.13} parent=0 // pred_fallthru
    _
  // Predicated region
  $region26: #{forward.13} parent=0 // pred_check
    _
  $region27: #{forward.13} parent=0 // pred_check_branch
    %1679 = sbr.rel (0) target = $region29
  $region28: #{forward.13} parent=0 // pred_region
    _
  $region29: #{forward.13} parent=0 // pred_fallthru
    _
  // Predicated region
  $region30: #{forward.13} parent=0 // pred_check
    _
  $region31: #{forward.13} parent=0 // pred_check_branch
    %1681 = sbr.rel (0) target = $region33
  $region32: #{forward.13} parent=0 // pred_region
    _
  $region33: #{forward.13} parent=0 // pred_fallthru
    _
  // Predicated region
  $region34: #{forward.13} parent=0 // pred_check
    _
  $region35: #{forward.13} parent=0 // pred_check_branch
    %1683 = sbr.rel (0) target = $region37
  $region36: #{forward.13} parent=0 // pred_region
    _
  $region37: #{forward.13} parent=0 // pred_fallthru
    _
  // Predicated region
  $region38: #{forward.13} parent=0 // pred_check
    _
  $region39: #{forward.13} parent=0 // pred_check_branch
    %1685 = sbr.rel (0) target = $region41
  $region40: #{forward.13} parent=0 // pred_region
    _
  $region41: #{forward.13} parent=0 // pred_fallthru
    _

// kernel: custom-call.2
$region0: #{custom-call.2}
  %s0 = inlined_call_operand.vmem [shape: f32[2,8,32], index: 0, kind: input, shape index: {}]
  %s1 = inlined_call_operand.vmem [shape: f32[2,8,32], index: 1, kind: input, shape index: {}]
  %s2 = inlined_call_operand.hbm [shape: c64[2,8,32], index: 2, kind: output, shape index: {}]
  %s3 = scalar_lea.hbm %s2, 256
  $region1: #{custom-call.2} parent=0
    #allocation0 [shape = 's32[1]{0}', space=sflag, size = 0x4, scoped, tag = 'scoped memory for custom-call.2']
    %4 = vsyncpa [#allocation0], 0
    %s5 = sshll.u32 %s0, 4
    %s6 = int_to_ptr.vmem [resolvable:$true] %s5
    %8 = dma.vmem_to_hbm [thread:$0]  %s6, 256, %s2, [#allocation0]
    %9 = dma.done [#allocation0], 256
    %10 = vsyncpa [#allocation0], 1
  $region2: #{custom-call.2} parent=0
    #allocation1 [shape = 's32[1]{0}', space=sflag, size = 0x4, scoped, tag = 'scoped memory for custom-call.2']
    %11 = vsyncpa [#allocation1], 0
    %s12 = sshll.u32 %s1, 4
    %s13 = int_to_ptr.vmem [resolvable:$true] %s12
    %15 = dma.vmem_to_hbm [thread:$0]  %s13, 256, %s3, [#allocation1]
    %16 = dma.done [#allocation1], 256
    %17 = vsyncpa [#allocation1], 1

// kernel: forward.15
$region0: #{forward.15}
  #allocation0 [shape = 'u32[]', space=smem, size = 0x4, offset = 0x4, fixed_abs, tag = 'smem constant byte address 0x4 - core index']
  #allocation1 [shape = 'u32[144,128]{1,0:T(1,128)}', space=vmem, size = 0x12000, scoped, tag = 'internal scratch']
  #allocation2 [shape = 'f32[16,32]{1,0:T(8,128)}', space=vmem, size = 0x2000, scoped, tag = 'scratch operand']
  #allocation3 [shape = 'f32[16,32]{1,0:T(8,128)}', space=vmem, size = 0x2000, scoped, tag = 'scratch operand']
  %s0 = inlined_call_operand.vmem [shape: f32[16,32], index: 0, kind: input, shape index: {}]
  %s1 = inlined_call_operand.vmem [shape: f32[16,32], index: 1, kind: input, shape index: {}]
  %s2 = inlined_call_operand.vmem [shape: f32[32,32], index: 2, kind: input, shape index: {}]
  %s3 = inlined_call_operand.vmem [shape: f32[32,32], index: 3, kind: input, shape index: {}]
  %s4 = inlined_call_operand.vmem [shape: f32[1,32], index: 4, kind: input, shape index: {}]
  %s5 = inlined_call_operand.vmem [shape: f32[1,32], index: 5, kind: input, shape index: {}]
  %s6 = inlined_call_operand.vmem [shape: f32[16,32], index: 6, kind: input, shape index: {}]
  %s7 = inlined_call_operand.vmem [shape: f32[16,32], index: 7, kind: input, shape index: {}]
  %s8 = inlined_call_operand.vmem [shape: f32[16,32], index: 8, kind: output, shape index: {0}]
  %s9 = inlined_call_operand.vmem [shape: f32[16,32], index: 9, kind: output, shape index: {1}]
  %10 = xla_tuple %s8, %s9
  %s11 = sld [smem:[#allocation0]]
  $region58: #{forward.15} parent=0
    _
  %s13 = ssub.s32 1, %s11
  %s14 = scalar_select 0, %s13, %s11
  // Predicated region
  $region2: #{forward.15} parent=0 // pred_check
    _
  $region3: #{forward.15} parent=0 // pred_check_branch
    %16 = sbr.rel (0) target = $region5
  $region4: #{forward.15} parent=0 // pred_region
    _
  $region5: #{forward.15} parent=0 // pred_fallthru
    _
  // Predicated region
  $region6: #{forward.15} parent=0 // pred_check
    _
  $region7: #{forward.15} parent=0 // pred_check_branch
    %18 = sbr.rel (0) target = $region9
  $region8: #{forward.15} parent=0 // pred_region
    _
  $region9: #{forward.15} parent=0 // pred_fallthru
    _
  // Predicated region
  $region10: #{forward.15} parent=0 // pred_check
    _
  $region11: #{forward.15} parent=0 // pred_check_branch
    %20 = sbr.rel (0) target = $region13
  $region12: #{forward.15} parent=0 // pred_region
    _
  $region13: #{forward.15} parent=0 // pred_fallthru
    _
  // Predicated region
  $region14: #{forward.15} parent=0 // pred_check
    _
  $region15: #{forward.15} parent=0 // pred_check_branch
    %22 = sbr.rel (0) target = $region17
  $region16: #{forward.15} parent=0 // pred_region
    _
  $region17: #{forward.15} parent=0 // pred_fallthru
    _
  // Predicated region
  $region18: #{forward.15} parent=0 // pred_check
    _
  $region19: #{forward.15} parent=0 // pred_check_branch
    %24 = sbr.rel (0) target = $region21
  $region20: #{forward.15} parent=0 // pred_region
    _
  $region21: #{forward.15} parent=0 // pred_fallthru
    _
  // Predicated region
  $region22: #{forward.15} parent=0 // pred_check
    _
  $region23: #{forward.15} parent=0 // pred_check_branch
    %26 = sbr.rel (0) target = $region25
  $region24: #{forward.15} parent=0 // pred_region
    _
  $region25: #{forward.15} parent=0 // pred_fallthru
    _
  // Predicated region
  $region26: #{forward.15} parent=0 // pred_check
    _
  $region27: #{forward.15} parent=0 // pred_check_branch
    %28 = sbr.rel (0) target = $region29
  $region28: #{forward.15} parent=0 // pred_region
    _
  $region29: #{forward.15} parent=0 // pred_fallthru
    _
  // Predicated region
  $region30: #{forward.15} parent=0 // pred_check
    _
  $region31: #{forward.15} parent=0 // pred_check_branch
    %30 = sbr.rel (0) target = $region33
  $region32: #{forward.15} parent=0 // pred_region
    _
  $region33: #{forward.15} parent=0 // pred_fallthru
    _
  %p31 = scmp.eq.s32.totalorder 0, 0
  // Predicated region
  $region34: #{forward.15} parent=0 // pred_check
    %p32 = pneg %p31
  $region35: #{forward.15} parent=0 // pred_check_branch
    %34 = sbr.rel (%p32) target = $region37
  $region36: #{forward.15} parent=0 // pred_region
    %vm35 = vcmask 261120
    %36 = vst.msk [vmem:[#allocation2] sm:$0xff] %vm35, 0.0
    %37 = vst.msk [vmem:[#allocation2 + $0x8] sm:$0xff] %vm35, 0.0
    %38 = vst.msk [vmem:[#allocation3] sm:$0xff] %vm35, 0.0
    %39 = vst.msk [vmem:[#allocation3 + $0x8] sm:$0xff] %vm35, 0.0
  $region37: #{forward.15} parent=0 // pred_fallthru
    _
  %v40 = vld [vmem:[%s0] sm:$0xff]
  %v41 = vld [vmem:[%s0 + $0x8] sm:$0xff]
  %v42 = vld [vmem:[%s1] sm:$0xff]
  %v43 = vld [vmem:[%s1 + $0x8] sm:$0xff]
  %v44 = vld [vmem:[%s2] sm:$0xff]
  %v45 = vld [vmem:[%s2 + $0x8] sm:$0xff]
  %v46 = vld [vmem:[%s2 + $0x10] sm:$0xff]
  %v47 = vld [vmem:[%s2 + $0x18] sm:$0xff]
  %v48 = vld [vmem:[%s3] sm:$0xff]
  %v49 = vld [vmem:[%s3 + $0x8] sm:$0xff]
  %v50 = vld [vmem:[%s3 + $0x10] sm:$0xff]
  %v51 = vld [vmem:[%s3 + $0x18] sm:$0xff]
  %vm52 = vcmask 261120
  %v54 = vsel %vm52, %v40, 0
  %v57 = vsel %vm52, %v41, 0
  %59 = vmatprep.subr.mxu0 0.0
  %60 = vmatpush1.msra.mxu0 0.0
  %61 = vmatprep.subr.mxu0 0.0
  %62 = vmatpush1.msra.mxu0 0.0
  %63 = vmatprep.subr.mxu0 0.0
  %64 = vmatpush1.msra.mxu0 0.0
  %65 = vmatprep.subr.mxu0 0.0
  %66 = vmatpush1.msra.mxu0 0.0
  %67 = vmatprep.subr.mxu0 0.0
  %68 = vmatpush1.msra.mxu0 0.0
  %69 = vmatprep.subr.mxu0 0.0
  %70 = vmatpush1.msra.mxu0 0.0
  %71 = vmatprep.subr.mxu0 0.0
  %72 = vmatpush1.msra.mxu0 0.0
  %73 = vmatprep.subr.mxu0 0.0
  %74 = vmatpush1.msra.mxu0 0.0
  %75 = vmatprep.subr.mxu0 0.0
  %76 = vmatpush1.msra.mxu0 0.0
  %77 = vmatprep.subr.mxu0 0.0
  %78 = vmatpush1.msra.mxu0 0.0
  %79 = vmatprep.subr.mxu0 0.0
  %80 = vmatpush1.msra.mxu0 0.0
  %81 = vmatprep.subr.mxu0 0.0
  %82 = vmatpush1.msra.mxu0 0.0
  %83 = vmatprep.subr.mxu0 0.0
  %v84 = vand.u32 %v47, 4294901760
  %85 = vmatpush1.msra.mxu0 %v84
  %86 = vmatprep.subr.mxu0 0.0
  %v87 = vand.u32 %v46, 4294901760
  %88 = vmatpush1.msra.mxu0 %v87
  %89 = vmatprep.subr.mxu0 0.0
  %v90 = vand.u32 %v45, 4294901760
  %91 = vmatpush1.msra.mxu0 %v90
  %92 = vmatprep.subr.mxu0 0.0
  %v93 = vand.u32 %v44, 4294901760
  %94 = vmatpush1.msra.mxu0 %v93
  %95 = vmatprep.subr.mxu0 0.0
  %96 = vmatpush2.msra.mxu0 0.0
  %97 = vmatprep.subr.mxu0 0.0
  %98 = vmatpush2.msra.mxu0 0.0
  %99 = vmatprep.subr.mxu0 0.0
  %100 = vmatpush2.msra.mxu0 0.0
  %101 = vmatprep.subr.mxu0 0.0
  %102 = vmatpush2.msra.mxu0 0.0
  %103 = vmatprep.subr.mxu0 0.0
  %104 = vmatpush2.msra.mxu0 0.0
  %105 = vmatprep.subr.mxu0 0.0
  %106 = vmatpush2.msra.mxu0 0.0
  %107 = vmatprep.subr.mxu0 0.0
  %108 = vmatpush2.msra.mxu0 0.0
  %109 = vmatprep.subr.mxu0 0.0
  %110 = vmatpush2.msra.mxu0 0.0
  %111 = vmatprep.subr.mxu0 0.0
  %112 = vmatpush2.msra.mxu0 0.0
  %113 = vmatprep.subr.mxu0 0.0
  %114 = vmatpush2.msra.mxu0 0.0
  %115 = vmatprep.subr.mxu0 0.0
  %116 = vmatpush2.msra.mxu0 0.0
  %117 = vmatprep.subr.mxu0 0.0
  %118 = vmatpush2.msra.mxu0 0.0
  %119 = vmatprep.subr.mxu0 0.0
  %120 = vmatpush2.msra.mxu0 0.0
  %121 = vmatprep.subr.mxu0 0.0
  %122 = vmatpush2.msra.mxu0 0.0
  %123 = vmatprep.subr.mxu0 0.0
  %124 = vmatpush2.msra.mxu0 0.0
  %125 = vmatprep.subr.mxu0 0.0
  %126 = vmatpush2.msra.mxu0 0.0
  %127 = vmatprep.mubr.f32.mxu0 0.0
  %v128 = vand.u32 %v54, 4294901760
  %v129 = vsub.f32 %v54, %v128
  %v130 = vand.u32 %v129, 4294901760
  %v131 = vsub.f32 %v129, %v130
  %v132 = vand.u32 %v131, 4294901760
  %133 = vmatmul.mubr.f32.gmra.mxu0 %v132
  %v134 = vpop.f32.mrf.mxu0
  %v135 = vadd.f32 0.0, %v134
  %v136 = vpop.f32.mrf.mxu0
  %137 = vmatprep.mubr.f32.mxu0 0.0
  %v138 = vand.u32 %v57, 4294901760
  %v139 = vsub.f32 %v57, %v138
  %v140 = vand.u32 %v139, 4294901760
  %v141 = vsub.f32 %v139, %v140
  %v142 = vand.u32 %v141, 4294901760
  %143 = vmatmul.mubr.f32.gmra.mxu0 %v142
  %v144 = vpop.f32.mrf.mxu0
  %v145 = vadd.f32 0.0, %v144
  %v146 = vpop.f32.mrf.mxu0
  %147 = vdwg.mxu0
  %148 = vmatprep.subr.mxu0 0.0
  %149 = vmatpush1.msra.mxu0 0.0
  %150 = vmatprep.subr.mxu0 0.0
  %151 = vmatpush1.msra.mxu0 0.0
  %152 = vmatprep.subr.mxu0 0.0
  %153 = vmatpush1.msra.mxu0 0.0
  %154 = vmatprep.subr.mxu0 0.0
  %155 = vmatpush1.msra.mxu0 0.0
  %156 = vmatprep.subr.mxu0 0.0
  %157 = vmatpush1.msra.mxu0 0.0
  %158 = vmatprep.subr.mxu0 0.0
  %159 = vmatpush1.msra.mxu0 0.0
  %160 = vmatprep.subr.mxu0 0.0
  %161 = vmatpush1.msra.mxu0 0.0
  %162 = vmatprep.subr.mxu0 0.0
  %163 = vmatpush1.msra.mxu0 0.0
  %164 = vmatprep.subr.mxu0 0.0
  %165 = vmatpush1.msra.mxu0 0.0
  %166 = vmatprep.subr.mxu0 0.0
  %167 = vmatpush1.msra.mxu0 0.0
  %168 = vmatprep.subr.mxu0 0.0
  %169 = vmatpush1.msra.mxu0 0.0
  %170 = vmatprep.subr.mxu0 0.0
  %171 = vmatpush1.msra.mxu0 0.0
  %172 = vmatprep.subr.mxu0 0.0
  %v173 = vand.u32 %v47, 4294901760
  %v174 = vsub.f32 %v47, %v173
  %v175 = vand.u32 %v174, 4294901760
  %v176 = vsub.f32 %v174, %v175
  %v177 = vand.u32 %v176, 4294901760
  %178 = vmatpush1.msra.mxu0 %v177
  %179 = vmatprep.subr.mxu0 0.0
  %v180 = vand.u32 %v46, 4294901760
  %v181 = vsub.f32 %v46, %v180
  %v182 = vand.u32 %v181, 4294901760
  %v183 = vsub.f32 %v181, %v182
  %v184 = vand.u32 %v183, 4294901760
  %185 = vmatpush1.msra.mxu0 %v184
  %186 = vmatprep.subr.mxu0 0.0
  %v187 = vand.u32 %v45, 4294901760
  %v188 = vsub.f32 %v45, %v187
  %v189 = vand.u32 %v188, 4294901760
  %v190 = vsub.f32 %v188, %v189
  %v191 = vand.u32 %v190, 4294901760
  %192 = vmatpush1.msra.mxu0 %v191
  %193 = vmatprep.subr.mxu0 0.0
  %v194 = vand.u32 %v44, 4294901760
  %v195 = vsub.f32 %v44, %v194
  %v196 = vand.u32 %v195, 4294901760
  %v197 = vsub.f32 %v195, %v196
  %v198 = vand.u32 %v197, 4294901760
  %199 = vmatpush1.msra.mxu0 %v198
  %200 = vmatprep.subr.mxu0 0.0
  %201 = vmatpush2.msra.mxu0 0.0
  %202 = vmatprep.subr.mxu0 0.0
  %203 = vmatpush2.msra.mxu0 0.0
  %204 = vmatprep.subr.mxu0 0.0
  %205 = vmatpush2.msra.mxu0 0.0
  %206 = vmatprep.subr.mxu0 0.0
  %207 = vmatpush2.msra.mxu0 0.0
  %208 = vmatprep.subr.mxu0 0.0
  %209 = vmatpush2.msra.mxu0 0.0
  %210 = vmatprep.subr.mxu0 0.0
  %211 = vmatpush2.msra.mxu0 0.0
  %212 = vmatprep.subr.mxu0 0.0
  %213 = vmatpush2.msra.mxu0 0.0
  %214 = vmatprep.subr.mxu0 0.0
  %215 = vmatpush2.msra.mxu0 0.0
  %216 = vmatprep.subr.mxu0 0.0
  %217 = vmatpush2.msra.mxu0 0.0
  %218 = vmatprep.subr.mxu0 0.0
  %219 = vmatpush2.msra.mxu0 0.0
  %220 = vmatprep.subr.mxu0 0.0
  %221 = vmatpush2.msra.mxu0 0.0
  %222 = vmatprep.subr.mxu0 0.0
  %223 = vmatpush2.msra.mxu0 0.0
  %224 = vmatprep.subr.mxu0 0.0
  %225 = vmatpush2.msra.mxu0 0.0
  %226 = vmatprep.subr.mxu0 0.0
  %227 = vmatpush2.msra.mxu0 0.0
  %228 = vmatprep.subr.mxu0 0.0
  %229 = vmatpush2.msra.mxu0 0.0
  %230 = vmatprep.subr.mxu0 0.0
  %231 = vmatpush2.msra.mxu0 0.0
  %232 = vmatprep.mubr.f32.mxu0 0.0
  %v233 = vand.u32 %v54, 4294901760
  %234 = vmatmul.mubr.f32.gmra.mxu0 %v233
  %v235 = vpop.f32.mrf.mxu0
  %v236 = vadd.f32 %v135, %v235
  %v237 = vpop.f32.mrf.mxu0
  %238 = vmatprep.mubr.f32.mxu0 0.0
  %v239 = vand.u32 %v57, 4294901760
  %240 = vmatmul.mubr.f32.gmra.mxu0 %v239
  %v241 = vpop.f32.mrf.mxu0
  %v242 = vadd.f32 %v145, %v241
  %v243 = vpop.f32.mrf.mxu0
  %244 = vdwg.mxu0
  %245 = vmatprep.subr.mxu0 0.0
  %246 = vmatpush1.msra.mxu0 0.0
  %247 = vmatprep.subr.mxu0 0.0
  %248 = vmatpush1.msra.mxu0 0.0
  %249 = vmatprep.subr.mxu0 0.0
  %250 = vmatpush1.msra.mxu0 0.0
  %251 = vmatprep.subr.mxu0 0.0
  %252 = vmatpush1.msra.mxu0 0.0
  %253 = vmatprep.subr.mxu0 0.0
  %254 = vmatpush1.msra.mxu0 0.0
  %255 = vmatprep.subr.mxu0 0.0
  %256 = vmatpush1.msra.mxu0 0.0
  %257 = vmatprep.subr.mxu0 0.0
  %258 = vmatpush1.msra.mxu0 0.0
  %259 = vmatprep.subr.mxu0 0.0
  %260 = vmatpush1.msra.mxu0 0.0
  %261 = vmatprep.subr.mxu0 0.0
  %262 = vmatpush1.msra.mxu0 0.0
  %263 = vmatprep.subr.mxu0 0.0
  %264 = vmatpush1.msra.mxu0 0.0
  %265 = vmatprep.subr.mxu0 0.0
  %266 = vmatpush1.msra.mxu0 0.0
  %267 = vmatprep.subr.mxu0 0.0
  %268 = vmatpush1.msra.mxu0 0.0
  %269 = vmatprep.subr.mxu0 0.0
  %v270 = vand.u32 %v47, 4294901760
  %v271 = vsub.f32 %v47, %v270
  %272 = vmatpush1.msra.mxu0 %v271
  %273 = vmatprep.subr.mxu0 0.0
  %v274 = vand.u32 %v46, 4294901760
  %v275 = vsub.f32 %v46, %v274
  %276 = vmatpush1.msra.mxu0 %v275
  %277 = vmatprep.subr.mxu0 0.0
  %v278 = vand.u32 %v45, 4294901760
  %v279 = vsub.f32 %v45, %v278
  %280 = vmatpush1.msra.mxu0 %v279
  %281 = vmatprep.subr.mxu0 0.0
  %v282 = vand.u32 %v44, 4294901760
  %v283 = vsub.f32 %v44, %v282
  %284 = vmatpush1.msra.mxu0 %v283
  %285 = vmatprep.subr.mxu0 0.0
  %286 = vmatpush2.msra.mxu0 0.0
  %287 = vmatprep.subr.mxu0 0.0
  %288 = vmatpush2.msra.mxu0 0.0
  %289 = vmatprep.subr.mxu0 0.0
  %290 = vmatpush2.msra.mxu0 0.0
  %291 = vmatprep.subr.mxu0 0.0
  %292 = vmatpush2.msra.mxu0 0.0
  %293 = vmatprep.subr.mxu0 0.0
  %294 = vmatpush2.msra.mxu0 0.0
  %295 = vmatprep.subr.mxu0 0.0
  %296 = vmatpush2.msra.mxu0 0.0
  %297 = vmatprep.subr.mxu0 0.0
  %298 = vmatpush2.msra.mxu0 0.0
  %299 = vmatprep.subr.mxu0 0.0
  %300 = vmatpush2.msra.mxu0 0.0
  %301 = vmatprep.subr.mxu0 0.0
  %302 = vmatpush2.msra.mxu0 0.0
  %303 = vmatprep.subr.mxu0 0.0
  %304 = vmatpush2.msra.mxu0 0.0
  %305 = vmatprep.subr.mxu0 0.0
  %306 = vmatpush2.msra.mxu0 0.0
  %307 = vmatprep.subr.mxu0 0.0
  %308 = vmatpush2.msra.mxu0 0.0
  %309 = vmatprep.subr.mxu0 0.0
  %310 = vmatpush2.msra.mxu0 0.0
  %311 = vmatprep.subr.mxu0 0.0
  %312 = vmatpush2.msra.mxu0 0.0
  %313 = vmatprep.subr.mxu0 0.0
  %314 = vmatpush2.msra.mxu0 0.0
  %315 = vmatprep.subr.mxu0 0.0
  %316 = vmatpush2.msra.mxu0 0.0
  %317 = vmatprep.mubr.f32.mxu0 0.0
  %v318 = vand.u32 %v54, 4294901760
  %v319 = vsub.f32 %v54, %v318
  %320 = vmatmul.mubr.f32.gmra.mxu0 %v319
  %v321 = vpop.f32.mrf.mxu0
  %v322 = vadd.f32 %v236, %v321
  %v323 = vpop.f32.mrf.mxu0
  %324 = vmatprep.mubr.f32.mxu0 0.0
  %v325 = vand.u32 %v57, 4294901760
  %v326 = vsub.f32 %v57, %v325
  %327 = vmatmul.mubr.f32.gmra.mxu0 %v326
  %v328 = vpop.f32.mrf.mxu0
  %v329 = vadd.f32 %v242, %v328
  %v330 = vpop.f32.mrf.mxu0
  %331 = vdwg.mxu0
  %332 = vmatprep.subr.mxu0 0.0
  %333 = vmatpush1.msra.mxu0 0.0
  %334 = vmatprep.subr.mxu0 0.0
  %335 = vmatpush1.msra.mxu0 0.0
  %336 = vmatprep.subr.mxu0 0.0
  %337 = vmatpush1.msra.mxu0 0.0
  %338 = vmatprep.subr.mxu0 0.0
  %339 = vmatpush1.msra.mxu0 0.0
  %340 = vmatprep.subr.mxu0 0.0
  %341 = vmatpush1.msra.mxu0 0.0
  %342 = vmatprep.subr.mxu0 0.0
  %343 = vmatpush1.msra.mxu0 0.0
  %344 = vmatprep.subr.mxu0 0.0
  %345 = vmatpush1.msra.mxu0 0.0
  %346 = vmatprep.subr.mxu0 0.0
  %347 = vmatpush1.msra.mxu0 0.0
  %348 = vmatprep.subr.mxu0 0.0
  %349 = vmatpush1.msra.mxu0 0.0
  %350 = vmatprep.subr.mxu0 0.0
  %351 = vmatpush1.msra.mxu0 0.0
  %352 = vmatprep.subr.mxu0 0.0
  %353 = vmatpush1.msra.mxu0 0.0
  %354 = vmatprep.subr.mxu0 0.0
  %355 = vmatpush1.msra.mxu0 0.0
  %356 = vmatprep.subr.mxu0 0.0
  %v357 = vand.u32 %v47, 4294901760
  %358 = vmatpush1.msra.mxu0 %v357
  %359 = vmatprep.subr.mxu0 0.0
  %v360 = vand.u32 %v46, 4294901760
  %361 = vmatpush1.msra.mxu0 %v360
  %362 = vmatprep.subr.mxu0 0.0
  %v363 = vand.u32 %v45, 4294901760
  %364 = vmatpush1.msra.mxu0 %v363
  %365 = vmatprep.subr.mxu0 0.0
  %v366 = vand.u32 %v44, 4294901760
  %367 = vmatpush1.msra.mxu0 %v366
  %368 = vmatprep.subr.mxu0 0.0
  %369 = vmatpush2.msra.mxu0 0.0
  %370 = vmatprep.subr.mxu0 0.0
  %371 = vmatpush2.msra.mxu0 0.0
  %372 = vmatprep.subr.mxu0 0.0
  %373 = vmatpush2.msra.mxu0 0.0
  %374 = vmatprep.subr.mxu0 0.0
  %375 = vmatpush2.msra.mxu0 0.0
  %376 = vmatprep.subr.mxu0 0.0
  %377 = vmatpush2.msra.mxu0 0.0
  %378 = vmatprep.subr.mxu0 0.0
  %379 = vmatpush2.msra.mxu0 0.0
  %380 = vmatprep.subr.mxu0 0.0
  %381 = vmatpush2.msra.mxu0 0.0
  %382 = vmatprep.subr.mxu0 0.0
  %383 = vmatpush2.msra.mxu0 0.0
  %384 = vmatprep.subr.mxu0 0.0
  %385 = vmatpush2.msra.mxu0 0.0
  %386 = vmatprep.subr.mxu0 0.0
  %387 = vmatpush2.msra.mxu0 0.0
  %388 = vmatprep.subr.mxu0 0.0
  %389 = vmatpush2.msra.mxu0 0.0
  %390 = vmatprep.subr.mxu0 0.0
  %391 = vmatpush2.msra.mxu0 0.0
  %392 = vmatprep.subr.mxu0 0.0
  %393 = vmatpush2.msra.mxu0 0.0
  %394 = vmatprep.subr.mxu0 0.0
  %395 = vmatpush2.msra.mxu0 0.0
  %396 = vmatprep.subr.mxu0 0.0
  %397 = vmatpush2.msra.mxu0 0.0
  %398 = vmatprep.subr.mxu0 0.0
  %399 = vmatpush2.msra.mxu0 0.0
  %400 = vmatprep.mubr.f32.mxu0 0.0
  %v401 = vand.u32 %v54, 4294901760
  %v402 = vsub.f32 %v54, %v401
  %v403 = vand.u32 %v402, 4294901760
  %404 = vmatmul.mubr.f32.gmra.mxu0 %v403
  %v405 = vpop.f32.mrf.mxu0
  %v406 = vadd.f32 %v322, %v405
  %v407 = vpop.f32.mrf.mxu0
  %408 = vmatprep.mubr.f32.mxu0 0.0
  %v409 = vand.u32 %v57, 4294901760
  %v410 = vsub.f32 %v57, %v409
  %v411 = vand.u32 %v410, 4294901760
  %412 = vmatmul.mubr.f32.gmra.mxu0 %v411
  %v413 = vpop.f32.mrf.mxu0
  %v414 = vadd.f32 %v329, %v413
  %v415 = vpop.f32.mrf.mxu0
  %416 = vdwg.mxu0
  %417 = vmatprep.subr.mxu0 0.0
  %418 = vmatpush1.msra.mxu0 0.0
  %419 = vmatprep.subr.mxu0 0.0
  %420 = vmatpush1.msra.mxu0 0.0
  %421 = vmatprep.subr.mxu0 0.0
  %422 = vmatpush1.msra.mxu0 0.0
  %423 = vmatprep.subr.mxu0 0.0
  %424 = vmatpush1.msra.mxu0 0.0
  %425 = vmatprep.subr.mxu0 0.0
  %426 = vmatpush1.msra.mxu0 0.0
  %427 = vmatprep.subr.mxu0 0.0
  %428 = vmatpush1.msra.mxu0 0.0
  %429 = vmatprep.subr.mxu0 0.0
  %430 = vmatpush1.msra.mxu0 0.0
  %431 = vmatprep.subr.mxu0 0.0
  %432 = vmatpush1.msra.mxu0 0.0
  %433 = vmatprep.subr.mxu0 0.0
  %434 = vmatpush1.msra.mxu0 0.0
  %435 = vmatprep.subr.mxu0 0.0
  %436 = vmatpush1.msra.mxu0 0.0
  %437 = vmatprep.subr.mxu0 0.0
  %438 = vmatpush1.msra.mxu0 0.0
  %439 = vmatprep.subr.mxu0 0.0
  %440 = vmatpush1.msra.mxu0 0.0
  %441 = vmatprep.subr.mxu0 0.0
  %v442 = vand.u32 %v47, 4294901760
  %v443 = vsub.f32 %v47, %v442
  %v444 = vand.u32 %v443, 4294901760
  %445 = vmatpush1.msra.mxu0 %v444
  %446 = vmatprep.subr.mxu0 0.0
  %v447 = vand.u32 %v46, 4294901760
  %v448 = vsub.f32 %v46, %v447
  %v449 = vand.u32 %v448, 4294901760
  %450 = vmatpush1.msra.mxu0 %v449
  %451 = vmatprep.subr.mxu0 0.0
  %v452 = vand.u32 %v45, 4294901760
  %v453 = vsub.f32 %v45, %v452
  %v454 = vand.u32 %v453, 4294901760
  %455 = vmatpush1.msra.mxu0 %v454
  %456 = vmatprep.subr.mxu0 0.0
  %v457 = vand.u32 %v44, 4294901760
  %v458 = vsub.f32 %v44, %v457
  %v459 = vand.u32 %v458, 4294901760
  %460 = vmatpush1.msra.mxu0 %v459
  %461 = vmatprep.subr.mxu0 0.0
  %462 = vmatpush2.msra.mxu0 0.0
  %463 = vmatprep.subr.mxu0 0.0
  %464 = vmatpush2.msra.mxu0 0.0
  %465 = vmatprep.subr.mxu0 0.0
  %466 = vmatpush2.msra.mxu0 0.0
  %467 = vmatprep.subr.mxu0 0.0
  %468 = vmatpush2.msra.mxu0 0.0
  %469 = vmatprep.subr.mxu0 0.0
  %470 = vmatpush2.msra.mxu0 0.0
  %471 = vmatprep.subr.mxu0 0.0
  %472 = vmatpush2.msra.mxu0 0.0
  %473 = vmatprep.subr.mxu0 0.0
  %474 = vmatpush2.msra.mxu0 0.0
  %475 = vmatprep.subr.mxu0 0.0
  %476 = vmatpush2.msra.mxu0 0.0
  %477 = vmatprep.subr.mxu0 0.0
  %478 = vmatpush2.msra.mxu0 0.0
  %479 = vmatprep.subr.mxu0 0.0
  %480 = vmatpush2.msra.mxu0 0.0
  %481 = vmatprep.subr.mxu0 0.0
  %482 = vmatpush2.msra.mxu0 0.0
  %483 = vmatprep.subr.mxu0 0.0
  %484 = vmatpush2.msra.mxu0 0.0
  %485 = vmatprep.subr.mxu0 0.0
  %486 = vmatpush2.msra.mxu0 0.0
  %487 = vmatprep.subr.mxu0 0.0
  %488 = vmatpush2.msra.mxu0 0.0
  %489 = vmatprep.subr.mxu0 0.0
  %490 = vmatpush2.msra.mxu0 0.0
  %491 = vmatprep.subr.mxu0 0.0
  %492 = vmatpush2.msra.mxu0 0.0
  %493 = vmatprep.mubr.f32.mxu0 0.0
  %v494 = vand.u32 %v54, 4294901760
  %495 = vmatmul.mubr.f32.gmra.mxu0 %v494
  %v496 = vpop.f32.mrf.mxu0
  %v497 = vadd.f32 %v406, %v496
  %v498 = vpop.f32.mrf.mxu0
  %499 = vmatprep.mubr.f32.mxu0 0.0
  %v500 = vand.u32 %v57, 4294901760
  %501 = vmatmul.mubr.f32.gmra.mxu0 %v500
  %v502 = vpop.f32.mrf.mxu0
  %v503 = vadd.f32 %v414, %v502
  %v504 = vpop.f32.mrf.mxu0
  %505 = vdwg.mxu0
  %506 = vmatprep.subr.mxu0 0.0
  %507 = vmatpush1.msra.mxu0 0.0
  %508 = vmatprep.subr.mxu0 0.0
  %509 = vmatpush1.msra.mxu0 0.0
  %510 = vmatprep.subr.mxu0 0.0
  %511 = vmatpush1.msra.mxu0 0.0
  %512 = vmatprep.subr.mxu0 0.0
  %513 = vmatpush1.msra.mxu0 0.0
  %514 = vmatprep.subr.mxu0 0.0
  %515 = vmatpush1.msra.mxu0 0.0
  %516 = vmatprep.subr.mxu0 0.0
  %517 = vmatpush1.msra.mxu0 0.0
  %518 = vmatprep.subr.mxu0 0.0
  %519 = vmatpush1.msra.mxu0 0.0
  %520 = vmatprep.subr.mxu0 0.0
  %521 = vmatpush1.msra.mxu0 0.0
  %522 = vmatprep.subr.mxu0 0.0
  %523 = vmatpush1.msra.mxu0 0.0
  %524 = vmatprep.subr.mxu0 0.0
  %525 = vmatpush1.msra.mxu0 0.0
  %526 = vmatprep.subr.mxu0 0.0
  %527 = vmatpush1.msra.mxu0 0.0
  %528 = vmatprep.subr.mxu0 0.0
  %529 = vmatpush1.msra.mxu0 0.0
  %530 = vmatprep.subr.mxu0 0.0
  %v531 = vand.u32 %v47, 4294901760
  %532 = vmatpush1.msra.mxu0 %v531
  %533 = vmatprep.subr.mxu0 0.0
  %v534 = vand.u32 %v46, 4294901760
  %535 = vmatpush1.msra.mxu0 %v534
  %536 = vmatprep.subr.mxu0 0.0
  %v537 = vand.u32 %v45, 4294901760
  %538 = vmatpush1.msra.mxu0 %v537
  %539 = vmatprep.subr.mxu0 0.0
  %v540 = vand.u32 %v44, 4294901760
  %541 = vmatpush1.msra.mxu0 %v540
  %542 = vmatprep.subr.mxu0 0.0
  %543 = vmatpush2.msra.mxu0 0.0
  %544 = vmatprep.subr.mxu0 0.0
  %545 = vmatpush2.msra.mxu0 0.0
  %546 = vmatprep.subr.mxu0 0.0
  %547 = vmatpush2.msra.mxu0 0.0
  %548 = vmatprep.subr.mxu0 0.0
  %549 = vmatpush2.msra.mxu0 0.0
  %550 = vmatprep.subr.mxu0 0.0
  %551 = vmatpush2.msra.mxu0 0.0
  %552 = vmatprep.subr.mxu0 0.0
  %553 = vmatpush2.msra.mxu0 0.0
  %554 = vmatprep.subr.mxu0 0.0
  %555 = vmatpush2.msra.mxu0 0.0
  %556 = vmatprep.subr.mxu0 0.0
  %557 = vmatpush2.msra.mxu0 0.0
  %558 = vmatprep.subr.mxu0 0.0
  %559 = vmatpush2.msra.mxu0 0.0
  %560 = vmatprep.subr.mxu0 0.0
  %561 = vmatpush2.msra.mxu0 0.0
  %562 = vmatprep.subr.mxu0 0.0
  %563 = vmatpush2.msra.mxu0 0.0
  %564 = vmatprep.subr.mxu0 0.0
  %565 = vmatpush2.msra.mxu0 0.0
  %566 = vmatprep.subr.mxu0 0.0
  %567 = vmatpush2.msra.mxu0 0.0
  %568 = vmatprep.subr.mxu0 0.0
  %569 = vmatpush2.msra.mxu0 0.0
  %570 = vmatprep.subr.mxu0 0.0
  %571 = vmatpush2.msra.mxu0 0.0
  %572 = vmatprep.subr.mxu0 0.0
  %573 = vmatpush2.msra.mxu0 0.0
  %574 = vmatprep.mubr.f32.mxu0 0.0
  %v575 = vand.u32 %v54, 4294901760
  %576 = vmatmul.mubr.f32.gmra.mxu0 %v575
  %v577 = vpop.f32.mrf.mxu0
  %v578 = vadd.f32 %v497, %v577
  %v579 = vpop.f32.mrf.mxu0
  %580 = vmatprep.mubr.f32.mxu0 0.0
  %v581 = vand.u32 %v57, 4294901760
  %582 = vmatmul.mubr.f32.gmra.mxu0 %v581
  %v583 = vpop.f32.mrf.mxu0
  %v584 = vadd.f32 %v503, %v583
  %v585 = vpop.f32.mrf.mxu0
  %586 = vdwg.mxu0
  %v588 = vsel %vm52, %v42, 0
  %v591 = vsel %vm52, %v43, 0
  %593 = vmatprep.subr.mxu0 0.0
  %594 = vmatpush1.msra.mxu0 0.0
  %595 = vmatprep.subr.mxu0 0.0
  %596 = vmatpush1.msra.mxu0 0.0
  %597 = vmatprep.subr.mxu0 0.0
  %598 = vmatpush1.msra.mxu0 0.0
  %599 = vmatprep.subr.mxu0 0.0
  %600 = vmatpush1.msra.mxu0 0.0
  %601 = vmatprep.subr.mxu0 0.0
  %602 = vmatpush1.msra.mxu0 0.0
  %603 = vmatprep.subr.mxu0 0.0
  %604 = vmatpush1.msra.mxu0 0.0
  %605 = vmatprep.subr.mxu0 0.0
  %606 = vmatpush1.msra.mxu0 0.0
  %607 = vmatprep.subr.mxu0 0.0
  %608 = vmatpush1.msra.mxu0 0.0
  %609 = vmatprep.subr.mxu0 0.0
  %610 = vmatpush1.msra.mxu0 0.0
  %611 = vmatprep.subr.mxu0 0.0
  %612 = vmatpush1.msra.mxu0 0.0
  %613 = vmatprep.subr.mxu0 0.0
  %614 = vmatpush1.msra.mxu0 0.0
  %615 = vmatprep.subr.mxu0 0.0
  %616 = vmatpush1.msra.mxu0 0.0
  %617 = vmatprep.subr.mxu0 0.0
  %v618 = vand.u32 %v51, 4294901760
  %619 = vmatpush1.msra.mxu0 %v618
  %620 = vmatprep.subr.mxu0 0.0
  %v621 = vand.u32 %v50, 4294901760
  %622 = vmatpush1.msra.mxu0 %v621
  %623 = vmatprep.subr.mxu0 0.0
  %v624 = vand.u32 %v49, 4294901760
  %625 = vmatpush1.msra.mxu0 %v624
  %626 = vmatprep.subr.mxu0 0.0
  %v627 = vand.u32 %v48, 4294901760
  %628 = vmatpush1.msra.mxu0 %v627
  %629 = vmatprep.subr.mxu0 0.0
  %630 = vmatpush2.msra.mxu0 0.0
  %631 = vmatprep.subr.mxu0 0.0
  %632 = vmatpush2.msra.mxu0 0.0
  %633 = vmatprep.subr.mxu0 0.0
  %634 = vmatpush2.msra.mxu0 0.0
  %635 = vmatprep.subr.mxu0 0.0
  %636 = vmatpush2.msra.mxu0 0.0
  %637 = vmatprep.subr.mxu0 0.0
  %638 = vmatpush2.msra.mxu0 0.0
  %639 = vmatprep.subr.mxu0 0.0
  %640 = vmatpush2.msra.mxu0 0.0
  %641 = vmatprep.subr.mxu0 0.0
  %642 = vmatpush2.msra.mxu0 0.0
  %643 = vmatprep.subr.mxu0 0.0
  %644 = vmatpush2.msra.mxu0 0.0
  %645 = vmatprep.subr.mxu0 0.0
  %646 = vmatpush2.msra.mxu0 0.0
  %647 = vmatprep.subr.mxu0 0.0
  %648 = vmatpush2.msra.mxu0 0.0
  %649 = vmatprep.subr.mxu0 0.0
  %650 = vmatpush2.msra.mxu0 0.0
  %651 = vmatprep.subr.mxu0 0.0
  %652 = vmatpush2.msra.mxu0 0.0
  %653 = vmatprep.subr.mxu0 0.0
  %654 = vmatpush2.msra.mxu0 0.0
  %655 = vmatprep.subr.mxu0 0.0
  %656 = vmatpush2.msra.mxu0 0.0
  %657 = vmatprep.subr.mxu0 0.0
  %658 = vmatpush2.msra.mxu0 0.0
  %659 = vmatprep.subr.mxu0 0.0
  %660 = vmatpush2.msra.mxu0 0.0
  %661 = vmatprep.mubr.f32.mxu0 0.0
  %v662 = vand.u32 %v588, 4294901760
  %v663 = vsub.f32 %v588, %v662
  %v664 = vand.u32 %v663, 4294901760
  %v665 = vsub.f32 %v663, %v664
  %v666 = vand.u32 %v665, 4294901760
  %667 = vmatmul.mubr.f32.gmra.mxu0 %v666
  %v668 = vpop.f32.mrf.mxu0
  %v669 = vadd.f32 0.0, %v668
  %v670 = vpop.f32.mrf.mxu0
  %671 = vmatprep.mubr.f32.mxu0 0.0
  %v672 = vand.u32 %v591, 4294901760
  %v673 = vsub.f32 %v591, %v672
  %v674 = vand.u32 %v673, 4294901760
  %v675 = vsub.f32 %v673, %v674
  %v676 = vand.u32 %v675, 4294901760
  %677 = vmatmul.mubr.f32.gmra.mxu0 %v676
  %v678 = vpop.f32.mrf.mxu0
  %v679 = vadd.f32 0.0, %v678
  %v680 = vpop.f32.mrf.mxu0
  %681 = vdwg.mxu0
  %682 = vmatprep.subr.mxu0 0.0
  %683 = vmatpush1.msra.mxu0 0.0
  %684 = vmatprep.subr.mxu0 0.0
  %685 = vmatpush1.msra.mxu0 0.0
  %686 = vmatprep.subr.mxu0 0.0
  %687 = vmatpush1.msra.mxu0 0.0
  %688 = vmatprep.subr.mxu0 0.0
  %689 = vmatpush1.msra.mxu0 0.0
  %690 = vmatprep.subr.mxu0 0.0
  %691 = vmatpush1.msra.mxu0 0.0
  %692 = vmatprep.subr.mxu0 0.0
  %693 = vmatpush1.msra.mxu0 0.0
  %694 = vmatprep.subr.mxu0 0.0
  %695 = vmatpush1.msra.mxu0 0.0
  %696 = vmatprep.subr.mxu0 0.0
  %697 = vmatpush1.msra.mxu0 0.0
  %698 = vmatprep.subr.mxu0 0.0
  %699 = vmatpush1.msra.mxu0 0.0
  %700 = vmatprep.subr.mxu0 0.0
  %701 = vmatpush1.msra.mxu0 0.0
  %702 = vmatprep.subr.mxu0 0.0
  %703 = vmatpush1.msra.mxu0 0.0
  %704 = vmatprep.subr.mxu0 0.0
  %705 = vmatpush1.msra.mxu0 0.0
  %706 = vmatprep.subr.mxu0 0.0
  %v707 = vand.u32 %v51, 4294901760
  %v708 = vsub.f32 %v51, %v707
  %v709 = vand.u32 %v708, 4294901760
  %v710 = vsub.f32 %v708, %v709
  %v711 = vand.u32 %v710, 4294901760
  %712 = vmatpush1.msra.mxu0 %v711
  %713 = vmatprep.subr.mxu0 0.0
  %v714 = vand.u32 %v50, 4294901760
  %v715 = vsub.f32 %v50, %v714
  %v716 = vand.u32 %v715, 4294901760
  %v717 = vsub.f32 %v715, %v716
  %v718 = vand.u32 %v717, 4294901760
  %719 = vmatpush1.msra.mxu0 %v718
  %720 = vmatprep.subr.mxu0 0.0
  %v721 = vand.u32 %v49, 4294901760
  %v722 = vsub.f32 %v49, %v721
  %v723 = vand.u32 %v722, 4294901760
  %v724 = vsub.f32 %v722, %v723
  %v725 = vand.u32 %v724, 4294901760
  %726 = vmatpush1.msra.mxu0 %v725
  %727 = vmatprep.subr.mxu0 0.0
  %v728 = vand.u32 %v48, 4294901760
  %v729 = vsub.f32 %v48, %v728
  %v730 = vand.u32 %v729, 4294901760
  %v731 = vsub.f32 %v729, %v730
  %v732 = vand.u32 %v731, 4294901760
  %733 = vmatpush1.msra.mxu0 %v732
  %734 = vmatprep.subr.mxu0 0.0
  %735 = vmatpush2.msra.mxu0 0.0
  %736 = vmatprep.subr.mxu0 0.0
  %737 = vmatpush2.msra.mxu0 0.0
  %738 = vmatprep.subr.mxu0 0.0
  %739 = vmatpush2.msra.mxu0 0.0
  %740 = vmatprep.subr.mxu0 0.0
  %741 = vmatpush2.msra.mxu0 0.0
  %742 = vmatprep.subr.mxu0 0.0
  %743 = vmatpush2.msra.mxu0 0.0
  %744 = vmatprep.subr.mxu0 0.0
  %745 = vmatpush2.msra.mxu0 0.0
  %746 = vmatprep.subr.mxu0 0.0
  %747 = vmatpush2.msra.mxu0 0.0
  %748 = vmatprep.subr.mxu0 0.0
  %749 = vmatpush2.msra.mxu0 0.0
  %750 = vmatprep.subr.mxu0 0.0
  %751 = vmatpush2.msra.mxu0 0.0
  %752 = vmatprep.subr.mxu0 0.0
  %753 = vmatpush2.msra.mxu0 0.0
  %754 = vmatprep.subr.mxu0 0.0
  %755 = vmatpush2.msra.mxu0 0.0
  %756 = vmatprep.subr.mxu0 0.0
  %757 = vmatpush2.msra.mxu0 0.0
  %758 = vmatprep.subr.mxu0 0.0
  %759 = vmatpush2.msra.mxu0 0.0
  %760 = vmatprep.subr.mxu0 0.0
  %761 = vmatpush2.msra.mxu0 0.0
  %762 = vmatprep.subr.mxu0 0.0
  %763 = vmatpush2.msra.mxu0 0.0
  %764 = vmatprep.subr.mxu0 0.0
  %765 = vmatpush2.msra.mxu0 0.0
  %766 = vmatprep.mubr.f32.mxu0 0.0
  %v767 = vand.u32 %v588, 4294901760
  %768 = vmatmul.mubr.f32.gmra.mxu0 %v767
  %v769 = vpop.f32.mrf.mxu0
  %v770 = vadd.f32 %v669, %v769
  %v771 = vpop.f32.mrf.mxu0
  %772 = vmatprep.mubr.f32.mxu0 0.0
  %v773 = vand.u32 %v591, 4294901760
  %774 = vmatmul.mubr.f32.gmra.mxu0 %v773
  %v775 = vpop.f32.mrf.mxu0
  %v776 = vadd.f32 %v679, %v775
  %v777 = vpop.f32.mrf.mxu0
  %778 = vdwg.mxu0
  %779 = vmatprep.subr.mxu0 0.0
  %780 = vmatpush1.msra.mxu0 0.0
  %781 = vmatprep.subr.mxu0 0.0
  %782 = vmatpush1.msra.mxu0 0.0
  %783 = vmatprep.subr.mxu0 0.0
  %784 = vmatpush1.msra.mxu0 0.0
  %785 = vmatprep.subr.mxu0 0.0
  %786 = vmatpush1.msra.mxu0 0.0
  %787 = vmatprep.subr.mxu0 0.0
  %788 = vmatpush1.msra.mxu0 0.0
  %789 = vmatprep.subr.mxu0 0.0
  %790 = vmatpush1.msra.mxu0 0.0
  %791 = vmatprep.subr.mxu0 0.0
  %792 = vmatpush1.msra.mxu0 0.0
  %793 = vmatprep.subr.mxu0 0.0
  %794 = vmatpush1.msra.mxu0 0.0
  %795 = vmatprep.subr.mxu0 0.0
  %796 = vmatpush1.msra.mxu0 0.0
  %797 = vmatprep.subr.mxu0 0.0
  %798 = vmatpush1.msra.mxu0 0.0
  %799 = vmatprep.subr.mxu0 0.0
  %800 = vmatpush1.msra.mxu0 0.0
  %801 = vmatprep.subr.mxu0 0.0
  %802 = vmatpush1.msra.mxu0 0.0
  %803 = vmatprep.subr.mxu0 0.0
  %v804 = vand.u32 %v51, 4294901760
  %v805 = vsub.f32 %v51, %v804
  %806 = vmatpush1.msra.mxu0 %v805
  %807 = vmatprep.subr.mxu0 0.0
  %v808 = vand.u32 %v50, 4294901760
  %v809 = vsub.f32 %v50, %v808
  %810 = vmatpush1.msra.mxu0 %v809
  %811 = vmatprep.subr.mxu0 0.0
  %v812 = vand.u32 %v49, 4294901760
  %v813 = vsub.f32 %v49, %v812
  %814 = vmatpush1.msra.mxu0 %v813
  %815 = vmatprep.subr.mxu0 0.0
  %v816 = vand.u32 %v48, 4294901760
  %v817 = vsub.f32 %v48, %v816
  %818 = vmatpush1.msra.mxu0 %v817
  %819 = vmatprep.subr.mxu0 0.0
  %820 = vmatpush2.msra.mxu0 0.0
  %821 = vmatprep.subr.mxu0 0.0
  %822 = vmatpush2.msra.mxu0 0.0
  %823 = vmatprep.subr.mxu0 0.0
  %824 = vmatpush2.msra.mxu0 0.0
  %825 = vmatprep.subr.mxu0 0.0
  %826 = vmatpush2.msra.mxu0 0.0
  %827 = vmatprep.subr.mxu0 0.0
  %828 = vmatpush2.msra.mxu0 0.0
  %829 = vmatprep.subr.mxu0 0.0
  %830 = vmatpush2.msra.mxu0 0.0
  %831 = vmatprep.subr.mxu0 0.0
  %832 = vmatpush2.msra.mxu0 0.0
  %833 = vmatprep.subr.mxu0 0.0
  %834 = vmatpush2.msra.mxu0 0.0
  %835 = vmatprep.subr.mxu0 0.0
  %836 = vmatpush2.msra.mxu0 0.0
  %837 = vmatprep.subr.mxu0 0.0
  %838 = vmatpush2.msra.mxu0 0.0
  %839 = vmatprep.subr.mxu0 0.0
  %840 = vmatpush2.msra.mxu0 0.0
  %841 = vmatprep.subr.mxu0 0.0
  %842 = vmatpush2.msra.mxu0 0.0
  %843 = vmatprep.subr.mxu0 0.0
  %844 = vmatpush2.msra.mxu0 0.0
  %845 = vmatprep.subr.mxu0 0.0
  %846 = vmatpush2.msra.mxu0 0.0
  %847 = vmatprep.subr.mxu0 0.0
  %848 = vmatpush2.msra.mxu0 0.0
  %849 = vmatprep.subr.mxu0 0.0
  %850 = vmatpush2.msra.mxu0 0.0
  %851 = vmatprep.mubr.f32.mxu0 0.0
  %v852 = vand.u32 %v588, 4294901760
  %v853 = vsub.f32 %v588, %v852
  %854 = vmatmul.mubr.f32.gmra.mxu0 %v853
  %v855 = vpop.f32.mrf.mxu0
  %v856 = vadd.f32 %v770, %v855
  %v857 = vpop.f32.mrf.mxu0
  %858 = vmatprep.mubr.f32.mxu0 0.0
  %v859 = vand.u32 %v591, 4294901760
  %v860 = vsub.f32 %v591, %v859
  %861 = vmatmul.mubr.f32.gmra.mxu0 %v860
  %v862 = vpop.f32.mrf.mxu0
  %v863 = vadd.f32 %v776, %v862
  %v864 = vpop.f32.mrf.mxu0
  %865 = vdwg.mxu0
  %866 = vmatprep.subr.mxu0 0.0
  %867 = vmatpush1.msra.mxu0 0.0
  %868 = vmatprep.subr.mxu0 0.0
  %869 = vmatpush1.msra.mxu0 0.0
  %870 = vmatprep.subr.mxu0 0.0
  %871 = vmatpush1.msra.mxu0 0.0
  %872 = vmatprep.subr.mxu0 0.0
  %873 = vmatpush1.msra.mxu0 0.0
  %874 = vmatprep.subr.mxu0 0.0
  %875 = vmatpush1.msra.mxu0 0.0
  %876 = vmatprep.subr.mxu0 0.0
  %877 = vmatpush1.msra.mxu0 0.0
  %878 = vmatprep.subr.mxu0 0.0
  %879 = vmatpush1.msra.mxu0 0.0
  %880 = vmatprep.subr.mxu0 0.0
  %881 = vmatpush1.msra.mxu0 0.0
  %882 = vmatprep.subr.mxu0 0.0
  %883 = vmatpush1.msra.mxu0 0.0
  %884 = vmatprep.subr.mxu0 0.0
  %885 = vmatpush1.msra.mxu0 0.0
  %886 = vmatprep.subr.mxu0 0.0
  %887 = vmatpush1.msra.mxu0 0.0
  %888 = vmatprep.subr.mxu0 0.0
  %889 = vmatpush1.msra.mxu0 0.0
  %890 = vmatprep.subr.mxu0 0.0
  %v891 = vand.u32 %v51, 4294901760
  %892 = vmatpush1.msra.mxu0 %v891
  %893 = vmatprep.subr.mxu0 0.0
  %v894 = vand.u32 %v50, 4294901760
  %895 = vmatpush1.msra.mxu0 %v894
  %896 = vmatprep.subr.mxu0 0.0
  %v897 = vand.u32 %v49, 4294901760
  %898 = vmatpush1.msra.mxu0 %v897
  %899 = vmatprep.subr.mxu0 0.0
  %v900 = vand.u32 %v48, 4294901760
  %901 = vmatpush1.msra.mxu0 %v900
  %902 = vmatprep.subr.mxu0 0.0
  %903 = vmatpush2.msra.mxu0 0.0
  %904 = vmatprep.subr.mxu0 0.0
  %905 = vmatpush2.msra.mxu0 0.0
  %906 = vmatprep.subr.mxu0 0.0
  %907 = vmatpush2.msra.mxu0 0.0
  %908 = vmatprep.subr.mxu0 0.0
  %909 = vmatpush2.msra.mxu0 0.0
  %910 = vmatprep.subr.mxu0 0.0
  %911 = vmatpush2.msra.mxu0 0.0
  %912 = vmatprep.subr.mxu0 0.0
  %913 = vmatpush2.msra.mxu0 0.0
  %914 = vmatprep.subr.mxu0 0.0
  %915 = vmatpush2.msra.mxu0 0.0
  %916 = vmatprep.subr.mxu0 0.0
  %917 = vmatpush2.msra.mxu0 0.0
  %918 = vmatprep.subr.mxu0 0.0
  %919 = vmatpush2.msra.mxu0 0.0
  %920 = vmatprep.subr.mxu0 0.0
  %921 = vmatpush2.msra.mxu0 0.0
  %922 = vmatprep.subr.mxu0 0.0
  %923 = vmatpush2.msra.mxu0 0.0
  %924 = vmatprep.subr.mxu0 0.0
  %925 = vmatpush2.msra.mxu0 0.0
  %926 = vmatprep.subr.mxu0 0.0
  %927 = vmatpush2.msra.mxu0 0.0
  %928 = vmatprep.subr.mxu0 0.0
  %929 = vmatpush2.msra.mxu0 0.0
  %930 = vmatprep.subr.mxu0 0.0
  %931 = vmatpush2.msra.mxu0 0.0
  %932 = vmatprep.subr.mxu0 0.0
  %933 = vmatpush2.msra.mxu0 0.0
  %934 = vmatprep.mubr.f32.mxu0 0.0
  %v935 = vand.u32 %v588, 4294901760
  %v936 = vsub.f32 %v588, %v935
  %v937 = vand.u32 %v936, 4294901760
  %938 = vmatmul.mubr.f32.gmra.mxu0 %v937
  %v939 = vpop.f32.mrf.mxu0
  %v940 = vadd.f32 %v856, %v939
  %v941 = vpop.f32.mrf.mxu0
  %942 = vmatprep.mubr.f32.mxu0 0.0
  %v943 = vand.u32 %v591, 4294901760
  %v944 = vsub.f32 %v591, %v943
  %v945 = vand.u32 %v944, 4294901760
  %946 = vmatmul.mubr.f32.gmra.mxu0 %v945
  %v947 = vpop.f32.mrf.mxu0
  %v948 = vadd.f32 %v863, %v947
  %v949 = vpop.f32.mrf.mxu0
  %950 = vdwg.mxu0
  %951 = vmatprep.subr.mxu0 0.0
  %952 = vmatpush1.msra.mxu0 0.0
  %953 = vmatprep.subr.mxu0 0.0
  %954 = vmatpush1.msra.mxu0 0.0
  %955 = vmatprep.subr.mxu0 0.0
  %956 = vmatpush1.msra.mxu0 0.0
  %957 = vmatprep.subr.mxu0 0.0
  %958 = vmatpush1.msra.mxu0 0.0
  %959 = vmatprep.subr.mxu0 0.0
  %960 = vmatpush1.msra.mxu0 0.0
  %961 = vmatprep.subr.mxu0 0.0
  %962 = vmatpush1.msra.mxu0 0.0
  %963 = vmatprep.subr.mxu0 0.0
  %964 = vmatpush1.msra.mxu0 0.0
  %965 = vmatprep.subr.mxu0 0.0
  %966 = vmatpush1.msra.mxu0 0.0
  %967 = vmatprep.subr.mxu0 0.0
  %968 = vmatpush1.msra.mxu0 0.0
  %969 = vmatprep.subr.mxu0 0.0
  %970 = vmatpush1.msra.mxu0 0.0
  %971 = vmatprep.subr.mxu0 0.0
  %972 = vmatpush1.msra.mxu0 0.0
  %973 = vmatprep.subr.mxu0 0.0
  %974 = vmatpush1.msra.mxu0 0.0
  %975 = vmatprep.subr.mxu0 0.0
  %v976 = vand.u32 %v51, 4294901760
  %v977 = vsub.f32 %v51, %v976
  %v978 = vand.u32 %v977, 4294901760
  %979 = vmatpush1.msra.mxu0 %v978
  %980 = vmatprep.subr.mxu0 0.0
  %v981 = vand.u32 %v50, 4294901760
  %v982 = vsub.f32 %v50, %v981
  %v983 = vand.u32 %v982, 4294901760
  %984 = vmatpush1.msra.mxu0 %v983
  %985 = vmatprep.subr.mxu0 0.0
  %v986 = vand.u32 %v49, 4294901760
  %v987 = vsub.f32 %v49, %v986
  %v988 = vand.u32 %v987, 4294901760
  %989 = vmatpush1.msra.mxu0 %v988
  %990 = vmatprep.subr.mxu0 0.0
  %v991 = vand.u32 %v48, 4294901760
  %v992 = vsub.f32 %v48, %v991
  %v993 = vand.u32 %v992, 4294901760
  %994 = vmatpush1.msra.mxu0 %v993
  %995 = vmatprep.subr.mxu0 0.0
  %996 = vmatpush2.msra.mxu0 0.0
  %997 = vmatprep.subr.mxu0 0.0
  %998 = vmatpush2.msra.mxu0 0.0
  %999 = vmatprep.subr.mxu0 0.0
  %1000 = vmatpush2.msra.mxu0 0.0
  %1001 = vmatprep.subr.mxu0 0.0
  %1002 = vmatpush2.msra.mxu0 0.0
  %1003 = vmatprep.subr.mxu0 0.0
  %1004 = vmatpush2.msra.mxu0 0.0
  %1005 = vmatprep.subr.mxu0 0.0
  %1006 = vmatpush2.msra.mxu0 0.0
  %1007 = vmatprep.subr.mxu0 0.0
  %1008 = vmatpush2.msra.mxu0 0.0
  %1009 = vmatprep.subr.mxu0 0.0
  %1010 = vmatpush2.msra.mxu0 0.0
  %1011 = vmatprep.subr.mxu0 0.0
  %1012 = vmatpush2.msra.mxu0 0.0
  %1013 = vmatprep.subr.mxu0 0.0
  %1014 = vmatpush2.msra.mxu0 0.0
  %1015 = vmatprep.subr.mxu0 0.0
  %1016 = vmatpush2.msra.mxu0 0.0
  %1017 = vmatprep.subr.mxu0 0.0
  %1018 = vmatpush2.msra.mxu0 0.0
  %1019 = vmatprep.subr.mxu0 0.0
  %1020 = vmatpush2.msra.mxu0 0.0
  %1021 = vmatprep.subr.mxu0 0.0
  %1022 = vmatpush2.msra.mxu0 0.0
  %1023 = vmatprep.subr.mxu0 0.0
  %1024 = vmatpush2.msra.mxu0 0.0
  %1025 = vmatprep.subr.mxu0 0.0
  %1026 = vmatpush2.msra.mxu0 0.0
  %1027 = vmatprep.mubr.f32.mxu0 0.0
  %v1028 = vand.u32 %v588, 4294901760
  %1029 = vmatmul.mubr.f32.gmra.mxu0 %v1028
  %v1030 = vpop.f32.mrf.mxu0
  %v1031 = vadd.f32 %v940, %v1030
  %v1032 = vpop.f32.mrf.mxu0
  %1033 = vmatprep.mubr.f32.mxu0 0.0
  %v1034 = vand.u32 %v591, 4294901760
  %1035 = vmatmul.mubr.f32.gmra.mxu0 %v1034
  %v1036 = vpop.f32.mrf.mxu0
  %v1037 = vadd.f32 %v948, %v1036
  %v1038 = vpop.f32.mrf.mxu0
  %1039 = vdwg.mxu0
  %1040 = vmatprep.subr.mxu0 0.0
  %1041 = vmatpush1.msra.mxu0 0.0
  %1042 = vmatprep.subr.mxu0 0.0
  %1043 = vmatpush1.msra.mxu0 0.0
  %1044 = vmatprep.subr.mxu0 0.0
  %1045 = vmatpush1.msra.mxu0 0.0
  %1046 = vmatprep.subr.mxu0 0.0
  %1047 = vmatpush1.msra.mxu0 0.0
  %1048 = vmatprep.subr.mxu0 0.0
  %1049 = vmatpush1.msra.mxu0 0.0
  %1050 = vmatprep.subr.mxu0 0.0
  %1051 = vmatpush1.msra.mxu0 0.0
  %1052 = vmatprep.subr.mxu0 0.0
  %1053 = vmatpush1.msra.mxu0 0.0
  %1054 = vmatprep.subr.mxu0 0.0
  %1055 = vmatpush1.msra.mxu0 0.0
  %1056 = vmatprep.subr.mxu0 0.0
  %1057 = vmatpush1.msra.mxu0 0.0
  %1058 = vmatprep.subr.mxu0 0.0
  %1059 = vmatpush1.msra.mxu0 0.0
  %1060 = vmatprep.subr.mxu0 0.0
  %1061 = vmatpush1.msra.mxu0 0.0
  %1062 = vmatprep.subr.mxu0 0.0
  %1063 = vmatpush1.msra.mxu0 0.0
  %1064 = vmatprep.subr.mxu0 0.0
  %v1065 = vand.u32 %v51, 4294901760
  %1066 = vmatpush1.msra.mxu0 %v1065
  %1067 = vmatprep.subr.mxu0 0.0
  %v1068 = vand.u32 %v50, 4294901760
  %1069 = vmatpush1.msra.mxu0 %v1068
  %1070 = vmatprep.subr.mxu0 0.0
  %v1071 = vand.u32 %v49, 4294901760
  %1072 = vmatpush1.msra.mxu0 %v1071
  %1073 = vmatprep.subr.mxu0 0.0
  %v1074 = vand.u32 %v48, 4294901760
  %1075 = vmatpush1.msra.mxu0 %v1074
  %1076 = vmatprep.subr.mxu0 0.0
  %1077 = vmatpush2.msra.mxu0 0.0
  %1078 = vmatprep.subr.mxu0 0.0
  %1079 = vmatpush2.msra.mxu0 0.0
  %1080 = vmatprep.subr.mxu0 0.0
  %1081 = vmatpush2.msra.mxu0 0.0
  %1082 = vmatprep.subr.mxu0 0.0
  %1083 = vmatpush2.msra.mxu0 0.0
  %1084 = vmatprep.subr.mxu0 0.0
  %1085 = vmatpush2.msra.mxu0 0.0
  %1086 = vmatprep.subr.mxu0 0.0
  %1087 = vmatpush2.msra.mxu0 0.0
  %1088 = vmatprep.subr.mxu0 0.0
  %1089 = vmatpush2.msra.mxu0 0.0
  %1090 = vmatprep.subr.mxu0 0.0
  %1091 = vmatpush2.msra.mxu0 0.0
  %1092 = vmatprep.subr.mxu0 0.0
  %1093 = vmatpush2.msra.mxu0 0.0
  %1094 = vmatprep.subr.mxu0 0.0
  %1095 = vmatpush2.msra.mxu0 0.0
  %1096 = vmatprep.subr.mxu0 0.0
  %1097 = vmatpush2.msra.mxu0 0.0
  %1098 = vmatprep.subr.mxu0 0.0
  %1099 = vmatpush2.msra.mxu0 0.0
  %1100 = vmatprep.subr.mxu0 0.0
  %1101 = vmatpush2.msra.mxu0 0.0
  %1102 = vmatprep.subr.mxu0 0.0
  %1103 = vmatpush2.msra.mxu0 0.0
  %1104 = vmatprep.subr.mxu0 0.0
  %1105 = vmatpush2.msra.mxu0 0.0
  %1106 = vmatprep.subr.mxu0 0.0
  %1107 = vmatpush2.msra.mxu0 0.0
  %1108 = vmatprep.mubr.f32.mxu0 0.0
  %v1109 = vand.u32 %v588, 4294901760
  %1110 = vmatmul.mubr.f32.gmra.mxu0 %v1109
  %v1111 = vpop.f32.mrf.mxu0
  %v1112 = vadd.f32 %v1031, %v1111
  %v1113 = vpop.f32.mrf.mxu0
  %1114 = vmatprep.mubr.f32.mxu0 0.0
  %v1115 = vand.u32 %v591, 4294901760
  %1116 = vmatmul.mubr.f32.gmra.mxu0 %v1115
  %v1117 = vpop.f32.mrf.mxu0
  %v1118 = vadd.f32 %v1037, %v1117
  %v1119 = vpop.f32.mrf.mxu0
  %1120 = vdwg.mxu0
  %v1121 = vadd.f32 %v40, %v42
  %v1122 = vadd.f32 %v41, %v43
  %v1123 = vadd.f32 %v44, %v48
  %v1124 = vadd.f32 %v45, %v49
  %v1125 = vadd.f32 %v46, %v50
  %v1126 = vadd.f32 %v47, %v51
  %v1128 = vsel %vm52, %v1121, 0
  %v1131 = vsel %vm52, %v1122, 0
  %1133 = vmatprep.subr.mxu0 0.0
  %1134 = vmatpush1.msra.mxu0 0.0
  %1135 = vmatprep.subr.mxu0 0.0
  %1136 = vmatpush1.msra.mxu0 0.0
  %1137 = vmatprep.subr.mxu0 0.0
  %1138 = vmatpush1.msra.mxu0 0.0
  %1139 = vmatprep.subr.mxu0 0.0
  %1140 = vmatpush1.msra.mxu0 0.0
  %1141 = vmatprep.subr.mxu0 0.0
  %1142 = vmatpush1.msra.mxu0 0.0
  %1143 = vmatprep.subr.mxu0 0.0
  %1144 = vmatpush1.msra.mxu0 0.0
  %1145 = vmatprep.subr.mxu0 0.0
  %1146 = vmatpush1.msra.mxu0 0.0
  %1147 = vmatprep.subr.mxu0 0.0
  %1148 = vmatpush1.msra.mxu0 0.0
  %1149 = vmatprep.subr.mxu0 0.0
  %1150 = vmatpush1.msra.mxu0 0.0
  %1151 = vmatprep.subr.mxu0 0.0
  %1152 = vmatpush1.msra.mxu0 0.0
  %1153 = vmatprep.subr.mxu0 0.0
  %1154 = vmatpush1.msra.mxu0 0.0
  %1155 = vmatprep.subr.mxu0 0.0
  %1156 = vmatpush1.msra.mxu0 0.0
  %1157 = vmatprep.subr.mxu0 0.0
  %v1158 = vand.u32 %v1126, 4294901760
  %1159 = vmatpush1.msra.mxu0 %v1158
  %1160 = vmatprep.subr.mxu0 0.0
  %v1161 = vand.u32 %v1125, 4294901760
  %1162 = vmatpush1.msra.mxu0 %v1161
  %1163 = vmatprep.subr.mxu0 0.0
  %v1164 = vand.u32 %v1124, 4294901760
  %1165 = vmatpush1.msra.mxu0 %v1164
  %1166 = vmatprep.subr.mxu0 0.0
  %v1167 = vand.u32 %v1123, 4294901760
  %1168 = vmatpush1.msra.mxu0 %v1167
  %1169 = vmatprep.subr.mxu0 0.0
  %1170 = vmatpush2.msra.mxu0 0.0
  %1171 = vmatprep.subr.mxu0 0.0
  %1172 = vmatpush2.msra.mxu0 0.0
  %1173 = vmatprep.subr.mxu0 0.0
  %1174 = vmatpush2.msra.mxu0 0.0
  %1175 = vmatprep.subr.mxu0 0.0
  %1176 = vmatpush2.msra.mxu0 0.0
  %1177 = vmatprep.subr.mxu0 0.0
  %1178 = vmatpush2.msra.mxu0 0.0
  %1179 = vmatprep.subr.mxu0 0.0
  %1180 = vmatpush2.msra.mxu0 0.0
  %1181 = vmatprep.subr.mxu0 0.0
  %1182 = vmatpush2.msra.mxu0 0.0
  %1183 = vmatprep.subr.mxu0 0.0
  %1184 = vmatpush2.msra.mxu0 0.0
  %1185 = vmatprep.subr.mxu0 0.0
  %1186 = vmatpush2.msra.mxu0 0.0
  %1187 = vmatprep.subr.mxu0 0.0
  %1188 = vmatpush2.msra.mxu0 0.0
  %1189 = vmatprep.subr.mxu0 0.0
  %1190 = vmatpush2.msra.mxu0 0.0
  %1191 = vmatprep.subr.mxu0 0.0
  %1192 = vmatpush2.msra.mxu0 0.0
  %1193 = vmatprep.subr.mxu0 0.0
  %1194 = vmatpush2.msra.mxu0 0.0
  %1195 = vmatprep.subr.mxu0 0.0
  %1196 = vmatpush2.msra.mxu0 0.0
  %1197 = vmatprep.subr.mxu0 0.0
  %1198 = vmatpush2.msra.mxu0 0.0
  %1199 = vmatprep.subr.mxu0 0.0
  %1200 = vmatpush2.msra.mxu0 0.0
  %1201 = vmatprep.mubr.f32.mxu0 0.0
  %v1202 = vand.u32 %v1128, 4294901760
  %v1203 = vsub.f32 %v1128, %v1202
  %v1204 = vand.u32 %v1203, 4294901760
  %v1205 = vsub.f32 %v1203, %v1204
  %v1206 = vand.u32 %v1205, 4294901760
  %1207 = vmatmul.mubr.f32.gmra.mxu0 %v1206
  %v1208 = vpop.f32.mrf.mxu0
  %v1209 = vadd.f32 0.0, %v1208
  %v1210 = vpop.f32.mrf.mxu0
  %1211 = vmatprep.mubr.f32.mxu0 0.0
  %v1212 = vand.u32 %v1131, 4294901760
  %v1213 = vsub.f32 %v1131, %v1212
  %v1214 = vand.u32 %v1213, 4294901760
  %v1215 = vsub.f32 %v1213, %v1214
  %v1216 = vand.u32 %v1215, 4294901760
  %1217 = vmatmul.mubr.f32.gmra.mxu0 %v1216
  %v1218 = vpop.f32.mrf.mxu0
  %v1219 = vadd.f32 0.0, %v1218
  %v1220 = vpop.f32.mrf.mxu0
  %1221 = vdwg.mxu0
  %1222 = vmatprep.subr.mxu0 0.0
  %1223 = vmatpush1.msra.mxu0 0.0
  %1224 = vmatprep.subr.mxu0 0.0
  %1225 = vmatpush1.msra.mxu0 0.0
  %1226 = vmatprep.subr.mxu0 0.0
  %1227 = vmatpush1.msra.mxu0 0.0
  %1228 = vmatprep.subr.mxu0 0.0
  %1229 = vmatpush1.msra.mxu0 0.0
  %1230 = vmatprep.subr.mxu0 0.0
  %1231 = vmatpush1.msra.mxu0 0.0
  %1232 = vmatprep.subr.mxu0 0.0
  %1233 = vmatpush1.msra.mxu0 0.0
  %1234 = vmatprep.subr.mxu0 0.0
  %1235 = vmatpush1.msra.mxu0 0.0
  %1236 = vmatprep.subr.mxu0 0.0
  %1237 = vmatpush1.msra.mxu0 0.0
  %1238 = vmatprep.subr.mxu0 0.0
  %1239 = vmatpush1.msra.mxu0 0.0
  %1240 = vmatprep.subr.mxu0 0.0
  %1241 = vmatpush1.msra.mxu0 0.0
  %1242 = vmatprep.subr.mxu0 0.0
  %1243 = vmatpush1.msra.mxu0 0.0
  %1244 = vmatprep.subr.mxu0 0.0
  %1245 = vmatpush1.msra.mxu0 0.0
  %1246 = vmatprep.subr.mxu0 0.0
  %v1247 = vand.u32 %v1126, 4294901760
  %v1248 = vsub.f32 %v1126, %v1247
  %v1249 = vand.u32 %v1248, 4294901760
  %v1250 = vsub.f32 %v1248, %v1249
  %v1251 = vand.u32 %v1250, 4294901760
  %1252 = vmatpush1.msra.mxu0 %v1251
  %1253 = vmatprep.subr.mxu0 0.0
  %v1254 = vand.u32 %v1125, 4294901760
  %v1255 = vsub.f32 %v1125, %v1254
  %v1256 = vand.u32 %v1255, 4294901760
  %v1257 = vsub.f32 %v1255, %v1256
  %v1258 = vand.u32 %v1257, 4294901760
  %1259 = vmatpush1.msra.mxu0 %v1258
  %1260 = vmatprep.subr.mxu0 0.0
  %v1261 = vand.u32 %v1124, 4294901760
  %v1262 = vsub.f32 %v1124, %v1261
  %v1263 = vand.u32 %v1262, 4294901760
  %v1264 = vsub.f32 %v1262, %v1263
  %v1265 = vand.u32 %v1264, 4294901760
  %1266 = vmatpush1.msra.mxu0 %v1265
  %1267 = vmatprep.subr.mxu0 0.0
  %v1268 = vand.u32 %v1123, 4294901760
  %v1269 = vsub.f32 %v1123, %v1268
  %v1270 = vand.u32 %v1269, 4294901760
  %v1271 = vsub.f32 %v1269, %v1270
  %v1272 = vand.u32 %v1271, 4294901760
  %1273 = vmatpush1.msra.mxu0 %v1272
  %1274 = vmatprep.subr.mxu0 0.0
  %1275 = vmatpush2.msra.mxu0 0.0
  %1276 = vmatprep.subr.mxu0 0.0
  %1277 = vmatpush2.msra.mxu0 0.0
  %1278 = vmatprep.subr.mxu0 0.0
  %1279 = vmatpush2.msra.mxu0 0.0
  %1280 = vmatprep.subr.mxu0 0.0
  %1281 = vmatpush2.msra.mxu0 0.0
  %1282 = vmatprep.subr.mxu0 0.0
  %1283 = vmatpush2.msra.mxu0 0.0
  %1284 = vmatprep.subr.mxu0 0.0
  %1285 = vmatpush2.msra.mxu0 0.0
  %1286 = vmatprep.subr.mxu0 0.0
  %1287 = vmatpush2.msra.mxu0 0.0
  %1288 = vmatprep.subr.mxu0 0.0
  %1289 = vmatpush2.msra.mxu0 0.0
  %1290 = vmatprep.subr.mxu0 0.0
  %1291 = vmatpush2.msra.mxu0 0.0
  %1292 = vmatprep.subr.mxu0 0.0
  %1293 = vmatpush2.msra.mxu0 0.0
  %1294 = vmatprep.subr.mxu0 0.0
  %1295 = vmatpush2.msra.mxu0 0.0
  %1296 = vmatprep.subr.mxu0 0.0
  %1297 = vmatpush2.msra.mxu0 0.0
  %1298 = vmatprep.subr.mxu0 0.0
  %1299 = vmatpush2.msra.mxu0 0.0
  %1300 = vmatprep.subr.mxu0 0.0
  %1301 = vmatpush2.msra.mxu0 0.0
  %1302 = vmatprep.subr.mxu0 0.0
  %1303 = vmatpush2.msra.mxu0 0.0
  %1304 = vmatprep.subr.mxu0 0.0
  %1305 = vmatpush2.msra.mxu0 0.0
  %1306 = vmatprep.mubr.f32.mxu0 0.0
  %v1307 = vand.u32 %v1128, 4294901760
  %1308 = vmatmul.mubr.f32.gmra.mxu0 %v1307
  %v1309 = vpop.f32.mrf.mxu0
  %v1310 = vadd.f32 %v1209, %v1309
  %v1311 = vpop.f32.mrf.mxu0
  %1312 = vmatprep.mubr.f32.mxu0 0.0
  %v1313 = vand.u32 %v1131, 4294901760
  %1314 = vmatmul.mubr.f32.gmra.mxu0 %v1313
  %v1315 = vpop.f32.mrf.mxu0
  %v1316 = vadd.f32 %v1219, %v1315
  %v1317 = vpop.f32.mrf.mxu0
  %1318 = vdwg.mxu0
  %1319 = vmatprep.subr.mxu0 0.0
  %1320 = vmatpush1.msra.mxu0 0.0
  %1321 = vmatprep.subr.mxu0 0.0
  %1322 = vmatpush1.msra.mxu0 0.0
  %1323 = vmatprep.subr.mxu0 0.0
  %1324 = vmatpush1.msra.mxu0 0.0
  %1325 = vmatprep.subr.mxu0 0.0
  %1326 = vmatpush1.msra.mxu0 0.0
  %1327 = vmatprep.subr.mxu0 0.0
  %1328 = vmatpush1.msra.mxu0 0.0
  %1329 = vmatprep.subr.mxu0 0.0
  %1330 = vmatpush1.msra.mxu0 0.0
  %1331 = vmatprep.subr.mxu0 0.0
  %1332 = vmatpush1.msra.mxu0 0.0
  %1333 = vmatprep.subr.mxu0 0.0
  %1334 = vmatpush1.msra.mxu0 0.0
  %1335 = vmatprep.subr.mxu0 0.0
  %1336 = vmatpush1.msra.mxu0 0.0
  %1337 = vmatprep.subr.mxu0 0.0
  %1338 = vmatpush1.msra.mxu0 0.0
  %1339 = vmatprep.subr.mxu0 0.0
  %1340 = vmatpush1.msra.mxu0 0.0
  %1341 = vmatprep.subr.mxu0 0.0
  %1342 = vmatpush1.msra.mxu0 0.0
  %1343 = vmatprep.subr.mxu0 0.0
  %v1344 = vand.u32 %v1126, 4294901760
  %v1345 = vsub.f32 %v1126, %v1344
  %1346 = vmatpush1.msra.mxu0 %v1345
  %1347 = vmatprep.subr.mxu0 0.0
  %v1348 = vand.u32 %v1125, 4294901760
  %v1349 = vsub.f32 %v1125, %v1348
  %1350 = vmatpush1.msra.mxu0 %v1349
  %1351 = vmatprep.subr.mxu0 0.0
  %v1352 = vand.u32 %v1124, 4294901760
  %v1353 = vsub.f32 %v1124, %v1352
  %1354 = vmatpush1.msra.mxu0 %v1353
  %1355 = vmatprep.subr.mxu0 0.0
  %v1356 = vand.u32 %v1123, 4294901760
  %v1357 = vsub.f32 %v1123, %v1356
  %1358 = vmatpush1.msra.mxu0 %v1357
  %1359 = vmatprep.subr.mxu0 0.0
  %1360 = vmatpush2.msra.mxu0 0.0
  %1361 = vmatprep.subr.mxu0 0.0
  %1362 = vmatpush2.msra.mxu0 0.0
  %1363 = vmatprep.subr.mxu0 0.0
  %1364 = vmatpush2.msra.mxu0 0.0
  %1365 = vmatprep.subr.mxu0 0.0
  %1366 = vmatpush2.msra.mxu0 0.0
  %1367 = vmatprep.subr.mxu0 0.0
  %1368 = vmatpush2.msra.mxu0 0.0
  %1369 = vmatprep.subr.mxu0 0.0
  %1370 = vmatpush2.msra.mxu0 0.0
  %1371 = vmatprep.subr.mxu0 0.0
  %1372 = vmatpush2.msra.mxu0 0.0
  %1373 = vmatprep.subr.mxu0 0.0
  %1374 = vmatpush2.msra.mxu0 0.0
  %1375 = vmatprep.subr.mxu0 0.0
  %1376 = vmatpush2.msra.mxu0 0.0
  %1377 = vmatprep.subr.mxu0 0.0
  %1378 = vmatpush2.msra.mxu0 0.0
  %1379 = vmatprep.subr.mxu0 0.0
  %1380 = vmatpush2.msra.mxu0 0.0
  %1381 = vmatprep.subr.mxu0 0.0
  %1382 = vmatpush2.msra.mxu0 0.0
  %1383 = vmatprep.subr.mxu0 0.0
  %1384 = vmatpush2.msra.mxu0 0.0
  %1385 = vmatprep.subr.mxu0 0.0
  %1386 = vmatpush2.msra.mxu0 0.0
  %1387 = vmatprep.subr.mxu0 0.0
  %1388 = vmatpush2.msra.mxu0 0.0
  %1389 = vmatprep.subr.mxu0 0.0
  %1390 = vmatpush2.msra.mxu0 0.0
  %1391 = vmatprep.mubr.f32.mxu0 0.0
  %v1392 = vand.u32 %v1128, 4294901760
  %v1393 = vsub.f32 %v1128, %v1392
  %1394 = vmatmul.mubr.f32.gmra.mxu0 %v1393
  %v1395 = vpop.f32.mrf.mxu0
  %v1396 = vadd.f32 %v1310, %v1395
  %v1397 = vpop.f32.mrf.mxu0
  %1398 = vmatprep.mubr.f32.mxu0 0.0
  %v1399 = vand.u32 %v1131, 4294901760
  %v1400 = vsub.f32 %v1131, %v1399
  %1401 = vmatmul.mubr.f32.gmra.mxu0 %v1400
  %v1402 = vpop.f32.mrf.mxu0
  %v1403 = vadd.f32 %v1316, %v1402
  %v1404 = vpop.f32.mrf.mxu0
  %1405 = vdwg.mxu0
  %1406 = vmatprep.subr.mxu0 0.0
  %1407 = vmatpush1.msra.mxu0 0.0
  %1408 = vmatprep.subr.mxu0 0.0
  %1409 = vmatpush1.msra.mxu0 0.0
  %1410 = vmatprep.subr.mxu0 0.0
  %1411 = vmatpush1.msra.mxu0 0.0
  %1412 = vmatprep.subr.mxu0 0.0
  %1413 = vmatpush1.msra.mxu0 0.0
  %1414 = vmatprep.subr.mxu0 0.0
  %1415 = vmatpush1.msra.mxu0 0.0
  %1416 = vmatprep.subr.mxu0 0.0
  %1417 = vmatpush1.msra.mxu0 0.0
  %1418 = vmatprep.subr.mxu0 0.0
  %1419 = vmatpush1.msra.mxu0 0.0
  %1420 = vmatprep.subr.mxu0 0.0
  %1421 = vmatpush1.msra.mxu0 0.0
  %1422 = vmatprep.subr.mxu0 0.0
  %1423 = vmatpush1.msra.mxu0 0.0
  %1424 = vmatprep.subr.mxu0 0.0
  %1425 = vmatpush1.msra.mxu0 0.0
  %1426 = vmatprep.subr.mxu0 0.0
  %1427 = vmatpush1.msra.mxu0 0.0
  %1428 = vmatprep.subr.mxu0 0.0
  %1429 = vmatpush1.msra.mxu0 0.0
  %1430 = vmatprep.subr.mxu0 0.0
  %v1431 = vand.u32 %v1126, 4294901760
  %1432 = vmatpush1.msra.mxu0 %v1431
  %1433 = vmatprep.subr.mxu0 0.0
  %v1434 = vand.u32 %v1125, 4294901760
  %1435 = vmatpush1.msra.mxu0 %v1434
  %1436 = vmatprep.subr.mxu0 0.0
  %v1437 = vand.u32 %v1124, 4294901760
  %1438 = vmatpush1.msra.mxu0 %v1437
  %1439 = vmatprep.subr.mxu0 0.0
  %v1440 = vand.u32 %v1123, 4294901760
  %1441 = vmatpush1.msra.mxu0 %v1440
  %1442 = vmatprep.subr.mxu0 0.0
  %1443 = vmatpush2.msra.mxu0 0.0
  %1444 = vmatprep.subr.mxu0 0.0
  %1445 = vmatpush2.msra.mxu0 0.0
  %1446 = vmatprep.subr.mxu0 0.0
  %1447 = vmatpush2.msra.mxu0 0.0
  %1448 = vmatprep.subr.mxu0 0.0
  %1449 = vmatpush2.msra.mxu0 0.0
  %1450 = vmatprep.subr.mxu0 0.0
  %1451 = vmatpush2.msra.mxu0 0.0
  %1452 = vmatprep.subr.mxu0 0.0
  %1453 = vmatpush2.msra.mxu0 0.0
  %1454 = vmatprep.subr.mxu0 0.0
  %1455 = vmatpush2.msra.mxu0 0.0
  %1456 = vmatprep.subr.mxu0 0.0
  %1457 = vmatpush2.msra.mxu0 0.0
  %1458 = vmatprep.subr.mxu0 0.0
  %1459 = vmatpush2.msra.mxu0 0.0
  %1460 = vmatprep.subr.mxu0 0.0
  %1461 = vmatpush2.msra.mxu0 0.0
  %1462 = vmatprep.subr.mxu0 0.0
  %1463 = vmatpush2.msra.mxu0 0.0
  %1464 = vmatprep.subr.mxu0 0.0
  %1465 = vmatpush2.msra.mxu0 0.0
  %1466 = vmatprep.subr.mxu0 0.0
  %1467 = vmatpush2.msra.mxu0 0.0
  %1468 = vmatprep.subr.mxu0 0.0
  %1469 = vmatpush2.msra.mxu0 0.0
  %1470 = vmatprep.subr.mxu0 0.0
  %1471 = vmatpush2.msra.mxu0 0.0
  %1472 = vmatprep.subr.mxu0 0.0
  %1473 = vmatpush2.msra.mxu0 0.0
  %1474 = vmatprep.mubr.f32.mxu0 0.0
  %v1475 = vand.u32 %v1128, 4294901760
  %v1476 = vsub.f32 %v1128, %v1475
  %v1477 = vand.u32 %v1476, 4294901760
  %1478 = vmatmul.mubr.f32.gmra.mxu0 %v1477
  %v1479 = vpop.f32.mrf.mxu0
  %v1480 = vadd.f32 %v1396, %v1479
  %v1481 = vpop.f32.mrf.mxu0
  %1482 = vmatprep.mubr.f32.mxu0 0.0
  %v1483 = vand.u32 %v1131, 4294901760
  %v1484 = vsub.f32 %v1131, %v1483
  %v1485 = vand.u32 %v1484, 4294901760
  %1486 = vmatmul.mubr.f32.gmra.mxu0 %v1485
  %v1487 = vpop.f32.mrf.mxu0
  %v1488 = vadd.f32 %v1403, %v1487
  %v1489 = vpop.f32.mrf.mxu0
  %1490 = vdwg.mxu0
  %1491 = vmatprep.subr.mxu0 0.0
  %1492 = vmatpush1.msra.mxu0 0.0
  %1493 = vmatprep.subr.mxu0 0.0
  %1494 = vmatpush1.msra.mxu0 0.0
  %1495 = vmatprep.subr.mxu0 0.0
  %1496 = vmatpush1.msra.mxu0 0.0
  %1497 = vmatprep.subr.mxu0 0.0
  %1498 = vmatpush1.msra.mxu0 0.0
  %1499 = vmatprep.subr.mxu0 0.0
  %1500 = vmatpush1.msra.mxu0 0.0
  %1501 = vmatprep.subr.mxu0 0.0
  %1502 = vmatpush1.msra.mxu0 0.0
  %1503 = vmatprep.subr.mxu0 0.0
  %1504 = vmatpush1.msra.mxu0 0.0
  %1505 = vmatprep.subr.mxu0 0.0
  %1506 = vmatpush1.msra.mxu0 0.0
  %1507 = vmatprep.subr.mxu0 0.0
  %1508 = vmatpush1.msra.mxu0 0.0
  %1509 = vmatprep.subr.mxu0 0.0
  %1510 = vmatpush1.msra.mxu0 0.0
  %1511 = vmatprep.subr.mxu0 0.0
  %1512 = vmatpush1.msra.mxu0 0.0
  %1513 = vmatprep.subr.mxu0 0.0
  %1514 = vmatpush1.msra.mxu0 0.0
  %1515 = vmatprep.subr.mxu0 0.0
  %v1516 = vand.u32 %v1126, 4294901760
  %v1517 = vsub.f32 %v1126, %v1516
  %v1518 = vand.u32 %v1517, 4294901760
  %1519 = vmatpush1.msra.mxu0 %v1518
  %1520 = vmatprep.subr.mxu0 0.0
  %v1521 = vand.u32 %v1125, 4294901760
  %v1522 = vsub.f32 %v1125, %v1521
  %v1523 = vand.u32 %v1522, 4294901760
  %1524 = vmatpush1.msra.mxu0 %v1523
  %1525 = vmatprep.subr.mxu0 0.0
  %v1526 = vand.u32 %v1124, 4294901760
  %v1527 = vsub.f32 %v1124, %v1526
  %v1528 = vand.u32 %v1527, 4294901760
  %1529 = vmatpush1.msra.mxu0 %v1528
  %1530 = vmatprep.subr.mxu0 0.0
  %v1531 = vand.u32 %v1123, 4294901760
  %v1532 = vsub.f32 %v1123, %v1531
  %v1533 = vand.u32 %v1532, 4294901760
  %1534 = vmatpush1.msra.mxu0 %v1533
  %1535 = vmatprep.subr.mxu0 0.0
  %1536 = vmatpush2.msra.mxu0 0.0
  %1537 = vmatprep.subr.mxu0 0.0
  %1538 = vmatpush2.msra.mxu0 0.0
  %1539 = vmatprep.subr.mxu0 0.0
  %1540 = vmatpush2.msra.mxu0 0.0
  %1541 = vmatprep.subr.mxu0 0.0
  %1542 = vmatpush2.msra.mxu0 0.0
  %1543 = vmatprep.subr.mxu0 0.0
  %1544 = vmatpush2.msra.mxu0 0.0
  %1545 = vmatprep.subr.mxu0 0.0
  %1546 = vmatpush2.msra.mxu0 0.0
  %1547 = vmatprep.subr.mxu0 0.0
  %1548 = vmatpush2.msra.mxu0 0.0
  %1549 = vmatprep.subr.mxu0 0.0
  %1550 = vmatpush2.msra.mxu0 0.0
  %1551 = vmatprep.subr.mxu0 0.0
  %1552 = vmatpush2.msra.mxu0 0.0
  %1553 = vmatprep.subr.mxu0 0.0
  %1554 = vmatpush2.msra.mxu0 0.0
  %1555 = vmatprep.subr.mxu0 0.0
  %1556 = vmatpush2.msra.mxu0 0.0
  %1557 = vmatprep.subr.mxu0 0.0
  %1558 = vmatpush2.msra.mxu0 0.0
  %1559 = vmatprep.subr.mxu0 0.0
  %1560 = vmatpush2.msra.mxu0 0.0
  %1561 = vmatprep.subr.mxu0 0.0
  %1562 = vmatpush2.msra.mxu0 0.0
  %1563 = vmatprep.subr.mxu0 0.0
  %1564 = vmatpush2.msra.mxu0 0.0
  %1565 = vmatprep.subr.mxu0 0.0
  %1566 = vmatpush2.msra.mxu0 0.0
  %1567 = vmatprep.mubr.f32.mxu0 0.0
  %v1568 = vand.u32 %v1128, 4294901760
  %1569 = vmatmul.mubr.f32.gmra.mxu0 %v1568
  %v1570 = vpop.f32.mrf.mxu0
  %v1571 = vadd.f32 %v1480, %v1570
  %v1572 = vpop.f32.mrf.mxu0
  %1573 = vmatprep.mubr.f32.mxu0 0.0
  %v1574 = vand.u32 %v1131, 4294901760
  %1575 = vmatmul.mubr.f32.gmra.mxu0 %v1574
  %v1576 = vpop.f32.mrf.mxu0
  %v1577 = vadd.f32 %v1488, %v1576
  %v1578 = vpop.f32.mrf.mxu0
  %1579 = vdwg.mxu0
  %1580 = vmatprep.subr.mxu0 0.0
  %1581 = vmatpush1.msra.mxu0 0.0
  %1582 = vmatprep.subr.mxu0 0.0
  %1583 = vmatpush1.msra.mxu0 0.0
  %1584 = vmatprep.subr.mxu0 0.0
  %1585 = vmatpush1.msra.mxu0 0.0
  %1586 = vmatprep.subr.mxu0 0.0
  %1587 = vmatpush1.msra.mxu0 0.0
  %1588 = vmatprep.subr.mxu0 0.0
  %1589 = vmatpush1.msra.mxu0 0.0
  %1590 = vmatprep.subr.mxu0 0.0
  %1591 = vmatpush1.msra.mxu0 0.0
  %1592 = vmatprep.subr.mxu0 0.0
  %1593 = vmatpush1.msra.mxu0 0.0
  %1594 = vmatprep.subr.mxu0 0.0
  %1595 = vmatpush1.msra.mxu0 0.0
  %1596 = vmatprep.subr.mxu0 0.0
  %1597 = vmatpush1.msra.mxu0 0.0
  %1598 = vmatprep.subr.mxu0 0.0
  %1599 = vmatpush1.msra.mxu0 0.0
  %1600 = vmatprep.subr.mxu0 0.0
  %1601 = vmatpush1.msra.mxu0 0.0
  %1602 = vmatprep.subr.mxu0 0.0
  %1603 = vmatpush1.msra.mxu0 0.0
  %1604 = vmatprep.subr.mxu0 0.0
  %v1605 = vand.u32 %v1126, 4294901760
  %1606 = vmatpush1.msra.mxu0 %v1605
  %1607 = vmatprep.subr.mxu0 0.0
  %v1608 = vand.u32 %v1125, 4294901760
  %1609 = vmatpush1.msra.mxu0 %v1608
  %1610 = vmatprep.subr.mxu0 0.0
  %v1611 = vand.u32 %v1124, 4294901760
  %1612 = vmatpush1.msra.mxu0 %v1611
  %1613 = vmatprep.subr.mxu0 0.0
  %v1614 = vand.u32 %v1123, 4294901760
  %1615 = vmatpush1.msra.mxu0 %v1614
  %1616 = vmatprep.subr.mxu0 0.0
  %1617 = vmatpush2.msra.mxu0 0.0
  %1618 = vmatprep.subr.mxu0 0.0
  %1619 = vmatpush2.msra.mxu0 0.0
  %1620 = vmatprep.subr.mxu0 0.0
  %1621 = vmatpush2.msra.mxu0 0.0
  %1622 = vmatprep.subr.mxu0 0.0
  %1623 = vmatpush2.msra.mxu0 0.0
  %1624 = vmatprep.subr.mxu0 0.0
  %1625 = vmatpush2.msra.mxu0 0.0
  %1626 = vmatprep.subr.mxu0 0.0
  %1627 = vmatpush2.msra.mxu0 0.0
  %1628 = vmatprep.subr.mxu0 0.0
  %1629 = vmatpush2.msra.mxu0 0.0
  %1630 = vmatprep.subr.mxu0 0.0
  %1631 = vmatpush2.msra.mxu0 0.0
  %1632 = vmatprep.subr.mxu0 0.0
  %1633 = vmatpush2.msra.mxu0 0.0
  %1634 = vmatprep.subr.mxu0 0.0
  %1635 = vmatpush2.msra.mxu0 0.0
  %1636 = vmatprep.subr.mxu0 0.0
  %1637 = vmatpush2.msra.mxu0 0.0
  %1638 = vmatprep.subr.mxu0 0.0
  %1639 = vmatpush2.msra.mxu0 0.0
  %1640 = vmatprep.subr.mxu0 0.0
  %1641 = vmatpush2.msra.mxu0 0.0
  %1642 = vmatprep.subr.mxu0 0.0
  %1643 = vmatpush2.msra.mxu0 0.0
  %1644 = vmatprep.subr.mxu0 0.0
  %1645 = vmatpush2.msra.mxu0 0.0
  %1646 = vmatprep.subr.mxu0 0.0
  %1647 = vmatpush2.msra.mxu0 0.0
  %1648 = vmatprep.mubr.f32.mxu0 0.0
  %v1649 = vand.u32 %v1128, 4294901760
  %1650 = vmatmul.mubr.f32.gmra.mxu0 %v1649
  %v1651 = vpop.f32.mrf.mxu0
  %v1652 = vadd.f32 %v1571, %v1651
  %v1653 = vpop.f32.mrf.mxu0
  %1654 = vmatprep.mubr.f32.mxu0 0.0
  %v1655 = vand.u32 %v1131, 4294901760
  %1656 = vmatmul.mubr.f32.gmra.mxu0 %v1655
  %v1657 = vpop.f32.mrf.mxu0
  %v1658 = vadd.f32 %v1577, %v1657
  %v1659 = vpop.f32.mrf.mxu0
  %1660 = vdwg.mxu0
  %v1661 = vld [vmem:[#allocation2] sm:$0xff]
  %v1662 = vld [vmem:[#allocation2 + $0x8] sm:$0xff]
  %v1663 = vsub.f32 %v578, %v1112
  %v1664 = vsub.f32 %v584, %v1118
  %v1665 = vadd.f32 %v1661, %v1663
  %v1666 = vadd.f32 %v1662, %v1664
  %1667 = vst.msk [vmem:[#allocation2] sm:$0xff] %vm52, %v1665
  %1668 = vst.msk [vmem:[#allocation2 + $0x8] sm:$0xff] %vm52, %v1666
  %v1669 = vld [vmem:[#allocation3] sm:$0xff]
  %v1670 = vld [vmem:[#allocation3 + $0x8] sm:$0xff]
  %v1671 = vsub.f32 %v1652, %v578
  %v1672 = vsub.f32 %v1658, %v584
  %v1673 = vsub.f32 %v1671, %v1112
  %v1674 = vsub.f32 %v1672, %v1118
  %v1675 = vadd.f32 %v1669, %v1673
  %v1676 = vadd.f32 %v1670, %v1674
  %1677 = vst.msk [vmem:[#allocation3] sm:$0xff] %vm52, %v1675
  %1678 = vst.msk [vmem:[#allocation3 + $0x8] sm:$0xff] %vm52, %v1676
  // Predicated region
  $region38: #{forward.15} parent=0 // pred_check
    %p1679 = pneg %p31
  $region39: #{forward.15} parent=0 // pred_check_branch
    %1681 = sbr.rel (%p1679) target = $region41
  $region40: #{forward.15} parent=0 // pred_region
    %v1682 = vld [vmem:[#allocation2] sm:$0xff]
    %v1683 = vld [vmem:[#allocation2 + $0x8] sm:$0xff]
    %v1684 = vld [vmem:[%s4] sm:$0x1]
    %v1686 = vlaneseq
    %v1687 = vshrl.u32 %v1686, 7
    %v1688 = vsub.s32 0, %v1687
    %v1689 = vrot.slane %v1684, %v1688
    %v1691 = vadd.f32 %v1682, %v1689
    %v1692 = vadd.f32 %v1683, %v1689
    %v1693 = vld [vmem:[%s6] sm:$0xff]
    %v1694 = vld [vmem:[%s6 + $0x8] sm:$0xff]
    %v1695 = vadd.f32 %v1691, %v1693
    %v1696 = vadd.f32 %v1692, %v1694
    %1697 = vst.msk [vmem:[%s8] sm:$0xff] %vm52, %v1695
    %1698 = vst.msk [vmem:[%s8 + $0x8] sm:$0xff] %vm52, %v1696
    %v1699 = vld [vmem:[#allocation3] sm:$0xff]
    %v1700 = vld [vmem:[#allocation3 + $0x8] sm:$0xff]
    %v1701 = vld [vmem:[%s5] sm:$0x1]
    %v1703 = vlaneseq
    %v1704 = vshrl.u32 %v1703, 7
    %v1705 = vsub.s32 0, %v1704
    %v1706 = vrot.slane %v1701, %v1705
    %v1708 = vadd.f32 %v1699, %v1706
    %v1709 = vadd.f32 %v1700, %v1706
    %v1710 = vld [vmem:[%s7] sm:$0xff]
    %v1711 = vld [vmem:[%s7 + $0x8] sm:$0xff]
    %v1712 = vadd.f32 %v1708, %v1710
    %v1713 = vadd.f32 %v1709, %v1711
    %1714 = vst.msk [vmem:[%s9] sm:$0xff] %vm52, %v1712
    %1715 = vst.msk [vmem:[%s9 + $0x8] sm:$0xff] %vm52, %v1713
  $region41: #{forward.15} parent=0 // pred_fallthru
    _
  // Predicated region
  $region42: #{forward.15} parent=0 // pred_check
    _
  $region43: #{forward.15} parent=0 // pred_check_branch
    %1717 = sbr.rel (0) target = $region45
  $region44: #{forward.15} parent=0 // pred_region
    _
  $region45: #{forward.15} parent=0 // pred_fallthru
    _
  // Predicated region
  $region46: #{forward.15} parent=0 // pred_check
    _
  $region47: #{forward.15} parent=0 // pred_check_branch
    %1719 = sbr.rel (0) target = $region49
  $region48: #{forward.15} parent=0 // pred_region
    _
  $region49: #{forward.15} parent=0 // pred_fallthru
    _
  // Predicated region
  $region50: #{forward.15} parent=0 // pred_check
    _
  $region51: #{forward.15} parent=0 // pred_check_branch
    %1721 = sbr.rel (0) target = $region53
  $region52: #{forward.15} parent=0 // pred_region
    _
  $region53: #{forward.15} parent=0 // pred_fallthru
    _
  // Predicated region
  $region54: #{forward.15} parent=0 // pred_check
    _
  $region55: #{forward.15} parent=0 // pred_check_branch
    %1723 = sbr.rel (0) target = $region57
  $region56: #{forward.15} parent=0 // pred_region
    _
  $region57: #{forward.15} parent=0 // pred_fallthru
    _

// kernel: forward.14
$region0: #{forward.14}
  #allocation0 [shape = 'u32[]', space=smem, size = 0x4, offset = 0x4, fixed_abs, tag = 'smem constant byte address 0x4 - core index']
  #allocation1 [shape = 'u32[144,128]{1,0:T(1,128)}', space=vmem, size = 0x12000, scoped, tag = 'internal scratch']
  %s0 = inlined_call_operand.vmem [shape: f32[8,8,8], index: 0, kind: input, shape index: {}]
  %s1 = inlined_call_operand.vmem [shape: f32[8,8,8], index: 1, kind: input, shape index: {}]
  %s2 = inlined_call_operand.vmem [shape: f32[8,8,8], index: 2, kind: output, shape index: {0}]
  %s3 = inlined_call_operand.vmem [shape: f32[8,8,8], index: 3, kind: output, shape index: {1}]
  %4 = xla_tuple %s2, %s3
  %s5 = sld [smem:[#allocation0]]
  $region49: #{forward.14} parent=0
    _
  %s7 = ssub.s32 1, %s5
  %s8 = scalar_select 0, %s7, %s5
  loop: start=0, step=1, limit=10
  $region2: #{forward.14} parent=0 // loop_pre_header
    _
  $region3: #{forward.14} parent=0 // loop_header
    %s10 = sphi 0, %s14
    %p11 = scmp.ge.s32.totalorder %s10, 10
    %s20 = sphi 0, %s22
    %s23 = sphi 0, %s20
    %s24 = sphi 0, %s23
    %s40 = sphi 0, %s24
    %s46 = sphi 0, %s48
    %s49 = sphi 0, %s46
    %s50 = sphi 0, %s49
    %s66 = sphi 0, %s50
    %s72 = sphi 0, %s74
    %s75 = sphi 0, %s72
    %s76 = sphi 0, %s75
    %s92 = sphi 0, %s76
    %s98 = sphi 0, %s100
    %s101 = sphi 0, %s98
    %s102 = sphi 0, %s101
    %s118 = sphi 0, %s102
  $region4: #{forward.14} parent=0 // loop_header_branch
    %13 = sbr.rel (%p11) target = $region8
  $region5: #{forward.14} parent=0 // loop_body
    %s15 = ssub.s32 %s10, 1
    %s16 = ssub.s32 %s10, 2
    %s17 = sadd.s32 %s10, 1
    %s18 = ssub.s32 %s10, %s17
    %p19 = scmp.eq.s32.totalorder %s18, 0
    %s21 = sadd.s32 %s20, 1
    %s22 = scalar_select %p19, %s20, %s21
    %p25 = pneg %p19
    %p26 = scmp.eq.s32.totalorder %s10, 7
    %p27 = por %p25, %p26
    %p28 = scmp.ne.s32.totalorder %s20, %s23
    %p29 = scmp.eq.s32.totalorder %s10, 0
    %p30 = por %p28, %p29
    %p31 = scmp.ne.s32.totalorder %s20, %s23
    %p32 = scmp.eq.s32.totalorder %s15, 7
    %p33 = por %p31, %p32
    %p34 = scmp.ne.s32.totalorder %s23, %s24
    %p35 = scmp.eq.s32.totalorder %s15, 0
    %p36 = por %p34, %p35
    %p37 = scmp.ne.s32.totalorder %s23, %s24
    %p38 = scmp.eq.s32.totalorder %s16, 7
    %p39 = por %p37, %p38
    %p41 = scmp.ne.s32.totalorder %s24, %s40
    %p42 = scmp.eq.s32.totalorder %s16, 0
    %p43 = por %p41, %p42
    %s44 = ssub.s32 %s10, %s17
    %p45 = scmp.eq.s32.totalorder %s44, 0
    %s47 = sadd.s32 %s46, 1
    %s48 = scalar_select %p45, %s46, %s47
    %p51 = pneg %p45
    %p52 = scmp.eq.s32.totalorder %s10, 7
    %p53 = por %p51, %p52
    %p54 = scmp.ne.s32.totalorder %s46, %s49
    %p55 = scmp.eq.s32.totalorder %s10, 0
    %p56 = por %p54, %p55
    %p57 = scmp.ne.s32.totalorder %s46, %s49
    %p58 = scmp.eq.s32.totalorder %s15, 7
    %p59 = por %p57, %p58
    %p60 = scmp.ne.s32.totalorder %s49, %s50
    %p61 = scmp.eq.s32.totalorder %s15, 0
    %p62 = por %p60, %p61
    %p63 = scmp.ne.s32.totalorder %s49, %s50
    %p64 = scmp.eq.s32.totalorder %s16, 7
    %p65 = por %p63, %p64
    %p67 = scmp.ne.s32.totalorder %s50, %s66
    %p68 = scmp.eq.s32.totalorder %s16, 0
    %p69 = por %p67, %p68
    %s70 = ssub.s32 %s10, %s17
    %p71 = scmp.eq.s32.totalorder %s70, 0
    %s73 = sadd.s32 %s72, 1
    %s74 = scalar_select %p71, %s72, %s73
    %p77 = pneg %p71
    %p78 = scmp.eq.s32.totalorder %s10, 7
    %p79 = por %p77, %p78
    %p80 = scmp.ne.s32.totalorder %s72, %s75
    %p81 = scmp.eq.s32.totalorder %s10, 0
    %p82 = por %p80, %p81
    %p83 = scmp.ne.s32.totalorder %s72, %s75
    %p84 = scmp.eq.s32.totalorder %s15, 7
    %p85 = por %p83, %p84
    %p86 = scmp.ne.s32.totalorder %s75, %s76
    %p87 = scmp.eq.s32.totalorder %s15, 0
    %p88 = por %p86, %p87
    %p89 = scmp.ne.s32.totalorder %s75, %s76
    %p90 = scmp.eq.s32.totalorder %s16, 7
    %p91 = por %p89, %p90
    %p93 = scmp.ne.s32.totalorder %s76, %s92
    %p94 = scmp.eq.s32.totalorder %s16, 0
    %p95 = por %p93, %p94
    %s96 = ssub.s32 %s10, %s17
    %p97 = scmp.eq.s32.totalorder %s96, 0
    %s99 = sadd.s32 %s98, 1
    %s100 = scalar_select %p97, %s98, %s99
    %p103 = pneg %p97
    %p104 = scmp.eq.s32.totalorder %s10, 7
    %p105 = por %p103, %p104
    %p106 = scmp.ne.s32.totalorder %s98, %s101
    %p107 = scmp.eq.s32.totalorder %s10, 0
    %p108 = por %p106, %p107
    %p109 = scmp.ne.s32.totalorder %s98, %s101
    %p110 = scmp.eq.s32.totalorder %s15, 7
    %p111 = por %p109, %p110
    %p112 = scmp.ne.s32.totalorder %s101, %s102
    %p113 = scmp.eq.s32.totalorder %s15, 0
    %p114 = por %p112, %p113
    %p115 = scmp.ne.s32.totalorder %s101, %s102
    %p116 = scmp.eq.s32.totalorder %s16, 7
    %p117 = por %p115, %p116
    %p119 = scmp.ne.s32.totalorder %s102, %s118
    %p120 = scmp.eq.s32.totalorder %s16, 0
    %p121 = por %p119, %p120
    %p122 = scmp.le.s32.totalorder 1, %s10
    %p123 = scmp.lt.s32.totalorder %s10, 9
    %p124 = pnand %p122, %p123
    %p125 = pneg %p124
    // Predicated region
    $region9: #{forward.14} parent=5 // pred_check
      _
    $region10: #{forward.14} parent=5 // pred_check_branch
      %127 = sbr.rel (%p124) target = $region12
    $region11: #{forward.14} parent=5 // pred_region
      %s128 = ssub.s32 %s10, 1
    $region12: #{forward.14} parent=5 // pred_fallthru
      _
    %p129 = scmp.lt.s32.totalorder %s10, 8
    // Predicated region
    $region13: #{forward.14} parent=5 // pred_check
      %p130 = pneg %p129
    $region14: #{forward.14} parent=5 // pred_check_branch
      %132 = sbr.rel (%p130) target = $region16
    $region15: #{forward.14} parent=5 // pred_region
      // Predicated region
      $region17: #{forward.14} parent=15 // pred_check
        %p133 = pneg %p30
      $region18: #{forward.14} parent=15 // pred_check_branch
        %135 = sbr.rel (%p133) target = $region20
      $region19: #{forward.14} parent=15 // pred_region
        %p136 = scmp.lt.s32.totalorder %s10, 7
        %s137 = scalar_select %p136, %s10, 7
        %s138 = smul.addr %s137, 8
        %s139 = scalar_lea.vmem %s0, %s138
      $region20: #{forward.14} parent=15 // pred_fallthru
        _
      // Predicated region
      $region21: #{forward.14} parent=15 // pred_check
        %p140 = pneg %p56
      $region22: #{forward.14} parent=15 // pred_check_branch
        %142 = sbr.rel (%p140) target = $region24
      $region23: #{forward.14} parent=15 // pred_region
        %p143 = scmp.lt.s32.totalorder %s10, 7
        %s144 = scalar_select %p143, %s10, 7
        %s145 = smul.addr %s144, 8
        %s146 = scalar_lea.vmem %s1, %s145
      $region24: #{forward.14} parent=15 // pred_fallthru
        _
    $region16: #{forward.14} parent=5 // pred_fallthru
      _
    %p147 = scmp.le.s32.totalorder 1, %s10
    %p148 = scmp.lt.s32.totalorder %s10, 9
    %p149 = pnand %p147, %p148
    %p150 = pneg %p149
    // Predicated region
    $region25: #{forward.14} parent=5 // pred_check
      _
    $region26: #{forward.14} parent=5 // pred_check_branch
      %152 = sbr.rel (%p149) target = $region28
    $region27: #{forward.14} parent=5 // pred_region
      %s153 = ssub.s32 %s10, 1
      %p154 = scmp.lt.s32.totalorder %s15, 7
      %s155 = scalar_select %p154, %s15, 7
      %s156 = smul.addr %s155, 8
      %s157 = scalar_lea.vmem %s0, %s156
      %p158 = pneg %p36
      %p159 = pneg %p33
      %p160 = scmp.lt.s32.totalorder %s15, 7
      %s161 = scalar_select %p160, %s15, 7
      %s162 = smul.addr %s161, 8
      %s163 = scalar_lea.vmem %s1, %s162
      %p164 = pneg %p62
      %p165 = pneg %p59
      %p166 = pneg %p88
      %p167 = pneg %p85
      %p168 = scmp.lt.s32.totalorder %s15, 7
      %s169 = scalar_select %p168, %s15, 7
      %s170 = smul.addr %s169, 8
      %s171 = scalar_lea.vmem %s2, %s170
      %p172 = pneg %p114
      %p173 = pneg %p111
      %p174 = scmp.lt.s32.totalorder %s15, 7
      %s175 = scalar_select %p174, %s15, 7
      %s176 = smul.addr %s175, 8
      %s177 = scalar_lea.vmem %s3, %s176
      %p178 = scmp.lt.s32.totalorder %s15, 7
      %s179 = scalar_select %p178, %s15, 7
      %s180 = smul.addr %s179, 8
      %s181 = scalar_lea.vmem %s0, %s180
      %p182 = scmp.lt.s32.totalorder %s15, 7
      %s183 = scalar_select %p182, %s15, 7
      %s184 = smul.addr %s183, 8
      %s185 = scalar_lea.vmem %s1, %s184
      %p186 = scmp.lt.s32.totalorder %s15, 7
      %s187 = scalar_select %p186, %s15, 7
      %s188 = smul.addr %s187, 8
      %s189 = scalar_lea.vmem %s2, %s188
      %p190 = scmp.lt.s32.totalorder %s15, 7
      %s191 = scalar_select %p190, %s15, 7
      %s192 = smul.addr %s191, 8
      %s193 = scalar_lea.vmem %s3, %s192
      %v194 = vld [vmem:[%s181] sm:$0xff]
      %v195 = vld [vmem:[%s185] sm:$0xff]
      %vm196 = vcmask 64512
      %v198 = vsel %vm196, %v194, 0
      %200 = vmatprep.subr.mxu0 0.0
      %201 = vmatpush1.xpose.msra.mxu0 0.0
      %202 = vmatprep.subr.mxu0 0.0
      %203 = vmatpush1.xpose.msra.mxu0 0.0
      %204 = vmatprep.subr.mxu0 0.0
      %205 = vmatpush1.xpose.msra.mxu0 0.0
      %206 = vmatprep.subr.mxu0 0.0
      %207 = vmatpush1.xpose.msra.mxu0 0.0
      %208 = vmatprep.subr.mxu0 0.0
      %209 = vmatpush1.xpose.msra.mxu0 0.0
      %210 = vmatprep.subr.mxu0 0.0
      %211 = vmatpush1.xpose.msra.mxu0 0.0
      %212 = vmatprep.subr.mxu0 0.0
      %213 = vmatpush1.xpose.msra.mxu0 0.0
      %214 = vmatprep.subr.mxu0 0.0
      %215 = vmatpush1.xpose.msra.mxu0 0.0
      %216 = vmatprep.subr.mxu0 0.0
      %217 = vmatpush1.xpose.msra.mxu0 0.0
      %218 = vmatprep.subr.mxu0 0.0
      %219 = vmatpush1.xpose.msra.mxu0 0.0
      %220 = vmatprep.subr.mxu0 0.0
      %221 = vmatpush1.xpose.msra.mxu0 0.0
      %222 = vmatprep.subr.mxu0 0.0
      %223 = vmatpush1.xpose.msra.mxu0 0.0
      %224 = vmatprep.subr.mxu0 0.0
      %225 = vmatpush1.xpose.msra.mxu0 0.0
      %226 = vmatprep.subr.mxu0 0.0
      %227 = vmatpush1.xpose.msra.mxu0 0.0
      %228 = vmatprep.subr.mxu0 0.0
      %229 = vmatpush1.xpose.msra.mxu0 0.0
      %230 = vmatprep.subr.mxu0 0.0
      %v231 = vand.u32 %v198, 4294901760
      %232 = vmatpush1.xpose.msra.mxu0 %v231
      %233 = vmatprep.subr.mxu0 0.0
      %234 = vmatpush2.xpose.msra.mxu0 0.0
      %235 = vmatprep.subr.mxu0 0.0
      %236 = vmatpush2.xpose.msra.mxu0 0.0
      %237 = vmatprep.subr.mxu0 0.0
      %238 = vmatpush2.xpose.msra.mxu0 0.0
      %239 = vmatprep.subr.mxu0 0.0
      %240 = vmatpush2.xpose.msra.mxu0 0.0
      %241 = vmatprep.subr.mxu0 0.0
      %242 = vmatpush2.xpose.msra.mxu0 0.0
      %243 = vmatprep.subr.mxu0 0.0
      %244 = vmatpush2.xpose.msra.mxu0 0.0
      %245 = vmatprep.subr.mxu0 0.0
      %246 = vmatpush2.xpose.msra.mxu0 0.0
      %247 = vmatprep.subr.mxu0 0.0
      %248 = vmatpush2.xpose.msra.mxu0 0.0
      %249 = vmatprep.subr.mxu0 0.0
      %250 = vmatpush2.xpose.msra.mxu0 0.0
      %251 = vmatprep.subr.mxu0 0.0
      %252 = vmatpush2.xpose.msra.mxu0 0.0
      %253 = vmatprep.subr.mxu0 0.0
      %254 = vmatpush2.xpose.msra.mxu0 0.0
      %255 = vmatprep.subr.mxu0 0.0
      %256 = vmatpush2.xpose.msra.mxu0 0.0
      %257 = vmatprep.subr.mxu0 0.0
      %258 = vmatpush2.xpose.msra.mxu0 0.0
      %259 = vmatprep.subr.mxu0 0.0
      %260 = vmatpush2.xpose.msra.mxu0 0.0
      %261 = vmatprep.subr.mxu0 0.0
      %262 = vmatpush2.xpose.msra.mxu0 0.0
      %263 = vmatprep.subr.mxu0 0.0
      %264 = vmatpush2.xpose.msra.mxu0 0.0
      %265 = vmatprep.mubr.f32.mxu0 0.0
      %v266 = vand.u32 %v198, 4294901760
      %v267 = vsub.f32 %v198, %v266
      %v268 = vand.u32 %v267, 4294901760
      %v269 = vsub.f32 %v267, %v268
      %v270 = vand.u32 %v269, 4294901760
      %271 = vmatmul.mubr.f32.gmra.mxu0 %v270
      %v272 = vpop.f32.mrf.mxu0
      %v273 = vadd.f32 0.0, %v272
      %v274 = vpop.f32.mrf.mxu0
      %275 = vdwg.mxu0
      %276 = vmatprep.subr.mxu0 0.0
      %277 = vmatpush1.xpose.msra.mxu0 0.0
      %278 = vmatprep.subr.mxu0 0.0
      %279 = vmatpush1.xpose.msra.mxu0 0.0
      %280 = vmatprep.subr.mxu0 0.0
      %281 = vmatpush1.xpose.msra.mxu0 0.0
      %282 = vmatprep.subr.mxu0 0.0
      %283 = vmatpush1.xpose.msra.mxu0 0.0
      %284 = vmatprep.subr.mxu0 0.0
      %285 = vmatpush1.xpose.msra.mxu0 0.0
      %286 = vmatprep.subr.mxu0 0.0
      %287 = vmatpush1.xpose.msra.mxu0 0.0
      %288 = vmatprep.subr.mxu0 0.0
      %289 = vmatpush1.xpose.msra.mxu0 0.0
      %290 = vmatprep.subr.mxu0 0.0
      %291 = vmatpush1.xpose.msra.mxu0 0.0
      %292 = vmatprep.subr.mxu0 0.0
      %293 = vmatpush1.xpose.msra.mxu0 0.0
      %294 = vmatprep.subr.mxu0 0.0
      %295 = vmatpush1.xpose.msra.mxu0 0.0
      %296 = vmatprep.subr.mxu0 0.0
      %297 = vmatpush1.xpose.msra.mxu0 0.0
      %298 = vmatprep.subr.mxu0 0.0
      %299 = vmatpush1.xpose.msra.mxu0 0.0
      %300 = vmatprep.subr.mxu0 0.0
      %301 = vmatpush1.xpose.msra.mxu0 0.0
      %302 = vmatprep.subr.mxu0 0.0
      %303 = vmatpush1.xpose.msra.mxu0 0.0
      %304 = vmatprep.subr.mxu0 0.0
      %305 = vmatpush1.xpose.msra.mxu0 0.0
      %306 = vmatprep.subr.mxu0 0.0
      %v307 = vand.u32 %v198, 4294901760
      %v308 = vsub.f32 %v198, %v307
      %v309 = vand.u32 %v308, 4294901760
      %v310 = vsub.f32 %v308, %v309
      %v311 = vand.u32 %v310, 4294901760
      %312 = vmatpush1.xpose.msra.mxu0 %v311
      %313 = vmatprep.subr.mxu0 0.0
      %314 = vmatpush2.xpose.msra.mxu0 0.0
      %315 = vmatprep.subr.mxu0 0.0
      %316 = vmatpush2.xpose.msra.mxu0 0.0
      %317 = vmatprep.subr.mxu0 0.0
      %318 = vmatpush2.xpose.msra.mxu0 0.0
      %319 = vmatprep.subr.mxu0 0.0
      %320 = vmatpush2.xpose.msra.mxu0 0.0
      %321 = vmatprep.subr.mxu0 0.0
      %322 = vmatpush2.xpose.msra.mxu0 0.0
      %323 = vmatprep.subr.mxu0 0.0
      %324 = vmatpush2.xpose.msra.mxu0 0.0
      %325 = vmatprep.subr.mxu0 0.0
      %326 = vmatpush2.xpose.msra.mxu0 0.0
      %327 = vmatprep.subr.mxu0 0.0
      %328 = vmatpush2.xpose.msra.mxu0 0.0
      %329 = vmatprep.subr.mxu0 0.0
      %330 = vmatpush2.xpose.msra.mxu0 0.0
      %331 = vmatprep.subr.mxu0 0.0
      %332 = vmatpush2.xpose.msra.mxu0 0.0
      %333 = vmatprep.subr.mxu0 0.0
      %334 = vmatpush2.xpose.msra.mxu0 0.0
      %335 = vmatprep.subr.mxu0 0.0
      %336 = vmatpush2.xpose.msra.mxu0 0.0
      %337 = vmatprep.subr.mxu0 0.0
      %338 = vmatpush2.xpose.msra.mxu0 0.0
      %339 = vmatprep.subr.mxu0 0.0
      %340 = vmatpush2.xpose.msra.mxu0 0.0
      %341 = vmatprep.subr.mxu0 0.0
      %342 = vmatpush2.xpose.msra.mxu0 0.0
      %343 = vmatprep.subr.mxu0 0.0
      %344 = vmatpush2.xpose.msra.mxu0 0.0
      %345 = vmatprep.mubr.f32.mxu0 0.0
      %v346 = vand.u32 %v198, 4294901760
      %347 = vmatmul.mubr.f32.gmra.mxu0 %v346
      %v348 = vpop.f32.mrf.mxu0
      %v349 = vadd.f32 %v273, %v348
      %v350 = vpop.f32.mrf.mxu0
      %351 = vdwg.mxu0
      %352 = vmatprep.subr.mxu0 0.0
      %353 = vmatpush1.xpose.msra.mxu0 0.0
      %354 = vmatprep.subr.mxu0 0.0
      %355 = vmatpush1.xpose.msra.mxu0 0.0
      %356 = vmatprep.subr.mxu0 0.0
      %357 = vmatpush1.xpose.msra.mxu0 0.0
      %358 = vmatprep.subr.mxu0 0.0
      %359 = vmatpush1.xpose.msra.mxu0 0.0
      %360 = vmatprep.subr.mxu0 0.0
      %361 = vmatpush1.xpose.msra.mxu0 0.0
      %362 = vmatprep.subr.mxu0 0.0
      %363 = vmatpush1.xpose.msra.mxu0 0.0
      %364 = vmatprep.subr.mxu0 0.0
      %365 = vmatpush1.xpose.msra.mxu0 0.0
      %366 = vmatprep.subr.mxu0 0.0
      %367 = vmatpush1.xpose.msra.mxu0 0.0
      %368 = vmatprep.subr.mxu0 0.0
      %369 = vmatpush1.xpose.msra.mxu0 0.0
      %370 = vmatprep.subr.mxu0 0.0
      %371 = vmatpush1.xpose.msra.mxu0 0.0
      %372 = vmatprep.subr.mxu0 0.0
      %373 = vmatpush1.xpose.msra.mxu0 0.0
      %374 = vmatprep.subr.mxu0 0.0
      %375 = vmatpush1.xpose.msra.mxu0 0.0
      %376 = vmatprep.subr.mxu0 0.0
      %377 = vmatpush1.xpose.msra.mxu0 0.0
      %378 = vmatprep.subr.mxu0 0.0
      %379 = vmatpush1.xpose.msra.mxu0 0.0
      %380 = vmatprep.subr.mxu0 0.0
      %381 = vmatpush1.xpose.msra.mxu0 0.0
      %382 = vmatprep.subr.mxu0 0.0
      %v383 = vand.u32 %v198, 4294901760
      %v384 = vsub.f32 %v198, %v383
      %385 = vmatpush1.xpose.msra.mxu0 %v384
      %386 = vmatprep.subr.mxu0 0.0
      %387 = vmatpush2.xpose.msra.mxu0 0.0
      %388 = vmatprep.subr.mxu0 0.0
      %389 = vmatpush2.xpose.msra.mxu0 0.0
      %390 = vmatprep.subr.mxu0 0.0
      %391 = vmatpush2.xpose.msra.mxu0 0.0
      %392 = vmatprep.subr.mxu0 0.0
      %393 = vmatpush2.xpose.msra.mxu0 0.0
      %394 = vmatprep.subr.mxu0 0.0
      %395 = vmatpush2.xpose.msra.mxu0 0.0
      %396 = vmatprep.subr.mxu0 0.0
      %397 = vmatpush2.xpose.msra.mxu0 0.0
      %398 = vmatprep.subr.mxu0 0.0
      %399 = vmatpush2.xpose.msra.mxu0 0.0
      %400 = vmatprep.subr.mxu0 0.0
      %401 = vmatpush2.xpose.msra.mxu0 0.0
      %402 = vmatprep.subr.mxu0 0.0
      %403 = vmatpush2.xpose.msra.mxu0 0.0
      %404 = vmatprep.subr.mxu0 0.0
      %405 = vmatpush2.xpose.msra.mxu0 0.0
      %406 = vmatprep.subr.mxu0 0.0
      %407 = vmatpush2.xpose.msra.mxu0 0.0
      %408 = vmatprep.subr.mxu0 0.0
      %409 = vmatpush2.xpose.msra.mxu0 0.0
      %410 = vmatprep.subr.mxu0 0.0
      %411 = vmatpush2.xpose.msra.mxu0 0.0
      %412 = vmatprep.subr.mxu0 0.0
      %413 = vmatpush2.xpose.msra.mxu0 0.0
      %414 = vmatprep.subr.mxu0 0.0
      %415 = vmatpush2.xpose.msra.mxu0 0.0
      %416 = vmatprep.subr.mxu0 0.0
      %417 = vmatpush2.xpose.msra.mxu0 0.0
      %418 = vmatprep.mubr.f32.mxu0 0.0
      %v419 = vand.u32 %v198, 4294901760
      %v420 = vsub.f32 %v198, %v419
      %421 = vmatmul.mubr.f32.gmra.mxu0 %v420
      %v422 = vpop.f32.mrf.mxu0
      %v423 = vadd.f32 %v349, %v422
      %v424 = vpop.f32.mrf.mxu0
      %425 = vdwg.mxu0
      %426 = vmatprep.subr.mxu0 0.0
      %427 = vmatpush1.xpose.msra.mxu0 0.0
      %428 = vmatprep.subr.mxu0 0.0
      %429 = vmatpush1.xpose.msra.mxu0 0.0
      %430 = vmatprep.subr.mxu0 0.0
      %431 = vmatpush1.xpose.msra.mxu0 0.0
      %432 = vmatprep.subr.mxu0 0.0
      %433 = vmatpush1.xpose.msra.mxu0 0.0
      %434 = vmatprep.subr.mxu0 0.0
      %435 = vmatpush1.xpose.msra.mxu0 0.0
      %436 = vmatprep.subr.mxu0 0.0
      %437 = vmatpush1.xpose.msra.mxu0 0.0
      %438 = vmatprep.subr.mxu0 0.0
      %439 = vmatpush1.xpose.msra.mxu0 0.0
      %440 = vmatprep.subr.mxu0 0.0
      %441 = vmatpush1.xpose.msra.mxu0 0.0
      %442 = vmatprep.subr.mxu0 0.0
      %443 = vmatpush1.xpose.msra.mxu0 0.0
      %444 = vmatprep.subr.mxu0 0.0
      %445 = vmatpush1.xpose.msra.mxu0 0.0
      %446 = vmatprep.subr.mxu0 0.0
      %447 = vmatpush1.xpose.msra.mxu0 0.0
      %448 = vmatprep.subr.mxu0 0.0
      %449 = vmatpush1.xpose.msra.mxu0 0.0
      %450 = vmatprep.subr.mxu0 0.0
      %451 = vmatpush1.xpose.msra.mxu0 0.0
      %452 = vmatprep.subr.mxu0 0.0
      %453 = vmatpush1.xpose.msra.mxu0 0.0
      %454 = vmatprep.subr.mxu0 0.0
      %455 = vmatpush1.xpose.msra.mxu0 0.0
      %456 = vmatprep.subr.mxu0 0.0
      %v457 = vand.u32 %v198, 4294901760
      %458 = vmatpush1.xpose.msra.mxu0 %v457
      %459 = vmatprep.subr.mxu0 0.0
      %460 = vmatpush2.xpose.msra.mxu0 0.0
      %461 = vmatprep.subr.mxu0 0.0
      %462 = vmatpush2.xpose.msra.mxu0 0.0
      %463 = vmatprep.subr.mxu0 0.0
      %464 = vmatpush2.xpose.msra.mxu0 0.0
      %465 = vmatprep.subr.mxu0 0.0
      %466 = vmatpush2.xpose.msra.mxu0 0.0
      %467 = vmatprep.subr.mxu0 0.0
      %468 = vmatpush2.xpose.msra.mxu0 0.0
      %469 = vmatprep.subr.mxu0 0.0
      %470 = vmatpush2.xpose.msra.mxu0 0.0
      %471 = vmatprep.subr.mxu0 0.0
      %472 = vmatpush2.xpose.msra.mxu0 0.0
      %473 = vmatprep.subr.mxu0 0.0
      %474 = vmatpush2.xpose.msra.mxu0 0.0
      %475 = vmatprep.subr.mxu0 0.0
      %476 = vmatpush2.xpose.msra.mxu0 0.0
      %477 = vmatprep.subr.mxu0 0.0
      %478 = vmatpush2.xpose.msra.mxu0 0.0
      %479 = vmatprep.subr.mxu0 0.0
      %480 = vmatpush2.xpose.msra.mxu0 0.0
      %481 = vmatprep.subr.mxu0 0.0
      %482 = vmatpush2.xpose.msra.mxu0 0.0
      %483 = vmatprep.subr.mxu0 0.0
      %484 = vmatpush2.xpose.msra.mxu0 0.0
      %485 = vmatprep.subr.mxu0 0.0
      %486 = vmatpush2.xpose.msra.mxu0 0.0
      %487 = vmatprep.subr.mxu0 0.0
      %488 = vmatpush2.xpose.msra.mxu0 0.0
      %489 = vmatprep.subr.mxu0 0.0
      %490 = vmatpush2.xpose.msra.mxu0 0.0
      %491 = vmatprep.mubr.f32.mxu0 0.0
      %v492 = vand.u32 %v198, 4294901760
      %v493 = vsub.f32 %v198, %v492
      %v494 = vand.u32 %v493, 4294901760
      %495 = vmatmul.mubr.f32.gmra.mxu0 %v494
      %v496 = vpop.f32.mrf.mxu0
      %v497 = vadd.f32 %v423, %v496
      %v498 = vpop.f32.mrf.mxu0
      %499 = vdwg.mxu0
      %500 = vmatprep.subr.mxu0 0.0
      %501 = vmatpush1.xpose.msra.mxu0 0.0
      %502 = vmatprep.subr.mxu0 0.0
      %503 = vmatpush1.xpose.msra.mxu0 0.0
      %504 = vmatprep.subr.mxu0 0.0
      %505 = vmatpush1.xpose.msra.mxu0 0.0
      %506 = vmatprep.subr.mxu0 0.0
      %507 = vmatpush1.xpose.msra.mxu0 0.0
      %508 = vmatprep.subr.mxu0 0.0
      %509 = vmatpush1.xpose.msra.mxu0 0.0
      %510 = vmatprep.subr.mxu0 0.0
      %511 = vmatpush1.xpose.msra.mxu0 0.0
      %512 = vmatprep.subr.mxu0 0.0
      %513 = vmatpush1.xpose.msra.mxu0 0.0
      %514 = vmatprep.subr.mxu0 0.0
      %515 = vmatpush1.xpose.msra.mxu0 0.0
      %516 = vmatprep.subr.mxu0 0.0
      %517 = vmatpush1.xpose.msra.mxu0 0.0
      %518 = vmatprep.subr.mxu0 0.0
      %519 = vmatpush1.xpose.msra.mxu0 0.0
      %520 = vmatprep.subr.mxu0 0.0
      %521 = vmatpush1.xpose.msra.mxu0 0.0
      %522 = vmatprep.subr.mxu0 0.0
      %523 = vmatpush1.xpose.msra.mxu0 0.0
      %524 = vmatprep.subr.mxu0 0.0
      %525 = vmatpush1.xpose.msra.mxu0 0.0
      %526 = vmatprep.subr.mxu0 0.0
      %527 = vmatpush1.xpose.msra.mxu0 0.0
      %528 = vmatprep.subr.mxu0 0.0
      %529 = vmatpush1.xpose.msra.mxu0 0.0
      %530 = vmatprep.subr.mxu0 0.0
      %v531 = vand.u32 %v198, 4294901760
      %v532 = vsub.f32 %v198, %v531
      %v533 = vand.u32 %v532, 4294901760
      %534 = vmatpush1.xpose.msra.mxu0 %v533
      %535 = vmatprep.subr.mxu0 0.0
      %536 = vmatpush2.xpose.msra.mxu0 0.0
      %537 = vmatprep.subr.mxu0 0.0
      %538 = vmatpush2.xpose.msra.mxu0 0.0
      %539 = vmatprep.subr.mxu0 0.0
      %540 = vmatpush2.xpose.msra.mxu0 0.0
      %541 = vmatprep.subr.mxu0 0.0
      %542 = vmatpush2.xpose.msra.mxu0 0.0
      %543 = vmatprep.subr.mxu0 0.0
      %544 = vmatpush2.xpose.msra.mxu0 0.0
      %545 = vmatprep.subr.mxu0 0.0
      %546 = vmatpush2.xpose.msra.mxu0 0.0
      %547 = vmatprep.subr.mxu0 0.0
      %548 = vmatpush2.xpose.msra.mxu0 0.0
      %549 = vmatprep.subr.mxu0 0.0
      %550 = vmatpush2.xpose.msra.mxu0 0.0
      %551 = vmatprep.subr.mxu0 0.0
      %552 = vmatpush2.xpose.msra.mxu0 0.0
      %553 = vmatprep.subr.mxu0 0.0
      %554 = vmatpush2.xpose.msra.mxu0 0.0
      %555 = vmatprep.subr.mxu0 0.0
      %556 = vmatpush2.xpose.msra.mxu0 0.0
      %557 = vmatprep.subr.mxu0 0.0
      %558 = vmatpush2.xpose.msra.mxu0 0.0
      %559 = vmatprep.subr.mxu0 0.0
      %560 = vmatpush2.xpose.msra.mxu0 0.0
      %561 = vmatprep.subr.mxu0 0.0
      %562 = vmatpush2.xpose.msra.mxu0 0.0
      %563 = vmatprep.subr.mxu0 0.0
      %564 = vmatpush2.xpose.msra.mxu0 0.0
      %565 = vmatprep.subr.mxu0 0.0
      %566 = vmatpush2.xpose.msra.mxu0 0.0
      %567 = vmatprep.mubr.f32.mxu0 0.0
      %v568 = vand.u32 %v198, 4294901760
      %569 = vmatmul.mubr.f32.gmra.mxu0 %v568
      %v570 = vpop.f32.mrf.mxu0
      %v571 = vadd.f32 %v497, %v570
      %v572 = vpop.f32.mrf.mxu0
      %573 = vdwg.mxu0
      %574 = vmatprep.subr.mxu0 0.0
      %575 = vmatpush1.xpose.msra.mxu0 0.0
      %576 = vmatprep.subr.mxu0 0.0
      %577 = vmatpush1.xpose.msra.mxu0 0.0
      %578 = vmatprep.subr.mxu0 0.0
      %579 = vmatpush1.xpose.msra.mxu0 0.0
      %580 = vmatprep.subr.mxu0 0.0
      %581 = vmatpush1.xpose.msra.mxu0 0.0
      %582 = vmatprep.subr.mxu0 0.0
      %583 = vmatpush1.xpose.msra.mxu0 0.0
      %584 = vmatprep.subr.mxu0 0.0
      %585 = vmatpush1.xpose.msra.mxu0 0.0
      %586 = vmatprep.subr.mxu0 0.0
      %587 = vmatpush1.xpose.msra.mxu0 0.0
      %588 = vmatprep.subr.mxu0 0.0
      %589 = vmatpush1.xpose.msra.mxu0 0.0
      %590 = vmatprep.subr.mxu0 0.0
      %591 = vmatpush1.xpose.msra.mxu0 0.0
      %592 = vmatprep.subr.mxu0 0.0
      %593 = vmatpush1.xpose.msra.mxu0 0.0
      %594 = vmatprep.subr.mxu0 0.0
      %595 = vmatpush1.xpose.msra.mxu0 0.0
      %596 = vmatprep.subr.mxu0 0.0
      %597 = vmatpush1.xpose.msra.mxu0 0.0
      %598 = vmatprep.subr.mxu0 0.0
      %599 = vmatpush1.xpose.msra.mxu0 0.0
      %600 = vmatprep.subr.mxu0 0.0
      %601 = vmatpush1.xpose.msra.mxu0 0.0
      %602 = vmatprep.subr.mxu0 0.0
      %603 = vmatpush1.xpose.msra.mxu0 0.0
      %604 = vmatprep.subr.mxu0 0.0
      %v605 = vand.u32 %v198, 4294901760
      %606 = vmatpush1.xpose.msra.mxu0 %v605
      %607 = vmatprep.subr.mxu0 0.0
      %608 = vmatpush2.xpose.msra.mxu0 0.0
      %609 = vmatprep.subr.mxu0 0.0
      %610 = vmatpush2.xpose.msra.mxu0 0.0
      %611 = vmatprep.subr.mxu0 0.0
      %612 = vmatpush2.xpose.msra.mxu0 0.0
      %613 = vmatprep.subr.mxu0 0.0
      %614 = vmatpush2.xpose.msra.mxu0 0.0
      %615 = vmatprep.subr.mxu0 0.0
      %616 = vmatpush2.xpose.msra.mxu0 0.0
      %617 = vmatprep.subr.mxu0 0.0
      %618 = vmatpush2.xpose.msra.mxu0 0.0
      %619 = vmatprep.subr.mxu0 0.0
      %620 = vmatpush2.xpose.msra.mxu0 0.0
      %621 = vmatprep.subr.mxu0 0.0
      %622 = vmatpush2.xpose.msra.mxu0 0.0
      %623 = vmatprep.subr.mxu0 0.0
      %624 = vmatpush2.xpose.msra.mxu0 0.0
      %625 = vmatprep.subr.mxu0 0.0
      %626 = vmatpush2.xpose.msra.mxu0 0.0
      %627 = vmatprep.subr.mxu0 0.0
      %628 = vmatpush2.xpose.msra.mxu0 0.0
      %629 = vmatprep.subr.mxu0 0.0
      %630 = vmatpush2.xpose.msra.mxu0 0.0
      %631 = vmatprep.subr.mxu0 0.0
      %632 = vmatpush2.xpose.msra.mxu0 0.0
      %633 = vmatprep.subr.mxu0 0.0
      %634 = vmatpush2.xpose.msra.mxu0 0.0
      %635 = vmatprep.subr.mxu0 0.0
      %636 = vmatpush2.xpose.msra.mxu0 0.0
      %637 = vmatprep.subr.mxu0 0.0
      %638 = vmatpush2.xpose.msra.mxu0 0.0
      %639 = vmatprep.mubr.f32.mxu0 0.0
      %v640 = vand.u32 %v198, 4294901760
      %641 = vmatmul.mubr.f32.gmra.mxu0 %v640
      %v642 = vpop.f32.mrf.mxu0
      %v643 = vadd.f32 %v571, %v642
      %v644 = vpop.f32.mrf.mxu0
      %645 = vdwg.mxu0
      %v647 = vsel %vm196, %v195, 0
      %649 = vmatprep.subr.mxu0 0.0
      %650 = vmatpush1.xpose.msra.mxu0 0.0
      %651 = vmatprep.subr.mxu0 0.0
      %652 = vmatpush1.xpose.msra.mxu0 0.0
      %653 = vmatprep.subr.mxu0 0.0
      %654 = vmatpush1.xpose.msra.mxu0 0.0
      %655 = vmatprep.subr.mxu0 0.0
      %656 = vmatpush1.xpose.msra.mxu0 0.0
      %657 = vmatprep.subr.mxu0 0.0
      %658 = vmatpush1.xpose.msra.mxu0 0.0
      %659 = vmatprep.subr.mxu0 0.0
      %660 = vmatpush1.xpose.msra.mxu0 0.0
      %661 = vmatprep.subr.mxu0 0.0
      %662 = vmatpush1.xpose.msra.mxu0 0.0
      %663 = vmatprep.subr.mxu0 0.0
      %664 = vmatpush1.xpose.msra.mxu0 0.0
      %665 = vmatprep.subr.mxu0 0.0
      %666 = vmatpush1.xpose.msra.mxu0 0.0
      %667 = vmatprep.subr.mxu0 0.0
      %668 = vmatpush1.xpose.msra.mxu0 0.0
      %669 = vmatprep.subr.mxu0 0.0
      %670 = vmatpush1.xpose.msra.mxu0 0.0
      %671 = vmatprep.subr.mxu0 0.0
      %672 = vmatpush1.xpose.msra.mxu0 0.0
      %673 = vmatprep.subr.mxu0 0.0
      %674 = vmatpush1.xpose.msra.mxu0 0.0
      %675 = vmatprep.subr.mxu0 0.0
      %676 = vmatpush1.xpose.msra.mxu0 0.0
      %677 = vmatprep.subr.mxu0 0.0
      %678 = vmatpush1.xpose.msra.mxu0 0.0
      %679 = vmatprep.subr.mxu0 0.0
      %v680 = vand.u32 %v647, 4294901760
      %681 = vmatpush1.xpose.msra.mxu0 %v680
      %682 = vmatprep.subr.mxu0 0.0
      %683 = vmatpush2.xpose.msra.mxu0 0.0
      %684 = vmatprep.subr.mxu0 0.0
      %685 = vmatpush2.xpose.msra.mxu0 0.0
      %686 = vmatprep.subr.mxu0 0.0
      %687 = vmatpush2.xpose.msra.mxu0 0.0
      %688 = vmatprep.subr.mxu0 0.0
      %689 = vmatpush2.xpose.msra.mxu0 0.0
      %690 = vmatprep.subr.mxu0 0.0
      %691 = vmatpush2.xpose.msra.mxu0 0.0
      %692 = vmatprep.subr.mxu0 0.0
      %693 = vmatpush2.xpose.msra.mxu0 0.0
      %694 = vmatprep.subr.mxu0 0.0
      %695 = vmatpush2.xpose.msra.mxu0 0.0
      %696 = vmatprep.subr.mxu0 0.0
      %697 = vmatpush2.xpose.msra.mxu0 0.0
      %698 = vmatprep.subr.mxu0 0.0
      %699 = vmatpush2.xpose.msra.mxu0 0.0
      %700 = vmatprep.subr.mxu0 0.0
      %701 = vmatpush2.xpose.msra.mxu0 0.0
      %702 = vmatprep.subr.mxu0 0.0
      %703 = vmatpush2.xpose.msra.mxu0 0.0
      %704 = vmatprep.subr.mxu0 0.0
      %705 = vmatpush2.xpose.msra.mxu0 0.0
      %706 = vmatprep.subr.mxu0 0.0
      %707 = vmatpush2.xpose.msra.mxu0 0.0
      %708 = vmatprep.subr.mxu0 0.0
      %709 = vmatpush2.xpose.msra.mxu0 0.0
      %710 = vmatprep.subr.mxu0 0.0
      %711 = vmatpush2.xpose.msra.mxu0 0.0
      %712 = vmatprep.subr.mxu0 0.0
      %713 = vmatpush2.xpose.msra.mxu0 0.0
      %714 = vmatprep.mubr.f32.mxu0 0.0
      %v715 = vand.u32 %v647, 4294901760
      %v716 = vsub.f32 %v647, %v715
      %v717 = vand.u32 %v716, 4294901760
      %v718 = vsub.f32 %v716, %v717
      %v719 = vand.u32 %v718, 4294901760
      %720 = vmatmul.mubr.f32.gmra.mxu0 %v719
      %v721 = vpop.f32.mrf.mxu0
      %v722 = vadd.f32 0.0, %v721
      %v723 = vpop.f32.mrf.mxu0
      %724 = vdwg.mxu0
      %725 = vmatprep.subr.mxu0 0.0
      %726 = vmatpush1.xpose.msra.mxu0 0.0
      %727 = vmatprep.subr.mxu0 0.0
      %728 = vmatpush1.xpose.msra.mxu0 0.0
      %729 = vmatprep.subr.mxu0 0.0
      %730 = vmatpush1.xpose.msra.mxu0 0.0
      %731 = vmatprep.subr.mxu0 0.0
      %732 = vmatpush1.xpose.msra.mxu0 0.0
      %733 = vmatprep.subr.mxu0 0.0
      %734 = vmatpush1.xpose.msra.mxu0 0.0
      %735 = vmatprep.subr.mxu0 0.0
      %736 = vmatpush1.xpose.msra.mxu0 0.0
      %737 = vmatprep.subr.mxu0 0.0
      %738 = vmatpush1.xpose.msra.mxu0 0.0
      %739 = vmatprep.subr.mxu0 0.0
      %740 = vmatpush1.xpose.msra.mxu0 0.0
      %741 = vmatprep.subr.mxu0 0.0
      %742 = vmatpush1.xpose.msra.mxu0 0.0
      %743 = vmatprep.subr.mxu0 0.0
      %744 = vmatpush1.xpose.msra.mxu0 0.0
      %745 = vmatprep.subr.mxu0 0.0
      %746 = vmatpush1.xpose.msra.mxu0 0.0
      %747 = vmatprep.subr.mxu0 0.0
      %748 = vmatpush1.xpose.msra.mxu0 0.0
      %749 = vmatprep.subr.mxu0 0.0
      %750 = vmatpush1.xpose.msra.mxu0 0.0
      %751 = vmatprep.subr.mxu0 0.0
      %752 = vmatpush1.xpose.msra.mxu0 0.0
      %753 = vmatprep.subr.mxu0 0.0
      %754 = vmatpush1.xpose.msra.mxu0 0.0
      %755 = vmatprep.subr.mxu0 0.0
      %v756 = vand.u32 %v647, 4294901760
      %v757 = vsub.f32 %v647, %v756
      %v758 = vand.u32 %v757, 4294901760
      %v759 = vsub.f32 %v757, %v758
      %v760 = vand.u32 %v759, 4294901760
      %761 = vmatpush1.xpose.msra.mxu0 %v760
      %762 = vmatprep.subr.mxu0 0.0
      %763 = vmatpush2.xpose.msra.mxu0 0.0
      %764 = vmatprep.subr.mxu0 0.0
      %765 = vmatpush2.xpose.msra.mxu0 0.0
      %766 = vmatprep.subr.mxu0 0.0
      %767 = vmatpush2.xpose.msra.mxu0 0.0
      %768 = vmatprep.subr.mxu0 0.0
      %769 = vmatpush2.xpose.msra.mxu0 0.0
      %770 = vmatprep.subr.mxu0 0.0
      %771 = vmatpush2.xpose.msra.mxu0 0.0
      %772 = vmatprep.subr.mxu0 0.0
      %773 = vmatpush2.xpose.msra.mxu0 0.0
      %774 = vmatprep.subr.mxu0 0.0
      %775 = vmatpush2.xpose.msra.mxu0 0.0
      %776 = vmatprep.subr.mxu0 0.0
      %777 = vmatpush2.xpose.msra.mxu0 0.0
      %778 = vmatprep.subr.mxu0 0.0
      %779 = vmatpush2.xpose.msra.mxu0 0.0
      %780 = vmatprep.subr.mxu0 0.0
      %781 = vmatpush2.xpose.msra.mxu0 0.0
      %782 = vmatprep.subr.mxu0 0.0
      %783 = vmatpush2.xpose.msra.mxu0 0.0
      %784 = vmatprep.subr.mxu0 0.0
      %785 = vmatpush2.xpose.msra.mxu0 0.0
      %786 = vmatprep.subr.mxu0 0.0
      %787 = vmatpush2.xpose.msra.mxu0 0.0
      %788 = vmatprep.subr.mxu0 0.0
      %789 = vmatpush2.xpose.msra.mxu0 0.0
      %790 = vmatprep.subr.mxu0 0.0
      %791 = vmatpush2.xpose.msra.mxu0 0.0
      %792 = vmatprep.subr.mxu0 0.0
      %793 = vmatpush2.xpose.msra.mxu0 0.0
      %794 = vmatprep.mubr.f32.mxu0 0.0
      %v795 = vand.u32 %v647, 4294901760
      %796 = vmatmul.mubr.f32.gmra.mxu0 %v795
      %v797 = vpop.f32.mrf.mxu0
      %v798 = vadd.f32 %v722, %v797
      %v799 = vpop.f32.mrf.mxu0
      %800 = vdwg.mxu0
      %801 = vmatprep.subr.mxu0 0.0
      %802 = vmatpush1.xpose.msra.mxu0 0.0
      %803 = vmatprep.subr.mxu0 0.0
      %804 = vmatpush1.xpose.msra.mxu0 0.0
      %805 = vmatprep.subr.mxu0 0.0
      %806 = vmatpush1.xpose.msra.mxu0 0.0
      %807 = vmatprep.subr.mxu0 0.0
      %808 = vmatpush1.xpose.msra.mxu0 0.0
      %809 = vmatprep.subr.mxu0 0.0
      %810 = vmatpush1.xpose.msra.mxu0 0.0
      %811 = vmatprep.subr.mxu0 0.0
      %812 = vmatpush1.xpose.msra.mxu0 0.0
      %813 = vmatprep.subr.mxu0 0.0
      %814 = vmatpush1.xpose.msra.mxu0 0.0
      %815 = vmatprep.subr.mxu0 0.0
      %816 = vmatpush1.xpose.msra.mxu0 0.0
      %817 = vmatprep.subr.mxu0 0.0
      %818 = vmatpush1.xpose.msra.mxu0 0.0
      %819 = vmatprep.subr.mxu0 0.0
      %820 = vmatpush1.xpose.msra.mxu0 0.0
      %821 = vmatprep.subr.mxu0 0.0
      %822 = vmatpush1.xpose.msra.mxu0 0.0
      %823 = vmatprep.subr.mxu0 0.0
      %824 = vmatpush1.xpose.msra.mxu0 0.0
      %825 = vmatprep.subr.mxu0 0.0
      %826 = vmatpush1.xpose.msra.mxu0 0.0
      %827 = vmatprep.subr.mxu0 0.0
      %828 = vmatpush1.xpose.msra.mxu0 0.0
      %829 = vmatprep.subr.mxu0 0.0
      %830 = vmatpush1.xpose.msra.mxu0 0.0
      %831 = vmatprep.subr.mxu0 0.0
      %v832 = vand.u32 %v647, 4294901760
      %v833 = vsub.f32 %v647, %v832
      %834 = vmatpush1.xpose.msra.mxu0 %v833
      %835 = vmatprep.subr.mxu0 0.0
      %836 = vmatpush2.xpose.msra.mxu0 0.0
      %837 = vmatprep.subr.mxu0 0.0
      %838 = vmatpush2.xpose.msra.mxu0 0.0
      %839 = vmatprep.subr.mxu0 0.0
      %840 = vmatpush2.xpose.msra.mxu0 0.0
      %841 = vmatprep.subr.mxu0 0.0
      %842 = vmatpush2.xpose.msra.mxu0 0.0
      %843 = vmatprep.subr.mxu0 0.0
      %844 = vmatpush2.xpose.msra.mxu0 0.0
      %845 = vmatprep.subr.mxu0 0.0
      %846 = vmatpush2.xpose.msra.mxu0 0.0
      %847 = vmatprep.subr.mxu0 0.0
      %848 = vmatpush2.xpose.msra.mxu0 0.0
      %849 = vmatprep.subr.mxu0 0.0
      %850 = vmatpush2.xpose.msra.mxu0 0.0
      %851 = vmatprep.subr.mxu0 0.0
      %852 = vmatpush2.xpose.msra.mxu0 0.0
      %853 = vmatprep.subr.mxu0 0.0
      %854 = vmatpush2.xpose.msra.mxu0 0.0
      %855 = vmatprep.subr.mxu0 0.0
      %856 = vmatpush2.xpose.msra.mxu0 0.0
      %857 = vmatprep.subr.mxu0 0.0
      %858 = vmatpush2.xpose.msra.mxu0 0.0
      %859 = vmatprep.subr.mxu0 0.0
      %860 = vmatpush2.xpose.msra.mxu0 0.0
      %861 = vmatprep.subr.mxu0 0.0
      %862 = vmatpush2.xpose.msra.mxu0 0.0
      %863 = vmatprep.subr.mxu0 0.0
      %864 = vmatpush2.xpose.msra.mxu0 0.0
      %865 = vmatprep.subr.mxu0 0.0
      %866 = vmatpush2.xpose.msra.mxu0 0.0
      %867 = vmatprep.mubr.f32.mxu0 0.0
      %v868 = vand.u32 %v647, 4294901760
      %v869 = vsub.f32 %v647, %v868
      %870 = vmatmul.mubr.f32.gmra.mxu0 %v869
      %v871 = vpop.f32.mrf.mxu0
      %v872 = vadd.f32 %v798, %v871
      %v873 = vpop.f32.mrf.mxu0
      %874 = vdwg.mxu0
      %875 = vmatprep.subr.mxu0 0.0
      %876 = vmatpush1.xpose.msra.mxu0 0.0
      %877 = vmatprep.subr.mxu0 0.0
      %878 = vmatpush1.xpose.msra.mxu0 0.0
      %879 = vmatprep.subr.mxu0 0.0
      %880 = vmatpush1.xpose.msra.mxu0 0.0
      %881 = vmatprep.subr.mxu0 0.0
      %882 = vmatpush1.xpose.msra.mxu0 0.0
      %883 = vmatprep.subr.mxu0 0.0
      %884 = vmatpush1.xpose.msra.mxu0 0.0
      %885 = vmatprep.subr.mxu0 0.0
      %886 = vmatpush1.xpose.msra.mxu0 0.0
      %887 = vmatprep.subr.mxu0 0.0
      %888 = vmatpush1.xpose.msra.mxu0 0.0
      %889 = vmatprep.subr.mxu0 0.0
      %890 = vmatpush1.xpose.msra.mxu0 0.0
      %891 = vmatprep.subr.mxu0 0.0
      %892 = vmatpush1.xpose.msra.mxu0 0.0
      %893 = vmatprep.subr.mxu0 0.0
      %894 = vmatpush1.xpose.msra.mxu0 0.0
      %895 = vmatprep.subr.mxu0 0.0
      %896 = vmatpush1.xpose.msra.mxu0 0.0
      %897 = vmatprep.subr.mxu0 0.0
      %898 = vmatpush1.xpose.msra.mxu0 0.0
      %899 = vmatprep.subr.mxu0 0.0
      %900 = vmatpush1.xpose.msra.mxu0 0.0
      %901 = vmatprep.subr.mxu0 0.0
      %902 = vmatpush1.xpose.msra.mxu0 0.0
      %903 = vmatprep.subr.mxu0 0.0
      %904 = vmatpush1.xpose.msra.mxu0 0.0
      %905 = vmatprep.subr.mxu0 0.0
      %v906 = vand.u32 %v647, 4294901760
      %907 = vmatpush1.xpose.msra.mxu0 %v906
      %908 = vmatprep.subr.mxu0 0.0
      %909 = vmatpush2.xpose.msra.mxu0 0.0
      %910 = vmatprep.subr.mxu0 0.0
      %911 = vmatpush2.xpose.msra.mxu0 0.0
      %912 = vmatprep.subr.mxu0 0.0
      %913 = vmatpush2.xpose.msra.mxu0 0.0
      %914 = vmatprep.subr.mxu0 0.0
      %915 = vmatpush2.xpose.msra.mxu0 0.0
      %916 = vmatprep.subr.mxu0 0.0
      %917 = vmatpush2.xpose.msra.mxu0 0.0
      %918 = vmatprep.subr.mxu0 0.0
      %919 = vmatpush2.xpose.msra.mxu0 0.0
      %920 = vmatprep.subr.mxu0 0.0
      %921 = vmatpush2.xpose.msra.mxu0 0.0
      %922 = vmatprep.subr.mxu0 0.0
      %923 = vmatpush2.xpose.msra.mxu0 0.0
      %924 = vmatprep.subr.mxu0 0.0
      %925 = vmatpush2.xpose.msra.mxu0 0.0
      %926 = vmatprep.subr.mxu0 0.0
      %927 = vmatpush2.xpose.msra.mxu0 0.0
      %928 = vmatprep.subr.mxu0 0.0
      %929 = vmatpush2.xpose.msra.mxu0 0.0
      %930 = vmatprep.subr.mxu0 0.0
      %931 = vmatpush2.xpose.msra.mxu0 0.0
      %932 = vmatprep.subr.mxu0 0.0
      %933 = vmatpush2.xpose.msra.mxu0 0.0
      %934 = vmatprep.subr.mxu0 0.0
      %935 = vmatpush2.xpose.msra.mxu0 0.0
      %936 = vmatprep.subr.mxu0 0.0
      %937 = vmatpush2.xpose.msra.mxu0 0.0
      %938 = vmatprep.subr.mxu0 0.0
      %939 = vmatpush2.xpose.msra.mxu0 0.0
      %940 = vmatprep.mubr.f32.mxu0 0.0
      %v941 = vand.u32 %v647, 4294901760
      %v942 = vsub.f32 %v647, %v941
      %v943 = vand.u32 %v942, 4294901760
      %944 = vmatmul.mubr.f32.gmra.mxu0 %v943
      %v945 = vpop.f32.mrf.mxu0
      %v946 = vadd.f32 %v872, %v945
      %v947 = vpop.f32.mrf.mxu0
      %948 = vdwg.mxu0
      %949 = vmatprep.subr.mxu0 0.0
      %950 = vmatpush1.xpose.msra.mxu0 0.0
      %951 = vmatprep.subr.mxu0 0.0
      %952 = vmatpush1.xpose.msra.mxu0 0.0
      %953 = vmatprep.subr.mxu0 0.0
      %954 = vmatpush1.xpose.msra.mxu0 0.0
      %955 = vmatprep.subr.mxu0 0.0
      %956 = vmatpush1.xpose.msra.mxu0 0.0
      %957 = vmatprep.subr.mxu0 0.0
      %958 = vmatpush1.xpose.msra.mxu0 0.0
      %959 = vmatprep.subr.mxu0 0.0
      %960 = vmatpush1.xpose.msra.mxu0 0.0
      %961 = vmatprep.subr.mxu0 0.0
      %962 = vmatpush1.xpose.msra.mxu0 0.0
      %963 = vmatprep.subr.mxu0 0.0
      %964 = vmatpush1.xpose.msra.mxu0 0.0
      %965 = vmatprep.subr.mxu0 0.0
      %966 = vmatpush1.xpose.msra.mxu0 0.0
      %967 = vmatprep.subr.mxu0 0.0
      %968 = vmatpush1.xpose.msra.mxu0 0.0
      %969 = vmatprep.subr.mxu0 0.0
      %970 = vmatpush1.xpose.msra.mxu0 0.0
      %971 = vmatprep.subr.mxu0 0.0
      %972 = vmatpush1.xpose.msra.mxu0 0.0
      %973 = vmatprep.subr.mxu0 0.0
      %974 = vmatpush1.xpose.msra.mxu0 0.0
      %975 = vmatprep.subr.mxu0 0.0
      %976 = vmatpush1.xpose.msra.mxu0 0.0
      %977 = vmatprep.subr.mxu0 0.0
      %978 = vmatpush1.xpose.msra.mxu0 0.0
      %979 = vmatprep.subr.mxu0 0.0
      %v980 = vand.u32 %v647, 4294901760
      %v981 = vsub.f32 %v647, %v980
      %v982 = vand.u32 %v981, 4294901760
      %983 = vmatpush1.xpose.msra.mxu0 %v982
      %984 = vmatprep.subr.mxu0 0.0
      %985 = vmatpush2.xpose.msra.mxu0 0.0
      %986 = vmatprep.subr.mxu0 0.0
      %987 = vmatpush2.xpose.msra.mxu0 0.0
      %988 = vmatprep.subr.mxu0 0.0
      %989 = vmatpush2.xpose.msra.mxu0 0.0
      %990 = vmatprep.subr.mxu0 0.0
      %991 = vmatpush2.xpose.msra.mxu0 0.0
      %992 = vmatprep.subr.mxu0 0.0
      %993 = vmatpush2.xpose.msra.mxu0 0.0
      %994 = vmatprep.subr.mxu0 0.0
      %995 = vmatpush2.xpose.msra.mxu0 0.0
      %996 = vmatprep.subr.mxu0 0.0
      %997 = vmatpush2.xpose.msra.mxu0 0.0
      %998 = vmatprep.subr.mxu0 0.0
      %999 = vmatpush2.xpose.msra.mxu0 0.0
      %1000 = vmatprep.subr.mxu0 0.0
      %1001 = vmatpush2.xpose.msra.mxu0 0.0
      %1002 = vmatprep.subr.mxu0 0.0
      %1003 = vmatpush2.xpose.msra.mxu0 0.0
      %1004 = vmatprep.subr.mxu0 0.0
      %1005 = vmatpush2.xpose.msra.mxu0 0.0
      %1006 = vmatprep.subr.mxu0 0.0
      %1007 = vmatpush2.xpose.msra.mxu0 0.0
      %1008 = vmatprep.subr.mxu0 0.0
      %1009 = vmatpush2.xpose.msra.mxu0 0.0
      %1010 = vmatprep.subr.mxu0 0.0
      %1011 = vmatpush2.xpose.msra.mxu0 0.0
      %1012 = vmatprep.subr.mxu0 0.0
      %1013 = vmatpush2.xpose.msra.mxu0 0.0
      %1014 = vmatprep.subr.mxu0 0.0
      %1015 = vmatpush2.xpose.msra.mxu0 0.0
      %1016 = vmatprep.mubr.f32.mxu0 0.0
      %v1017 = vand.u32 %v647, 4294901760
      %1018 = vmatmul.mubr.f32.gmra.mxu0 %v1017
      %v1019 = vpop.f32.mrf.mxu0
      %v1020 = vadd.f32 %v946, %v1019
      %v1021 = vpop.f32.mrf.mxu0
      %1022 = vdwg.mxu0
      %1023 = vmatprep.subr.mxu0 0.0
      %1024 = vmatpush1.xpose.msra.mxu0 0.0
      %1025 = vmatprep.subr.mxu0 0.0
      %1026 = vmatpush1.xpose.msra.mxu0 0.0
      %1027 = vmatprep.subr.mxu0 0.0
      %1028 = vmatpush1.xpose.msra.mxu0 0.0
      %1029 = vmatprep.subr.mxu0 0.0
      %1030 = vmatpush1.xpose.msra.mxu0 0.0
      %1031 = vmatprep.subr.mxu0 0.0
      %1032 = vmatpush1.xpose.msra.mxu0 0.0
      %1033 = vmatprep.subr.mxu0 0.0
      %1034 = vmatpush1.xpose.msra.mxu0 0.0
      %1035 = vmatprep.subr.mxu0 0.0
      %1036 = vmatpush1.xpose.msra.mxu0 0.0
      %1037 = vmatprep.subr.mxu0 0.0
      %1038 = vmatpush1.xpose.msra.mxu0 0.0
      %1039 = vmatprep.subr.mxu0 0.0
      %1040 = vmatpush1.xpose.msra.mxu0 0.0
      %1041 = vmatprep.subr.mxu0 0.0
      %1042 = vmatpush1.xpose.msra.mxu0 0.0
      %1043 = vmatprep.subr.mxu0 0.0
      %1044 = vmatpush1.xpose.msra.mxu0 0.0
      %1045 = vmatprep.subr.mxu0 0.0
      %1046 = vmatpush1.xpose.msra.mxu0 0.0
      %1047 = vmatprep.subr.mxu0 0.0
      %1048 = vmatpush1.xpose.msra.mxu0 0.0
      %1049 = vmatprep.subr.mxu0 0.0
      %1050 = vmatpush1.xpose.msra.mxu0 0.0
      %1051 = vmatprep.subr.mxu0 0.0
      %1052 = vmatpush1.xpose.msra.mxu0 0.0
      %1053 = vmatprep.subr.mxu0 0.0
      %v1054 = vand.u32 %v647, 4294901760
      %1055 = vmatpush1.xpose.msra.mxu0 %v1054
      %1056 = vmatprep.subr.mxu0 0.0
      %1057 = vmatpush2.xpose.msra.mxu0 0.0
      %1058 = vmatprep.subr.mxu0 0.0
      %1059 = vmatpush2.xpose.msra.mxu0 0.0
      %1060 = vmatprep.subr.mxu0 0.0
      %1061 = vmatpush2.xpose.msra.mxu0 0.0
      %1062 = vmatprep.subr.mxu0 0.0
      %1063 = vmatpush2.xpose.msra.mxu0 0.0
      %1064 = vmatprep.subr.mxu0 0.0
      %1065 = vmatpush2.xpose.msra.mxu0 0.0
      %1066 = vmatprep.subr.mxu0 0.0
      %1067 = vmatpush2.xpose.msra.mxu0 0.0
      %1068 = vmatprep.subr.mxu0 0.0
      %1069 = vmatpush2.xpose.msra.mxu0 0.0
      %1070 = vmatprep.subr.mxu0 0.0
      %1071 = vmatpush2.xpose.msra.mxu0 0.0
      %1072 = vmatprep.subr.mxu0 0.0
      %1073 = vmatpush2.xpose.msra.mxu0 0.0
      %1074 = vmatprep.subr.mxu0 0.0
      %1075 = vmatpush2.xpose.msra.mxu0 0.0
      %1076 = vmatprep.subr.mxu0 0.0
      %1077 = vmatpush2.xpose.msra.mxu0 0.0
      %1078 = vmatprep.subr.mxu0 0.0
      %1079 = vmatpush2.xpose.msra.mxu0 0.0
      %1080 = vmatprep.subr.mxu0 0.0
      %1081 = vmatpush2.xpose.msra.mxu0 0.0
      %1082 = vmatprep.subr.mxu0 0.0
      %1083 = vmatpush2.xpose.msra.mxu0 0.0
      %1084 = vmatprep.subr.mxu0 0.0
      %1085 = vmatpush2.xpose.msra.mxu0 0.0
      %1086 = vmatprep.subr.mxu0 0.0
      %1087 = vmatpush2.xpose.msra.mxu0 0.0
      %1088 = vmatprep.mubr.f32.mxu0 0.0
      %v1089 = vand.u32 %v647, 4294901760
      %1090 = vmatmul.mubr.f32.gmra.mxu0 %v1089
      %v1091 = vpop.f32.mrf.mxu0
      %v1092 = vadd.f32 %v1020, %v1091
      %v1093 = vpop.f32.mrf.mxu0
      %1094 = vdwg.mxu0
      %v1095 = vadd.f32 %v194, %v195
      %v1096 = vsub.f32 %v194, %v195
      %v1098 = vsel %vm196, %v1095, 0
      %v1101 = vsel %vm196, %v1096, 0
      %1103 = vmatprep.subr.mxu0 0.0
      %1104 = vmatpush1.xpose.msra.mxu0 0.0
      %1105 = vmatprep.subr.mxu0 0.0
      %1106 = vmatpush1.xpose.msra.mxu0 0.0
      %1107 = vmatprep.subr.mxu0 0.0
      %1108 = vmatpush1.xpose.msra.mxu0 0.0
      %1109 = vmatprep.subr.mxu0 0.0
      %1110 = vmatpush1.xpose.msra.mxu0 0.0
      %1111 = vmatprep.subr.mxu0 0.0
      %1112 = vmatpush1.xpose.msra.mxu0 0.0
      %1113 = vmatprep.subr.mxu0 0.0
      %1114 = vmatpush1.xpose.msra.mxu0 0.0
      %1115 = vmatprep.subr.mxu0 0.0
      %1116 = vmatpush1.xpose.msra.mxu0 0.0
      %1117 = vmatprep.subr.mxu0 0.0
      %1118 = vmatpush1.xpose.msra.mxu0 0.0
      %1119 = vmatprep.subr.mxu0 0.0
      %1120 = vmatpush1.xpose.msra.mxu0 0.0
      %1121 = vmatprep.subr.mxu0 0.0
      %1122 = vmatpush1.xpose.msra.mxu0 0.0
      %1123 = vmatprep.subr.mxu0 0.0
      %1124 = vmatpush1.xpose.msra.mxu0 0.0
      %1125 = vmatprep.subr.mxu0 0.0
      %1126 = vmatpush1.xpose.msra.mxu0 0.0
      %1127 = vmatprep.subr.mxu0 0.0
      %1128 = vmatpush1.xpose.msra.mxu0 0.0
      %1129 = vmatprep.subr.mxu0 0.0
      %1130 = vmatpush1.xpose.msra.mxu0 0.0
      %1131 = vmatprep.subr.mxu0 0.0
      %1132 = vmatpush1.xpose.msra.mxu0 0.0
      %1133 = vmatprep.subr.mxu0 0.0
      %v1134 = vand.u32 %v1101, 4294901760
      %1135 = vmatpush1.xpose.msra.mxu0 %v1134
      %1136 = vmatprep.subr.mxu0 0.0
      %1137 = vmatpush2.xpose.msra.mxu0 0.0
      %1138 = vmatprep.subr.mxu0 0.0
      %1139 = vmatpush2.xpose.msra.mxu0 0.0
      %1140 = vmatprep.subr.mxu0 0.0
      %1141 = vmatpush2.xpose.msra.mxu0 0.0
      %1142 = vmatprep.subr.mxu0 0.0
      %1143 = vmatpush2.xpose.msra.mxu0 0.0
      %1144 = vmatprep.subr.mxu0 0.0
      %1145 = vmatpush2.xpose.msra.mxu0 0.0
      %1146 = vmatprep.subr.mxu0 0.0
      %1147 = vmatpush2.xpose.msra.mxu0 0.0
      %1148 = vmatprep.subr.mxu0 0.0
      %1149 = vmatpush2.xpose.msra.mxu0 0.0
      %1150 = vmatprep.subr.mxu0 0.0
      %1151 = vmatpush2.xpose.msra.mxu0 0.0
      %1152 = vmatprep.subr.mxu0 0.0
      %1153 = vmatpush2.xpose.msra.mxu0 0.0
      %1154 = vmatprep.subr.mxu0 0.0
      %1155 = vmatpush2.xpose.msra.mxu0 0.0
      %1156 = vmatprep.subr.mxu0 0.0
      %1157 = vmatpush2.xpose.msra.mxu0 0.0
      %1158 = vmatprep.subr.mxu0 0.0
      %1159 = vmatpush2.xpose.msra.mxu0 0.0
      %1160 = vmatprep.subr.mxu0 0.0
      %1161 = vmatpush2.xpose.msra.mxu0 0.0
      %1162 = vmatprep.subr.mxu0 0.0
      %1163 = vmatpush2.xpose.msra.mxu0 0.0
      %1164 = vmatprep.subr.mxu0 0.0
      %1165 = vmatpush2.xpose.msra.mxu0 0.0
      %1166 = vmatprep.subr.mxu0 0.0
      %1167 = vmatpush2.xpose.msra.mxu0 0.0
      %1168 = vmatprep.mubr.f32.mxu0 0.0
      %v1169 = vand.u32 %v1098, 4294901760
      %v1170 = vsub.f32 %v1098, %v1169
      %v1171 = vand.u32 %v1170, 4294901760
      %v1172 = vsub.f32 %v1170, %v1171
      %v1173 = vand.u32 %v1172, 4294901760
      %1174 = vmatmul.mubr.f32.gmra.mxu0 %v1173
      %v1175 = vpop.f32.mrf.mxu0
      %v1176 = vadd.f32 0.0, %v1175
      %v1177 = vpop.f32.mrf.mxu0
      %1178 = vdwg.mxu0
      %1179 = vmatprep.subr.mxu0 0.0
      %1180 = vmatpush1.xpose.msra.mxu0 0.0
      %1181 = vmatprep.subr.mxu0 0.0
      %1182 = vmatpush1.xpose.msra.mxu0 0.0
      %1183 = vmatprep.subr.mxu0 0.0
      %1184 = vmatpush1.xpose.msra.mxu0 0.0
      %1185 = vmatprep.subr.mxu0 0.0
      %1186 = vmatpush1.xpose.msra.mxu0 0.0
      %1187 = vmatprep.subr.mxu0 0.0
      %1188 = vmatpush1.xpose.msra.mxu0 0.0
      %1189 = vmatprep.subr.mxu0 0.0
      %1190 = vmatpush1.xpose.msra.mxu0 0.0
      %1191 = vmatprep.subr.mxu0 0.0
      %1192 = vmatpush1.xpose.msra.mxu0 0.0
      %1193 = vmatprep.subr.mxu0 0.0
      %1194 = vmatpush1.xpose.msra.mxu0 0.0
      %1195 = vmatprep.subr.mxu0 0.0
      %1196 = vmatpush1.xpose.msra.mxu0 0.0
      %1197 = vmatprep.subr.mxu0 0.0
      %1198 = vmatpush1.xpose.msra.mxu0 0.0
      %1199 = vmatprep.subr.mxu0 0.0
      %1200 = vmatpush1.xpose.msra.mxu0 0.0
      %1201 = vmatprep.subr.mxu0 0.0
      %1202 = vmatpush1.xpose.msra.mxu0 0.0
      %1203 = vmatprep.subr.mxu0 0.0
      %1204 = vmatpush1.xpose.msra.mxu0 0.0
      %1205 = vmatprep.subr.mxu0 0.0
      %1206 = vmatpush1.xpose.msra.mxu0 0.0
      %1207 = vmatprep.subr.mxu0 0.0
      %1208 = vmatpush1.xpose.msra.mxu0 0.0
      %1209 = vmatprep.subr.mxu0 0.0
      %v1210 = vand.u32 %v1101, 4294901760
      %v1211 = vsub.f32 %v1101, %v1210
      %v1212 = vand.u32 %v1211, 4294901760
      %v1213 = vsub.f32 %v1211, %v1212
      %v1214 = vand.u32 %v1213, 4294901760
      %1215 = vmatpush1.xpose.msra.mxu0 %v1214
      %1216 = vmatprep.subr.mxu0 0.0
      %1217 = vmatpush2.xpose.msra.mxu0 0.0
      %1218 = vmatprep.subr.mxu0 0.0
      %1219 = vmatpush2.xpose.msra.mxu0 0.0
      %1220 = vmatprep.subr.mxu0 0.0
      %1221 = vmatpush2.xpose.msra.mxu0 0.0
      %1222 = vmatprep.subr.mxu0 0.0
      %1223 = vmatpush2.xpose.msra.mxu0 0.0
      %1224 = vmatprep.subr.mxu0 0.0
      %1225 = vmatpush2.xpose.msra.mxu0 0.0
      %1226 = vmatprep.subr.mxu0 0.0
      %1227 = vmatpush2.xpose.msra.mxu0 0.0
      %1228 = vmatprep.subr.mxu0 0.0
      %1229 = vmatpush2.xpose.msra.mxu0 0.0
      %1230 = vmatprep.subr.mxu0 0.0
      %1231 = vmatpush2.xpose.msra.mxu0 0.0
      %1232 = vmatprep.subr.mxu0 0.0
      %1233 = vmatpush2.xpose.msra.mxu0 0.0
      %1234 = vmatprep.subr.mxu0 0.0
      %1235 = vmatpush2.xpose.msra.mxu0 0.0
      %1236 = vmatprep.subr.mxu0 0.0
      %1237 = vmatpush2.xpose.msra.mxu0 0.0
      %1238 = vmatprep.subr.mxu0 0.0
      %1239 = vmatpush2.xpose.msra.mxu0 0.0
      %1240 = vmatprep.subr.mxu0 0.0
      %1241 = vmatpush2.xpose.msra.mxu0 0.0
      %1242 = vmatprep.subr.mxu0 0.0
      %1243 = vmatpush2.xpose.msra.mxu0 0.0
      %1244 = vmatprep.subr.mxu0 0.0
      %1245 = vmatpush2.xpose.msra.mxu0 0.0
      %1246 = vmatprep.subr.mxu0 0.0
      %1247 = vmatpush2.xpose.msra.mxu0 0.0
      %1248 = vmatprep.mubr.f32.mxu0 0.0
      %v1249 = vand.u32 %v1098, 4294901760
      %1250 = vmatmul.mubr.f32.gmra.mxu0 %v1249
      %v1251 = vpop.f32.mrf.mxu0
      %v1252 = vadd.f32 %v1176, %v1251
      %v1253 = vpop.f32.mrf.mxu0
      %1254 = vdwg.mxu0
      %1255 = vmatprep.subr.mxu0 0.0
      %1256 = vmatpush1.xpose.msra.mxu0 0.0
      %1257 = vmatprep.subr.mxu0 0.0
      %1258 = vmatpush1.xpose.msra.mxu0 0.0
      %1259 = vmatprep.subr.mxu0 0.0
      %1260 = vmatpush1.xpose.msra.mxu0 0.0
      %1261 = vmatprep.subr.mxu0 0.0
      %1262 = vmatpush1.xpose.msra.mxu0 0.0
      %1263 = vmatprep.subr.mxu0 0.0
      %1264 = vmatpush1.xpose.msra.mxu0 0.0
      %1265 = vmatprep.subr.mxu0 0.0
      %1266 = vmatpush1.xpose.msra.mxu0 0.0
      %1267 = vmatprep.subr.mxu0 0.0
      %1268 = vmatpush1.xpose.msra.mxu0 0.0
      %1269 = vmatprep.subr.mxu0 0.0
      %1270 = vmatpush1.xpose.msra.mxu0 0.0
      %1271 = vmatprep.subr.mxu0 0.0
      %1272 = vmatpush1.xpose.msra.mxu0 0.0
      %1273 = vmatprep.subr.mxu0 0.0
      %1274 = vmatpush1.xpose.msra.mxu0 0.0
      %1275 = vmatprep.subr.mxu0 0.0
      %1276 = vmatpush1.xpose.msra.mxu0 0.0
      %1277 = vmatprep.subr.mxu0 0.0
      %1278 = vmatpush1.xpose.msra.mxu0 0.0
      %1279 = vmatprep.subr.mxu0 0.0
      %1280 = vmatpush1.xpose.msra.mxu0 0.0
      %1281 = vmatprep.subr.mxu0 0.0
      %1282 = vmatpush1.xpose.msra.mxu0 0.0
      %1283 = vmatprep.subr.mxu0 0.0
      %1284 = vmatpush1.xpose.msra.mxu0 0.0
      %1285 = vmatprep.subr.mxu0 0.0
      %v1286 = vand.u32 %v1101, 4294901760
      %v1287 = vsub.f32 %v1101, %v1286
      %1288 = vmatpush1.xpose.msra.mxu0 %v1287
      %1289 = vmatprep.subr.mxu0 0.0
      %1290 = vmatpush2.xpose.msra.mxu0 0.0
      %1291 = vmatprep.subr.mxu0 0.0
      %1292 = vmatpush2.xpose.msra.mxu0 0.0
      %1293 = vmatprep.subr.mxu0 0.0
      %1294 = vmatpush2.xpose.msra.mxu0 0.0
      %1295 = vmatprep.subr.mxu0 0.0
      %1296 = vmatpush2.xpose.msra.mxu0 0.0
      %1297 = vmatprep.subr.mxu0 0.0
      %1298 = vmatpush2.xpose.msra.mxu0 0.0
      %1299 = vmatprep.subr.mxu0 0.0
      %1300 = vmatpush2.xpose.msra.mxu0 0.0
      %1301 = vmatprep.subr.mxu0 0.0
      %1302 = vmatpush2.xpose.msra.mxu0 0.0
      %1303 = vmatprep.subr.mxu0 0.0
      %1304 = vmatpush2.xpose.msra.mxu0 0.0
      %1305 = vmatprep.subr.mxu0 0.0
      %1306 = vmatpush2.xpose.msra.mxu0 0.0
      %1307 = vmatprep.subr.mxu0 0.0
      %1308 = vmatpush2.xpose.msra.mxu0 0.0
      %1309 = vmatprep.subr.mxu0 0.0
      %1310 = vmatpush2.xpose.msra.mxu0 0.0
      %1311 = vmatprep.subr.mxu0 0.0
      %1312 = vmatpush2.xpose.msra.mxu0 0.0
      %1313 = vmatprep.subr.mxu0 0.0
      %1314 = vmatpush2.xpose.msra.mxu0 0.0
      %1315 = vmatprep.subr.mxu0 0.0
      %1316 = vmatpush2.xpose.msra.mxu0 0.0
      %1317 = vmatprep.subr.mxu0 0.0
      %1318 = vmatpush2.xpose.msra.mxu0 0.0
      %1319 = vmatprep.subr.mxu0 0.0
      %1320 = vmatpush2.xpose.msra.mxu0 0.0
      %1321 = vmatprep.mubr.f32.mxu0 0.0
      %v1322 = vand.u32 %v1098, 4294901760
      %v1323 = vsub.f32 %v1098, %v1322
      %1324 = vmatmul.mubr.f32.gmra.mxu0 %v1323
      %v1325 = vpop.f32.mrf.mxu0
      %v1326 = vadd.f32 %v1252, %v1325
      %v1327 = vpop.f32.mrf.mxu0
      %1328 = vdwg.mxu0
      %1329 = vmatprep.subr.mxu0 0.0
      %1330 = vmatpush1.xpose.msra.mxu0 0.0
      %1331 = vmatprep.subr.mxu0 0.0
      %1332 = vmatpush1.xpose.msra.mxu0 0.0
      %1333 = vmatprep.subr.mxu0 0.0
      %1334 = vmatpush1.xpose.msra.mxu0 0.0
      %1335 = vmatprep.subr.mxu0 0.0
      %1336 = vmatpush1.xpose.msra.mxu0 0.0
      %1337 = vmatprep.subr.mxu0 0.0
      %1338 = vmatpush1.xpose.msra.mxu0 0.0
      %1339 = vmatprep.subr.mxu0 0.0
      %1340 = vmatpush1.xpose.msra.mxu0 0.0
      %1341 = vmatprep.subr.mxu0 0.0
      %1342 = vmatpush1.xpose.msra.mxu0 0.0
      %1343 = vmatprep.subr.mxu0 0.0
      %1344 = vmatpush1.xpose.msra.mxu0 0.0
      %1345 = vmatprep.subr.mxu0 0.0
      %1346 = vmatpush1.xpose.msra.mxu0 0.0
      %1347 = vmatprep.subr.mxu0 0.0
      %1348 = vmatpush1.xpose.msra.mxu0 0.0
      %1349 = vmatprep.subr.mxu0 0.0
      %1350 = vmatpush1.xpose.msra.mxu0 0.0
      %1351 = vmatprep.subr.mxu0 0.0
      %1352 = vmatpush1.xpose.msra.mxu0 0.0
      %1353 = vmatprep.subr.mxu0 0.0
      %1354 = vmatpush1.xpose.msra.mxu0 0.0
      %1355 = vmatprep.subr.mxu0 0.0
      %1356 = vmatpush1.xpose.msra.mxu0 0.0
      %1357 = vmatprep.subr.mxu0 0.0
      %1358 = vmatpush1.xpose.msra.mxu0 0.0
      %1359 = vmatprep.subr.mxu0 0.0
      %v1360 = vand.u32 %v1101, 4294901760
      %1361 = vmatpush1.xpose.msra.mxu0 %v1360
      %1362 = vmatprep.subr.mxu0 0.0
      %1363 = vmatpush2.xpose.msra.mxu0 0.0
      %1364 = vmatprep.subr.mxu0 0.0
      %1365 = vmatpush2.xpose.msra.mxu0 0.0
      %1366 = vmatprep.subr.mxu0 0.0
      %1367 = vmatpush2.xpose.msra.mxu0 0.0
      %1368 = vmatprep.subr.mxu0 0.0
      %1369 = vmatpush2.xpose.msra.mxu0 0.0
      %1370 = vmatprep.subr.mxu0 0.0
      %1371 = vmatpush2.xpose.msra.mxu0 0.0
      %1372 = vmatprep.subr.mxu0 0.0
      %1373 = vmatpush2.xpose.msra.mxu0 0.0
      %1374 = vmatprep.subr.mxu0 0.0
      %1375 = vmatpush2.xpose.msra.mxu0 0.0
      %1376 = vmatprep.subr.mxu0 0.0
      %1377 = vmatpush2.xpose.msra.mxu0 0.0
      %1378 = vmatprep.subr.mxu0 0.0
      %1379 = vmatpush2.xpose.msra.mxu0 0.0
      %1380 = vmatprep.subr.mxu0 0.0
      %1381 = vmatpush2.xpose.msra.mxu0 0.0
      %1382 = vmatprep.subr.mxu0 0.0
      %1383 = vmatpush2.xpose.msra.mxu0 0.0
      %1384 = vmatprep.subr.mxu0 0.0
      %1385 = vmatpush2.xpose.msra.mxu0 0.0
      %1386 = vmatprep.subr.mxu0 0.0
      %1387 = vmatpush2.xpose.msra.mxu0 0.0
      %1388 = vmatprep.subr.mxu0 0.0
      %1389 = vmatpush2.xpose.msra.mxu0 0.0
      %1390 = vmatprep.subr.mxu0 0.0
      %1391 = vmatpush2.xpose.msra.mxu0 0.0
      %1392 = vmatprep.subr.mxu0 0.0
      %1393 = vmatpush2.xpose.msra.mxu0 0.0
      %1394 = vmatprep.mubr.f32.mxu0 0.0
      %v1395 = vand.u32 %v1098, 4294901760
      %v1396 = vsub.f32 %v1098, %v1395
      %v1397 = vand.u32 %v1396, 4294901760
      %1398 = vmatmul.mubr.f32.gmra.mxu0 %v1397
      %v1399 = vpop.f32.mrf.mxu0
      %v1400 = vadd.f32 %v1326, %v1399
      %v1401 = vpop.f32.mrf.mxu0
      %1402 = vdwg.mxu0
      %1403 = vmatprep.subr.mxu0 0.0
      %1404 = vmatpush1.xpose.msra.mxu0 0.0
      %1405 = vmatprep.subr.mxu0 0.0
      %1406 = vmatpush1.xpose.msra.mxu0 0.0
      %1407 = vmatprep.subr.mxu0 0.0
      %1408 = vmatpush1.xpose.msra.mxu0 0.0
      %1409 = vmatprep.subr.mxu0 0.0
      %1410 = vmatpush1.xpose.msra.mxu0 0.0
      %1411 = vmatprep.subr.mxu0 0.0
      %1412 = vmatpush1.xpose.msra.mxu0 0.0
      %1413 = vmatprep.subr.mxu0 0.0
      %1414 = vmatpush1.xpose.msra.mxu0 0.0
      %1415 = vmatprep.subr.mxu0 0.0
      %1416 = vmatpush1.xpose.msra.mxu0 0.0
      %1417 = vmatprep.subr.mxu0 0.0
      %1418 = vmatpush1.xpose.msra.mxu0 0.0
      %1419 = vmatprep.subr.mxu0 0.0
      %1420 = vmatpush1.xpose.msra.mxu0 0.0
      %1421 = vmatprep.subr.mxu0 0.0
      %1422 = vmatpush1.xpose.msra.mxu0 0.0
      %1423 = vmatprep.subr.mxu0 0.0
      %1424 = vmatpush1.xpose.msra.mxu0 0.0
      %1425 = vmatprep.subr.mxu0 0.0
      %1426 = vmatpush1.xpose.msra.mxu0 0.0
      %1427 = vmatprep.subr.mxu0 0.0
      %1428 = vmatpush1.xpose.msra.mxu0 0.0
      %1429 = vmatprep.subr.mxu0 0.0
      %1430 = vmatpush1.xpose.msra.mxu0 0.0
      %1431 = vmatprep.subr.mxu0 0.0
      %1432 = vmatpush1.xpose.msra.mxu0 0.0
      %1433 = vmatprep.subr.mxu0 0.0
      %v1434 = vand.u32 %v1101, 4294901760
      %v1435 = vsub.f32 %v1101, %v1434
      %v1436 = vand.u32 %v1435, 4294901760
      %1437 = vmatpush1.xpose.msra.mxu0 %v1436
      %1438 = vmatprep.subr.mxu0 0.0
      %1439 = vmatpush2.xpose.msra.mxu0 0.0
      %1440 = vmatprep.subr.mxu0 0.0
      %1441 = vmatpush2.xpose.msra.mxu0 0.0
      %1442 = vmatprep.subr.mxu0 0.0
      %1443 = vmatpush2.xpose.msra.mxu0 0.0
      %1444 = vmatprep.subr.mxu0 0.0
      %1445 = vmatpush2.xpose.msra.mxu0 0.0
      %1446 = vmatprep.subr.mxu0 0.0
      %1447 = vmatpush2.xpose.msra.mxu0 0.0
      %1448 = vmatprep.subr.mxu0 0.0
      %1449 = vmatpush2.xpose.msra.mxu0 0.0
      %1450 = vmatprep.subr.mxu0 0.0
      %1451 = vmatpush2.xpose.msra.mxu0 0.0
      %1452 = vmatprep.subr.mxu0 0.0
      %1453 = vmatpush2.xpose.msra.mxu0 0.0
      %1454 = vmatprep.subr.mxu0 0.0
      %1455 = vmatpush2.xpose.msra.mxu0 0.0
      %1456 = vmatprep.subr.mxu0 0.0
      %1457 = vmatpush2.xpose.msra.mxu0 0.0
      %1458 = vmatprep.subr.mxu0 0.0
      %1459 = vmatpush2.xpose.msra.mxu0 0.0
      %1460 = vmatprep.subr.mxu0 0.0
      %1461 = vmatpush2.xpose.msra.mxu0 0.0
      %1462 = vmatprep.subr.mxu0 0.0
      %1463 = vmatpush2.xpose.msra.mxu0 0.0
      %1464 = vmatprep.subr.mxu0 0.0
      %1465 = vmatpush2.xpose.msra.mxu0 0.0
      %1466 = vmatprep.subr.mxu0 0.0
      %1467 = vmatpush2.xpose.msra.mxu0 0.0
      %1468 = vmatprep.subr.mxu0 0.0
      %1469 = vmatpush2.xpose.msra.mxu0 0.0
      %1470 = vmatprep.mubr.f32.mxu0 0.0
      %v1471 = vand.u32 %v1098, 4294901760
      %1472 = vmatmul.mubr.f32.gmra.mxu0 %v1471
      %v1473 = vpop.f32.mrf.mxu0
      %v1474 = vadd.f32 %v1400, %v1473
      %v1475 = vpop.f32.mrf.mxu0
      %1476 = vdwg.mxu0
      %1477 = vmatprep.subr.mxu0 0.0
      %1478 = vmatpush1.xpose.msra.mxu0 0.0
      %1479 = vmatprep.subr.mxu0 0.0
      %1480 = vmatpush1.xpose.msra.mxu0 0.0
      %1481 = vmatprep.subr.mxu0 0.0
      %1482 = vmatpush1.xpose.msra.mxu0 0.0
      %1483 = vmatprep.subr.mxu0 0.0
      %1484 = vmatpush1.xpose.msra.mxu0 0.0
      %1485 = vmatprep.subr.mxu0 0.0
      %1486 = vmatpush1.xpose.msra.mxu0 0.0
      %1487 = vmatprep.subr.mxu0 0.0
      %1488 = vmatpush1.xpose.msra.mxu0 0.0
      %1489 = vmatprep.subr.mxu0 0.0
      %1490 = vmatpush1.xpose.msra.mxu0 0.0
      %1491 = vmatprep.subr.mxu0 0.0
      %1492 = vmatpush1.xpose.msra.mxu0 0.0
      %1493 = vmatprep.subr.mxu0 0.0
      %1494 = vmatpush1.xpose.msra.mxu0 0.0
      %1495 = vmatprep.subr.mxu0 0.0
      %1496 = vmatpush1.xpose.msra.mxu0 0.0
      %1497 = vmatprep.subr.mxu0 0.0
      %1498 = vmatpush1.xpose.msra.mxu0 0.0
      %1499 = vmatprep.subr.mxu0 0.0
      %1500 = vmatpush1.xpose.msra.mxu0 0.0
      %1501 = vmatprep.subr.mxu0 0.0
      %1502 = vmatpush1.xpose.msra.mxu0 0.0
      %1503 = vmatprep.subr.mxu0 0.0
      %1504 = vmatpush1.xpose.msra.mxu0 0.0
      %1505 = vmatprep.subr.mxu0 0.0
      %1506 = vmatpush1.xpose.msra.mxu0 0.0
      %1507 = vmatprep.subr.mxu0 0.0
      %v1508 = vand.u32 %v1101, 4294901760
      %1509 = vmatpush1.xpose.msra.mxu0 %v1508
      %1510 = vmatprep.subr.mxu0 0.0
      %1511 = vmatpush2.xpose.msra.mxu0 0.0
      %1512 = vmatprep.subr.mxu0 0.0
      %1513 = vmatpush2.xpose.msra.mxu0 0.0
      %1514 = vmatprep.subr.mxu0 0.0
      %1515 = vmatpush2.xpose.msra.mxu0 0.0
      %1516 = vmatprep.subr.mxu0 0.0
      %1517 = vmatpush2.xpose.msra.mxu0 0.0
      %1518 = vmatprep.subr.mxu0 0.0
      %1519 = vmatpush2.xpose.msra.mxu0 0.0
      %1520 = vmatprep.subr.mxu0 0.0
      %1521 = vmatpush2.xpose.msra.mxu0 0.0
      %1522 = vmatprep.subr.mxu0 0.0
      %1523 = vmatpush2.xpose.msra.mxu0 0.0
      %1524 = vmatprep.subr.mxu0 0.0
      %1525 = vmatpush2.xpose.msra.mxu0 0.0
      %1526 = vmatprep.subr.mxu0 0.0
      %1527 = vmatpush2.xpose.msra.mxu0 0.0
      %1528 = vmatprep.subr.mxu0 0.0
      %1529 = vmatpush2.xpose.msra.mxu0 0.0
      %1530 = vmatprep.subr.mxu0 0.0
      %1531 = vmatpush2.xpose.msra.mxu0 0.0
      %1532 = vmatprep.subr.mxu0 0.0
      %1533 = vmatpush2.xpose.msra.mxu0 0.0
      %1534 = vmatprep.subr.mxu0 0.0
      %1535 = vmatpush2.xpose.msra.mxu0 0.0
      %1536 = vmatprep.subr.mxu0 0.0
      %1537 = vmatpush2.xpose.msra.mxu0 0.0
      %1538 = vmatprep.subr.mxu0 0.0
      %1539 = vmatpush2.xpose.msra.mxu0 0.0
      %1540 = vmatprep.subr.mxu0 0.0
      %1541 = vmatpush2.xpose.msra.mxu0 0.0
      %1542 = vmatprep.mubr.f32.mxu0 0.0
      %v1543 = vand.u32 %v1098, 4294901760
      %1544 = vmatmul.mubr.f32.gmra.mxu0 %v1543
      %v1545 = vpop.f32.mrf.mxu0
      %v1546 = vadd.f32 %v1474, %v1545
      %v1547 = vpop.f32.mrf.mxu0
      %1548 = vdwg.mxu0
      %v1549 = vadd.f32 %v643, %v1092
      %v1550 = vmul.f32 %v1549, 0.35355338
      %v1551 = vsub.f32 %v1546, %v643
      %v1552 = vadd.f32 %v1551, %v1092
      %v1553 = vmul.f32 %v1552, 0.35355338
      %v1554 = vmul.f32 %v1550, %v1550
      %v1555 = vmul.f32 %v1553, %v1553
      %v1556 = vadd.f32 %v1554, %v1555
      %v1557 = vrsqrt.pop %v1556
      %v1558 = vmul.f32 %v1556, %v1557
      %vm1559 = vcmp.eq.f32.partialorder %v1556, inf
      %v1560 = vsel %vm1559, %v1556, %v1558
      %vm1561 = vcmp.eq.f32.partialorder %v1556, 0.0
      %v1562 = vand.u32 %v1556, 2147483648
      %v1563 = vsel %vm1561, %v1562, %v1560
      %v1564 = vsel %vm196, %v1563, -inf
      %1565 = vmax.xlane.f32.xlu0 %v1564
      %v1566 = vpop.xlane.xlu0 %1565
      %v1567 = vsub.f32 %v1563, %v1566
      %v1568 = vmul.f32 %v1567, 1.442695
      %v1569 = vpow.pop %v1568
      %v1570 = vsel %vm196, %v1569, 0.0
      %1571 = vadd.xlane.f32.xlu0 %v1570
      %v1572 = vpop.xlane.xlu0 %1571
      %v1573 = vrcp.pop %v1572
      %v1574 = vmul.f32 %v1569, %v1573
      %vm1575 = vcmp.gt.f32.partialorder %v1563, 0.0
      %v1576 = vsel %vm1575, %v1563, 1.0
      %v1577 = vrcp.pop %v1576
      %v1578 = vmul.f32 %v1550, %v1577
      %v1579 = vsel %vm1575, %v1578, 1.0
      %v1580 = vmul.f32 %v1553, %v1577
      %v1581 = vsel %vm1575, %v1580, 0.0
      %v1582 = vmul.f32 %v1574, %v1579
      %v1583 = vmul.f32 %v1574, %v1581
      %v1585 = vsel %vm196, %v1582, 0
      %1587 = vmatprep.subr.mxu0 0.0
      %1588 = vmatpush1.msra.mxu0 0.0
      %1589 = vmatprep.subr.mxu0 0.0
      %1590 = vmatpush1.msra.mxu0 0.0
      %1591 = vmatprep.subr.mxu0 0.0
      %1592 = vmatpush1.msra.mxu0 0.0
      %1593 = vmatprep.subr.mxu0 0.0
      %1594 = vmatpush1.msra.mxu0 0.0
      %1595 = vmatprep.subr.mxu0 0.0
      %1596 = vmatpush1.msra.mxu0 0.0
      %1597 = vmatprep.subr.mxu0 0.0
      %1598 = vmatpush1.msra.mxu0 0.0
      %1599 = vmatprep.subr.mxu0 0.0
      %1600 = vmatpush1.msra.mxu0 0.0
      %1601 = vmatprep.subr.mxu0 0.0
      %1602 = vmatpush1.msra.mxu0 0.0
      %1603 = vmatprep.subr.mxu0 0.0
      %1604 = vmatpush1.msra.mxu0 0.0
      %1605 = vmatprep.subr.mxu0 0.0
      %1606 = vmatpush1.msra.mxu0 0.0
      %1607 = vmatprep.subr.mxu0 0.0
      %1608 = vmatpush1.msra.mxu0 0.0
      %1609 = vmatprep.subr.mxu0 0.0
      %1610 = vmatpush1.msra.mxu0 0.0
      %1611 = vmatprep.subr.mxu0 0.0
      %1612 = vmatpush1.msra.mxu0 0.0
      %1613 = vmatprep.subr.mxu0 0.0
      %1614 = vmatpush1.msra.mxu0 0.0
      %1615 = vmatprep.subr.mxu0 0.0
      %1616 = vmatpush1.msra.mxu0 0.0
      %1617 = vmatprep.subr.mxu0 0.0
      %v1618 = vand.u32 %v194, 4294901760
      %1619 = vmatpush1.msra.mxu0 %v1618
      %1620 = vmatprep.subr.mxu0 0.0
      %1621 = vmatpush2.msra.mxu0 0.0
      %1622 = vmatprep.subr.mxu0 0.0
      %1623 = vmatpush2.msra.mxu0 0.0
      %1624 = vmatprep.subr.mxu0 0.0
      %1625 = vmatpush2.msra.mxu0 0.0
      %1626 = vmatprep.subr.mxu0 0.0
      %1627 = vmatpush2.msra.mxu0 0.0
      %1628 = vmatprep.subr.mxu0 0.0
      %1629 = vmatpush2.msra.mxu0 0.0
      %1630 = vmatprep.subr.mxu0 0.0
      %1631 = vmatpush2.msra.mxu0 0.0
      %1632 = vmatprep.subr.mxu0 0.0
      %1633 = vmatpush2.msra.mxu0 0.0
      %1634 = vmatprep.subr.mxu0 0.0
      %1635 = vmatpush2.msra.mxu0 0.0
      %1636 = vmatprep.subr.mxu0 0.0
      %1637 = vmatpush2.msra.mxu0 0.0
      %1638 = vmatprep.subr.mxu0 0.0
      %1639 = vmatpush2.msra.mxu0 0.0
      %1640 = vmatprep.subr.mxu0 0.0
      %1641 = vmatpush2.msra.mxu0 0.0
      %1642 = vmatprep.subr.mxu0 0.0
      %1643 = vmatpush2.msra.mxu0 0.0
      %1644 = vmatprep.subr.mxu0 0.0
      %1645 = vmatpush2.msra.mxu0 0.0
      %1646 = vmatprep.subr.mxu0 0.0
      %1647 = vmatpush2.msra.mxu0 0.0
      %1648 = vmatprep.subr.mxu0 0.0
      %1649 = vmatpush2.msra.mxu0 0.0
      %1650 = vmatprep.subr.mxu0 0.0
      %1651 = vmatpush2.msra.mxu0 0.0
      %1652 = vmatprep.mubr.f32.mxu0 0.0
      %v1653 = vand.u32 %v1585, 4294901760
      %v1654 = vsub.f32 %v1585, %v1653
      %v1655 = vand.u32 %v1654, 4294901760
      %v1656 = vsub.f32 %v1654, %v1655
      %v1657 = vand.u32 %v1656, 4294901760
      %1658 = vmatmul.mubr.f32.gmra.mxu0 %v1657
      %v1659 = vpop.f32.mrf.mxu0
      %v1660 = vadd.f32 0.0, %v1659
      %v1661 = vpop.f32.mrf.mxu0
      %1662 = vdwg.mxu0
      %1663 = vmatprep.subr.mxu0 0.0
      %1664 = vmatpush1.msra.mxu0 0.0
      %1665 = vmatprep.subr.mxu0 0.0
      %1666 = vmatpush1.msra.mxu0 0.0
      %1667 = vmatprep.subr.mxu0 0.0
      %1668 = vmatpush1.msra.mxu0 0.0
      %1669 = vmatprep.subr.mxu0 0.0
      %1670 = vmatpush1.msra.mxu0 0.0
      %1671 = vmatprep.subr.mxu0 0.0
      %1672 = vmatpush1.msra.mxu0 0.0
      %1673 = vmatprep.subr.mxu0 0.0
      %1674 = vmatpush1.msra.mxu0 0.0
      %1675 = vmatprep.subr.mxu0 0.0
      %1676 = vmatpush1.msra.mxu0 0.0
      %1677 = vmatprep.subr.mxu0 0.0
      %1678 = vmatpush1.msra.mxu0 0.0
      %1679 = vmatprep.subr.mxu0 0.0
      %1680 = vmatpush1.msra.mxu0 0.0
      %1681 = vmatprep.subr.mxu0 0.0
      %1682 = vmatpush1.msra.mxu0 0.0
      %1683 = vmatprep.subr.mxu0 0.0
      %1684 = vmatpush1.msra.mxu0 0.0
      %1685 = vmatprep.subr.mxu0 0.0
      %1686 = vmatpush1.msra.mxu0 0.0
      %1687 = vmatprep.subr.mxu0 0.0
      %1688 = vmatpush1.msra.mxu0 0.0
      %1689 = vmatprep.subr.mxu0 0.0
      %1690 = vmatpush1.msra.mxu0 0.0
      %1691 = vmatprep.subr.mxu0 0.0
      %1692 = vmatpush1.msra.mxu0 0.0
      %1693 = vmatprep.subr.mxu0 0.0
      %v1694 = vand.u32 %v194, 4294901760
      %v1695 = vsub.f32 %v194, %v1694
      %v1696 = vand.u32 %v1695, 4294901760
      %v1697 = vsub.f32 %v1695, %v1696
      %v1698 = vand.u32 %v1697, 4294901760
      %1699 = vmatpush1.msra.mxu0 %v1698
      %1700 = vmatprep.subr.mxu0 0.0
      %1701 = vmatpush2.msra.mxu0 0.0
      %1702 = vmatprep.subr.mxu0 0.0
      %1703 = vmatpush2.msra.mxu0 0.0
      %1704 = vmatprep.subr.mxu0 0.0
      %1705 = vmatpush2.msra.mxu0 0.0
      %1706 = vmatprep.subr.mxu0 0.0
      %1707 = vmatpush2.msra.mxu0 0.0
      %1708 = vmatprep.subr.mxu0 0.0
      %1709 = vmatpush2.msra.mxu0 0.0
      %1710 = vmatprep.subr.mxu0 0.0
      %1711 = vmatpush2.msra.mxu0 0.0
      %1712 = vmatprep.subr.mxu0 0.0
      %1713 = vmatpush2.msra.mxu0 0.0
      %1714 = vmatprep.subr.mxu0 0.0
      %1715 = vmatpush2.msra.mxu0 0.0
      %1716 = vmatprep.subr.mxu0 0.0
      %1717 = vmatpush2.msra.mxu0 0.0
      %1718 = vmatprep.subr.mxu0 0.0
      %1719 = vmatpush2.msra.mxu0 0.0
      %1720 = vmatprep.subr.mxu0 0.0
      %1721 = vmatpush2.msra.mxu0 0.0
      %1722 = vmatprep.subr.mxu0 0.0
      %1723 = vmatpush2.msra.mxu0 0.0
      %1724 = vmatprep.subr.mxu0 0.0
      %1725 = vmatpush2.msra.mxu0 0.0
      %1726 = vmatprep.subr.mxu0 0.0
      %1727 = vmatpush2.msra.mxu0 0.0
      %1728 = vmatprep.subr.mxu0 0.0
      %1729 = vmatpush2.msra.mxu0 0.0
      %1730 = vmatprep.subr.mxu0 0.0
      %1731 = vmatpush2.msra.mxu0 0.0
      %1732 = vmatprep.mubr.f32.mxu0 0.0
      %v1733 = vand.u32 %v1585, 4294901760
      %1734 = vmatmul.mubr.f32.gmra.mxu0 %v1733
      %v1735 = vpop.f32.mrf.mxu0
      %v1736 = vadd.f32 %v1660, %v1735
      %v1737 = vpop.f32.mrf.mxu0
      %1738 = vdwg.mxu0
      %1739 = vmatprep.subr.mxu0 0.0
      %1740 = vmatpush1.msra.mxu0 0.0
      %1741 = vmatprep.subr.mxu0 0.0
      %1742 = vmatpush1.msra.mxu0 0.0
      %1743 = vmatprep.subr.mxu0 0.0
      %1744 = vmatpush1.msra.mxu0 0.0
      %1745 = vmatprep.subr.mxu0 0.0
      %1746 = vmatpush1.msra.mxu0 0.0
      %1747 = vmatprep.subr.mxu0 0.0
      %1748 = vmatpush1.msra.mxu0 0.0
      %1749 = vmatprep.subr.mxu0 0.0
      %1750 = vmatpush1.msra.mxu0 0.0
      %1751 = vmatprep.subr.mxu0 0.0
      %1752 = vmatpush1.msra.mxu0 0.0
      %1753 = vmatprep.subr.mxu0 0.0
      %1754 = vmatpush1.msra.mxu0 0.0
      %1755 = vmatprep.subr.mxu0 0.0
      %1756 = vmatpush1.msra.mxu0 0.0
      %1757 = vmatprep.subr.mxu0 0.0
      %1758 = vmatpush1.msra.mxu0 0.0
      %1759 = vmatprep.subr.mxu0 0.0
      %1760 = vmatpush1.msra.mxu0 0.0
      %1761 = vmatprep.subr.mxu0 0.0
      %1762 = vmatpush1.msra.mxu0 0.0
      %1763 = vmatprep.subr.mxu0 0.0
      %1764 = vmatpush1.msra.mxu0 0.0
      %1765 = vmatprep.subr.mxu0 0.0
      %1766 = vmatpush1.msra.mxu0 0.0
      %1767 = vmatprep.subr.mxu0 0.0
      %1768 = vmatpush1.msra.mxu0 0.0
      %1769 = vmatprep.subr.mxu0 0.0
      %v1770 = vand.u32 %v194, 4294901760
      %v1771 = vsub.f32 %v194, %v1770
      %1772 = vmatpush1.msra.mxu0 %v1771
      %1773 = vmatprep.subr.mxu0 0.0
      %1774 = vmatpush2.msra.mxu0 0.0
      %1775 = vmatprep.subr.mxu0 0.0
      %1776 = vmatpush2.msra.mxu0 0.0
      %1777 = vmatprep.subr.mxu0 0.0
      %1778 = vmatpush2.msra.mxu0 0.0
      %1779 = vmatprep.subr.mxu0 0.0
      %1780 = vmatpush2.msra.mxu0 0.0
      %1781 = vmatprep.subr.mxu0 0.0
      %1782 = vmatpush2.msra.mxu0 0.0
      %1783 = vmatprep.subr.mxu0 0.0
      %1784 = vmatpush2.msra.mxu0 0.0
      %1785 = vmatprep.subr.mxu0 0.0
      %1786 = vmatpush2.msra.mxu0 0.0
      %1787 = vmatprep.subr.mxu0 0.0
      %1788 = vmatpush2.msra.mxu0 0.0
      %1789 = vmatprep.subr.mxu0 0.0
      %1790 = vmatpush2.msra.mxu0 0.0
      %1791 = vmatprep.subr.mxu0 0.0
      %1792 = vmatpush2.msra.mxu0 0.0
      %1793 = vmatprep.subr.mxu0 0.0
      %1794 = vmatpush2.msra.mxu0 0.0
      %1795 = vmatprep.subr.mxu0 0.0
      %1796 = vmatpush2.msra.mxu0 0.0
      %1797 = vmatprep.subr.mxu0 0.0
      %1798 = vmatpush2.msra.mxu0 0.0
      %1799 = vmatprep.subr.mxu0 0.0
      %1800 = vmatpush2.msra.mxu0 0.0
      %1801 = vmatprep.subr.mxu0 0.0
      %1802 = vmatpush2.msra.mxu0 0.0
      %1803 = vmatprep.subr.mxu0 0.0
      %1804 = vmatpush2.msra.mxu0 0.0
      %1805 = vmatprep.mubr.f32.mxu0 0.0
      %v1806 = vand.u32 %v1585, 4294901760
      %v1807 = vsub.f32 %v1585, %v1806
      %1808 = vmatmul.mubr.f32.gmra.mxu0 %v1807
      %v1809 = vpop.f32.mrf.mxu0
      %v1810 = vadd.f32 %v1736, %v1809
      %v1811 = vpop.f32.mrf.mxu0
      %1812 = vdwg.mxu0
      %1813 = vmatprep.subr.mxu0 0.0
      %1814 = vmatpush1.msra.mxu0 0.0
      %1815 = vmatprep.subr.mxu0 0.0
      %1816 = vmatpush1.msra.mxu0 0.0
      %1817 = vmatprep.subr.mxu0 0.0
      %1818 = vmatpush1.msra.mxu0 0.0
      %1819 = vmatprep.subr.mxu0 0.0
      %1820 = vmatpush1.msra.mxu0 0.0
      %1821 = vmatprep.subr.mxu0 0.0
      %1822 = vmatpush1.msra.mxu0 0.0
      %1823 = vmatprep.subr.mxu0 0.0
      %1824 = vmatpush1.msra.mxu0 0.0
      %1825 = vmatprep.subr.mxu0 0.0
      %1826 = vmatpush1.msra.mxu0 0.0
      %1827 = vmatprep.subr.mxu0 0.0
      %1828 = vmatpush1.msra.mxu0 0.0
      %1829 = vmatprep.subr.mxu0 0.0
      %1830 = vmatpush1.msra.mxu0 0.0
      %1831 = vmatprep.subr.mxu0 0.0
      %1832 = vmatpush1.msra.mxu0 0.0
      %1833 = vmatprep.subr.mxu0 0.0
      %1834 = vmatpush1.msra.mxu0 0.0
      %1835 = vmatprep.subr.mxu0 0.0
      %1836 = vmatpush1.msra.mxu0 0.0
      %1837 = vmatprep.subr.mxu0 0.0
      %1838 = vmatpush1.msra.mxu0 0.0
      %1839 = vmatprep.subr.mxu0 0.0
      %1840 = vmatpush1.msra.mxu0 0.0
      %1841 = vmatprep.subr.mxu0 0.0
      %1842 = vmatpush1.msra.mxu0 0.0
      %1843 = vmatprep.subr.mxu0 0.0
      %v1844 = vand.u32 %v194, 4294901760
      %1845 = vmatpush1.msra.mxu0 %v1844
      %1846 = vmatprep.subr.mxu0 0.0
      %1847 = vmatpush2.msra.mxu0 0.0
      %1848 = vmatprep.subr.mxu0 0.0
      %1849 = vmatpush2.msra.mxu0 0.0
      %1850 = vmatprep.subr.mxu0 0.0
      %1851 = vmatpush2.msra.mxu0 0.0
      %1852 = vmatprep.subr.mxu0 0.0
      %1853 = vmatpush2.msra.mxu0 0.0
      %1854 = vmatprep.subr.mxu0 0.0
      %1855 = vmatpush2.msra.mxu0 0.0
      %1856 = vmatprep.subr.mxu0 0.0
      %1857 = vmatpush2.msra.mxu0 0.0
      %1858 = vmatprep.subr.mxu0 0.0
      %1859 = vmatpush2.msra.mxu0 0.0
      %1860 = vmatprep.subr.mxu0 0.0
      %1861 = vmatpush2.msra.mxu0 0.0
      %1862 = vmatprep.subr.mxu0 0.0
      %1863 = vmatpush2.msra.mxu0 0.0
      %1864 = vmatprep.subr.mxu0 0.0
      %1865 = vmatpush2.msra.mxu0 0.0
      %1866 = vmatprep.subr.mxu0 0.0
      %1867 = vmatpush2.msra.mxu0 0.0
      %1868 = vmatprep.subr.mxu0 0.0
      %1869 = vmatpush2.msra.mxu0 0.0
      %1870 = vmatprep.subr.mxu0 0.0
      %1871 = vmatpush2.msra.mxu0 0.0
      %1872 = vmatprep.subr.mxu0 0.0
      %1873 = vmatpush2.msra.mxu0 0.0
      %1874 = vmatprep.subr.mxu0 0.0
      %1875 = vmatpush2.msra.mxu0 0.0
      %1876 = vmatprep.subr.mxu0 0.0
      %1877 = vmatpush2.msra.mxu0 0.0
      %1878 = vmatprep.mubr.f32.mxu0 0.0
      %v1879 = vand.u32 %v1585, 4294901760
      %v1880 = vsub.f32 %v1585, %v1879
      %v1881 = vand.u32 %v1880, 4294901760
      %1882 = vmatmul.mubr.f32.gmra.mxu0 %v1881
      %v1883 = vpop.f32.mrf.mxu0
      %v1884 = vadd.f32 %v1810, %v1883
      %v1885 = vpop.f32.mrf.mxu0
      %1886 = vdwg.mxu0
      %1887 = vmatprep.subr.mxu0 0.0
      %1888 = vmatpush1.msra.mxu0 0.0
      %1889 = vmatprep.subr.mxu0 0.0
      %1890 = vmatpush1.msra.mxu0 0.0
      %1891 = vmatprep.subr.mxu0 0.0
      %1892 = vmatpush1.msra.mxu0 0.0
      %1893 = vmatprep.subr.mxu0 0.0
      %1894 = vmatpush1.msra.mxu0 0.0
      %1895 = vmatprep.subr.mxu0 0.0
      %1896 = vmatpush1.msra.mxu0 0.0
      %1897 = vmatprep.subr.mxu0 0.0
      %1898 = vmatpush1.msra.mxu0 0.0
      %1899 = vmatprep.subr.mxu0 0.0
      %1900 = vmatpush1.msra.mxu0 0.0
      %1901 = vmatprep.subr.mxu0 0.0
      %1902 = vmatpush1.msra.mxu0 0.0
      %1903 = vmatprep.subr.mxu0 0.0
      %1904 = vmatpush1.msra.mxu0 0.0
      %1905 = vmatprep.subr.mxu0 0.0
      %1906 = vmatpush1.msra.mxu0 0.0
      %1907 = vmatprep.subr.mxu0 0.0
      %1908 = vmatpush1.msra.mxu0 0.0
      %1909 = vmatprep.subr.mxu0 0.0
      %1910 = vmatpush1.msra.mxu0 0.0
      %1911 = vmatprep.subr.mxu0 0.0
      %1912 = vmatpush1.msra.mxu0 0.0
      %1913 = vmatprep.subr.mxu0 0.0
      %1914 = vmatpush1.msra.mxu0 0.0
      %1915 = vmatprep.subr.mxu0 0.0
      %1916 = vmatpush1.msra.mxu0 0.0
      %1917 = vmatprep.subr.mxu0 0.0
      %v1918 = vand.u32 %v194, 4294901760
      %v1919 = vsub.f32 %v194, %v1918
      %v1920 = vand.u32 %v1919, 4294901760
      %1921 = vmatpush1.msra.mxu0 %v1920
      %1922 = vmatprep.subr.mxu0 0.0
      %1923 = vmatpush2.msra.mxu0 0.0
      %1924 = vmatprep.subr.mxu0 0.0
      %1925 = vmatpush2.msra.mxu0 0.0
      %1926 = vmatprep.subr.mxu0 0.0
      %1927 = vmatpush2.msra.mxu0 0.0
      %1928 = vmatprep.subr.mxu0 0.0
      %1929 = vmatpush2.msra.mxu0 0.0
      %1930 = vmatprep.subr.mxu0 0.0
      %1931 = vmatpush2.msra.mxu0 0.0
      %1932 = vmatprep.subr.mxu0 0.0
      %1933 = vmatpush2.msra.mxu0 0.0
      %1934 = vmatprep.subr.mxu0 0.0
      %1935 = vmatpush2.msra.mxu0 0.0
      %1936 = vmatprep.subr.mxu0 0.0
      %1937 = vmatpush2.msra.mxu0 0.0
      %1938 = vmatprep.subr.mxu0 0.0
      %1939 = vmatpush2.msra.mxu0 0.0
      %1940 = vmatprep.subr.mxu0 0.0
      %1941 = vmatpush2.msra.mxu0 0.0
      %1942 = vmatprep.subr.mxu0 0.0
      %1943 = vmatpush2.msra.mxu0 0.0
      %1944 = vmatprep.subr.mxu0 0.0
      %1945 = vmatpush2.msra.mxu0 0.0
      %1946 = vmatprep.subr.mxu0 0.0
      %1947 = vmatpush2.msra.mxu0 0.0
      %1948 = vmatprep.subr.mxu0 0.0
      %1949 = vmatpush2.msra.mxu0 0.0
      %1950 = vmatprep.subr.mxu0 0.0
      %1951 = vmatpush2.msra.mxu0 0.0
      %1952 = vmatprep.subr.mxu0 0.0
      %1953 = vmatpush2.msra.mxu0 0.0
      %1954 = vmatprep.mubr.f32.mxu0 0.0
      %v1955 = vand.u32 %v1585, 4294901760
      %1956 = vmatmul.mubr.f32.gmra.mxu0 %v1955
      %v1957 = vpop.f32.mrf.mxu0
      %v1958 = vadd.f32 %v1884, %v1957
      %v1959 = vpop.f32.mrf.mxu0
      %1960 = vdwg.mxu0
      %1961 = vmatprep.subr.mxu0 0.0
      %1962 = vmatpush1.msra.mxu0 0.0
      %1963 = vmatprep.subr.mxu0 0.0
      %1964 = vmatpush1.msra.mxu0 0.0
      %1965 = vmatprep.subr.mxu0 0.0
      %1966 = vmatpush1.msra.mxu0 0.0
      %1967 = vmatprep.subr.mxu0 0.0
      %1968 = vmatpush1.msra.mxu0 0.0
      %1969 = vmatprep.subr.mxu0 0.0
      %1970 = vmatpush1.msra.mxu0 0.0
      %1971 = vmatprep.subr.mxu0 0.0
      %1972 = vmatpush1.msra.mxu0 0.0
      %1973 = vmatprep.subr.mxu0 0.0
      %1974 = vmatpush1.msra.mxu0 0.0
      %1975 = vmatprep.subr.mxu0 0.0
      %1976 = vmatpush1.msra.mxu0 0.0
      %1977 = vmatprep.subr.mxu0 0.0
      %1978 = vmatpush1.msra.mxu0 0.0
      %1979 = vmatprep.subr.mxu0 0.0
      %1980 = vmatpush1.msra.mxu0 0.0
      %1981 = vmatprep.subr.mxu0 0.0
      %1982 = vmatpush1.msra.mxu0 0.0
      %1983 = vmatprep.subr.mxu0 0.0
      %1984 = vmatpush1.msra.mxu0 0.0
      %1985 = vmatprep.subr.mxu0 0.0
      %1986 = vmatpush1.msra.mxu0 0.0
      %1987 = vmatprep.subr.mxu0 0.0
      %1988 = vmatpush1.msra.mxu0 0.0
      %1989 = vmatprep.subr.mxu0 0.0
      %1990 = vmatpush1.msra.mxu0 0.0
      %1991 = vmatprep.subr.mxu0 0.0
      %v1992 = vand.u32 %v194, 4294901760
      %1993 = vmatpush1.msra.mxu0 %v1992
      %1994 = vmatprep.subr.mxu0 0.0
      %1995 = vmatpush2.msra.mxu0 0.0
      %1996 = vmatprep.subr.mxu0 0.0
      %1997 = vmatpush2.msra.mxu0 0.0
      %1998 = vmatprep.subr.mxu0 0.0
      %1999 = vmatpush2.msra.mxu0 0.0
      %2000 = vmatprep.subr.mxu0 0.0
      %2001 = vmatpush2.msra.mxu0 0.0
      %2002 = vmatprep.subr.mxu0 0.0
      %2003 = vmatpush2.msra.mxu0 0.0
      %2004 = vmatprep.subr.mxu0 0.0
      %2005 = vmatpush2.msra.mxu0 0.0
      %2006 = vmatprep.subr.mxu0 0.0
      %2007 = vmatpush2.msra.mxu0 0.0
      %2008 = vmatprep.subr.mxu0 0.0
      %2009 = vmatpush2.msra.mxu0 0.0
      %2010 = vmatprep.subr.mxu0 0.0
      %2011 = vmatpush2.msra.mxu0 0.0
      %2012 = vmatprep.subr.mxu0 0.0
      %2013 = vmatpush2.msra.mxu0 0.0
      %2014 = vmatprep.subr.mxu0 0.0
      %2015 = vmatpush2.msra.mxu0 0.0
      %2016 = vmatprep.subr.mxu0 0.0
      %2017 = vmatpush2.msra.mxu0 0.0
      %2018 = vmatprep.subr.mxu0 0.0
      %2019 = vmatpush2.msra.mxu0 0.0
      %2020 = vmatprep.subr.mxu0 0.0
      %2021 = vmatpush2.msra.mxu0 0.0
      %2022 = vmatprep.subr.mxu0 0.0
      %2023 = vmatpush2.msra.mxu0 0.0
      %2024 = vmatprep.subr.mxu0 0.0
      %2025 = vmatpush2.msra.mxu0 0.0
      %2026 = vmatprep.mubr.f32.mxu0 0.0
      %v2027 = vand.u32 %v1585, 4294901760
      %2028 = vmatmul.mubr.f32.gmra.mxu0 %v2027
      %v2029 = vpop.f32.mrf.mxu0
      %v2030 = vadd.f32 %v1958, %v2029
      %v2031 = vpop.f32.mrf.mxu0
      %2032 = vdwg.mxu0
      %v2034 = vsel %vm196, %v1583, 0
      %2036 = vmatprep.subr.mxu0 0.0
      %2037 = vmatpush1.msra.mxu0 0.0
      %2038 = vmatprep.subr.mxu0 0.0
      %2039 = vmatpush1.msra.mxu0 0.0
      %2040 = vmatprep.subr.mxu0 0.0
      %2041 = vmatpush1.msra.mxu0 0.0
      %2042 = vmatprep.subr.mxu0 0.0
      %2043 = vmatpush1.msra.mxu0 0.0
      %2044 = vmatprep.subr.mxu0 0.0
      %2045 = vmatpush1.msra.mxu0 0.0
      %2046 = vmatprep.subr.mxu0 0.0
      %2047 = vmatpush1.msra.mxu0 0.0
      %2048 = vmatprep.subr.mxu0 0.0
      %2049 = vmatpush1.msra.mxu0 0.0
      %2050 = vmatprep.subr.mxu0 0.0
      %2051 = vmatpush1.msra.mxu0 0.0
      %2052 = vmatprep.subr.mxu0 0.0
      %2053 = vmatpush1.msra.mxu0 0.0
      %2054 = vmatprep.subr.mxu0 0.0
      %2055 = vmatpush1.msra.mxu0 0.0
      %2056 = vmatprep.subr.mxu0 0.0
      %2057 = vmatpush1.msra.mxu0 0.0
      %2058 = vmatprep.subr.mxu0 0.0
      %2059 = vmatpush1.msra.mxu0 0.0
      %2060 = vmatprep.subr.mxu0 0.0
      %2061 = vmatpush1.msra.mxu0 0.0
      %2062 = vmatprep.subr.mxu0 0.0
      %2063 = vmatpush1.msra.mxu0 0.0
      %2064 = vmatprep.subr.mxu0 0.0
      %2065 = vmatpush1.msra.mxu0 0.0
      %2066 = vmatprep.subr.mxu0 0.0
      %v2067 = vand.u32 %v195, 4294901760
      %2068 = vmatpush1.msra.mxu0 %v2067
      %2069 = vmatprep.subr.mxu0 0.0
      %2070 = vmatpush2.msra.mxu0 0.0
      %2071 = vmatprep.subr.mxu0 0.0
      %2072 = vmatpush2.msra.mxu0 0.0
      %2073 = vmatprep.subr.mxu0 0.0
      %2074 = vmatpush2.msra.mxu0 0.0
      %2075 = vmatprep.subr.mxu0 0.0
      %2076 = vmatpush2.msra.mxu0 0.0
      %2077 = vmatprep.subr.mxu0 0.0
      %2078 = vmatpush2.msra.mxu0 0.0
      %2079 = vmatprep.subr.mxu0 0.0
      %2080 = vmatpush2.msra.mxu0 0.0
      %2081 = vmatprep.subr.mxu0 0.0
      %2082 = vmatpush2.msra.mxu0 0.0
      %2083 = vmatprep.subr.mxu0 0.0
      %2084 = vmatpush2.msra.mxu0 0.0
      %2085 = vmatprep.subr.mxu0 0.0
      %2086 = vmatpush2.msra.mxu0 0.0
      %2087 = vmatprep.subr.mxu0 0.0
      %2088 = vmatpush2.msra.mxu0 0.0
      %2089 = vmatprep.subr.mxu0 0.0
      %2090 = vmatpush2.msra.mxu0 0.0
      %2091 = vmatprep.subr.mxu0 0.0
      %2092 = vmatpush2.msra.mxu0 0.0
      %2093 = vmatprep.subr.mxu0 0.0
      %2094 = vmatpush2.msra.mxu0 0.0
      %2095 = vmatprep.subr.mxu0 0.0
      %2096 = vmatpush2.msra.mxu0 0.0
      %2097 = vmatprep.subr.mxu0 0.0
      %2098 = vmatpush2.msra.mxu0 0.0
      %2099 = vmatprep.subr.mxu0 0.0
      %2100 = vmatpush2.msra.mxu0 0.0
      %2101 = vmatprep.mubr.f32.mxu0 0.0
      %v2102 = vand.u32 %v2034, 4294901760
      %v2103 = vsub.f32 %v2034, %v2102
      %v2104 = vand.u32 %v2103, 4294901760
      %v2105 = vsub.f32 %v2103, %v2104
      %v2106 = vand.u32 %v2105, 4294901760
      %2107 = vmatmul.mubr.f32.gmra.mxu0 %v2106
      %v2108 = vpop.f32.mrf.mxu0
      %v2109 = vadd.f32 0.0, %v2108
      %v2110 = vpop.f32.mrf.mxu0
      %2111 = vdwg.mxu0
      %2112 = vmatprep.subr.mxu0 0.0
      %2113 = vmatpush1.msra.mxu0 0.0
      %2114 = vmatprep.subr.mxu0 0.0
      %2115 = vmatpush1.msra.mxu0 0.0
      %2116 = vmatprep.subr.mxu0 0.0
      %2117 = vmatpush1.msra.mxu0 0.0
      %2118 = vmatprep.subr.mxu0 0.0
      %2119 = vmatpush1.msra.mxu0 0.0
      %2120 = vmatprep.subr.mxu0 0.0
      %2121 = vmatpush1.msra.mxu0 0.0
      %2122 = vmatprep.subr.mxu0 0.0
      %2123 = vmatpush1.msra.mxu0 0.0
      %2124 = vmatprep.subr.mxu0 0.0
      %2125 = vmatpush1.msra.mxu0 0.0
      %2126 = vmatprep.subr.mxu0 0.0
      %2127 = vmatpush1.msra.mxu0 0.0
      %2128 = vmatprep.subr.mxu0 0.0
      %2129 = vmatpush1.msra.mxu0 0.0
      %2130 = vmatprep.subr.mxu0 0.0
      %2131 = vmatpush1.msra.mxu0 0.0
      %2132 = vmatprep.subr.mxu0 0.0
      %2133 = vmatpush1.msra.mxu0 0.0
      %2134 = vmatprep.subr.mxu0 0.0
      %2135 = vmatpush1.msra.mxu0 0.0
      %2136 = vmatprep.subr.mxu0 0.0
      %2137 = vmatpush1.msra.mxu0 0.0
      %2138 = vmatprep.subr.mxu0 0.0
      %2139 = vmatpush1.msra.mxu0 0.0
      %2140 = vmatprep.subr.mxu0 0.0
      %2141 = vmatpush1.msra.mxu0 0.0
      %2142 = vmatprep.subr.mxu0 0.0
      %v2143 = vand.u32 %v195, 4294901760
      %v2144 = vsub.f32 %v195, %v2143
      %v2145 = vand.u32 %v2144, 4294901760
      %v2146 = vsub.f32 %v2144, %v2145
      %v2147 = vand.u32 %v2146, 4294901760
      %2148 = vmatpush1.msra.mxu0 %v2147
      %2149 = vmatprep.subr.mxu0 0.0
      %2150 = vmatpush2.msra.mxu0 0.0
      %2151 = vmatprep.subr.mxu0 0.0
      %2152 = vmatpush2.msra.mxu0 0.0
      %2153 = vmatprep.subr.mxu0 0.0
      %2154 = vmatpush2.msra.mxu0 0.0
      %2155 = vmatprep.subr.mxu0 0.0
      %2156 = vmatpush2.msra.mxu0 0.0
      %2157 = vmatprep.subr.mxu0 0.0
      %2158 = vmatpush2.msra.mxu0 0.0
      %2159 = vmatprep.subr.mxu0 0.0
      %2160 = vmatpush2.msra.mxu0 0.0
      %2161 = vmatprep.subr.mxu0 0.0
      %2162 = vmatpush2.msra.mxu0 0.0
      %2163 = vmatprep.subr.mxu0 0.0
      %2164 = vmatpush2.msra.mxu0 0.0
      %2165 = vmatprep.subr.mxu0 0.0
      %2166 = vmatpush2.msra.mxu0 0.0
      %2167 = vmatprep.subr.mxu0 0.0
      %2168 = vmatpush2.msra.mxu0 0.0
      %2169 = vmatprep.subr.mxu0 0.0
      %2170 = vmatpush2.msra.mxu0 0.0
      %2171 = vmatprep.subr.mxu0 0.0
      %2172 = vmatpush2.msra.mxu0 0.0
      %2173 = vmatprep.subr.mxu0 0.0
      %2174 = vmatpush2.msra.mxu0 0.0
      %2175 = vmatprep.subr.mxu0 0.0
      %2176 = vmatpush2.msra.mxu0 0.0
      %2177 = vmatprep.subr.mxu0 0.0
      %2178 = vmatpush2.msra.mxu0 0.0
      %2179 = vmatprep.subr.mxu0 0.0
      %2180 = vmatpush2.msra.mxu0 0.0
      %2181 = vmatprep.mubr.f32.mxu0 0.0
      %v2182 = vand.u32 %v2034, 4294901760
      %2183 = vmatmul.mubr.f32.gmra.mxu0 %v2182
      %v2184 = vpop.f32.mrf.mxu0
      %v2185 = vadd.f32 %v2109, %v2184
      %v2186 = vpop.f32.mrf.mxu0
      %2187 = vdwg.mxu0
      %2188 = vmatprep.subr.mxu0 0.0
      %2189 = vmatpush1.msra.mxu0 0.0
      %2190 = vmatprep.subr.mxu0 0.0
      %2191 = vmatpush1.msra.mxu0 0.0
      %2192 = vmatprep.subr.mxu0 0.0
      %2193 = vmatpush1.msra.mxu0 0.0
      %2194 = vmatprep.subr.mxu0 0.0
      %2195 = vmatpush1.msra.mxu0 0.0
      %2196 = vmatprep.subr.mxu0 0.0
      %2197 = vmatpush1.msra.mxu0 0.0
      %2198 = vmatprep.subr.mxu0 0.0
      %2199 = vmatpush1.msra.mxu0 0.0
      %2200 = vmatprep.subr.mxu0 0.0
      %2201 = vmatpush1.msra.mxu0 0.0
      %2202 = vmatprep.subr.mxu0 0.0
      %2203 = vmatpush1.msra.mxu0 0.0
      %2204 = vmatprep.subr.mxu0 0.0
      %2205 = vmatpush1.msra.mxu0 0.0
      %2206 = vmatprep.subr.mxu0 0.0
      %2207 = vmatpush1.msra.mxu0 0.0
      %2208 = vmatprep.subr.mxu0 0.0
      %2209 = vmatpush1.msra.mxu0 0.0
      %2210 = vmatprep.subr.mxu0 0.0
      %2211 = vmatpush1.msra.mxu0 0.0
      %2212 = vmatprep.subr.mxu0 0.0
      %2213 = vmatpush1.msra.mxu0 0.0
      %2214 = vmatprep.subr.mxu0 0.0
      %2215 = vmatpush1.msra.mxu0 0.0
      %2216 = vmatprep.subr.mxu0 0.0
      %2217 = vmatpush1.msra.mxu0 0.0
      %2218 = vmatprep.subr.mxu0 0.0
      %v2219 = vand.u32 %v195, 4294901760
      %v2220 = vsub.f32 %v195, %v2219
      %2221 = vmatpush1.msra.mxu0 %v2220
      %2222 = vmatprep.subr.mxu0 0.0
      %2223 = vmatpush2.msra.mxu0 0.0
      %2224 = vmatprep.subr.mxu0 0.0
      %2225 = vmatpush2.msra.mxu0 0.0
      %2226 = vmatprep.subr.mxu0 0.0
      %2227 = vmatpush2.msra.mxu0 0.0
      %2228 = vmatprep.subr.mxu0 0.0
      %2229 = vmatpush2.msra.mxu0 0.0
      %2230 = vmatprep.subr.mxu0 0.0
      %2231 = vmatpush2.msra.mxu0 0.0
      %2232 = vmatprep.subr.mxu0 0.0
      %2233 = vmatpush2.msra.mxu0 0.0
      %2234 = vmatprep.subr.mxu0 0.0
      %2235 = vmatpush2.msra.mxu0 0.0
      %2236 = vmatprep.subr.mxu0 0.0
      %2237 = vmatpush2.msra.mxu0 0.0
      %2238 = vmatprep.subr.mxu0 0.0
      %2239 = vmatpush2.msra.mxu0 0.0
      %2240 = vmatprep.subr.mxu0 0.0
      %2241 = vmatpush2.msra.mxu0 0.0
      %2242 = vmatprep.subr.mxu0 0.0
      %2243 = vmatpush2.msra.mxu0 0.0
      %2244 = vmatprep.subr.mxu0 0.0
      %2245 = vmatpush2.msra.mxu0 0.0
      %2246 = vmatprep.subr.mxu0 0.0
      %2247 = vmatpush2.msra.mxu0 0.0
      %2248 = vmatprep.subr.mxu0 0.0
      %2249 = vmatpush2.msra.mxu0 0.0
      %2250 = vmatprep.subr.mxu0 0.0
      %2251 = vmatpush2.msra.mxu0 0.0
      %2252 = vmatprep.subr.mxu0 0.0
      %2253 = vmatpush2.msra.mxu0 0.0
      %2254 = vmatprep.mubr.f32.mxu0 0.0
      %v2255 = vand.u32 %v2034, 4294901760
      %v2256 = vsub.f32 %v2034, %v2255
      %2257 = vmatmul.mubr.f32.gmra.mxu0 %v2256
      %v2258 = vpop.f32.mrf.mxu0
      %v2259 = vadd.f32 %v2185, %v2258
      %v2260 = vpop.f32.mrf.mxu0
      %2261 = vdwg.mxu0
      %2262 = vmatprep.subr.mxu0 0.0
      %2263 = vmatpush1.msra.mxu0 0.0
      %2264 = vmatprep.subr.mxu0 0.0
      %2265 = vmatpush1.msra.mxu0 0.0
      %2266 = vmatprep.subr.mxu0 0.0
      %2267 = vmatpush1.msra.mxu0 0.0
      %2268 = vmatprep.subr.mxu0 0.0
      %2269 = vmatpush1.msra.mxu0 0.0
      %2270 = vmatprep.subr.mxu0 0.0
      %2271 = vmatpush1.msra.mxu0 0.0
      %2272 = vmatprep.subr.mxu0 0.0
      %2273 = vmatpush1.msra.mxu0 0.0
      %2274 = vmatprep.subr.mxu0 0.0
      %2275 = vmatpush1.msra.mxu0 0.0
      %2276 = vmatprep.subr.mxu0 0.0
      %2277 = vmatpush1.msra.mxu0 0.0
      %2278 = vmatprep.subr.mxu0 0.0
      %2279 = vmatpush1.msra.mxu0 0.0
      %2280 = vmatprep.subr.mxu0 0.0
      %2281 = vmatpush1.msra.mxu0 0.0
      %2282 = vmatprep.subr.mxu0 0.0
      %2283 = vmatpush1.msra.mxu0 0.0
      %2284 = vmatprep.subr.mxu0 0.0
      %2285 = vmatpush1.msra.mxu0 0.0
      %2286 = vmatprep.subr.mxu0 0.0
      %2287 = vmatpush1.msra.mxu0 0.0
      %2288 = vmatprep.subr.mxu0 0.0
      %2289 = vmatpush1.msra.mxu0 0.0
      %2290 = vmatprep.subr.mxu0 0.0
      %2291 = vmatpush1.msra.mxu0 0.0
      %2292 = vmatprep.subr.mxu0 0.0
      %v2293 = vand.u32 %v195, 4294901760
      %2294 = vmatpush1.msra.mxu0 %v2293
      %2295 = vmatprep.subr.mxu0 0.0
      %2296 = vmatpush2.msra.mxu0 0.0
      %2297 = vmatprep.subr.mxu0 0.0
      %2298 = vmatpush2.msra.mxu0 0.0
      %2299 = vmatprep.subr.mxu0 0.0
      %2300 = vmatpush2.msra.mxu0 0.0
      %2301 = vmatprep.subr.mxu0 0.0
      %2302 = vmatpush2.msra.mxu0 0.0
      %2303 = vmatprep.subr.mxu0 0.0
      %2304 = vmatpush2.msra.mxu0 0.0
      %2305 = vmatprep.subr.mxu0 0.0
      %2306 = vmatpush2.msra.mxu0 0.0
      %2307 = vmatprep.subr.mxu0 0.0
      %2308 = vmatpush2.msra.mxu0 0.0
      %2309 = vmatprep.subr.mxu0 0.0
      %2310 = vmatpush2.msra.mxu0 0.0
      %2311 = vmatprep.subr.mxu0 0.0
      %2312 = vmatpush2.msra.mxu0 0.0
      %2313 = vmatprep.subr.mxu0 0.0
      %2314 = vmatpush2.msra.mxu0 0.0
      %2315 = vmatprep.subr.mxu0 0.0
      %2316 = vmatpush2.msra.mxu0 0.0
      %2317 = vmatprep.subr.mxu0 0.0
      %2318 = vmatpush2.msra.mxu0 0.0
      %2319 = vmatprep.subr.mxu0 0.0
      %2320 = vmatpush2.msra.mxu0 0.0
      %2321 = vmatprep.subr.mxu0 0.0
      %2322 = vmatpush2.msra.mxu0 0.0
      %2323 = vmatprep.subr.mxu0 0.0
      %2324 = vmatpush2.msra.mxu0 0.0
      %2325 = vmatprep.subr.mxu0 0.0
      %2326 = vmatpush2.msra.mxu0 0.0
      %2327 = vmatprep.mubr.f32.mxu0 0.0
      %v2328 = vand.u32 %v2034, 4294901760
      %v2329 = vsub.f32 %v2034, %v2328
      %v2330 = vand.u32 %v2329, 4294901760
      %2331 = vmatmul.mubr.f32.gmra.mxu0 %v2330
      %v2332 = vpop.f32.mrf.mxu0
      %v2333 = vadd.f32 %v2259, %v2332
      %v2334 = vpop.f32.mrf.mxu0
      %2335 = vdwg.mxu0
      %2336 = vmatprep.subr.mxu0 0.0
      %2337 = vmatpush1.msra.mxu0 0.0
      %2338 = vmatprep.subr.mxu0 0.0
      %2339 = vmatpush1.msra.mxu0 0.0
      %2340 = vmatprep.subr.mxu0 0.0
      %2341 = vmatpush1.msra.mxu0 0.0
      %2342 = vmatprep.subr.mxu0 0.0
      %2343 = vmatpush1.msra.mxu0 0.0
      %2344 = vmatprep.subr.mxu0 0.0
      %2345 = vmatpush1.msra.mxu0 0.0
      %2346 = vmatprep.subr.mxu0 0.0
      %2347 = vmatpush1.msra.mxu0 0.0
      %2348 = vmatprep.subr.mxu0 0.0
      %2349 = vmatpush1.msra.mxu0 0.0
      %2350 = vmatprep.subr.mxu0 0.0
      %2351 = vmatpush1.msra.mxu0 0.0
      %2352 = vmatprep.subr.mxu0 0.0
      %2353 = vmatpush1.msra.mxu0 0.0
      %2354 = vmatprep.subr.mxu0 0.0
      %2355 = vmatpush1.msra.mxu0 0.0
      %2356 = vmatprep.subr.mxu0 0.0
      %2357 = vmatpush1.msra.mxu0 0.0
      %2358 = vmatprep.subr.mxu0 0.0
      %2359 = vmatpush1.msra.mxu0 0.0
      %2360 = vmatprep.subr.mxu0 0.0
      %2361 = vmatpush1.msra.mxu0 0.0
      %2362 = vmatprep.subr.mxu0 0.0
      %2363 = vmatpush1.msra.mxu0 0.0
      %2364 = vmatprep.subr.mxu0 0.0
      %2365 = vmatpush1.msra.mxu0 0.0
      %2366 = vmatprep.subr.mxu0 0.0
      %v2367 = vand.u32 %v195, 4294901760
      %v2368 = vsub.f32 %v195, %v2367
      %v2369 = vand.u32 %v2368, 4294901760
      %2370 = vmatpush1.msra.mxu0 %v2369
      %2371 = vmatprep.subr.mxu0 0.0
      %2372 = vmatpush2.msra.mxu0 0.0
      %2373 = vmatprep.subr.mxu0 0.0
      %2374 = vmatpush2.msra.mxu0 0.0
      %2375 = vmatprep.subr.mxu0 0.0
      %2376 = vmatpush2.msra.mxu0 0.0
      %2377 = vmatprep.subr.mxu0 0.0
      %2378 = vmatpush2.msra.mxu0 0.0
      %2379 = vmatprep.subr.mxu0 0.0
      %2380 = vmatpush2.msra.mxu0 0.0
      %2381 = vmatprep.subr.mxu0 0.0
      %2382 = vmatpush2.msra.mxu0 0.0
      %2383 = vmatprep.subr.mxu0 0.0
      %2384 = vmatpush2.msra.mxu0 0.0
      %2385 = vmatprep.subr.mxu0 0.0
      %2386 = vmatpush2.msra.mxu0 0.0
      %2387 = vmatprep.subr.mxu0 0.0
      %2388 = vmatpush2.msra.mxu0 0.0
      %2389 = vmatprep.subr.mxu0 0.0
      %2390 = vmatpush2.msra.mxu0 0.0
      %2391 = vmatprep.subr.mxu0 0.0
      %2392 = vmatpush2.msra.mxu0 0.0
      %2393 = vmatprep.subr.mxu0 0.0
      %2394 = vmatpush2.msra.mxu0 0.0
      %2395 = vmatprep.subr.mxu0 0.0
      %2396 = vmatpush2.msra.mxu0 0.0
      %2397 = vmatprep.subr.mxu0 0.0
      %2398 = vmatpush2.msra.mxu0 0.0
      %2399 = vmatprep.subr.mxu0 0.0
      %2400 = vmatpush2.msra.mxu0 0.0
      %2401 = vmatprep.subr.mxu0 0.0
      %2402 = vmatpush2.msra.mxu0 0.0
      %2403 = vmatprep.mubr.f32.mxu0 0.0
      %v2404 = vand.u32 %v2034, 4294901760
      %2405 = vmatmul.mubr.f32.gmra.mxu0 %v2404
      %v2406 = vpop.f32.mrf.mxu0
      %v2407 = vadd.f32 %v2333, %v2406
      %v2408 = vpop.f32.mrf.mxu0
      %2409 = vdwg.mxu0
      %2410 = vmatprep.subr.mxu0 0.0
      %2411 = vmatpush1.msra.mxu0 0.0
      %2412 = vmatprep.subr.mxu0 0.0
      %2413 = vmatpush1.msra.mxu0 0.0
      %2414 = vmatprep.subr.mxu0 0.0
      %2415 = vmatpush1.msra.mxu0 0.0
      %2416 = vmatprep.subr.mxu0 0.0
      %2417 = vmatpush1.msra.mxu0 0.0
      %2418 = vmatprep.subr.mxu0 0.0
      %2419 = vmatpush1.msra.mxu0 0.0
      %2420 = vmatprep.subr.mxu0 0.0
      %2421 = vmatpush1.msra.mxu0 0.0
      %2422 = vmatprep.subr.mxu0 0.0
      %2423 = vmatpush1.msra.mxu0 0.0
      %2424 = vmatprep.subr.mxu0 0.0
      %2425 = vmatpush1.msra.mxu0 0.0
      %2426 = vmatprep.subr.mxu0 0.0
      %2427 = vmatpush1.msra.mxu0 0.0
      %2428 = vmatprep.subr.mxu0 0.0
      %2429 = vmatpush1.msra.mxu0 0.0
      %2430 = vmatprep.subr.mxu0 0.0
      %2431 = vmatpush1.msra.mxu0 0.0
      %2432 = vmatprep.subr.mxu0 0.0
      %2433 = vmatpush1.msra.mxu0 0.0
      %2434 = vmatprep.subr.mxu0 0.0
      %2435 = vmatpush1.msra.mxu0 0.0
      %2436 = vmatprep.subr.mxu0 0.0
      %2437 = vmatpush1.msra.mxu0 0.0
      %2438 = vmatprep.subr.mxu0 0.0
      %2439 = vmatpush1.msra.mxu0 0.0
      %2440 = vmatprep.subr.mxu0 0.0
      %v2441 = vand.u32 %v195, 4294901760
      %2442 = vmatpush1.msra.mxu0 %v2441
      %2443 = vmatprep.subr.mxu0 0.0
      %2444 = vmatpush2.msra.mxu0 0.0
      %2445 = vmatprep.subr.mxu0 0.0
      %2446 = vmatpush2.msra.mxu0 0.0
      %2447 = vmatprep.subr.mxu0 0.0
      %2448 = vmatpush2.msra.mxu0 0.0
      %2449 = vmatprep.subr.mxu0 0.0
      %2450 = vmatpush2.msra.mxu0 0.0
      %2451 = vmatprep.subr.mxu0 0.0
      %2452 = vmatpush2.msra.mxu0 0.0
      %2453 = vmatprep.subr.mxu0 0.0
      %2454 = vmatpush2.msra.mxu0 0.0
      %2455 = vmatprep.subr.mxu0 0.0
      %2456 = vmatpush2.msra.mxu0 0.0
      %2457 = vmatprep.subr.mxu0 0.0
      %2458 = vmatpush2.msra.mxu0 0.0
      %2459 = vmatprep.subr.mxu0 0.0
      %2460 = vmatpush2.msra.mxu0 0.0
      %2461 = vmatprep.subr.mxu0 0.0
      %2462 = vmatpush2.msra.mxu0 0.0
      %2463 = vmatprep.subr.mxu0 0.0
      %2464 = vmatpush2.msra.mxu0 0.0
      %2465 = vmatprep.subr.mxu0 0.0
      %2466 = vmatpush2.msra.mxu0 0.0
      %2467 = vmatprep.subr.mxu0 0.0
      %2468 = vmatpush2.msra.mxu0 0.0
      %2469 = vmatprep.subr.mxu0 0.0
      %2470 = vmatpush2.msra.mxu0 0.0
      %2471 = vmatprep.subr.mxu0 0.0
      %2472 = vmatpush2.msra.mxu0 0.0
      %2473 = vmatprep.subr.mxu0 0.0
      %2474 = vmatpush2.msra.mxu0 0.0
      %2475 = vmatprep.mubr.f32.mxu0 0.0
      %v2476 = vand.u32 %v2034, 4294901760
      %2477 = vmatmul.mubr.f32.gmra.mxu0 %v2476
      %v2478 = vpop.f32.mrf.mxu0
      %v2479 = vadd.f32 %v2407, %v2478
      %v2480 = vpop.f32.mrf.mxu0
      %2481 = vdwg.mxu0
      %v2482 = vadd.f32 %v1582, %v1583
      %v2484 = vsel %vm196, %v2482, 0
      %2486 = vmatprep.subr.mxu0 0.0
      %2487 = vmatpush1.msra.mxu0 0.0
      %2488 = vmatprep.subr.mxu0 0.0
      %2489 = vmatpush1.msra.mxu0 0.0
      %2490 = vmatprep.subr.mxu0 0.0
      %2491 = vmatpush1.msra.mxu0 0.0
      %2492 = vmatprep.subr.mxu0 0.0
      %2493 = vmatpush1.msra.mxu0 0.0
      %2494 = vmatprep.subr.mxu0 0.0
      %2495 = vmatpush1.msra.mxu0 0.0
      %2496 = vmatprep.subr.mxu0 0.0
      %2497 = vmatpush1.msra.mxu0 0.0
      %2498 = vmatprep.subr.mxu0 0.0
      %2499 = vmatpush1.msra.mxu0 0.0
      %2500 = vmatprep.subr.mxu0 0.0
      %2501 = vmatpush1.msra.mxu0 0.0
      %2502 = vmatprep.subr.mxu0 0.0
      %2503 = vmatpush1.msra.mxu0 0.0
      %2504 = vmatprep.subr.mxu0 0.0
      %2505 = vmatpush1.msra.mxu0 0.0
      %2506 = vmatprep.subr.mxu0 0.0
      %2507 = vmatpush1.msra.mxu0 0.0
      %2508 = vmatprep.subr.mxu0 0.0
      %2509 = vmatpush1.msra.mxu0 0.0
      %2510 = vmatprep.subr.mxu0 0.0
      %2511 = vmatpush1.msra.mxu0 0.0
      %2512 = vmatprep.subr.mxu0 0.0
      %2513 = vmatpush1.msra.mxu0 0.0
      %2514 = vmatprep.subr.mxu0 0.0
      %2515 = vmatpush1.msra.mxu0 0.0
      %2516 = vmatprep.subr.mxu0 0.0
      %v2517 = vand.u32 %v1095, 4294901760
      %2518 = vmatpush1.msra.mxu0 %v2517
      %2519 = vmatprep.subr.mxu0 0.0
      %2520 = vmatpush2.msra.mxu0 0.0
      %2521 = vmatprep.subr.mxu0 0.0
      %2522 = vmatpush2.msra.mxu0 0.0
      %2523 = vmatprep.subr.mxu0 0.0
      %2524 = vmatpush2.msra.mxu0 0.0
      %2525 = vmatprep.subr.mxu0 0.0
      %2526 = vmatpush2.msra.mxu0 0.0
      %2527 = vmatprep.subr.mxu0 0.0
      %2528 = vmatpush2.msra.mxu0 0.0
      %2529 = vmatprep.subr.mxu0 0.0
      %2530 = vmatpush2.msra.mxu0 0.0
      %2531 = vmatprep.subr.mxu0 0.0
      %2532 = vmatpush2.msra.mxu0 0.0
      %2533 = vmatprep.subr.mxu0 0.0
      %2534 = vmatpush2.msra.mxu0 0.0
      %2535 = vmatprep.subr.mxu0 0.0
      %2536 = vmatpush2.msra.mxu0 0.0
      %2537 = vmatprep.subr.mxu0 0.0
      %2538 = vmatpush2.msra.mxu0 0.0
      %2539 = vmatprep.subr.mxu0 0.0
      %2540 = vmatpush2.msra.mxu0 0.0
      %2541 = vmatprep.subr.mxu0 0.0
      %2542 = vmatpush2.msra.mxu0 0.0
      %2543 = vmatprep.subr.mxu0 0.0
      %2544 = vmatpush2.msra.mxu0 0.0
      %2545 = vmatprep.subr.mxu0 0.0
      %2546 = vmatpush2.msra.mxu0 0.0
      %2547 = vmatprep.subr.mxu0 0.0
      %2548 = vmatpush2.msra.mxu0 0.0
      %2549 = vmatprep.subr.mxu0 0.0
      %2550 = vmatpush2.msra.mxu0 0.0
      %2551 = vmatprep.mubr.f32.mxu0 0.0
      %v2552 = vand.u32 %v2484, 4294901760
      %v2553 = vsub.f32 %v2484, %v2552
      %v2554 = vand.u32 %v2553, 4294901760
      %v2555 = vsub.f32 %v2553, %v2554
      %v2556 = vand.u32 %v2555, 4294901760
      %2557 = vmatmul.mubr.f32.gmra.mxu0 %v2556
      %v2558 = vpop.f32.mrf.mxu0
      %v2559 = vadd.f32 0.0, %v2558
      %v2560 = vpop.f32.mrf.mxu0
      %2561 = vdwg.mxu0
      %2562 = vmatprep.subr.mxu0 0.0
      %2563 = vmatpush1.msra.mxu0 0.0
      %2564 = vmatprep.subr.mxu0 0.0
      %2565 = vmatpush1.msra.mxu0 0.0
      %2566 = vmatprep.subr.mxu0 0.0
      %2567 = vmatpush1.msra.mxu0 0.0
      %2568 = vmatprep.subr.mxu0 0.0
      %2569 = vmatpush1.msra.mxu0 0.0
      %2570 = vmatprep.subr.mxu0 0.0
      %2571 = vmatpush1.msra.mxu0 0.0
      %2572 = vmatprep.subr.mxu0 0.0
      %2573 = vmatpush1.msra.mxu0 0.0
      %2574 = vmatprep.subr.mxu0 0.0
      %2575 = vmatpush1.msra.mxu0 0.0
      %2576 = vmatprep.subr.mxu0 0.0
      %2577 = vmatpush1.msra.mxu0 0.0
      %2578 = vmatprep.subr.mxu0 0.0
      %2579 = vmatpush1.msra.mxu0 0.0
      %2580 = vmatprep.subr.mxu0 0.0
      %2581 = vmatpush1.msra.mxu0 0.0
      %2582 = vmatprep.subr.mxu0 0.0
      %2583 = vmatpush1.msra.mxu0 0.0
      %2584 = vmatprep.subr.mxu0 0.0
      %2585 = vmatpush1.msra.mxu0 0.0
      %2586 = vmatprep.subr.mxu0 0.0
      %2587 = vmatpush1.msra.mxu0 0.0
      %2588 = vmatprep.subr.mxu0 0.0
      %2589 = vmatpush1.msra.mxu0 0.0
      %2590 = vmatprep.subr.mxu0 0.0
      %2591 = vmatpush1.msra.mxu0 0.0
      %2592 = vmatprep.subr.mxu0 0.0
      %v2593 = vand.u32 %v1095, 4294901760
      %v2594 = vsub.f32 %v1095, %v2593
      %v2595 = vand.u32 %v2594, 4294901760
      %v2596 = vsub.f32 %v2594, %v2595
      %v2597 = vand.u32 %v2596, 4294901760
      %2598 = vmatpush1.msra.mxu0 %v2597
      %2599 = vmatprep.subr.mxu0 0.0
      %2600 = vmatpush2.msra.mxu0 0.0
      %2601 = vmatprep.subr.mxu0 0.0
      %2602 = vmatpush2.msra.mxu0 0.0
      %2603 = vmatprep.subr.mxu0 0.0
      %2604 = vmatpush2.msra.mxu0 0.0
      %2605 = vmatprep.subr.mxu0 0.0
      %2606 = vmatpush2.msra.mxu0 0.0
      %2607 = vmatprep.subr.mxu0 0.0
      %2608 = vmatpush2.msra.mxu0 0.0
      %2609 = vmatprep.subr.mxu0 0.0
      %2610 = vmatpush2.msra.mxu0 0.0
      %2611 = vmatprep.subr.mxu0 0.0
      %2612 = vmatpush2.msra.mxu0 0.0
      %2613 = vmatprep.subr.mxu0 0.0
      %2614 = vmatpush2.msra.mxu0 0.0
      %2615 = vmatprep.subr.mxu0 0.0
      %2616 = vmatpush2.msra.mxu0 0.0
      %2617 = vmatprep.subr.mxu0 0.0
      %2618 = vmatpush2.msra.mxu0 0.0
      %2619 = vmatprep.subr.mxu0 0.0
      %2620 = vmatpush2.msra.mxu0 0.0
      %2621 = vmatprep.subr.mxu0 0.0
      %2622 = vmatpush2.msra.mxu0 0.0
      %2623 = vmatprep.subr.mxu0 0.0
      %2624 = vmatpush2.msra.mxu0 0.0
      %2625 = vmatprep.subr.mxu0 0.0
      %2626 = vmatpush2.msra.mxu0 0.0
      %2627 = vmatprep.subr.mxu0 0.0
      %2628 = vmatpush2.msra.mxu0 0.0
      %2629 = vmatprep.subr.mxu0 0.0
      %2630 = vmatpush2.msra.mxu0 0.0
      %2631 = vmatprep.mubr.f32.mxu0 0.0
      %v2632 = vand.u32 %v2484, 4294901760
      %2633 = vmatmul.mubr.f32.gmra.mxu0 %v2632
      %v2634 = vpop.f32.mrf.mxu0
      %v2635 = vadd.f32 %v2559, %v2634
      %v2636 = vpop.f32.mrf.mxu0
      %2637 = vdwg.mxu0
      %2638 = vmatprep.subr.mxu0 0.0
      %2639 = vmatpush1.msra.mxu0 0.0
      %2640 = vmatprep.subr.mxu0 0.0
      %2641 = vmatpush1.msra.mxu0 0.0
      %2642 = vmatprep.subr.mxu0 0.0
      %2643 = vmatpush1.msra.mxu0 0.0
      %2644 = vmatprep.subr.mxu0 0.0
      %2645 = vmatpush1.msra.mxu0 0.0
      %2646 = vmatprep.subr.mxu0 0.0
      %2647 = vmatpush1.msra.mxu0 0.0
      %2648 = vmatprep.subr.mxu0 0.0
      %2649 = vmatpush1.msra.mxu0 0.0
      %2650 = vmatprep.subr.mxu0 0.0
      %2651 = vmatpush1.msra.mxu0 0.0
      %2652 = vmatprep.subr.mxu0 0.0
      %2653 = vmatpush1.msra.mxu0 0.0
      %2654 = vmatprep.subr.mxu0 0.0
      %2655 = vmatpush1.msra.mxu0 0.0
      %2656 = vmatprep.subr.mxu0 0.0
      %2657 = vmatpush1.msra.mxu0 0.0
      %2658 = vmatprep.subr.mxu0 0.0
      %2659 = vmatpush1.msra.mxu0 0.0
      %2660 = vmatprep.subr.mxu0 0.0
      %2661 = vmatpush1.msra.mxu0 0.0
      %2662 = vmatprep.subr.mxu0 0.0
      %2663 = vmatpush1.msra.mxu0 0.0
      %2664 = vmatprep.subr.mxu0 0.0
      %2665 = vmatpush1.msra.mxu0 0.0
      %2666 = vmatprep.subr.mxu0 0.0
      %2667 = vmatpush1.msra.mxu0 0.0
      %2668 = vmatprep.subr.mxu0 0.0
      %v2669 = vand.u32 %v1095, 4294901760
      %v2670 = vsub.f32 %v1095, %v2669
      %2671 = vmatpush1.msra.mxu0 %v2670
      %2672 = vmatprep.subr.mxu0 0.0
      %2673 = vmatpush2.msra.mxu0 0.0
      %2674 = vmatprep.subr.mxu0 0.0
      %2675 = vmatpush2.msra.mxu0 0.0
      %2676 = vmatprep.subr.mxu0 0.0
      %2677 = vmatpush2.msra.mxu0 0.0
      %2678 = vmatprep.subr.mxu0 0.0
      %2679 = vmatpush2.msra.mxu0 0.0
      %2680 = vmatprep.subr.mxu0 0.0
      %2681 = vmatpush2.msra.mxu0 0.0
      %2682 = vmatprep.subr.mxu0 0.0
      %2683 = vmatpush2.msra.mxu0 0.0
      %2684 = vmatprep.subr.mxu0 0.0
      %2685 = vmatpush2.msra.mxu0 0.0
      %2686 = vmatprep.subr.mxu0 0.0
      %2687 = vmatpush2.msra.mxu0 0.0
      %2688 = vmatprep.subr.mxu0 0.0
      %2689 = vmatpush2.msra.mxu0 0.0
      %2690 = vmatprep.subr.mxu0 0.0
      %2691 = vmatpush2.msra.mxu0 0.0
      %2692 = vmatprep.subr.mxu0 0.0
      %2693 = vmatpush2.msra.mxu0 0.0
      %2694 = vmatprep.subr.mxu0 0.0
      %2695 = vmatpush2.msra.mxu0 0.0
      %2696 = vmatprep.subr.mxu0 0.0
      %2697 = vmatpush2.msra.mxu0 0.0
      %2698 = vmatprep.subr.mxu0 0.0
      %2699 = vmatpush2.msra.mxu0 0.0
      %2700 = vmatprep.subr.mxu0 0.0
      %2701 = vmatpush2.msra.mxu0 0.0
      %2702 = vmatprep.subr.mxu0 0.0
      %2703 = vmatpush2.msra.mxu0 0.0
      %2704 = vmatprep.mubr.f32.mxu0 0.0
      %v2705 = vand.u32 %v2484, 4294901760
      %v2706 = vsub.f32 %v2484, %v2705
      %2707 = vmatmul.mubr.f32.gmra.mxu0 %v2706
      %v2708 = vpop.f32.mrf.mxu0
      %v2709 = vadd.f32 %v2635, %v2708
      %v2710 = vpop.f32.mrf.mxu0
      %2711 = vdwg.mxu0
      %2712 = vmatprep.subr.mxu0 0.0
      %2713 = vmatpush1.msra.mxu0 0.0
      %2714 = vmatprep.subr.mxu0 0.0
      %2715 = vmatpush1.msra.mxu0 0.0
      %2716 = vmatprep.subr.mxu0 0.0
      %2717 = vmatpush1.msra.mxu0 0.0
      %2718 = vmatprep.subr.mxu0 0.0
      %2719 = vmatpush1.msra.mxu0 0.0
      %2720 = vmatprep.subr.mxu0 0.0
      %2721 = vmatpush1.msra.mxu0 0.0
      %2722 = vmatprep.subr.mxu0 0.0
      %2723 = vmatpush1.msra.mxu0 0.0
      %2724 = vmatprep.subr.mxu0 0.0
      %2725 = vmatpush1.msra.mxu0 0.0
      %2726 = vmatprep.subr.mxu0 0.0
      %2727 = vmatpush1.msra.mxu0 0.0
      %2728 = vmatprep.subr.mxu0 0.0
      %2729 = vmatpush1.msra.mxu0 0.0
      %2730 = vmatprep.subr.mxu0 0.0
      %2731 = vmatpush1.msra.mxu0 0.0
      %2732 = vmatprep.subr.mxu0 0.0
      %2733 = vmatpush1.msra.mxu0 0.0
      %2734 = vmatprep.subr.mxu0 0.0
      %2735 = vmatpush1.msra.mxu0 0.0
      %2736 = vmatprep.subr.mxu0 0.0
      %2737 = vmatpush1.msra.mxu0 0.0
      %2738 = vmatprep.subr.mxu0 0.0
      %2739 = vmatpush1.msra.mxu0 0.0
      %2740 = vmatprep.subr.mxu0 0.0
      %2741 = vmatpush1.msra.mxu0 0.0
      %2742 = vmatprep.subr.mxu0 0.0
      %v2743 = vand.u32 %v1095, 4294901760
      %2744 = vmatpush1.msra.mxu0 %v2743
      %2745 = vmatprep.subr.mxu0 0.0
      %2746 = vmatpush2.msra.mxu0 0.0
      %2747 = vmatprep.subr.mxu0 0.0
      %2748 = vmatpush2.msra.mxu0 0.0
      %2749 = vmatprep.subr.mxu0 0.0
      %2750 = vmatpush2.msra.mxu0 0.0
      %2751 = vmatprep.subr.mxu0 0.0
      %2752 = vmatpush2.msra.mxu0 0.0
      %2753 = vmatprep.subr.mxu0 0.0
      %2754 = vmatpush2.msra.mxu0 0.0
      %2755 = vmatprep.subr.mxu0 0.0
      %2756 = vmatpush2.msra.mxu0 0.0
      %2757 = vmatprep.subr.mxu0 0.0
      %2758 = vmatpush2.msra.mxu0 0.0
      %2759 = vmatprep.subr.mxu0 0.0
      %2760 = vmatpush2.msra.mxu0 0.0
      %2761 = vmatprep.subr.mxu0 0.0
      %2762 = vmatpush2.msra.mxu0 0.0
      %2763 = vmatprep.subr.mxu0 0.0
      %2764 = vmatpush2.msra.mxu0 0.0
      %2765 = vmatprep.subr.mxu0 0.0
      %2766 = vmatpush2.msra.mxu0 0.0
      %2767 = vmatprep.subr.mxu0 0.0
      %2768 = vmatpush2.msra.mxu0 0.0
      %2769 = vmatprep.subr.mxu0 0.0
      %2770 = vmatpush2.msra.mxu0 0.0
      %2771 = vmatprep.subr.mxu0 0.0
      %2772 = vmatpush2.msra.mxu0 0.0
      %2773 = vmatprep.subr.mxu0 0.0
      %2774 = vmatpush2.msra.mxu0 0.0
      %2775 = vmatprep.subr.mxu0 0.0
      %2776 = vmatpush2.msra.mxu0 0.0
      %2777 = vmatprep.mubr.f32.mxu0 0.0
      %v2778 = vand.u32 %v2484, 4294901760
      %v2779 = vsub.f32 %v2484, %v2778
      %v2780 = vand.u32 %v2779, 4294901760
      %2781 = vmatmul.mubr.f32.gmra.mxu0 %v2780
      %v2782 = vpop.f32.mrf.mxu0
      %v2783 = vadd.f32 %v2709, %v2782
      %v2784 = vpop.f32.mrf.mxu0
      %2785 = vdwg.mxu0
      %2786 = vmatprep.subr.mxu0 0.0
      %2787 = vmatpush1.msra.mxu0 0.0
      %2788 = vmatprep.subr.mxu0 0.0
      %2789 = vmatpush1.msra.mxu0 0.0
      %2790 = vmatprep.subr.mxu0 0.0
      %2791 = vmatpush1.msra.mxu0 0.0
      %2792 = vmatprep.subr.mxu0 0.0
      %2793 = vmatpush1.msra.mxu0 0.0
      %2794 = vmatprep.subr.mxu0 0.0
      %2795 = vmatpush1.msra.mxu0 0.0
      %2796 = vmatprep.subr.mxu0 0.0
      %2797 = vmatpush1.msra.mxu0 0.0
      %2798 = vmatprep.subr.mxu0 0.0
      %2799 = vmatpush1.msra.mxu0 0.0
      %2800 = vmatprep.subr.mxu0 0.0
      %2801 = vmatpush1.msra.mxu0 0.0
      %2802 = vmatprep.subr.mxu0 0.0
      %2803 = vmatpush1.msra.mxu0 0.0
      %2804 = vmatprep.subr.mxu0 0.0
      %2805 = vmatpush1.msra.mxu0 0.0
      %2806 = vmatprep.subr.mxu0 0.0
      %2807 = vmatpush1.msra.mxu0 0.0
      %2808 = vmatprep.subr.mxu0 0.0
      %2809 = vmatpush1.msra.mxu0 0.0
      %2810 = vmatprep.subr.mxu0 0.0
      %2811 = vmatpush1.msra.mxu0 0.0
      %2812 = vmatprep.subr.mxu0 0.0
      %2813 = vmatpush1.msra.mxu0 0.0
      %2814 = vmatprep.subr.mxu0 0.0
      %2815 = vmatpush1.msra.mxu0 0.0
      %2816 = vmatprep.subr.mxu0 0.0
      %v2817 = vand.u32 %v1095, 4294901760
      %v2818 = vsub.f32 %v1095, %v2817
      %v2819 = vand.u32 %v2818, 4294901760
      %2820 = vmatpush1.msra.mxu0 %v2819
      %2821 = vmatprep.subr.mxu0 0.0
      %2822 = vmatpush2.msra.mxu0 0.0
      %2823 = vmatprep.subr.mxu0 0.0
      %2824 = vmatpush2.msra.mxu0 0.0
      %2825 = vmatprep.subr.mxu0 0.0
      %2826 = vmatpush2.msra.mxu0 0.0
      %2827 = vmatprep.subr.mxu0 0.0
      %2828 = vmatpush2.msra.mxu0 0.0
      %2829 = vmatprep.subr.mxu0 0.0
      %2830 = vmatpush2.msra.mxu0 0.0
      %2831 = vmatprep.subr.mxu0 0.0
      %2832 = vmatpush2.msra.mxu0 0.0
      %2833 = vmatprep.subr.mxu0 0.0
      %2834 = vmatpush2.msra.mxu0 0.0
      %2835 = vmatprep.subr.mxu0 0.0
      %2836 = vmatpush2.msra.mxu0 0.0
      %2837 = vmatprep.subr.mxu0 0.0
      %2838 = vmatpush2.msra.mxu0 0.0
      %2839 = vmatprep.subr.mxu0 0.0
      %2840 = vmatpush2.msra.mxu0 0.0
      %2841 = vmatprep.subr.mxu0 0.0
      %2842 = vmatpush2.msra.mxu0 0.0
      %2843 = vmatprep.subr.mxu0 0.0
      %2844 = vmatpush2.msra.mxu0 0.0
      %2845 = vmatprep.subr.mxu0 0.0
      %2846 = vmatpush2.msra.mxu0 0.0
      %2847 = vmatprep.subr.mxu0 0.0
      %2848 = vmatpush2.msra.mxu0 0.0
      %2849 = vmatprep.subr.mxu0 0.0
      %2850 = vmatpush2.msra.mxu0 0.0
      %2851 = vmatprep.subr.mxu0 0.0
      %2852 = vmatpush2.msra.mxu0 0.0
      %2853 = vmatprep.mubr.f32.mxu0 0.0
      %v2854 = vand.u32 %v2484, 4294901760
      %2855 = vmatmul.mubr.f32.gmra.mxu0 %v2854
      %v2856 = vpop.f32.mrf.mxu0
      %v2857 = vadd.f32 %v2783, %v2856
      %v2858 = vpop.f32.mrf.mxu0
      %2859 = vdwg.mxu0
      %2860 = vmatprep.subr.mxu0 0.0
      %2861 = vmatpush1.msra.mxu0 0.0
      %2862 = vmatprep.subr.mxu0 0.0
      %2863 = vmatpush1.msra.mxu0 0.0
      %2864 = vmatprep.subr.mxu0 0.0
      %2865 = vmatpush1.msra.mxu0 0.0
      %2866 = vmatprep.subr.mxu0 0.0
      %2867 = vmatpush1.msra.mxu0 0.0
      %2868 = vmatprep.subr.mxu0 0.0
      %2869 = vmatpush1.msra.mxu0 0.0
      %2870 = vmatprep.subr.mxu0 0.0
      %2871 = vmatpush1.msra.mxu0 0.0
      %2872 = vmatprep.subr.mxu0 0.0
      %2873 = vmatpush1.msra.mxu0 0.0
      %2874 = vmatprep.subr.mxu0 0.0
      %2875 = vmatpush1.msra.mxu0 0.0
      %2876 = vmatprep.subr.mxu0 0.0
      %2877 = vmatpush1.msra.mxu0 0.0
      %2878 = vmatprep.subr.mxu0 0.0
      %2879 = vmatpush1.msra.mxu0 0.0
      %2880 = vmatprep.subr.mxu0 0.0
      %2881 = vmatpush1.msra.mxu0 0.0
      %2882 = vmatprep.subr.mxu0 0.0
      %2883 = vmatpush1.msra.mxu0 0.0
      %2884 = vmatprep.subr.mxu0 0.0
      %2885 = vmatpush1.msra.mxu0 0.0
      %2886 = vmatprep.subr.mxu0 0.0
      %2887 = vmatpush1.msra.mxu0 0.0
      %2888 = vmatprep.subr.mxu0 0.0
      %2889 = vmatpush1.msra.mxu0 0.0
      %2890 = vmatprep.subr.mxu0 0.0
      %v2891 = vand.u32 %v1095, 4294901760
      %2892 = vmatpush1.msra.mxu0 %v2891
      %2893 = vmatprep.subr.mxu0 0.0
      %2894 = vmatpush2.msra.mxu0 0.0
      %2895 = vmatprep.subr.mxu0 0.0
      %2896 = vmatpush2.msra.mxu0 0.0
      %2897 = vmatprep.subr.mxu0 0.0
      %2898 = vmatpush2.msra.mxu0 0.0
      %2899 = vmatprep.subr.mxu0 0.0
      %2900 = vmatpush2.msra.mxu0 0.0
      %2901 = vmatprep.subr.mxu0 0.0
      %2902 = vmatpush2.msra.mxu0 0.0
      %2903 = vmatprep.subr.mxu0 0.0
      %2904 = vmatpush2.msra.mxu0 0.0
      %2905 = vmatprep.subr.mxu0 0.0
      %2906 = vmatpush2.msra.mxu0 0.0
      %2907 = vmatprep.subr.mxu0 0.0
      %2908 = vmatpush2.msra.mxu0 0.0
      %2909 = vmatprep.subr.mxu0 0.0
      %2910 = vmatpush2.msra.mxu0 0.0
      %2911 = vmatprep.subr.mxu0 0.0
      %2912 = vmatpush2.msra.mxu0 0.0
      %2913 = vmatprep.subr.mxu0 0.0
      %2914 = vmatpush2.msra.mxu0 0.0
      %2915 = vmatprep.subr.mxu0 0.0
      %2916 = vmatpush2.msra.mxu0 0.0
      %2917 = vmatprep.subr.mxu0 0.0
      %2918 = vmatpush2.msra.mxu0 0.0
      %2919 = vmatprep.subr.mxu0 0.0
      %2920 = vmatpush2.msra.mxu0 0.0
      %2921 = vmatprep.subr.mxu0 0.0
      %2922 = vmatpush2.msra.mxu0 0.0
      %2923 = vmatprep.subr.mxu0 0.0
      %2924 = vmatpush2.msra.mxu0 0.0
      %2925 = vmatprep.mubr.f32.mxu0 0.0
      %v2926 = vand.u32 %v2484, 4294901760
      %2927 = vmatmul.mubr.f32.gmra.mxu0 %v2926
      %v2928 = vpop.f32.mrf.mxu0
      %v2929 = vadd.f32 %v2857, %v2928
      %v2930 = vpop.f32.mrf.mxu0
      %2931 = vdwg.mxu0
      %v2932 = vsub.f32 %v2030, %v2479
      %2933 = vst.msk [vmem:[%s189] sm:$0xff] %vm196, %v2932
      %v2934 = vsub.f32 %v2929, %v2030
      %v2935 = vsub.f32 %v2934, %v2479
      %2936 = vst.msk [vmem:[%s193] sm:$0xff] %vm196, %v2935
      %p2937 = scmp.lt.s32.totalorder %s15, 7
      %s2938 = scalar_select %p2937, %s15, 7
      %s2939 = smul.addr %s2938, 8
      %s2940 = scalar_lea.vmem %s2, %s2939
      %p2941 = scmp.lt.s32.totalorder %s15, 7
      %s2942 = scalar_select %p2941, %s15, 7
      %s2943 = smul.addr %s2942, 8
      %s2944 = scalar_lea.vmem %s3, %s2943
      // Predicated region
      $region29: #{forward.14} parent=27 // pred_check
        %p2945 = pneg %p85
      $region30: #{forward.14} parent=27 // pred_check_branch
        %2947 = sbr.rel (%p2945) target = $region32
      $region31: #{forward.14} parent=27 // pred_region
        _
      $region32: #{forward.14} parent=27 // pred_fallthru
        _
      // Predicated region
      $region33: #{forward.14} parent=27 // pred_check
        %p2948 = pneg %p111
      $region34: #{forward.14} parent=27 // pred_check_branch
        %2950 = sbr.rel (%p2948) target = $region36
      $region35: #{forward.14} parent=27 // pred_region
        _
      $region36: #{forward.14} parent=27 // pred_fallthru
        _
    $region28: #{forward.14} parent=5 // pred_fallthru
      _
    %p2951 = scmp.le.s32.totalorder 2, %s10
    // Predicated region
    $region37: #{forward.14} parent=5 // pred_check
      %p2952 = pneg %p2951
    $region38: #{forward.14} parent=5 // pred_check_branch
      %2954 = sbr.rel (%p2952) target = $region40
    $region39: #{forward.14} parent=5 // pred_region
      %s2955 = ssub.s32 %s10, 2
      // Predicated region
      $region41: #{forward.14} parent=39 // pred_check
        %p2956 = pneg %p91
      $region42: #{forward.14} parent=39 // pred_check_branch
        %2958 = sbr.rel (%p2956) target = $region44
      $region43: #{forward.14} parent=39 // pred_region
        %p2959 = scmp.lt.s32.totalorder %s16, 7
        %s2960 = scalar_select %p2959, %s16, 7
        %s2961 = smul.addr %s2960, 8
        %s2962 = scalar_lea.vmem %s2, %s2961
      $region44: #{forward.14} parent=39 // pred_fallthru
        _
      // Predicated region
      $region45: #{forward.14} parent=39 // pred_check
        %p2963 = pneg %p117
      $region46: #{forward.14} parent=39 // pred_check_branch
        %2965 = sbr.rel (%p2963) target = $region48
      $region47: #{forward.14} parent=39 // pred_region
        %p2966 = scmp.lt.s32.totalorder %s16, 7
        %s2967 = scalar_select %p2966, %s16, 7
        %s2968 = smul.addr %s2967, 8
        %s2969 = scalar_lea.vmem %s3, %s2968
      $region48: #{forward.14} parent=39 // pred_fallthru
        _
    $region40: #{forward.14} parent=5 // pred_fallthru
      _
  $region6: #{forward.14} parent=0 // loop_footer
    %s14 = sadd.s32 1, %s10
  $region7: #{forward.14} parent=0 // loop_footer_branch
    %9 = sbr.rel target = $region3
  $region8: #{forward.14} parent=0 // loop_exit
    _

// kernel: forward.17
$region0: #{forward.17}
  #allocation0 [shape = 'u32[]', space=smem, size = 0x4, offset = 0x4, fixed_abs, tag = 'smem constant byte address 0x4 - core index']
  #allocation1 [shape = 'u32[144,128]{1,0:T(1,128)}', space=vmem, size = 0x12000, scoped, tag = 'internal scratch']
  #allocation2 [shape = 'f32[16,32]{1,0:T(8,128)}', space=vmem, size = 0x2000, scoped, tag = 'scratch operand']
  #allocation3 [shape = 'f32[16,32]{1,0:T(8,128)}', space=vmem, size = 0x2000, scoped, tag = 'scratch operand']
  %s0 = inlined_call_operand.vmem [shape: f32[16,32], index: 0, kind: input, shape index: {}, may-alias: {0,4}]
  %s1 = inlined_call_operand.vmem [shape: f32[16,32], index: 1, kind: input, shape index: {}, may-alias: {1,5}]
  %s2 = inlined_call_operand.vmem [shape: f32[32,32], index: 2, kind: input, shape index: {}]
  %s3 = inlined_call_operand.vmem [shape: f32[32,32], index: 3, kind: input, shape index: {}]
  %s4 = inlined_call_operand.vmem [shape: f32[16,32], index: 4, kind: input, shape index: {}, may-alias: {0,4}]
  %s5 = inlined_call_operand.vmem [shape: f32[16,32], index: 5, kind: input, shape index: {}, may-alias: {1,5}]
  %s6 = inlined_call_operand.vmem [shape: f32[16,32], index: 6, kind: output, shape index: {0}]
  %s7 = inlined_call_operand.vmem [shape: f32[16,32], index: 7, kind: output, shape index: {1}]
  %8 = xla_tuple %s6, %s7
  %s9 = sld [smem:[#allocation0]]
  $region50: #{forward.17} parent=0
    _
  %s11 = ssub.s32 1, %s9
  %s12 = scalar_select 0, %s11, %s9
  // Predicated region
  $region2: #{forward.17} parent=0 // pred_check
    _
  $region3: #{forward.17} parent=0 // pred_check_branch
    %14 = sbr.rel (0) target = $region5
  $region4: #{forward.17} parent=0 // pred_region
    _
  $region5: #{forward.17} parent=0 // pred_fallthru
    _
  // Predicated region
  $region6: #{forward.17} parent=0 // pred_check
    _
  $region7: #{forward.17} parent=0 // pred_check_branch
    %16 = sbr.rel (0) target = $region9
  $region8: #{forward.17} parent=0 // pred_region
    _
  $region9: #{forward.17} parent=0 // pred_fallthru
    _
  // Predicated region
  $region10: #{forward.17} parent=0 // pred_check
    _
  $region11: #{forward.17} parent=0 // pred_check_branch
    %18 = sbr.rel (0) target = $region13
  $region12: #{forward.17} parent=0 // pred_region
    _
  $region13: #{forward.17} parent=0 // pred_fallthru
    _
  // Predicated region
  $region14: #{forward.17} parent=0 // pred_check
    _
  $region15: #{forward.17} parent=0 // pred_check_branch
    %20 = sbr.rel (0) target = $region17
  $region16: #{forward.17} parent=0 // pred_region
    _
  $region17: #{forward.17} parent=0 // pred_fallthru
    _
  // Predicated region
  $region18: #{forward.17} parent=0 // pred_check
    _
  $region19: #{forward.17} parent=0 // pred_check_branch
    %22 = sbr.rel (0) target = $region21
  $region20: #{forward.17} parent=0 // pred_region
    _
  $region21: #{forward.17} parent=0 // pred_fallthru
    _
  // Predicated region
  $region22: #{forward.17} parent=0 // pred_check
    _
  $region23: #{forward.17} parent=0 // pred_check_branch
    %24 = sbr.rel (0) target = $region25
  $region24: #{forward.17} parent=0 // pred_region
    _
  $region25: #{forward.17} parent=0 // pred_fallthru
    _
  %p25 = scmp.eq.s32.totalorder 0, 0
  // Predicated region
  $region26: #{forward.17} parent=0 // pred_check
    %p26 = pneg %p25
  $region27: #{forward.17} parent=0 // pred_check_branch
    %28 = sbr.rel (%p26) target = $region29
  $region28: #{forward.17} parent=0 // pred_region
    %vm29 = vcmask 261120
    %30 = vst.msk [vmem:[#allocation2] sm:$0xff] %vm29, 0.0
    %31 = vst.msk [vmem:[#allocation2 + $0x8] sm:$0xff] %vm29, 0.0
    %32 = vst.msk [vmem:[#allocation3] sm:$0xff] %vm29, 0.0
    %33 = vst.msk [vmem:[#allocation3 + $0x8] sm:$0xff] %vm29, 0.0
  $region29: #{forward.17} parent=0 // pred_fallthru
    _
  %v34 = vld [vmem:[%s0] sm:$0xff]
  %v35 = vld [vmem:[%s0 + $0x8] sm:$0xff]
  %v36 = vld [vmem:[%s1] sm:$0xff]
  %v37 = vld [vmem:[%s1 + $0x8] sm:$0xff]
  %v38 = vld [vmem:[%s2] sm:$0xff]
  %v39 = vld [vmem:[%s2 + $0x8] sm:$0xff]
  %v40 = vld [vmem:[%s2 + $0x10] sm:$0xff]
  %v41 = vld [vmem:[%s2 + $0x18] sm:$0xff]
  %v42 = vld [vmem:[%s3] sm:$0xff]
  %v43 = vld [vmem:[%s3 + $0x8] sm:$0xff]
  %v44 = vld [vmem:[%s3 + $0x10] sm:$0xff]
  %v45 = vld [vmem:[%s3 + $0x18] sm:$0xff]
  %vm46 = vcmask 261120
  %v48 = vsel %vm46, %v34, 0
  %v51 = vsel %vm46, %v35, 0
  %53 = vmatprep.subr.mxu0 0.0
  %54 = vmatpush1.msra.mxu0 0.0
  %55 = vmatprep.subr.mxu0 0.0
  %56 = vmatpush1.msra.mxu0 0.0
  %57 = vmatprep.subr.mxu0 0.0
  %58 = vmatpush1.msra.mxu0 0.0
  %59 = vmatprep.subr.mxu0 0.0
  %60 = vmatpush1.msra.mxu0 0.0
  %61 = vmatprep.subr.mxu0 0.0
  %62 = vmatpush1.msra.mxu0 0.0
  %63 = vmatprep.subr.mxu0 0.0
  %64 = vmatpush1.msra.mxu0 0.0
  %65 = vmatprep.subr.mxu0 0.0
  %66 = vmatpush1.msra.mxu0 0.0
  %67 = vmatprep.subr.mxu0 0.0
  %68 = vmatpush1.msra.mxu0 0.0
  %69 = vmatprep.subr.mxu0 0.0
  %70 = vmatpush1.msra.mxu0 0.0
  %71 = vmatprep.subr.mxu0 0.0
  %72 = vmatpush1.msra.mxu0 0.0
  %73 = vmatprep.subr.mxu0 0.0
  %74 = vmatpush1.msra.mxu0 0.0
  %75 = vmatprep.subr.mxu0 0.0
  %76 = vmatpush1.msra.mxu0 0.0
  %77 = vmatprep.subr.mxu0 0.0
  %v78 = vand.u32 %v41, 4294901760
  %79 = vmatpush1.msra.mxu0 %v78
  %80 = vmatprep.subr.mxu0 0.0
  %v81 = vand.u32 %v40, 4294901760
  %82 = vmatpush1.msra.mxu0 %v81
  %83 = vmatprep.subr.mxu0 0.0
  %v84 = vand.u32 %v39, 4294901760
  %85 = vmatpush1.msra.mxu0 %v84
  %86 = vmatprep.subr.mxu0 0.0
  %v87 = vand.u32 %v38, 4294901760
  %88 = vmatpush1.msra.mxu0 %v87
  %89 = vmatprep.subr.mxu0 0.0
  %90 = vmatpush2.msra.mxu0 0.0
  %91 = vmatprep.subr.mxu0 0.0
  %92 = vmatpush2.msra.mxu0 0.0
  %93 = vmatprep.subr.mxu0 0.0
  %94 = vmatpush2.msra.mxu0 0.0
  %95 = vmatprep.subr.mxu0 0.0
  %96 = vmatpush2.msra.mxu0 0.0
  %97 = vmatprep.subr.mxu0 0.0
  %98 = vmatpush2.msra.mxu0 0.0
  %99 = vmatprep.subr.mxu0 0.0
  %100 = vmatpush2.msra.mxu0 0.0
  %101 = vmatprep.subr.mxu0 0.0
  %102 = vmatpush2.msra.mxu0 0.0
  %103 = vmatprep.subr.mxu0 0.0
  %104 = vmatpush2.msra.mxu0 0.0
  %105 = vmatprep.subr.mxu0 0.0
  %106 = vmatpush2.msra.mxu0 0.0
  %107 = vmatprep.subr.mxu0 0.0
  %108 = vmatpush2.msra.mxu0 0.0
  %109 = vmatprep.subr.mxu0 0.0
  %110 = vmatpush2.msra.mxu0 0.0
  %111 = vmatprep.subr.mxu0 0.0
  %112 = vmatpush2.msra.mxu0 0.0
  %113 = vmatprep.subr.mxu0 0.0
  %114 = vmatpush2.msra.mxu0 0.0
  %115 = vmatprep.subr.mxu0 0.0
  %116 = vmatpush2.msra.mxu0 0.0
  %117 = vmatprep.subr.mxu0 0.0
  %118 = vmatpush2.msra.mxu0 0.0
  %119 = vmatprep.subr.mxu0 0.0
  %120 = vmatpush2.msra.mxu0 0.0
  %121 = vmatprep.mubr.f32.mxu0 0.0
  %v122 = vand.u32 %v48, 4294901760
  %v123 = vsub.f32 %v48, %v122
  %v124 = vand.u32 %v123, 4294901760
  %v125 = vsub.f32 %v123, %v124
  %v126 = vand.u32 %v125, 4294901760
  %127 = vmatmul.mubr.f32.gmra.mxu0 %v126
  %v128 = vpop.f32.mrf.mxu0
  %v129 = vadd.f32 0.0, %v128
  %v130 = vpop.f32.mrf.mxu0
  %131 = vmatprep.mubr.f32.mxu0 0.0
  %v132 = vand.u32 %v51, 4294901760
  %v133 = vsub.f32 %v51, %v132
  %v134 = vand.u32 %v133, 4294901760
  %v135 = vsub.f32 %v133, %v134
  %v136 = vand.u32 %v135, 4294901760
  %137 = vmatmul.mubr.f32.gmra.mxu0 %v136
  %v138 = vpop.f32.mrf.mxu0
  %v139 = vadd.f32 0.0, %v138
  %v140 = vpop.f32.mrf.mxu0
  %141 = vdwg.mxu0
  %142 = vmatprep.subr.mxu0 0.0
  %143 = vmatpush1.msra.mxu0 0.0
  %144 = vmatprep.subr.mxu0 0.0
  %145 = vmatpush1.msra.mxu0 0.0
  %146 = vmatprep.subr.mxu0 0.0
  %147 = vmatpush1.msra.mxu0 0.0
  %148 = vmatprep.subr.mxu0 0.0
  %149 = vmatpush1.msra.mxu0 0.0
  %150 = vmatprep.subr.mxu0 0.0
  %151 = vmatpush1.msra.mxu0 0.0
  %152 = vmatprep.subr.mxu0 0.0
  %153 = vmatpush1.msra.mxu0 0.0
  %154 = vmatprep.subr.mxu0 0.0
  %155 = vmatpush1.msra.mxu0 0.0
  %156 = vmatprep.subr.mxu0 0.0
  %157 = vmatpush1.msra.mxu0 0.0
  %158 = vmatprep.subr.mxu0 0.0
  %159 = vmatpush1.msra.mxu0 0.0
  %160 = vmatprep.subr.mxu0 0.0
  %161 = vmatpush1.msra.mxu0 0.0
  %162 = vmatprep.subr.mxu0 0.0
  %163 = vmatpush1.msra.mxu0 0.0
  %164 = vmatprep.subr.mxu0 0.0
  %165 = vmatpush1.msra.mxu0 0.0
  %166 = vmatprep.subr.mxu0 0.0
  %v167 = vand.u32 %v41, 4294901760
  %v168 = vsub.f32 %v41, %v167
  %v169 = vand.u32 %v168, 4294901760
  %v170 = vsub.f32 %v168, %v169
  %v171 = vand.u32 %v170, 4294901760
  %172 = vmatpush1.msra.mxu0 %v171
  %173 = vmatprep.subr.mxu0 0.0
  %v174 = vand.u32 %v40, 4294901760
  %v175 = vsub.f32 %v40, %v174
  %v176 = vand.u32 %v175, 4294901760
  %v177 = vsub.f32 %v175, %v176
  %v178 = vand.u32 %v177, 4294901760
  %179 = vmatpush1.msra.mxu0 %v178
  %180 = vmatprep.subr.mxu0 0.0
  %v181 = vand.u32 %v39, 4294901760
  %v182 = vsub.f32 %v39, %v181
  %v183 = vand.u32 %v182, 4294901760
  %v184 = vsub.f32 %v182, %v183
  %v185 = vand.u32 %v184, 4294901760
  %186 = vmatpush1.msra.mxu0 %v185
  %187 = vmatprep.subr.mxu0 0.0
  %v188 = vand.u32 %v38, 4294901760
  %v189 = vsub.f32 %v38, %v188
  %v190 = vand.u32 %v189, 4294901760
  %v191 = vsub.f32 %v189, %v190
  %v192 = vand.u32 %v191, 4294901760
  %193 = vmatpush1.msra.mxu0 %v192
  %194 = vmatprep.subr.mxu0 0.0
  %195 = vmatpush2.msra.mxu0 0.0
  %196 = vmatprep.subr.mxu0 0.0
  %197 = vmatpush2.msra.mxu0 0.0
  %198 = vmatprep.subr.mxu0 0.0
  %199 = vmatpush2.msra.mxu0 0.0
  %200 = vmatprep.subr.mxu0 0.0
  %201 = vmatpush2.msra.mxu0 0.0
  %202 = vmatprep.subr.mxu0 0.0
  %203 = vmatpush2.msra.mxu0 0.0
  %204 = vmatprep.subr.mxu0 0.0
  %205 = vmatpush2.msra.mxu0 0.0
  %206 = vmatprep.subr.mxu0 0.0
  %207 = vmatpush2.msra.mxu0 0.0
  %208 = vmatprep.subr.mxu0 0.0
  %209 = vmatpush2.msra.mxu0 0.0
  %210 = vmatprep.subr.mxu0 0.0
  %211 = vmatpush2.msra.mxu0 0.0
  %212 = vmatprep.subr.mxu0 0.0
  %213 = vmatpush2.msra.mxu0 0.0
  %214 = vmatprep.subr.mxu0 0.0
  %215 = vmatpush2.msra.mxu0 0.0
  %216 = vmatprep.subr.mxu0 0.0
  %217 = vmatpush2.msra.mxu0 0.0
  %218 = vmatprep.subr.mxu0 0.0
  %219 = vmatpush2.msra.mxu0 0.0
  %220 = vmatprep.subr.mxu0 0.0
  %221 = vmatpush2.msra.mxu0 0.0
  %222 = vmatprep.subr.mxu0 0.0
  %223 = vmatpush2.msra.mxu0 0.0
  %224 = vmatprep.subr.mxu0 0.0
  %225 = vmatpush2.msra.mxu0 0.0
  %226 = vmatprep.mubr.f32.mxu0 0.0
  %v227 = vand.u32 %v48, 4294901760
  %228 = vmatmul.mubr.f32.gmra.mxu0 %v227
  %v229 = vpop.f32.mrf.mxu0
  %v230 = vadd.f32 %v129, %v229
  %v231 = vpop.f32.mrf.mxu0
  %232 = vmatprep.mubr.f32.mxu0 0.0
  %v233 = vand.u32 %v51, 4294901760
  %234 = vmatmul.mubr.f32.gmra.mxu0 %v233
  %v235 = vpop.f32.mrf.mxu0
  %v236 = vadd.f32 %v139, %v235
  %v237 = vpop.f32.mrf.mxu0
  %238 = vdwg.mxu0
  %239 = vmatprep.subr.mxu0 0.0
  %240 = vmatpush1.msra.mxu0 0.0
  %241 = vmatprep.subr.mxu0 0.0
  %242 = vmatpush1.msra.mxu0 0.0
  %243 = vmatprep.subr.mxu0 0.0
  %244 = vmatpush1.msra.mxu0 0.0
  %245 = vmatprep.subr.mxu0 0.0
  %246 = vmatpush1.msra.mxu0 0.0
  %247 = vmatprep.subr.mxu0 0.0
  %248 = vmatpush1.msra.mxu0 0.0
  %249 = vmatprep.subr.mxu0 0.0
  %250 = vmatpush1.msra.mxu0 0.0
  %251 = vmatprep.subr.mxu0 0.0
  %252 = vmatpush1.msra.mxu0 0.0
  %253 = vmatprep.subr.mxu0 0.0
  %254 = vmatpush1.msra.mxu0 0.0
  %255 = vmatprep.subr.mxu0 0.0
  %256 = vmatpush1.msra.mxu0 0.0
  %257 = vmatprep.subr.mxu0 0.0
  %258 = vmatpush1.msra.mxu0 0.0
  %259 = vmatprep.subr.mxu0 0.0
  %260 = vmatpush1.msra.mxu0 0.0
  %261 = vmatprep.subr.mxu0 0.0
  %262 = vmatpush1.msra.mxu0 0.0
  %263 = vmatprep.subr.mxu0 0.0
  %v264 = vand.u32 %v41, 4294901760
  %v265 = vsub.f32 %v41, %v264
  %266 = vmatpush1.msra.mxu0 %v265
  %267 = vmatprep.subr.mxu0 0.0
  %v268 = vand.u32 %v40, 4294901760
  %v269 = vsub.f32 %v40, %v268
  %270 = vmatpush1.msra.mxu0 %v269
  %271 = vmatprep.subr.mxu0 0.0
  %v272 = vand.u32 %v39, 4294901760
  %v273 = vsub.f32 %v39, %v272
  %274 = vmatpush1.msra.mxu0 %v273
  %275 = vmatprep.subr.mxu0 0.0
  %v276 = vand.u32 %v38, 4294901760
  %v277 = vsub.f32 %v38, %v276
  %278 = vmatpush1.msra.mxu0 %v277
  %279 = vmatprep.subr.mxu0 0.0
  %280 = vmatpush2.msra.mxu0 0.0
  %281 = vmatprep.subr.mxu0 0.0
  %282 = vmatpush2.msra.mxu0 0.0
  %283 = vmatprep.subr.mxu0 0.0
  %284 = vmatpush2.msra.mxu0 0.0
  %285 = vmatprep.subr.mxu0 0.0
  %286 = vmatpush2.msra.mxu0 0.0
  %287 = vmatprep.subr.mxu0 0.0
  %288 = vmatpush2.msra.mxu0 0.0
  %289 = vmatprep.subr.mxu0 0.0
  %290 = vmatpush2.msra.mxu0 0.0
  %291 = vmatprep.subr.mxu0 0.0
  %292 = vmatpush2.msra.mxu0 0.0
  %293 = vmatprep.subr.mxu0 0.0
  %294 = vmatpush2.msra.mxu0 0.0
  %295 = vmatprep.subr.mxu0 0.0
  %296 = vmatpush2.msra.mxu0 0.0
  %297 = vmatprep.subr.mxu0 0.0
  %298 = vmatpush2.msra.mxu0 0.0
  %299 = vmatprep.subr.mxu0 0.0
  %300 = vmatpush2.msra.mxu0 0.0
  %301 = vmatprep.subr.mxu0 0.0
  %302 = vmatpush2.msra.mxu0 0.0
  %303 = vmatprep.subr.mxu0 0.0
  %304 = vmatpush2.msra.mxu0 0.0
  %305 = vmatprep.subr.mxu0 0.0
  %306 = vmatpush2.msra.mxu0 0.0
  %307 = vmatprep.subr.mxu0 0.0
  %308 = vmatpush2.msra.mxu0 0.0
  %309 = vmatprep.subr.mxu0 0.0
  %310 = vmatpush2.msra.mxu0 0.0
  %311 = vmatprep.mubr.f32.mxu0 0.0
  %v312 = vand.u32 %v48, 4294901760
  %v313 = vsub.f32 %v48, %v312
  %314 = vmatmul.mubr.f32.gmra.mxu0 %v313
  %v315 = vpop.f32.mrf.mxu0
  %v316 = vadd.f32 %v230, %v315
  %v317 = vpop.f32.mrf.mxu0
  %318 = vmatprep.mubr.f32.mxu0 0.0
  %v319 = vand.u32 %v51, 4294901760
  %v320 = vsub.f32 %v51, %v319
  %321 = vmatmul.mubr.f32.gmra.mxu0 %v320
  %v322 = vpop.f32.mrf.mxu0
  %v323 = vadd.f32 %v236, %v322
  %v324 = vpop.f32.mrf.mxu0
  %325 = vdwg.mxu0
  %326 = vmatprep.subr.mxu0 0.0
  %327 = vmatpush1.msra.mxu0 0.0
  %328 = vmatprep.subr.mxu0 0.0
  %329 = vmatpush1.msra.mxu0 0.0
  %330 = vmatprep.subr.mxu0 0.0
  %331 = vmatpush1.msra.mxu0 0.0
  %332 = vmatprep.subr.mxu0 0.0
  %333 = vmatpush1.msra.mxu0 0.0
  %334 = vmatprep.subr.mxu0 0.0
  %335 = vmatpush1.msra.mxu0 0.0
  %336 = vmatprep.subr.mxu0 0.0
  %337 = vmatpush1.msra.mxu0 0.0
  %338 = vmatprep.subr.mxu0 0.0
  %339 = vmatpush1.msra.mxu0 0.0
  %340 = vmatprep.subr.mxu0 0.0
  %341 = vmatpush1.msra.mxu0 0.0
  %342 = vmatprep.subr.mxu0 0.0
  %343 = vmatpush1.msra.mxu0 0.0
  %344 = vmatprep.subr.mxu0 0.0
  %345 = vmatpush1.msra.mxu0 0.0
  %346 = vmatprep.subr.mxu0 0.0
  %347 = vmatpush1.msra.mxu0 0.0
  %348 = vmatprep.subr.mxu0 0.0
  %349 = vmatpush1.msra.mxu0 0.0
  %350 = vmatprep.subr.mxu0 0.0
  %v351 = vand.u32 %v41, 4294901760
  %352 = vmatpush1.msra.mxu0 %v351
  %353 = vmatprep.subr.mxu0 0.0
  %v354 = vand.u32 %v40, 4294901760
  %355 = vmatpush1.msra.mxu0 %v354
  %356 = vmatprep.subr.mxu0 0.0
  %v357 = vand.u32 %v39, 4294901760
  %358 = vmatpush1.msra.mxu0 %v357
  %359 = vmatprep.subr.mxu0 0.0
  %v360 = vand.u32 %v38, 4294901760
  %361 = vmatpush1.msra.mxu0 %v360
  %362 = vmatprep.subr.mxu0 0.0
  %363 = vmatpush2.msra.mxu0 0.0
  %364 = vmatprep.subr.mxu0 0.0
  %365 = vmatpush2.msra.mxu0 0.0
  %366 = vmatprep.subr.mxu0 0.0
  %367 = vmatpush2.msra.mxu0 0.0
  %368 = vmatprep.subr.mxu0 0.0
  %369 = vmatpush2.msra.mxu0 0.0
  %370 = vmatprep.subr.mxu0 0.0
  %371 = vmatpush2.msra.mxu0 0.0
  %372 = vmatprep.subr.mxu0 0.0
  %373 = vmatpush2.msra.mxu0 0.0
  %374 = vmatprep.subr.mxu0 0.0
  %375 = vmatpush2.msra.mxu0 0.0
  %376 = vmatprep.subr.mxu0 0.0
  %377 = vmatpush2.msra.mxu0 0.0
  %378 = vmatprep.subr.mxu0 0.0
  %379 = vmatpush2.msra.mxu0 0.0
  %380 = vmatprep.subr.mxu0 0.0
  %381 = vmatpush2.msra.mxu0 0.0
  %382 = vmatprep.subr.mxu0 0.0
  %383 = vmatpush2.msra.mxu0 0.0
  %384 = vmatprep.subr.mxu0 0.0
  %385 = vmatpush2.msra.mxu0 0.0
  %386 = vmatprep.subr.mxu0 0.0
  %387 = vmatpush2.msra.mxu0 0.0
  %388 = vmatprep.subr.mxu0 0.0
  %389 = vmatpush2.msra.mxu0 0.0
  %390 = vmatprep.subr.mxu0 0.0
  %391 = vmatpush2.msra.mxu0 0.0
  %392 = vmatprep.subr.mxu0 0.0
  %393 = vmatpush2.msra.mxu0 0.0
  %394 = vmatprep.mubr.f32.mxu0 0.0
  %v395 = vand.u32 %v48, 4294901760
  %v396 = vsub.f32 %v48, %v395
  %v397 = vand.u32 %v396, 4294901760
  %398 = vmatmul.mubr.f32.gmra.mxu0 %v397
  %v399 = vpop.f32.mrf.mxu0
  %v400 = vadd.f32 %v316, %v399
  %v401 = vpop.f32.mrf.mxu0
  %402 = vmatprep.mubr.f32.mxu0 0.0
  %v403 = vand.u32 %v51, 4294901760
  %v404 = vsub.f32 %v51, %v403
  %v405 = vand.u32 %v404, 4294901760
  %406 = vmatmul.mubr.f32.gmra.mxu0 %v405
  %v407 = vpop.f32.mrf.mxu0
  %v408 = vadd.f32 %v323, %v407
  %v409 = vpop.f32.mrf.mxu0
  %410 = vdwg.mxu0
  %411 = vmatprep.subr.mxu0 0.0
  %412 = vmatpush1.msra.mxu0 0.0
  %413 = vmatprep.subr.mxu0 0.0
  %414 = vmatpush1.msra.mxu0 0.0
  %415 = vmatprep.subr.mxu0 0.0
  %416 = vmatpush1.msra.mxu0 0.0
  %417 = vmatprep.subr.mxu0 0.0
  %418 = vmatpush1.msra.mxu0 0.0
  %419 = vmatprep.subr.mxu0 0.0
  %420 = vmatpush1.msra.mxu0 0.0
  %421 = vmatprep.subr.mxu0 0.0
  %422 = vmatpush1.msra.mxu0 0.0
  %423 = vmatprep.subr.mxu0 0.0
  %424 = vmatpush1.msra.mxu0 0.0
  %425 = vmatprep.subr.mxu0 0.0
  %426 = vmatpush1.msra.mxu0 0.0
  %427 = vmatprep.subr.mxu0 0.0
  %428 = vmatpush1.msra.mxu0 0.0
  %429 = vmatprep.subr.mxu0 0.0
  %430 = vmatpush1.msra.mxu0 0.0
  %431 = vmatprep.subr.mxu0 0.0
  %432 = vmatpush1.msra.mxu0 0.0
  %433 = vmatprep.subr.mxu0 0.0
  %434 = vmatpush1.msra.mxu0 0.0
  %435 = vmatprep.subr.mxu0 0.0
  %v436 = vand.u32 %v41, 4294901760
  %v437 = vsub.f32 %v41, %v436
  %v438 = vand.u32 %v437, 4294901760
  %439 = vmatpush1.msra.mxu0 %v438
  %440 = vmatprep.subr.mxu0 0.0
  %v441 = vand.u32 %v40, 4294901760
  %v442 = vsub.f32 %v40, %v441
  %v443 = vand.u32 %v442, 4294901760
  %444 = vmatpush1.msra.mxu0 %v443
  %445 = vmatprep.subr.mxu0 0.0
  %v446 = vand.u32 %v39, 4294901760
  %v447 = vsub.f32 %v39, %v446
  %v448 = vand.u32 %v447, 4294901760
  %449 = vmatpush1.msra.mxu0 %v448
  %450 = vmatprep.subr.mxu0 0.0
  %v451 = vand.u32 %v38, 4294901760
  %v452 = vsub.f32 %v38, %v451
  %v453 = vand.u32 %v452, 4294901760
  %454 = vmatpush1.msra.mxu0 %v453
  %455 = vmatprep.subr.mxu0 0.0
  %456 = vmatpush2.msra.mxu0 0.0
  %457 = vmatprep.subr.mxu0 0.0
  %458 = vmatpush2.msra.mxu0 0.0
  %459 = vmatprep.subr.mxu0 0.0
  %460 = vmatpush2.msra.mxu0 0.0
  %461 = vmatprep.subr.mxu0 0.0
  %462 = vmatpush2.msra.mxu0 0.0
  %463 = vmatprep.subr.mxu0 0.0
  %464 = vmatpush2.msra.mxu0 0.0
  %465 = vmatprep.subr.mxu0 0.0
  %466 = vmatpush2.msra.mxu0 0.0
  %467 = vmatprep.subr.mxu0 0.0
  %468 = vmatpush2.msra.mxu0 0.0
  %469 = vmatprep.subr.mxu0 0.0
  %470 = vmatpush2.msra.mxu0 0.0
  %471 = vmatprep.subr.mxu0 0.0
  %472 = vmatpush2.msra.mxu0 0.0
  %473 = vmatprep.subr.mxu0 0.0
  %474 = vmatpush2.msra.mxu0 0.0
  %475 = vmatprep.subr.mxu0 0.0
  %476 = vmatpush2.msra.mxu0 0.0
  %477 = vmatprep.subr.mxu0 0.0
  %478 = vmatpush2.msra.mxu0 0.0
  %479 = vmatprep.subr.mxu0 0.0
  %480 = vmatpush2.msra.mxu0 0.0
  %481 = vmatprep.subr.mxu0 0.0
  %482 = vmatpush2.msra.mxu0 0.0
  %483 = vmatprep.subr.mxu0 0.0
  %484 = vmatpush2.msra.mxu0 0.0
  %485 = vmatprep.subr.mxu0 0.0
  %486 = vmatpush2.msra.mxu0 0.0
  %487 = vmatprep.mubr.f32.mxu0 0.0
  %v488 = vand.u32 %v48, 4294901760
  %489 = vmatmul.mubr.f32.gmra.mxu0 %v488
  %v490 = vpop.f32.mrf.mxu0
  %v491 = vadd.f32 %v400, %v490
  %v492 = vpop.f32.mrf.mxu0
  %493 = vmatprep.mubr.f32.mxu0 0.0
  %v494 = vand.u32 %v51, 4294901760
  %495 = vmatmul.mubr.f32.gmra.mxu0 %v494
  %v496 = vpop.f32.mrf.mxu0
  %v497 = vadd.f32 %v408, %v496
  %v498 = vpop.f32.mrf.mxu0
  %499 = vdwg.mxu0
  %500 = vmatprep.subr.mxu0 0.0
  %501 = vmatpush1.msra.mxu0 0.0
  %502 = vmatprep.subr.mxu0 0.0
  %503 = vmatpush1.msra.mxu0 0.0
  %504 = vmatprep.subr.mxu0 0.0
  %505 = vmatpush1.msra.mxu0 0.0
  %506 = vmatprep.subr.mxu0 0.0
  %507 = vmatpush1.msra.mxu0 0.0
  %508 = vmatprep.subr.mxu0 0.0
  %509 = vmatpush1.msra.mxu0 0.0
  %510 = vmatprep.subr.mxu0 0.0
  %511 = vmatpush1.msra.mxu0 0.0
  %512 = vmatprep.subr.mxu0 0.0
  %513 = vmatpush1.msra.mxu0 0.0
  %514 = vmatprep.subr.mxu0 0.0
  %515 = vmatpush1.msra.mxu0 0.0
  %516 = vmatprep.subr.mxu0 0.0
  %517 = vmatpush1.msra.mxu0 0.0
  %518 = vmatprep.subr.mxu0 0.0
  %519 = vmatpush1.msra.mxu0 0.0
  %520 = vmatprep.subr.mxu0 0.0
  %521 = vmatpush1.msra.mxu0 0.0
  %522 = vmatprep.subr.mxu0 0.0
  %523 = vmatpush1.msra.mxu0 0.0
  %524 = vmatprep.subr.mxu0 0.0
  %v525 = vand.u32 %v41, 4294901760
  %526 = vmatpush1.msra.mxu0 %v525
  %527 = vmatprep.subr.mxu0 0.0
  %v528 = vand.u32 %v40, 4294901760
  %529 = vmatpush1.msra.mxu0 %v528
  %530 = vmatprep.subr.mxu0 0.0
  %v531 = vand.u32 %v39, 4294901760
  %532 = vmatpush1.msra.mxu0 %v531
  %533 = vmatprep.subr.mxu0 0.0
  %v534 = vand.u32 %v38, 4294901760
  %535 = vmatpush1.msra.mxu0 %v534
  %536 = vmatprep.subr.mxu0 0.0
  %537 = vmatpush2.msra.mxu0 0.0
  %538 = vmatprep.subr.mxu0 0.0
  %539 = vmatpush2.msra.mxu0 0.0
  %540 = vmatprep.subr.mxu0 0.0
  %541 = vmatpush2.msra.mxu0 0.0
  %542 = vmatprep.subr.mxu0 0.0
  %543 = vmatpush2.msra.mxu0 0.0
  %544 = vmatprep.subr.mxu0 0.0
  %545 = vmatpush2.msra.mxu0 0.0
  %546 = vmatprep.subr.mxu0 0.0
  %547 = vmatpush2.msra.mxu0 0.0
  %548 = vmatprep.subr.mxu0 0.0
  %549 = vmatpush2.msra.mxu0 0.0
  %550 = vmatprep.subr.mxu0 0.0
  %551 = vmatpush2.msra.mxu0 0.0
  %552 = vmatprep.subr.mxu0 0.0
  %553 = vmatpush2.msra.mxu0 0.0
  %554 = vmatprep.subr.mxu0 0.0
  %555 = vmatpush2.msra.mxu0 0.0
  %556 = vmatprep.subr.mxu0 0.0
  %557 = vmatpush2.msra.mxu0 0.0
  %558 = vmatprep.subr.mxu0 0.0
  %559 = vmatpush2.msra.mxu0 0.0
  %560 = vmatprep.subr.mxu0 0.0
  %561 = vmatpush2.msra.mxu0 0.0
  %562 = vmatprep.subr.mxu0 0.0
  %563 = vmatpush2.msra.mxu0 0.0
  %564 = vmatprep.subr.mxu0 0.0
  %565 = vmatpush2.msra.mxu0 0.0
  %566 = vmatprep.subr.mxu0 0.0
  %567 = vmatpush2.msra.mxu0 0.0
  %568 = vmatprep.mubr.f32.mxu0 0.0
  %v569 = vand.u32 %v48, 4294901760
  %570 = vmatmul.mubr.f32.gmra.mxu0 %v569
  %v571 = vpop.f32.mrf.mxu0
  %v572 = vadd.f32 %v491, %v571
  %v573 = vpop.f32.mrf.mxu0
  %574 = vmatprep.mubr.f32.mxu0 0.0
  %v575 = vand.u32 %v51, 4294901760
  %576 = vmatmul.mubr.f32.gmra.mxu0 %v575
  %v577 = vpop.f32.mrf.mxu0
  %v578 = vadd.f32 %v497, %v577
  %v579 = vpop.f32.mrf.mxu0
  %580 = vdwg.mxu0
  %v582 = vsel %vm46, %v36, 0
  %v585 = vsel %vm46, %v37, 0
  %587 = vmatprep.subr.mxu0 0.0
  %588 = vmatpush1.msra.mxu0 0.0
  %589 = vmatprep.subr.mxu0 0.0
  %590 = vmatpush1.msra.mxu0 0.0
  %591 = vmatprep.subr.mxu0 0.0
  %592 = vmatpush1.msra.mxu0 0.0
  %593 = vmatprep.subr.mxu0 0.0
  %594 = vmatpush1.msra.mxu0 0.0
  %595 = vmatprep.subr.mxu0 0.0
  %596 = vmatpush1.msra.mxu0 0.0
  %597 = vmatprep.subr.mxu0 0.0
  %598 = vmatpush1.msra.mxu0 0.0
  %599 = vmatprep.subr.mxu0 0.0
  %600 = vmatpush1.msra.mxu0 0.0
  %601 = vmatprep.subr.mxu0 0.0
  %602 = vmatpush1.msra.mxu0 0.0
  %603 = vmatprep.subr.mxu0 0.0
  %604 = vmatpush1.msra.mxu0 0.0
  %605 = vmatprep.subr.mxu0 0.0
  %606 = vmatpush1.msra.mxu0 0.0
  %607 = vmatprep.subr.mxu0 0.0
  %608 = vmatpush1.msra.mxu0 0.0
  %609 = vmatprep.subr.mxu0 0.0
  %610 = vmatpush1.msra.mxu0 0.0
  %611 = vmatprep.subr.mxu0 0.0
  %v612 = vand.u32 %v45, 4294901760
  %613 = vmatpush1.msra.mxu0 %v612
  %614 = vmatprep.subr.mxu0 0.0
  %v615 = vand.u32 %v44, 4294901760
  %616 = vmatpush1.msra.mxu0 %v615
  %617 = vmatprep.subr.mxu0 0.0
  %v618 = vand.u32 %v43, 4294901760
  %619 = vmatpush1.msra.mxu0 %v618
  %620 = vmatprep.subr.mxu0 0.0
  %v621 = vand.u32 %v42, 4294901760
  %622 = vmatpush1.msra.mxu0 %v621
  %623 = vmatprep.subr.mxu0 0.0
  %624 = vmatpush2.msra.mxu0 0.0
  %625 = vmatprep.subr.mxu0 0.0
  %626 = vmatpush2.msra.mxu0 0.0
  %627 = vmatprep.subr.mxu0 0.0
  %628 = vmatpush2.msra.mxu0 0.0
  %629 = vmatprep.subr.mxu0 0.0
  %630 = vmatpush2.msra.mxu0 0.0
  %631 = vmatprep.subr.mxu0 0.0
  %632 = vmatpush2.msra.mxu0 0.0
  %633 = vmatprep.subr.mxu0 0.0
  %634 = vmatpush2.msra.mxu0 0.0
  %635 = vmatprep.subr.mxu0 0.0
  %636 = vmatpush2.msra.mxu0 0.0
  %637 = vmatprep.subr.mxu0 0.0
  %638 = vmatpush2.msra.mxu0 0.0
  %639 = vmatprep.subr.mxu0 0.0
  %640 = vmatpush2.msra.mxu0 0.0
  %641 = vmatprep.subr.mxu0 0.0
  %642 = vmatpush2.msra.mxu0 0.0
  %643 = vmatprep.subr.mxu0 0.0
  %644 = vmatpush2.msra.mxu0 0.0
  %645 = vmatprep.subr.mxu0 0.0
  %646 = vmatpush2.msra.mxu0 0.0
  %647 = vmatprep.subr.mxu0 0.0
  %648 = vmatpush2.msra.mxu0 0.0
  %649 = vmatprep.subr.mxu0 0.0
  %650 = vmatpush2.msra.mxu0 0.0
  %651 = vmatprep.subr.mxu0 0.0
  %652 = vmatpush2.msra.mxu0 0.0
  %653 = vmatprep.subr.mxu0 0.0
  %654 = vmatpush2.msra.mxu0 0.0
  %655 = vmatprep.mubr.f32.mxu0 0.0
  %v656 = vand.u32 %v582, 4294901760
  %v657 = vsub.f32 %v582, %v656
  %v658 = vand.u32 %v657, 4294901760
  %v659 = vsub.f32 %v657, %v658
  %v660 = vand.u32 %v659, 4294901760
  %661 = vmatmul.mubr.f32.gmra.mxu0 %v660
  %v662 = vpop.f32.mrf.mxu0
  %v663 = vadd.f32 0.0, %v662
  %v664 = vpop.f32.mrf.mxu0
  %665 = vmatprep.mubr.f32.mxu0 0.0
  %v666 = vand.u32 %v585, 4294901760
  %v667 = vsub.f32 %v585, %v666
  %v668 = vand.u32 %v667, 4294901760
  %v669 = vsub.f32 %v667, %v668
  %v670 = vand.u32 %v669, 4294901760
  %671 = vmatmul.mubr.f32.gmra.mxu0 %v670
  %v672 = vpop.f32.mrf.mxu0
  %v673 = vadd.f32 0.0, %v672
  %v674 = vpop.f32.mrf.mxu0
  %675 = vdwg.mxu0
  %676 = vmatprep.subr.mxu0 0.0
  %677 = vmatpush1.msra.mxu0 0.0
  %678 = vmatprep.subr.mxu0 0.0
  %679 = vmatpush1.msra.mxu0 0.0
  %680 = vmatprep.subr.mxu0 0.0
  %681 = vmatpush1.msra.mxu0 0.0
  %682 = vmatprep.subr.mxu0 0.0
  %683 = vmatpush1.msra.mxu0 0.0
  %684 = vmatprep.subr.mxu0 0.0
  %685 = vmatpush1.msra.mxu0 0.0
  %686 = vmatprep.subr.mxu0 0.0
  %687 = vmatpush1.msra.mxu0 0.0
  %688 = vmatprep.subr.mxu0 0.0
  %689 = vmatpush1.msra.mxu0 0.0
  %690 = vmatprep.subr.mxu0 0.0
  %691 = vmatpush1.msra.mxu0 0.0
  %692 = vmatprep.subr.mxu0 0.0
  %693 = vmatpush1.msra.mxu0 0.0
  %694 = vmatprep.subr.mxu0 0.0
  %695 = vmatpush1.msra.mxu0 0.0
  %696 = vmatprep.subr.mxu0 0.0
  %697 = vmatpush1.msra.mxu0 0.0
  %698 = vmatprep.subr.mxu0 0.0
  %699 = vmatpush1.msra.mxu0 0.0
  %700 = vmatprep.subr.mxu0 0.0
  %v701 = vand.u32 %v45, 4294901760
  %v702 = vsub.f32 %v45, %v701
  %v703 = vand.u32 %v702, 4294901760
  %v704 = vsub.f32 %v702, %v703
  %v705 = vand.u32 %v704, 4294901760
  %706 = vmatpush1.msra.mxu0 %v705
  %707 = vmatprep.subr.mxu0 0.0
  %v708 = vand.u32 %v44, 4294901760
  %v709 = vsub.f32 %v44, %v708
  %v710 = vand.u32 %v709, 4294901760
  %v711 = vsub.f32 %v709, %v710
  %v712 = vand.u32 %v711, 4294901760
  %713 = vmatpush1.msra.mxu0 %v712
  %714 = vmatprep.subr.mxu0 0.0
  %v715 = vand.u32 %v43, 4294901760
  %v716 = vsub.f32 %v43, %v715
  %v717 = vand.u32 %v716, 4294901760
  %v718 = vsub.f32 %v716, %v717
  %v719 = vand.u32 %v718, 4294901760
  %720 = vmatpush1.msra.mxu0 %v719
  %721 = vmatprep.subr.mxu0 0.0
  %v722 = vand.u32 %v42, 4294901760
  %v723 = vsub.f32 %v42, %v722
  %v724 = vand.u32 %v723, 4294901760
  %v725 = vsub.f32 %v723, %v724
  %v726 = vand.u32 %v725, 4294901760
  %727 = vmatpush1.msra.mxu0 %v726
  %728 = vmatprep.subr.mxu0 0.0
  %729 = vmatpush2.msra.mxu0 0.0
  %730 = vmatprep.subr.mxu0 0.0
  %731 = vmatpush2.msra.mxu0 0.0
  %732 = vmatprep.subr.mxu0 0.0
  %733 = vmatpush2.msra.mxu0 0.0
  %734 = vmatprep.subr.mxu0 0.0
  %735 = vmatpush2.msra.mxu0 0.0
  %736 = vmatprep.subr.mxu0 0.0
  %737 = vmatpush2.msra.mxu0 0.0
  %738 = vmatprep.subr.mxu0 0.0
  %739 = vmatpush2.msra.mxu0 0.0
  %740 = vmatprep.subr.mxu0 0.0
  %741 = vmatpush2.msra.mxu0 0.0
  %742 = vmatprep.subr.mxu0 0.0
  %743 = vmatpush2.msra.mxu0 0.0
  %744 = vmatprep.subr.mxu0 0.0
  %745 = vmatpush2.msra.mxu0 0.0
  %746 = vmatprep.subr.mxu0 0.0
  %747 = vmatpush2.msra.mxu0 0.0
  %748 = vmatprep.subr.mxu0 0.0
  %749 = vmatpush2.msra.mxu0 0.0
  %750 = vmatprep.subr.mxu0 0.0
  %751 = vmatpush2.msra.mxu0 0.0
  %752 = vmatprep.subr.mxu0 0.0
  %753 = vmatpush2.msra.mxu0 0.0
  %754 = vmatprep.subr.mxu0 0.0
  %755 = vmatpush2.msra.mxu0 0.0
  %756 = vmatprep.subr.mxu0 0.0
  %757 = vmatpush2.msra.mxu0 0.0
  %758 = vmatprep.subr.mxu0 0.0
  %759 = vmatpush2.msra.mxu0 0.0
  %760 = vmatprep.mubr.f32.mxu0 0.0
  %v761 = vand.u32 %v582, 4294901760
  %762 = vmatmul.mubr.f32.gmra.mxu0 %v761
  %v763 = vpop.f32.mrf.mxu0
  %v764 = vadd.f32 %v663, %v763
  %v765 = vpop.f32.mrf.mxu0
  %766 = vmatprep.mubr.f32.mxu0 0.0
  %v767 = vand.u32 %v585, 4294901760
  %768 = vmatmul.mubr.f32.gmra.mxu0 %v767
  %v769 = vpop.f32.mrf.mxu0
  %v770 = vadd.f32 %v673, %v769
  %v771 = vpop.f32.mrf.mxu0
  %772 = vdwg.mxu0
  %773 = vmatprep.subr.mxu0 0.0
  %774 = vmatpush1.msra.mxu0 0.0
  %775 = vmatprep.subr.mxu0 0.0
  %776 = vmatpush1.msra.mxu0 0.0
  %777 = vmatprep.subr.mxu0 0.0
  %778 = vmatpush1.msra.mxu0 0.0
  %779 = vmatprep.subr.mxu0 0.0
  %780 = vmatpush1.msra.mxu0 0.0
  %781 = vmatprep.subr.mxu0 0.0
  %782 = vmatpush1.msra.mxu0 0.0
  %783 = vmatprep.subr.mxu0 0.0
  %784 = vmatpush1.msra.mxu0 0.0
  %785 = vmatprep.subr.mxu0 0.0
  %786 = vmatpush1.msra.mxu0 0.0
  %787 = vmatprep.subr.mxu0 0.0
  %788 = vmatpush1.msra.mxu0 0.0
  %789 = vmatprep.subr.mxu0 0.0
  %790 = vmatpush1.msra.mxu0 0.0
  %791 = vmatprep.subr.mxu0 0.0
  %792 = vmatpush1.msra.mxu0 0.0
  %793 = vmatprep.subr.mxu0 0.0
  %794 = vmatpush1.msra.mxu0 0.0
  %795 = vmatprep.subr.mxu0 0.0
  %796 = vmatpush1.msra.mxu0 0.0
  %797 = vmatprep.subr.mxu0 0.0
  %v798 = vand.u32 %v45, 4294901760
  %v799 = vsub.f32 %v45, %v798
  %800 = vmatpush1.msra.mxu0 %v799
  %801 = vmatprep.subr.mxu0 0.0
  %v802 = vand.u32 %v44, 4294901760
  %v803 = vsub.f32 %v44, %v802
  %804 = vmatpush1.msra.mxu0 %v803
  %805 = vmatprep.subr.mxu0 0.0
  %v806 = vand.u32 %v43, 4294901760
  %v807 = vsub.f32 %v43, %v806
  %808 = vmatpush1.msra.mxu0 %v807
  %809 = vmatprep.subr.mxu0 0.0
  %v810 = vand.u32 %v42, 4294901760
  %v811 = vsub.f32 %v42, %v810
  %812 = vmatpush1.msra.mxu0 %v811
  %813 = vmatprep.subr.mxu0 0.0
  %814 = vmatpush2.msra.mxu0 0.0
  %815 = vmatprep.subr.mxu0 0.0
  %816 = vmatpush2.msra.mxu0 0.0
  %817 = vmatprep.subr.mxu0 0.0
  %818 = vmatpush2.msra.mxu0 0.0
  %819 = vmatprep.subr.mxu0 0.0
  %820 = vmatpush2.msra.mxu0 0.0
  %821 = vmatprep.subr.mxu0 0.0
  %822 = vmatpush2.msra.mxu0 0.0
  %823 = vmatprep.subr.mxu0 0.0
  %824 = vmatpush2.msra.mxu0 0.0
  %825 = vmatprep.subr.mxu0 0.0
  %826 = vmatpush2.msra.mxu0 0.0
  %827 = vmatprep.subr.mxu0 0.0
  %828 = vmatpush2.msra.mxu0 0.0
  %829 = vmatprep.subr.mxu0 0.0
  %830 = vmatpush2.msra.mxu0 0.0
  %831 = vmatprep.subr.mxu0 0.0
  %832 = vmatpush2.msra.mxu0 0.0
  %833 = vmatprep.subr.mxu0 0.0
  %834 = vmatpush2.msra.mxu0 0.0
  %835 = vmatprep.subr.mxu0 0.0
  %836 = vmatpush2.msra.mxu0 0.0
  %837 = vmatprep.subr.mxu0 0.0
  %838 = vmatpush2.msra.mxu0 0.0
  %839 = vmatprep.subr.mxu0 0.0
  %840 = vmatpush2.msra.mxu0 0.0
  %841 = vmatprep.subr.mxu0 0.0
  %842 = vmatpush2.msra.mxu0 0.0
  %843 = vmatprep.subr.mxu0 0.0
  %844 = vmatpush2.msra.mxu0 0.0
  %845 = vmatprep.mubr.f32.mxu0 0.0
  %v846 = vand.u32 %v582, 4294901760
  %v847 = vsub.f32 %v582, %v846
  %848 = vmatmul.mubr.f32.gmra.mxu0 %v847
  %v849 = vpop.f32.mrf.mxu0
  %v850 = vadd.f32 %v764, %v849
  %v851 = vpop.f32.mrf.mxu0
  %852 = vmatprep.mubr.f32.mxu0 0.0
  %v853 = vand.u32 %v585, 4294901760
  %v854 = vsub.f32 %v585, %v853
  %855 = vmatmul.mubr.f32.gmra.mxu0 %v854
  %v856 = vpop.f32.mrf.mxu0
  %v857 = vadd.f32 %v770, %v856
  %v858 = vpop.f32.mrf.mxu0
  %859 = vdwg.mxu0
  %860 = vmatprep.subr.mxu0 0.0
  %861 = vmatpush1.msra.mxu0 0.0
  %862 = vmatprep.subr.mxu0 0.0
  %863 = vmatpush1.msra.mxu0 0.0
  %864 = vmatprep.subr.mxu0 0.0
  %865 = vmatpush1.msra.mxu0 0.0
  %866 = vmatprep.subr.mxu0 0.0
  %867 = vmatpush1.msra.mxu0 0.0
  %868 = vmatprep.subr.mxu0 0.0
  %869 = vmatpush1.msra.mxu0 0.0
  %870 = vmatprep.subr.mxu0 0.0
  %871 = vmatpush1.msra.mxu0 0.0
  %872 = vmatprep.subr.mxu0 0.0
  %873 = vmatpush1.msra.mxu0 0.0
  %874 = vmatprep.subr.mxu0 0.0
  %875 = vmatpush1.msra.mxu0 0.0
  %876 = vmatprep.subr.mxu0 0.0
  %877 = vmatpush1.msra.mxu0 0.0
  %878 = vmatprep.subr.mxu0 0.0
  %879 = vmatpush1.msra.mxu0 0.0
  %880 = vmatprep.subr.mxu0 0.0
  %881 = vmatpush1.msra.mxu0 0.0
  %882 = vmatprep.subr.mxu0 0.0
  %883 = vmatpush1.msra.mxu0 0.0
  %884 = vmatprep.subr.mxu0 0.0
  %v885 = vand.u32 %v45, 4294901760
  %886 = vmatpush1.msra.mxu0 %v885
  %887 = vmatprep.subr.mxu0 0.0
  %v888 = vand.u32 %v44, 4294901760
  %889 = vmatpush1.msra.mxu0 %v888
  %890 = vmatprep.subr.mxu0 0.0
  %v891 = vand.u32 %v43, 4294901760
  %892 = vmatpush1.msra.mxu0 %v891
  %893 = vmatprep.subr.mxu0 0.0
  %v894 = vand.u32 %v42, 4294901760
  %895 = vmatpush1.msra.mxu0 %v894
  %896 = vmatprep.subr.mxu0 0.0
  %897 = vmatpush2.msra.mxu0 0.0
  %898 = vmatprep.subr.mxu0 0.0
  %899 = vmatpush2.msra.mxu0 0.0
  %900 = vmatprep.subr.mxu0 0.0
  %901 = vmatpush2.msra.mxu0 0.0
  %902 = vmatprep.subr.mxu0 0.0
  %903 = vmatpush2.msra.mxu0 0.0
  %904 = vmatprep.subr.mxu0 0.0
  %905 = vmatpush2.msra.mxu0 0.0
  %906 = vmatprep.subr.mxu0 0.0
  %907 = vmatpush2.msra.mxu0 0.0
  %908 = vmatprep.subr.mxu0 0.0
  %909 = vmatpush2.msra.mxu0 0.0
  %910 = vmatprep.subr.mxu0 0.0
  %911 = vmatpush2.msra.mxu0 0.0
  %912 = vmatprep.subr.mxu0 0.0
  %913 = vmatpush2.msra.mxu0 0.0
  %914 = vmatprep.subr.mxu0 0.0
  %915 = vmatpush2.msra.mxu0 0.0
  %916 = vmatprep.subr.mxu0 0.0
  %917 = vmatpush2.msra.mxu0 0.0
  %918 = vmatprep.subr.mxu0 0.0
  %919 = vmatpush2.msra.mxu0 0.0
  %920 = vmatprep.subr.mxu0 0.0
  %921 = vmatpush2.msra.mxu0 0.0
  %922 = vmatprep.subr.mxu0 0.0
  %923 = vmatpush2.msra.mxu0 0.0
  %924 = vmatprep.subr.mxu0 0.0
  %925 = vmatpush2.msra.mxu0 0.0
  %926 = vmatprep.subr.mxu0 0.0
  %927 = vmatpush2.msra.mxu0 0.0
  %928 = vmatprep.mubr.f32.mxu0 0.0
  %v929 = vand.u32 %v582, 4294901760
  %v930 = vsub.f32 %v582, %v929
  %v931 = vand.u32 %v930, 4294901760
  %932 = vmatmul.mubr.f32.gmra.mxu0 %v931
  %v933 = vpop.f32.mrf.mxu0
  %v934 = vadd.f32 %v850, %v933
  %v935 = vpop.f32.mrf.mxu0
  %936 = vmatprep.mubr.f32.mxu0 0.0
  %v937 = vand.u32 %v585, 4294901760
  %v938 = vsub.f32 %v585, %v937
  %v939 = vand.u32 %v938, 4294901760
  %940 = vmatmul.mubr.f32.gmra.mxu0 %v939
  %v941 = vpop.f32.mrf.mxu0
  %v942 = vadd.f32 %v857, %v941
  %v943 = vpop.f32.mrf.mxu0
  %944 = vdwg.mxu0
  %945 = vmatprep.subr.mxu0 0.0
  %946 = vmatpush1.msra.mxu0 0.0
  %947 = vmatprep.subr.mxu0 0.0
  %948 = vmatpush1.msra.mxu0 0.0
  %949 = vmatprep.subr.mxu0 0.0
  %950 = vmatpush1.msra.mxu0 0.0
  %951 = vmatprep.subr.mxu0 0.0
  %952 = vmatpush1.msra.mxu0 0.0
  %953 = vmatprep.subr.mxu0 0.0
  %954 = vmatpush1.msra.mxu0 0.0
  %955 = vmatprep.subr.mxu0 0.0
  %956 = vmatpush1.msra.mxu0 0.0
  %957 = vmatprep.subr.mxu0 0.0
  %958 = vmatpush1.msra.mxu0 0.0
  %959 = vmatprep.subr.mxu0 0.0
  %960 = vmatpush1.msra.mxu0 0.0
  %961 = vmatprep.subr.mxu0 0.0
  %962 = vmatpush1.msra.mxu0 0.0
  %963 = vmatprep.subr.mxu0 0.0
  %964 = vmatpush1.msra.mxu0 0.0
  %965 = vmatprep.subr.mxu0 0.0
  %966 = vmatpush1.msra.mxu0 0.0
  %967 = vmatprep.subr.mxu0 0.0
  %968 = vmatpush1.msra.mxu0 0.0
  %969 = vmatprep.subr.mxu0 0.0
  %v970 = vand.u32 %v45, 4294901760
  %v971 = vsub.f32 %v45, %v970
  %v972 = vand.u32 %v971, 4294901760
  %973 = vmatpush1.msra.mxu0 %v972
  %974 = vmatprep.subr.mxu0 0.0
  %v975 = vand.u32 %v44, 4294901760
  %v976 = vsub.f32 %v44, %v975
  %v977 = vand.u32 %v976, 4294901760
  %978 = vmatpush1.msra.mxu0 %v977
  %979 = vmatprep.subr.mxu0 0.0
  %v980 = vand.u32 %v43, 4294901760
  %v981 = vsub.f32 %v43, %v980
  %v982 = vand.u32 %v981, 4294901760
  %983 = vmatpush1.msra.mxu0 %v982
  %984 = vmatprep.subr.mxu0 0.0
  %v985 = vand.u32 %v42, 4294901760
  %v986 = vsub.f32 %v42, %v985
  %v987 = vand.u32 %v986, 4294901760
  %988 = vmatpush1.msra.mxu0 %v987
  %989 = vmatprep.subr.mxu0 0.0
  %990 = vmatpush2.msra.mxu0 0.0
  %991 = vmatprep.subr.mxu0 0.0
  %992 = vmatpush2.msra.mxu0 0.0
  %993 = vmatprep.subr.mxu0 0.0
  %994 = vmatpush2.msra.mxu0 0.0
  %995 = vmatprep.subr.mxu0 0.0
  %996 = vmatpush2.msra.mxu0 0.0
  %997 = vmatprep.subr.mxu0 0.0
  %998 = vmatpush2.msra.mxu0 0.0
  %999 = vmatprep.subr.mxu0 0.0
  %1000 = vmatpush2.msra.mxu0 0.0
  %1001 = vmatprep.subr.mxu0 0.0
  %1002 = vmatpush2.msra.mxu0 0.0
  %1003 = vmatprep.subr.mxu0 0.0
  %1004 = vmatpush2.msra.mxu0 0.0
  %1005 = vmatprep.subr.mxu0 0.0
  %1006 = vmatpush2.msra.mxu0 0.0
  %1007 = vmatprep.subr.mxu0 0.0
  %1008 = vmatpush2.msra.mxu0 0.0
  %1009 = vmatprep.subr.mxu0 0.0
  %1010 = vmatpush2.msra.mxu0 0.0
  %1011 = vmatprep.subr.mxu0 0.0
  %1012 = vmatpush2.msra.mxu0 0.0
  %1013 = vmatprep.subr.mxu0 0.0
  %1014 = vmatpush2.msra.mxu0 0.0
  %1015 = vmatprep.subr.mxu0 0.0
  %1016 = vmatpush2.msra.mxu0 0.0
  %1017 = vmatprep.subr.mxu0 0.0
  %1018 = vmatpush2.msra.mxu0 0.0
  %1019 = vmatprep.subr.mxu0 0.0
  %1020 = vmatpush2.msra.mxu0 0.0
  %1021 = vmatprep.mubr.f32.mxu0 0.0
  %v1022 = vand.u32 %v582, 4294901760
  %1023 = vmatmul.mubr.f32.gmra.mxu0 %v1022
  %v1024 = vpop.f32.mrf.mxu0
  %v1025 = vadd.f32 %v934, %v1024
  %v1026 = vpop.f32.mrf.mxu0
  %1027 = vmatprep.mubr.f32.mxu0 0.0
  %v1028 = vand.u32 %v585, 4294901760
  %1029 = vmatmul.mubr.f32.gmra.mxu0 %v1028
  %v1030 = vpop.f32.mrf.mxu0
  %v1031 = vadd.f32 %v942, %v1030
  %v1032 = vpop.f32.mrf.mxu0
  %1033 = vdwg.mxu0
  %1034 = vmatprep.subr.mxu0 0.0
  %1035 = vmatpush1.msra.mxu0 0.0
  %1036 = vmatprep.subr.mxu0 0.0
  %1037 = vmatpush1.msra.mxu0 0.0
  %1038 = vmatprep.subr.mxu0 0.0
  %1039 = vmatpush1.msra.mxu0 0.0
  %1040 = vmatprep.subr.mxu0 0.0
  %1041 = vmatpush1.msra.mxu0 0.0
  %1042 = vmatprep.subr.mxu0 0.0
  %1043 = vmatpush1.msra.mxu0 0.0
  %1044 = vmatprep.subr.mxu0 0.0
  %1045 = vmatpush1.msra.mxu0 0.0
  %1046 = vmatprep.subr.mxu0 0.0
  %1047 = vmatpush1.msra.mxu0 0.0
  %1048 = vmatprep.subr.mxu0 0.0
  %1049 = vmatpush1.msra.mxu0 0.0
  %1050 = vmatprep.subr.mxu0 0.0
  %1051 = vmatpush1.msra.mxu0 0.0
  %1052 = vmatprep.subr.mxu0 0.0
  %1053 = vmatpush1.msra.mxu0 0.0
  %1054 = vmatprep.subr.mxu0 0.0
  %1055 = vmatpush1.msra.mxu0 0.0
  %1056 = vmatprep.subr.mxu0 0.0
  %1057 = vmatpush1.msra.mxu0 0.0
  %1058 = vmatprep.subr.mxu0 0.0
  %v1059 = vand.u32 %v45, 4294901760
  %1060 = vmatpush1.msra.mxu0 %v1059
  %1061 = vmatprep.subr.mxu0 0.0
  %v1062 = vand.u32 %v44, 4294901760
  %1063 = vmatpush1.msra.mxu0 %v1062
  %1064 = vmatprep.subr.mxu0 0.0
  %v1065 = vand.u32 %v43, 4294901760
  %1066 = vmatpush1.msra.mxu0 %v1065
  %1067 = vmatprep.subr.mxu0 0.0
  %v1068 = vand.u32 %v42, 4294901760
  %1069 = vmatpush1.msra.mxu0 %v1068
  %1070 = vmatprep.subr.mxu0 0.0
  %1071 = vmatpush2.msra.mxu0 0.0
  %1072 = vmatprep.subr.mxu0 0.0
  %1073 = vmatpush2.msra.mxu0 0.0
  %1074 = vmatprep.subr.mxu0 0.0
  %1075 = vmatpush2.msra.mxu0 0.0
  %1076 = vmatprep.subr.mxu0 0.0
  %1077 = vmatpush2.msra.mxu0 0.0
  %1078 = vmatprep.subr.mxu0 0.0
  %1079 = vmatpush2.msra.mxu0 0.0
  %1080 = vmatprep.subr.mxu0 0.0
  %1081 = vmatpush2.msra.mxu0 0.0
  %1082 = vmatprep.subr.mxu0 0.0
  %1083 = vmatpush2.msra.mxu0 0.0
  %1084 = vmatprep.subr.mxu0 0.0
  %1085 = vmatpush2.msra.mxu0 0.0
  %1086 = vmatprep.subr.mxu0 0.0
  %1087 = vmatpush2.msra.mxu0 0.0
  %1088 = vmatprep.subr.mxu0 0.0
  %1089 = vmatpush2.msra.mxu0 0.0
  %1090 = vmatprep.subr.mxu0 0.0
  %1091 = vmatpush2.msra.mxu0 0.0
  %1092 = vmatprep.subr.mxu0 0.0
  %1093 = vmatpush2.msra.mxu0 0.0
  %1094 = vmatprep.subr.mxu0 0.0
  %1095 = vmatpush2.msra.mxu0 0.0
  %1096 = vmatprep.subr.mxu0 0.0
  %1097 = vmatpush2.msra.mxu0 0.0
  %1098 = vmatprep.subr.mxu0 0.0
  %1099 = vmatpush2.msra.mxu0 0.0
  %1100 = vmatprep.subr.mxu0 0.0
  %1101 = vmatpush2.msra.mxu0 0.0
  %1102 = vmatprep.mubr.f32.mxu0 0.0
  %v1103 = vand.u32 %v582, 4294901760
  %1104 = vmatmul.mubr.f32.gmra.mxu0 %v1103
  %v1105 = vpop.f32.mrf.mxu0
  %v1106 = vadd.f32 %v1025, %v1105
  %v1107 = vpop.f32.mrf.mxu0
  %1108 = vmatprep.mubr.f32.mxu0 0.0
  %v1109 = vand.u32 %v585, 4294901760
  %1110 = vmatmul.mubr.f32.gmra.mxu0 %v1109
  %v1111 = vpop.f32.mrf.mxu0
  %v1112 = vadd.f32 %v1031, %v1111
  %v1113 = vpop.f32.mrf.mxu0
  %1114 = vdwg.mxu0
  %v1115 = vadd.f32 %v34, %v36
  %v1116 = vadd.f32 %v35, %v37
  %v1117 = vadd.f32 %v38, %v42
  %v1118 = vadd.f32 %v39, %v43
  %v1119 = vadd.f32 %v40, %v44
  %v1120 = vadd.f32 %v41, %v45
  %v1122 = vsel %vm46, %v1115, 0
  %v1125 = vsel %vm46, %v1116, 0
  %1127 = vmatprep.subr.mxu0 0.0
  %1128 = vmatpush1.msra.mxu0 0.0
  %1129 = vmatprep.subr.mxu0 0.0
  %1130 = vmatpush1.msra.mxu0 0.0
  %1131 = vmatprep.subr.mxu0 0.0
  %1132 = vmatpush1.msra.mxu0 0.0
  %1133 = vmatprep.subr.mxu0 0.0
  %1134 = vmatpush1.msra.mxu0 0.0
  %1135 = vmatprep.subr.mxu0 0.0
  %1136 = vmatpush1.msra.mxu0 0.0
  %1137 = vmatprep.subr.mxu0 0.0
  %1138 = vmatpush1.msra.mxu0 0.0
  %1139 = vmatprep.subr.mxu0 0.0
  %1140 = vmatpush1.msra.mxu0 0.0
  %1141 = vmatprep.subr.mxu0 0.0
  %1142 = vmatpush1.msra.mxu0 0.0
  %1143 = vmatprep.subr.mxu0 0.0
  %1144 = vmatpush1.msra.mxu0 0.0
  %1145 = vmatprep.subr.mxu0 0.0
  %1146 = vmatpush1.msra.mxu0 0.0
  %1147 = vmatprep.subr.mxu0 0.0
  %1148 = vmatpush1.msra.mxu0 0.0
  %1149 = vmatprep.subr.mxu0 0.0
  %1150 = vmatpush1.msra.mxu0 0.0
  %1151 = vmatprep.subr.mxu0 0.0
  %v1152 = vand.u32 %v1120, 4294901760
  %1153 = vmatpush1.msra.mxu0 %v1152
  %1154 = vmatprep.subr.mxu0 0.0
  %v1155 = vand.u32 %v1119, 4294901760
  %1156 = vmatpush1.msra.mxu0 %v1155
  %1157 = vmatprep.subr.mxu0 0.0
  %v1158 = vand.u32 %v1118, 4294901760
  %1159 = vmatpush1.msra.mxu0 %v1158
  %1160 = vmatprep.subr.mxu0 0.0
  %v1161 = vand.u32 %v1117, 4294901760
  %1162 = vmatpush1.msra.mxu0 %v1161
  %1163 = vmatprep.subr.mxu0 0.0
  %1164 = vmatpush2.msra.mxu0 0.0
  %1165 = vmatprep.subr.mxu0 0.0
  %1166 = vmatpush2.msra.mxu0 0.0
  %1167 = vmatprep.subr.mxu0 0.0
  %1168 = vmatpush2.msra.mxu0 0.0
  %1169 = vmatprep.subr.mxu0 0.0
  %1170 = vmatpush2.msra.mxu0 0.0
  %1171 = vmatprep.subr.mxu0 0.0
  %1172 = vmatpush2.msra.mxu0 0.0
  %1173 = vmatprep.subr.mxu0 0.0
  %1174 = vmatpush2.msra.mxu0 0.0
  %1175 = vmatprep.subr.mxu0 0.0
  %1176 = vmatpush2.msra.mxu0 0.0
  %1177 = vmatprep.subr.mxu0 0.0
  %1178 = vmatpush2.msra.mxu0 0.0
  %1179 = vmatprep.subr.mxu0 0.0
  %1180 = vmatpush2.msra.mxu0 0.0
  %1181 = vmatprep.subr.mxu0 0.0
  %1182 = vmatpush2.msra.mxu0 0.0
  %1183 = vmatprep.subr.mxu0 0.0
  %1184 = vmatpush2.msra.mxu0 0.0
  %1185 = vmatprep.subr.mxu0 0.0
  %1186 = vmatpush2.msra.mxu0 0.0
  %1187 = vmatprep.subr.mxu0 0.0
  %1188 = vmatpush2.msra.mxu0 0.0
  %1189 = vmatprep.subr.mxu0 0.0
  %1190 = vmatpush2.msra.mxu0 0.0
  %1191 = vmatprep.subr.mxu0 0.0
  %1192 = vmatpush2.msra.mxu0 0.0
  %1193 = vmatprep.subr.mxu0 0.0
  %1194 = vmatpush2.msra.mxu0 0.0
  %1195 = vmatprep.mubr.f32.mxu0 0.0
  %v1196 = vand.u32 %v1122, 4294901760
  %v1197 = vsub.f32 %v1122, %v1196
  %v1198 = vand.u32 %v1197, 4294901760
  %v1199 = vsub.f32 %v1197, %v1198
  %v1200 = vand.u32 %v1199, 4294901760
  %1201 = vmatmul.mubr.f32.gmra.mxu0 %v1200
  %v1202 = vpop.f32.mrf.mxu0
  %v1203 = vadd.f32 0.0, %v1202
  %v1204 = vpop.f32.mrf.mxu0
  %1205 = vmatprep.mubr.f32.mxu0 0.0
  %v1206 = vand.u32 %v1125, 4294901760
  %v1207 = vsub.f32 %v1125, %v1206
  %v1208 = vand.u32 %v1207, 4294901760
  %v1209 = vsub.f32 %v1207, %v1208
  %v1210 = vand.u32 %v1209, 4294901760
  %1211 = vmatmul.mubr.f32.gmra.mxu0 %v1210
  %v1212 = vpop.f32.mrf.mxu0
  %v1213 = vadd.f32 0.0, %v1212
  %v1214 = vpop.f32.mrf.mxu0
  %1215 = vdwg.mxu0
  %1216 = vmatprep.subr.mxu0 0.0
  %1217 = vmatpush1.msra.mxu0 0.0
  %1218 = vmatprep.subr.mxu0 0.0
  %1219 = vmatpush1.msra.mxu0 0.0
  %1220 = vmatprep.subr.mxu0 0.0
  %1221 = vmatpush1.msra.mxu0 0.0
  %1222 = vmatprep.subr.mxu0 0.0
  %1223 = vmatpush1.msra.mxu0 0.0
  %1224 = vmatprep.subr.mxu0 0.0
  %1225 = vmatpush1.msra.mxu0 0.0
  %1226 = vmatprep.subr.mxu0 0.0
  %1227 = vmatpush1.msra.mxu0 0.0
  %1228 = vmatprep.subr.mxu0 0.0
  %1229 = vmatpush1.msra.mxu0 0.0
  %1230 = vmatprep.subr.mxu0 0.0
  %1231 = vmatpush1.msra.mxu0 0.0
  %1232 = vmatprep.subr.mxu0 0.0
  %1233 = vmatpush1.msra.mxu0 0.0
  %1234 = vmatprep.subr.mxu0 0.0
  %1235 = vmatpush1.msra.mxu0 0.0
  %1236 = vmatprep.subr.mxu0 0.0
  %1237 = vmatpush1.msra.mxu0 0.0
  %1238 = vmatprep.subr.mxu0 0.0
  %1239 = vmatpush1.msra.mxu0 0.0
  %1240 = vmatprep.subr.mxu0 0.0
  %v1241 = vand.u32 %v1120, 4294901760
  %v1242 = vsub.f32 %v1120, %v1241
  %v1243 = vand.u32 %v1242, 4294901760
  %v1244 = vsub.f32 %v1242, %v1243
  %v1245 = vand.u32 %v1244, 4294901760
  %1246 = vmatpush1.msra.mxu0 %v1245
  %1247 = vmatprep.subr.mxu0 0.0
  %v1248 = vand.u32 %v1119, 4294901760
  %v1249 = vsub.f32 %v1119, %v1248
  %v1250 = vand.u32 %v1249, 4294901760
  %v1251 = vsub.f32 %v1249, %v1250
  %v1252 = vand.u32 %v1251, 4294901760
  %1253 = vmatpush1.msra.mxu0 %v1252
  %1254 = vmatprep.subr.mxu0 0.0
  %v1255 = vand.u32 %v1118, 4294901760
  %v1256 = vsub.f32 %v1118, %v1255
  %v1257 = vand.u32 %v1256, 4294901760
  %v1258 = vsub.f32 %v1256, %v1257
  %v1259 = vand.u32 %v1258, 4294901760
  %1260 = vmatpush1.msra.mxu0 %v1259
  %1261 = vmatprep.subr.mxu0 0.0
  %v1262 = vand.u32 %v1117, 4294901760
  %v1263 = vsub.f32 %v1117, %v1262
  %v1264 = vand.u32 %v1263, 4294901760
  %v1265 = vsub.f32 %v1263, %v1264
  %v1266 = vand.u32 %v1265, 4294901760
  %1267 = vmatpush1.msra.mxu0 %v1266
  %1268 = vmatprep.subr.mxu0 0.0
  %1269 = vmatpush2.msra.mxu0 0.0
  %1270 = vmatprep.subr.mxu0 0.0
  %1271 = vmatpush2.msra.mxu0 0.0
  %1272 = vmatprep.subr.mxu0 0.0
  %1273 = vmatpush2.msra.mxu0 0.0
  %1274 = vmatprep.subr.mxu0 0.0
  %1275 = vmatpush2.msra.mxu0 0.0
  %1276 = vmatprep.subr.mxu0 0.0
  %1277 = vmatpush2.msra.mxu0 0.0
  %1278 = vmatprep.subr.mxu0 0.0
  %1279 = vmatpush2.msra.mxu0 0.0
  %1280 = vmatprep.subr.mxu0 0.0
  %1281 = vmatpush2.msra.mxu0 0.0
  %1282 = vmatprep.subr.mxu0 0.0
  %1283 = vmatpush2.msra.mxu0 0.0
  %1284 = vmatprep.subr.mxu0 0.0
  %1285 = vmatpush2.msra.mxu0 0.0
  %1286 = vmatprep.subr.mxu0 0.0
  %1287 = vmatpush2.msra.mxu0 0.0
  %1288 = vmatprep.subr.mxu0 0.0
  %1289 = vmatpush2.msra.mxu0 0.0
  %1290 = vmatprep.subr.mxu0 0.0
  %1291 = vmatpush2.msra.mxu0 0.0
  %1292 = vmatprep.subr.mxu0 0.0
  %1293 = vmatpush2.msra.mxu0 0.0
  %1294 = vmatprep.subr.mxu0 0.0
  %1295 = vmatpush2.msra.mxu0 0.0
  %1296 = vmatprep.subr.mxu0 0.0
  %1297 = vmatpush2.msra.mxu0 0.0
  %1298 = vmatprep.subr.mxu0 0.0
  %1299 = vmatpush2.msra.mxu0 0.0
  %1300 = vmatprep.mubr.f32.mxu0 0.0
  %v1301 = vand.u32 %v1122, 4294901760
  %1302 = vmatmul.mubr.f32.gmra.mxu0 %v1301
  %v1303 = vpop.f32.mrf.mxu0
  %v1304 = vadd.f32 %v1203, %v1303
  %v1305 = vpop.f32.mrf.mxu0
  %1306 = vmatprep.mubr.f32.mxu0 0.0
  %v1307 = vand.u32 %v1125, 4294901760
  %1308 = vmatmul.mubr.f32.gmra.mxu0 %v1307
  %v1309 = vpop.f32.mrf.mxu0
  %v1310 = vadd.f32 %v1213, %v1309
  %v1311 = vpop.f32.mrf.mxu0
  %1312 = vdwg.mxu0
  %1313 = vmatprep.subr.mxu0 0.0
  %1314 = vmatpush1.msra.mxu0 0.0
  %1315 = vmatprep.subr.mxu0 0.0
  %1316 = vmatpush1.msra.mxu0 0.0
  %1317 = vmatprep.subr.mxu0 0.0
  %1318 = vmatpush1.msra.mxu0 0.0
  %1319 = vmatprep.subr.mxu0 0.0
  %1320 = vmatpush1.msra.mxu0 0.0
  %1321 = vmatprep.subr.mxu0 0.0
  %1322 = vmatpush1.msra.mxu0 0.0
  %1323 = vmatprep.subr.mxu0 0.0
  %1324 = vmatpush1.msra.mxu0 0.0
  %1325 = vmatprep.subr.mxu0 0.0
  %1326 = vmatpush1.msra.mxu0 0.0
  %1327 = vmatprep.subr.mxu0 0.0
  %1328 = vmatpush1.msra.mxu0 0.0
  %1329 = vmatprep.subr.mxu0 0.0
  %1330 = vmatpush1.msra.mxu0 0.0
  %1331 = vmatprep.subr.mxu0 0.0
  %1332 = vmatpush1.msra.mxu0 0.0
  %1333 = vmatprep.subr.mxu0 0.0
  %1334 = vmatpush1.msra.mxu0 0.0
  %1335 = vmatprep.subr.mxu0 0.0
  %1336 = vmatpush1.msra.mxu0 0.0
  %1337 = vmatprep.subr.mxu0 0.0
  %v1338 = vand.u32 %v1120, 4294901760
  %v1339 = vsub.f32 %v1120, %v1338
  %1340 = vmatpush1.msra.mxu0 %v1339
  %1341 = vmatprep.subr.mxu0 0.0
  %v1342 = vand.u32 %v1119, 4294901760
  %v1343 = vsub.f32 %v1119, %v1342
  %1344 = vmatpush1.msra.mxu0 %v1343
  %1345 = vmatprep.subr.mxu0 0.0
  %v1346 = vand.u32 %v1118, 4294901760
  %v1347 = vsub.f32 %v1118, %v1346
  %1348 = vmatpush1.msra.mxu0 %v1347
  %1349 = vmatprep.subr.mxu0 0.0
  %v1350 = vand.u32 %v1117, 4294901760
  %v1351 = vsub.f32 %v1117, %v1350
  %1352 = vmatpush1.msra.mxu0 %v1351
  %1353 = vmatprep.subr.mxu0 0.0
  %1354 = vmatpush2.msra.mxu0 0.0
  %1355 = vmatprep.subr.mxu0 0.0
  %1356 = vmatpush2.msra.mxu0 0.0
  %1357 = vmatprep.subr.mxu0 0.0
  %1358 = vmatpush2.msra.mxu0 0.0
  %1359 = vmatprep.subr.mxu0 0.0
  %1360 = vmatpush2.msra.mxu0 0.0
  %1361 = vmatprep.subr.mxu0 0.0
  %1362 = vmatpush2.msra.mxu0 0.0
  %1363 = vmatprep.subr.mxu0 0.0
  %1364 = vmatpush2.msra.mxu0 0.0
  %1365 = vmatprep.subr.mxu0 0.0
  %1366 = vmatpush2.msra.mxu0 0.0
  %1367 = vmatprep.subr.mxu0 0.0
  %1368 = vmatpush2.msra.mxu0 0.0
  %1369 = vmatprep.subr.mxu0 0.0
  %1370 = vmatpush2.msra.mxu0 0.0
  %1371 = vmatprep.subr.mxu0 0.0
  %1372 = vmatpush2.msra.mxu0 0.0
  %1373 = vmatprep.subr.mxu0 0.0
  %1374 = vmatpush2.msra.mxu0 0.0
  %1375 = vmatprep.subr.mxu0 0.0
  %1376 = vmatpush2.msra.mxu0 0.0
  %1377 = vmatprep.subr.mxu0 0.0
  %1378 = vmatpush2.msra.mxu0 0.0
  %1379 = vmatprep.subr.mxu0 0.0
  %1380 = vmatpush2.msra.mxu0 0.0
  %1381 = vmatprep.subr.mxu0 0.0
  %1382 = vmatpush2.msra.mxu0 0.0
  %1383 = vmatprep.subr.mxu0 0.0
  %1384 = vmatpush2.msra.mxu0 0.0
  %1385 = vmatprep.mubr.f32.mxu0 0.0
  %v1386 = vand.u32 %v1122, 4294901760
  %v1387 = vsub.f32 %v1122, %v1386
  %1388 = vmatmul.mubr.f32.gmra.mxu0 %v1387
  %v1389 = vpop.f32.mrf.mxu0
  %v1390 = vadd.f32 %v1304, %v1389
  %v1391 = vpop.f32.mrf.mxu0
  %1392 = vmatprep.mubr.f32.mxu0 0.0
  %v1393 = vand.u32 %v1125, 4294901760
  %v1394 = vsub.f32 %v1125, %v1393
  %1395 = vmatmul.mubr.f32.gmra.mxu0 %v1394
  %v1396 = vpop.f32.mrf.mxu0
  %v1397 = vadd.f32 %v1310, %v1396
  %v1398 = vpop.f32.mrf.mxu0
  %1399 = vdwg.mxu0
  %1400 = vmatprep.subr.mxu0 0.0
  %1401 = vmatpush1.msra.mxu0 0.0
  %1402 = vmatprep.subr.mxu0 0.0
  %1403 = vmatpush1.msra.mxu0 0.0
  %1404 = vmatprep.subr.mxu0 0.0
  %1405 = vmatpush1.msra.mxu0 0.0
  %1406 = vmatprep.subr.mxu0 0.0
  %1407 = vmatpush1.msra.mxu0 0.0
  %1408 = vmatprep.subr.mxu0 0.0
  %1409 = vmatpush1.msra.mxu0 0.0
  %1410 = vmatprep.subr.mxu0 0.0
  %1411 = vmatpush1.msra.mxu0 0.0
  %1412 = vmatprep.subr.mxu0 0.0
  %1413 = vmatpush1.msra.mxu0 0.0
  %1414 = vmatprep.subr.mxu0 0.0
  %1415 = vmatpush1.msra.mxu0 0.0
  %1416 = vmatprep.subr.mxu0 0.0
  %1417 = vmatpush1.msra.mxu0 0.0
  %1418 = vmatprep.subr.mxu0 0.0
  %1419 = vmatpush1.msra.mxu0 0.0
  %1420 = vmatprep.subr.mxu0 0.0
  %1421 = vmatpush1.msra.mxu0 0.0
  %1422 = vmatprep.subr.mxu0 0.0
  %1423 = vmatpush1.msra.mxu0 0.0
  %1424 = vmatprep.subr.mxu0 0.0
  %v1425 = vand.u32 %v1120, 4294901760
  %1426 = vmatpush1.msra.mxu0 %v1425
  %1427 = vmatprep.subr.mxu0 0.0
  %v1428 = vand.u32 %v1119, 4294901760
  %1429 = vmatpush1.msra.mxu0 %v1428
  %1430 = vmatprep.subr.mxu0 0.0
  %v1431 = vand.u32 %v1118, 4294901760
  %1432 = vmatpush1.msra.mxu0 %v1431
  %1433 = vmatprep.subr.mxu0 0.0
  %v1434 = vand.u32 %v1117, 4294901760
  %1435 = vmatpush1.msra.mxu0 %v1434
  %1436 = vmatprep.subr.mxu0 0.0
  %1437 = vmatpush2.msra.mxu0 0.0
  %1438 = vmatprep.subr.mxu0 0.0
  %1439 = vmatpush2.msra.mxu0 0.0
  %1440 = vmatprep.subr.mxu0 0.0
  %1441 = vmatpush2.msra.mxu0 0.0
  %1442 = vmatprep.subr.mxu0 0.0
  %1443 = vmatpush2.msra.mxu0 0.0
  %1444 = vmatprep.subr.mxu0 0.0
  %1445 = vmatpush2.msra.mxu0 0.0
  %1446 = vmatprep.subr.mxu0 0.0
  %1447 = vmatpush2.msra.mxu0 0.0
  %1448 = vmatprep.subr.mxu0 0.0
  %1449 = vmatpush2.msra.mxu0 0.0
  %1450 = vmatprep.subr.mxu0 0.0
  %1451 = vmatpush2.msra.mxu0 0.0
  %1452 = vmatprep.subr.mxu0 0.0
  %1453 = vmatpush2.msra.mxu0 0.0
  %1454 = vmatprep.subr.mxu0 0.0
  %1455 = vmatpush2.msra.mxu0 0.0
  %1456 = vmatprep.subr.mxu0 0.0
  %1457 = vmatpush2.msra.mxu0 0.0
  %1458 = vmatprep.subr.mxu0 0.0
  %1459 = vmatpush2.msra.mxu0 0.0
  %1460 = vmatprep.subr.mxu0 0.0
  %1461 = vmatpush2.msra.mxu0 0.0
  %1462 = vmatprep.subr.mxu0 0.0
  %1463 = vmatpush2.msra.mxu0 0.0
  %1464 = vmatprep.subr.mxu0 0.0
  %1465 = vmatpush2.msra.mxu0 0.0
  %1466 = vmatprep.subr.mxu0 0.0
  %1467 = vmatpush2.msra.mxu0 0.0
  %1468 = vmatprep.mubr.f32.mxu0 0.0
  %v1469 = vand.u32 %v1122, 4294901760
  %v1470 = vsub.f32 %v1122, %v1469
  %v1471 = vand.u32 %v1470, 4294901760
  %1472 = vmatmul.mubr.f32.gmra.mxu0 %v1471
  %v1473 = vpop.f32.mrf.mxu0
  %v1474 = vadd.f32 %v1390, %v1473
  %v1475 = vpop.f32.mrf.mxu0
  %1476 = vmatprep.mubr.f32.mxu0 0.0
  %v1477 = vand.u32 %v1125, 4294901760
  %v1478 = vsub.f32 %v1125, %v1477
  %v1479 = vand.u32 %v1478, 4294901760
  %1480 = vmatmul.mubr.f32.gmra.mxu0 %v1479
  %v1481 = vpop.f32.mrf.mxu0
  %v1482 = vadd.f32 %v1397, %v1481
  %v1483 = vpop.f32.mrf.mxu0
  %1484 = vdwg.mxu0
  %1485 = vmatprep.subr.mxu0 0.0
  %1486 = vmatpush1.msra.mxu0 0.0
  %1487 = vmatprep.subr.mxu0 0.0
  %1488 = vmatpush1.msra.mxu0 0.0
  %1489 = vmatprep.subr.mxu0 0.0
  %1490 = vmatpush1.msra.mxu0 0.0
  %1491 = vmatprep.subr.mxu0 0.0
  %1492 = vmatpush1.msra.mxu0 0.0
  %1493 = vmatprep.subr.mxu0 0.0
  %1494 = vmatpush1.msra.mxu0 0.0
  %1495 = vmatprep.subr.mxu0 0.0
  %1496 = vmatpush1.msra.mxu0 0.0
  %1497 = vmatprep.subr.mxu0 0.0
  %1498 = vmatpush1.msra.mxu0 0.0
  %1499 = vmatprep.subr.mxu0 0.0
  %1500 = vmatpush1.msra.mxu0 0.0
  %1501 = vmatprep.subr.mxu0 0.0
  %1502 = vmatpush1.msra.mxu0 0.0
  %1503 = vmatprep.subr.mxu0 0.0
  %1504 = vmatpush1.msra.mxu0 0.0
  %1505 = vmatprep.subr.mxu0 0.0
  %1506 = vmatpush1.msra.mxu0 0.0
  %1507 = vmatprep.subr.mxu0 0.0
  %1508 = vmatpush1.msra.mxu0 0.0
  %1509 = vmatprep.subr.mxu0 0.0
  %v1510 = vand.u32 %v1120, 4294901760
  %v1511 = vsub.f32 %v1120, %v1510
  %v1512 = vand.u32 %v1511, 4294901760
  %1513 = vmatpush1.msra.mxu0 %v1512
  %1514 = vmatprep.subr.mxu0 0.0
  %v1515 = vand.u32 %v1119, 4294901760
  %v1516 = vsub.f32 %v1119, %v1515
  %v1517 = vand.u32 %v1516, 4294901760
  %1518 = vmatpush1.msra.mxu0 %v1517
  %1519 = vmatprep.subr.mxu0 0.0
  %v1520 = vand.u32 %v1118, 4294901760
  %v1521 = vsub.f32 %v1118, %v1520
  %v1522 = vand.u32 %v1521, 4294901760
  %1523 = vmatpush1.msra.mxu0 %v1522
  %1524 = vmatprep.subr.mxu0 0.0
  %v1525 = vand.u32 %v1117, 4294901760
  %v1526 = vsub.f32 %v1117, %v1525
  %v1527 = vand.u32 %v1526, 4294901760
  %1528 = vmatpush1.msra.mxu0 %v1527
  %1529 = vmatprep.subr.mxu0 0.0
  %1530 = vmatpush2.msra.mxu0 0.0
  %1531 = vmatprep.subr.mxu0 0.0
  %1532 = vmatpush2.msra.mxu0 0.0
  %1533 = vmatprep.subr.mxu0 0.0
  %1534 = vmatpush2.msra.mxu0 0.0
  %1535 = vmatprep.subr.mxu0 0.0
  %1536 = vmatpush2.msra.mxu0 0.0
  %1537 = vmatprep.subr.mxu0 0.0
  %1538 = vmatpush2.msra.mxu0 0.0
  %1539 = vmatprep.subr.mxu0 0.0
  %1540 = vmatpush2.msra.mxu0 0.0
  %1541 = vmatprep.subr.mxu0 0.0
  %1542 = vmatpush2.msra.mxu0 0.0
  %1543 = vmatprep.subr.mxu0 0.0
  %1544 = vmatpush2.msra.mxu0 0.0
  %1545 = vmatprep.subr.mxu0 0.0
  %1546 = vmatpush2.msra.mxu0 0.0
  %1547 = vmatprep.subr.mxu0 0.0
  %1548 = vmatpush2.msra.mxu0 0.0
  %1549 = vmatprep.subr.mxu0 0.0
  %1550 = vmatpush2.msra.mxu0 0.0
  %1551 = vmatprep.subr.mxu0 0.0
  %1552 = vmatpush2.msra.mxu0 0.0
  %1553 = vmatprep.subr.mxu0 0.0
  %1554 = vmatpush2.msra.mxu0 0.0
  %1555 = vmatprep.subr.mxu0 0.0
  %1556 = vmatpush2.msra.mxu0 0.0
  %1557 = vmatprep.subr.mxu0 0.0
  %1558 = vmatpush2.msra.mxu0 0.0
  %1559 = vmatprep.subr.mxu0 0.0
  %1560 = vmatpush2.msra.mxu0 0.0
  %1561 = vmatprep.mubr.f32.mxu0 0.0
  %v1562 = vand.u32 %v1122, 4294901760
  %1563 = vmatmul.mubr.f32.gmra.mxu0 %v1562
  %v1564 = vpop.f32.mrf.mxu0
  %v1565 = vadd.f32 %v1474, %v1564
  %v1566 = vpop.f32.mrf.mxu0
  %1567 = vmatprep.mubr.f32.mxu0 0.0
  %v1568 = vand.u32 %v1125, 4294901760
  %1569 = vmatmul.mubr.f32.gmra.mxu0 %v1568
  %v1570 = vpop.f32.mrf.mxu0
  %v1571 = vadd.f32 %v1482, %v1570
  %v1572 = vpop.f32.mrf.mxu0
  %1573 = vdwg.mxu0
  %1574 = vmatprep.subr.mxu0 0.0
  %1575 = vmatpush1.msra.mxu0 0.0
  %1576 = vmatprep.subr.mxu0 0.0
  %1577 = vmatpush1.msra.mxu0 0.0
  %1578 = vmatprep.subr.mxu0 0.0
  %1579 = vmatpush1.msra.mxu0 0.0
  %1580 = vmatprep.subr.mxu0 0.0
  %1581 = vmatpush1.msra.mxu0 0.0
  %1582 = vmatprep.subr.mxu0 0.0
  %1583 = vmatpush1.msra.mxu0 0.0
  %1584 = vmatprep.subr.mxu0 0.0
  %1585 = vmatpush1.msra.mxu0 0.0
  %1586 = vmatprep.subr.mxu0 0.0
  %1587 = vmatpush1.msra.mxu0 0.0
  %1588 = vmatprep.subr.mxu0 0.0
  %1589 = vmatpush1.msra.mxu0 0.0
  %1590 = vmatprep.subr.mxu0 0.0
  %1591 = vmatpush1.msra.mxu0 0.0
  %1592 = vmatprep.subr.mxu0 0.0
  %1593 = vmatpush1.msra.mxu0 0.0
  %1594 = vmatprep.subr.mxu0 0.0
  %1595 = vmatpush1.msra.mxu0 0.0
  %1596 = vmatprep.subr.mxu0 0.0
  %1597 = vmatpush1.msra.mxu0 0.0
  %1598 = vmatprep.subr.mxu0 0.0
  %v1599 = vand.u32 %v1120, 4294901760
  %1600 = vmatpush1.msra.mxu0 %v1599
  %1601 = vmatprep.subr.mxu0 0.0
  %v1602 = vand.u32 %v1119, 4294901760
  %1603 = vmatpush1.msra.mxu0 %v1602
  %1604 = vmatprep.subr.mxu0 0.0
  %v1605 = vand.u32 %v1118, 4294901760
  %1606 = vmatpush1.msra.mxu0 %v1605
  %1607 = vmatprep.subr.mxu0 0.0
  %v1608 = vand.u32 %v1117, 4294901760
  %1609 = vmatpush1.msra.mxu0 %v1608
  %1610 = vmatprep.subr.mxu0 0.0
  %1611 = vmatpush2.msra.mxu0 0.0
  %1612 = vmatprep.subr.mxu0 0.0
  %1613 = vmatpush2.msra.mxu0 0.0
  %1614 = vmatprep.subr.mxu0 0.0
  %1615 = vmatpush2.msra.mxu0 0.0
  %1616 = vmatprep.subr.mxu0 0.0
  %1617 = vmatpush2.msra.mxu0 0.0
  %1618 = vmatprep.subr.mxu0 0.0
  %1619 = vmatpush2.msra.mxu0 0.0
  %1620 = vmatprep.subr.mxu0 0.0
  %1621 = vmatpush2.msra.mxu0 0.0
  %1622 = vmatprep.subr.mxu0 0.0
  %1623 = vmatpush2.msra.mxu0 0.0
  %1624 = vmatprep.subr.mxu0 0.0
  %1625 = vmatpush2.msra.mxu0 0.0
  %1626 = vmatprep.subr.mxu0 0.0
  %1627 = vmatpush2.msra.mxu0 0.0
  %1628 = vmatprep.subr.mxu0 0.0
  %1629 = vmatpush2.msra.mxu0 0.0
  %1630 = vmatprep.subr.mxu0 0.0
  %1631 = vmatpush2.msra.mxu0 0.0
  %1632 = vmatprep.subr.mxu0 0.0
  %1633 = vmatpush2.msra.mxu0 0.0
  %1634 = vmatprep.subr.mxu0 0.0
  %1635 = vmatpush2.msra.mxu0 0.0
  %1636 = vmatprep.subr.mxu0 0.0
  %1637 = vmatpush2.msra.mxu0 0.0
  %1638 = vmatprep.subr.mxu0 0.0
  %1639 = vmatpush2.msra.mxu0 0.0
  %1640 = vmatprep.subr.mxu0 0.0
  %1641 = vmatpush2.msra.mxu0 0.0
  %1642 = vmatprep.mubr.f32.mxu0 0.0
  %v1643 = vand.u32 %v1122, 4294901760
  %1644 = vmatmul.mubr.f32.gmra.mxu0 %v1643
  %v1645 = vpop.f32.mrf.mxu0
  %v1646 = vadd.f32 %v1565, %v1645
  %v1647 = vpop.f32.mrf.mxu0
  %1648 = vmatprep.mubr.f32.mxu0 0.0
  %v1649 = vand.u32 %v1125, 4294901760
  %1650 = vmatmul.mubr.f32.gmra.mxu0 %v1649
  %v1651 = vpop.f32.mrf.mxu0
  %v1652 = vadd.f32 %v1571, %v1651
  %v1653 = vpop.f32.mrf.mxu0
  %1654 = vdwg.mxu0
  %v1655 = vld [vmem:[#allocation2] sm:$0xff]
  %v1656 = vld [vmem:[#allocation2 + $0x8] sm:$0xff]
  %v1657 = vsub.f32 %v572, %v1106
  %v1658 = vsub.f32 %v578, %v1112
  %v1659 = vadd.f32 %v1655, %v1657
  %v1660 = vadd.f32 %v1656, %v1658
  %1661 = vst.msk [vmem:[#allocation2] sm:$0xff] %vm46, %v1659
  %1662 = vst.msk [vmem:[#allocation2 + $0x8] sm:$0xff] %vm46, %v1660
  %v1663 = vld [vmem:[#allocation3] sm:$0xff]
  %v1664 = vld [vmem:[#allocation3 + $0x8] sm:$0xff]
  %v1665 = vsub.f32 %v1646, %v572
  %v1666 = vsub.f32 %v1652, %v578
  %v1667 = vsub.f32 %v1665, %v1106
  %v1668 = vsub.f32 %v1666, %v1112
  %v1669 = vadd.f32 %v1663, %v1667
  %v1670 = vadd.f32 %v1664, %v1668
  %1671 = vst.msk [vmem:[#allocation3] sm:$0xff] %vm46, %v1669
  %1672 = vst.msk [vmem:[#allocation3 + $0x8] sm:$0xff] %vm46, %v1670
  // Predicated region
  $region30: #{forward.17} parent=0 // pred_check
    %p1673 = pneg %p25
  $region31: #{forward.17} parent=0 // pred_check_branch
    %1675 = sbr.rel (%p1673) target = $region33
  $region32: #{forward.17} parent=0 // pred_region
    %v1676 = vld [vmem:[%s4] sm:$0xff]
    %v1677 = vld [vmem:[%s4 + $0x8] sm:$0xff]
    %v1678 = vld [vmem:[#allocation2] sm:$0xff]
    %v1679 = vld [vmem:[#allocation2 + $0x8] sm:$0xff]
    %v1680 = vmul.f32 %v1678, 0.1
    %v1681 = vmul.f32 %v1679, 0.1
    %v1682 = vadd.f32 %v1676, %v1680
    %v1683 = vadd.f32 %v1677, %v1681
    %v1684 = vsub.f32 %v1682, 0.01
    %v1685 = vsub.f32 %v1683, 0.01
    %v1686 = vld [vmem:[%s5] sm:$0xff]
    %v1687 = vld [vmem:[%s5 + $0x8] sm:$0xff]
    %v1688 = vld [vmem:[#allocation3] sm:$0xff]
    %v1689 = vld [vmem:[#allocation3 + $0x8] sm:$0xff]
    %v1690 = vmul.f32 %v1688, 0.1
    %v1691 = vmul.f32 %v1689, 0.1
    %v1692 = vadd.f32 %v1686, %v1690
    %v1693 = vadd.f32 %v1687, %v1691
    %v1694 = vmax.f32 %v1684, 0.0
    %v1695 = vmax.f32 %v1685, 0.0
    %1696 = vst.msk [vmem:[%s6] sm:$0xff] %vm46, %v1694
    %1697 = vst.msk [vmem:[%s6 + $0x8] sm:$0xff] %vm46, %v1695
    %v1698 = vmax.f32 %v1692, 0.0
    %v1699 = vmax.f32 %v1693, 0.0
    %1700 = vst.msk [vmem:[%s7] sm:$0xff] %vm46, %v1698
    %1701 = vst.msk [vmem:[%s7 + $0x8] sm:$0xff] %vm46, %v1699
  $region33: #{forward.17} parent=0 // pred_fallthru
    _
  // Predicated region
  $region34: #{forward.17} parent=0 // pred_check
    _
  $region35: #{forward.17} parent=0 // pred_check_branch
    %1703 = sbr.rel (0) target = $region37
  $region36: #{forward.17} parent=0 // pred_region
    _
  $region37: #{forward.17} parent=0 // pred_fallthru
    _
  // Predicated region
  $region38: #{forward.17} parent=0 // pred_check
    _
  $region39: #{forward.17} parent=0 // pred_check_branch
    %1705 = sbr.rel (0) target = $region41
  $region40: #{forward.17} parent=0 // pred_region
    _
  $region41: #{forward.17} parent=0 // pred_fallthru
    _
  // Predicated region
  $region42: #{forward.17} parent=0 // pred_check
    _
  $region43: #{forward.17} parent=0 // pred_check_branch
    %1707 = sbr.rel (0) target = $region45
  $region44: #{forward.17} parent=0 // pred_region
    _
  $region45: #{forward.17} parent=0 // pred_fallthru
    _
  // Predicated region
  $region46: #{forward.17} parent=0 // pred_check
    _
  $region47: #{forward.17} parent=0 // pred_check_branch
    %1709 = sbr.rel (0) target = $region49
  $region48: #{forward.17} parent=0 // pred_region
    _
  $region49: #{forward.17} parent=0 // pred_fallthru
    _

</llo_original>
